<compile_context>
chip_gen: v6e
topology: v6e:2x2x1
jax: 0.10.0
libtpu: 0.0.40
codegen_flags: <defaults>
</compile_context>

<pallas_src>
import jax
import jax.numpy as jnp
from jax import lax
from jax.experimental import pallas as pl
from jax.experimental.pallas import tpu as pltpu

# ---- small, self-consistent hparams (mirror DecoderRNN.__init__ shapes) ----
B = 8               # batch (one full sublane group)
T = 8               # encoder sequence length
S = 8               # decode steps executed inside one kernel call
HE = 64             # enc_hidden_size
ENC_DIR = 2         # enc_bidirectional -> 2 directions
ENC = HE * ENC_DIR  # encoder feature size (DE*HE) = 128
E = 128             # dec_emb_size
HD = 64             # dec_hidden_size
DD = 2              # dec_bidirectional -> 2 directions
LD = 1              # dec_layers
DH = DD * HD        # 128 (concatenated bidirectional hidden)
A = 128             # attention hidden size
V = 128             # output_size (target vocab)
VOCAB_IN = 64       # embedding input_size
PAD = 0             # lang.PAD_TOKEN
IN_DIM = E + ENC    # GRU input size
G6 = 6 * HD         # fused gate width: [r_f | r_b | z_f | z_b | n_f | n_b]


# --------------------------------------------------------------------------
# Fused multi-step decoder kernel (single invocation, loop inside)
# --------------------------------------------------------------------------
def decoder_kernel(gie_ref,                      # [S, B, 6*HD]  pre-gathered emb @ Wi_e
                   enc_ref, mask_ref, h0_ref,    # [B,T,ENC], [B,T], [B,DH]
                   attn_we_ref, attn_v_ref,      # [ENC,A], [1,A]
                   h_w_ref,                      # [DH, A+6*HD] = [attn_wh | wh_blk]
                   wi_c_ref,                     # [ENC, 6*HD]
                   bi_ref, bh_ref,               # [1, 6*HD] each
                   wout_ref, bout_ref,           # [DH, V], [1, V]
                   logp_ref, ctx_ref, hout_ref): # outs: [S,B,V], [S,B,ENC], [B,DH]
    n_steps = gie_ref.shape[0]

    # ---- step-invariant work, hoisted out of the decode loop ----------------
    enc = enc_ref[...]                                   # [B, T, ENC]
    maskb = mask_ref[...] > 0.0                          # [B, T]
    eproj = jnp.dot(enc.reshape(B * T, ENC), attn_we_ref[...],
                    preferred_element_type=jnp.float32).reshape(B, T, A)
    v_b = attn_v_ref[...].reshape(1, 1, A)               # attention score vector
    bi_b = jnp.broadcast_to(bi_ref[...], (B, G6))
    bh_b = jnp.broadcast_to(bh_ref[...], (B, G6))
    bout_b = jnp.broadcast_to(bout_ref[...], (B, V))

    def step(s, h):                                      # h: [B, DH] = [h_f | h_b]
        # One fused matmul for everything that multiplies the carried hidden:
        # columns [0:A] = attention query, [A:] = GRU hidden-gate pre-activations
        # (block-diagonal fwd/bwd weight -> adding exact zeros, bit-identical).
        hw = jnp.dot(h, h_w_ref[...], preferred_element_type=jnp.float32)
        q = hw[:, :A]                                    # [B, A]
        gh = hw[:, A:] + bh_b                            # [B, 6*HD]

        # ---- additive (Bahdanau) attention, masked softmax over T -----------
        energy = jnp.tanh(q[:, None, :] + eproj)         # [B, T, A]
        score = jnp.sum(energy * v_b, axis=-1)           # [B, T]  (XLU lane-reduce)
        score = jnp.where(maskb, score, -1e9)
        smax = jnp.max(score, axis=-1, keepdims=True)
        p = jnp.exp(score - smax)                        # masked lanes underflow to 0
        attn = p / jnp.sum(p, axis=-1, keepdims=True)
        ctx = jnp.sum(attn[:, :, None] * enc, axis=1)    # [B, ENC]

        # ---- fused bidirectional GRU (1 layer, seq_len == 1) -----------------
        # embedding contribution was folded into gie at pack/gather time
        gi = gie_ref[s] + jnp.dot(ctx, wi_c_ref[...],
                                  preferred_element_type=jnp.float32) + bi_b
        r = jax.nn.sigmoid(gi[:, :DH] + gh[:, :DH])
        z = jax.nn.sigmoid(gi[:, DH:2 * DH] + gh[:, DH:2 * DH])
        n = jnp.tanh(gi[:, 2 * DH:] + r * gh[:, 2 * DH:])
        h_new = (1.0 - z) * n + z * h                    # [B, DH] = [hf' | hb']

        # ---- output projection + log_softmax ---------------------------------
        logits = jnp.dot(h_new, wout_ref[...],
                         preferred_element_type=jnp.float32) + bout_b
        shifted = logits - jnp.max(logits, axis=-1, keepdims=True)
        lse = jnp.log(jnp.sum(jnp.exp(shifted), axis=-1, keepdims=True))

        logp_ref[s] = shifted - lse                      # per-step output write
        ctx_ref[s] = ctx
        return h_new

    hout_ref[...] = lax.fori_loop(0, n_steps, step, h0_ref[...], unroll=True)


# --------------------------------------------------------------------------
# Host wrapper
# --------------------------------------------------------------------------
def decoder_forward(packed, input_ids, encoder_outputs, mask, hidden=None):
    """Runs S teacher-forced decoder steps (== S calls of DecoderRNN.forward).

    input_ids: [S, B] int32, encoder_outputs: [B, T, ENC], mask: [B, T],
    hidden: [LD*DD, B, HD] or None.
    Returns: logp [S, B, V], next_hidden [LD*DD, B, HD], context [S, B, ENC].
    """
    S_, B_ = input_ids.shape
    if hidden is None:                                        # init_hidden
        h0 = jnp.zeros((B_, DH), jnp.float32)
    else:
        h0 = hidden.transpose(1, 0, 2).reshape(B_, DH)        # [B, hf|hb]

    # Embedding lookup folded into the GRU input weights at pack time; the
    # gather happens here (plain XLA) so the kernel never does row loads.
    gi_e = jnp.take(packed["gi_e_table"], input_ids, axis=0)  # [S, B, 6*HD]

    vmem = pl.BlockSpec(memory_space=pltpu.MemorySpace.VMEM)  # full-array residency
    out_shape = (
        jax.ShapeDtypeStruct((S_, B_, V), jnp.float32),
        jax.ShapeDtypeStruct((S_, B_, ENC), jnp.float32),
        jax.ShapeDtypeStruct((B_, DH), jnp.float32),
    )
    logp, ctx, h_final = pl.pallas_call(
        decoder_kernel,
        out_shape=out_shape,
        in_specs=[vmem] * 12,
        out_specs=(vmem, vmem, vmem),
    )(gi_e, encoder_outputs, mask, h0,
      packed["attn_we"], packed["attn_v"], packed["h_w"], packed["wi_c"],
      packed["bi"], packed["bh"], packed["out_w"], packed["out_b"])

    next_hidden = h_final.reshape(B_, DD, HD).transpose(1, 0, 2)  # [LD*DD, B, HD]
    return logp, next_hidden, ctx


# --------------------------------------------------------------------------
# Parameter init (PyTorch-style per-direction layout) + one-time packing
# --------------------------------------------------------------------------
def init_params(key):
    ks = jax.random.split(key, 16)
    n = lambda k, shape, s=0.1: (s * jax.random.normal(k, shape)).astype(jnp.float32)
    emb = n(ks[0], (VOCAB_IN, E))
    emb = emb.at[PAD].set(0.0)  # padding_idx behaviour of nn.Embedding
    return {
        "embedding": emb,
        "attn_wh": n(ks[1], (DH, A)),
        "attn_we": n(ks[2], (ENC, A)),
        "attn_v":  n(ks[3], (1, A)),
        "gru_wif": n(ks[4], (IN_DIM, 3 * HD)),   # columns: r, z, n
        "gru_whf": n(ks[5], (HD, 3 * HD)),
        "gru_bif": n(ks[6], (1, 3 * HD)),
        "gru_bhf": n(ks[7], (1, 3 * HD)),
        "gru_wib": n(ks[8], (IN_DIM, 3 * HD)),
        "gru_whb": n(ks[9], (HD, 3 * HD)),
        "gru_bib": n(ks[10], (1, 3 * HD)),
        "gru_bhb": n(ks[11], (1, 3 * HD)),
        "out_w":   n(ks[12], (DH, V)),
        "out_b":   n(ks[13], (1, V)),
    }


def pack_params(p):
    """One-time host-side re-layout into the fused kernel weight layout."""
    gc = lambda w: [w[:, g * HD:(g + 1) * HD] for g in range(3)]   # split r,z,n columns
    wif, wib = gc(p["gru_wif"]), gc(p["gru_wib"])
    # gate-major, direction-minor: [r_f | r_b | z_f | z_b | n_f | n_b]
    wi_all = jnp.concatenate([wif[0], wib[0], wif[1], wib[1], wif[2], wib[2]], axis=1)
    wi_e, wi_c = wi_all[:E], wi_all[E:]                            # emb rows / ctx rows
    whf, whb = gc(p["gru_whf"]), gc(p["gru_whb"])
    zz = jnp.zeros((HD, HD), jnp.float32)
    wh_blk = jnp.concatenate([
        jnp.concatenate([whf[0], zz, whf[1], zz, whf[2], zz], axis=1),   # h_f rows
        jnp.concatenate([zz, whb[0], zz, whb[1], zz, whb[2]], axis=1),   # h_b rows
    ], axis=0)                                                           # [DH, 6*HD]
    bif, bib = gc(p["gru_bif"]), gc(p["gru_bib"])
    bhf, bhb = gc(p["gru_bhf"]), gc(p["gru_bhb"])
    bi = jnp.concatenate([bif[0], bib[0], bif[1], bib[1], bif[2], bib[2]], axis=1)
    bh = jnp.concatenate([bhf[0], bhb[0], bhf[1], bhb[1], bhf[2], bhb[2]], axis=1)
    # Embedding folded into the GRU input weights (gather commutes with matmul
    # on the non-gathered axis; PAD row stays zero).
    gi_e_table = p["embedding"] @ wi_e                                    # [VOCAB, 6*HD]
    # Fused hidden-LHS weight: one matmul per step yields [q | gh_pre].
    h_w = jnp.concatenate([p["attn_wh"], wh_blk], axis=1)                 # [DH, A+6*HD]
    return {"gi_e_table": gi_e_table, "h_w": h_w,
            "attn_we": p["attn_we"], "attn_v": p["attn_v"],
            "wi_c": wi_c, "bi": bi, "bh": bh,
            "out_w": p["out_w"], "out_b": p["out_b"]}


# --------------------------------------------------------------------------
# Pure-JAX reference (per-direction, step-by-step) for correctness check
# --------------------------------------------------------------------------
def _ref_step(p, ids, enc, mask, hidden):
    emb = jnp.take(p["embedding"], ids, axis=0)
    h_f, h_b = hidden[0], hidden[1]
    hq = jnp.concatenate([h_f, h_b], axis=-1)
    q = hq @ p["attn_wh"]
    e_proj = jnp.einsum("btd,da->bta", enc, p["attn_we"])
    energy = jnp.tanh(q[:, None, :] + e_proj)
    score = jnp.sum(energy * p["attn_v"][None, :, :], axis=-1)
    score = jnp.where(mask > 0.0, score, -1e9)
    pr = jnp.exp(score - jnp.max(score, axis=-1, keepdims=True)) * mask
    attn = pr / jnp.sum(pr, axis=-1, keepdims=True)
    ctx = jnp.einsum("bt,btd->bd", attn, enc)
    x = jnp.concatenate([emb, ctx], axis=-1)

    def cell(x, h, wi, wh, bi, bh):
        gi = x @ wi + bi
        gh = h @ wh + bh
        r = jax.nn.sigmoid(gi[:, :HD] + gh[:, :HD])
        z = jax.nn.sigmoid(gi[:, HD:2 * HD] + gh[:, HD:2 * HD])
        n = jnp.tanh(gi[:, 2 * HD:] + r * gh[:, 2 * HD:])
        return (1.0 - z) * n + z * h

    hf = cell(x, h_f, p["gru_wif"], p["gru_whf"], p["gru_bif"], p["gru_bhf"])
    hb = cell(x, h_b, p["gru_wib"], p["gru_whb"], p["gru_bib"], p["gru_bhb"])
    out = jnp.concatenate([hf, hb], axis=-1)
    logits = out @ p["out_w"] + p["out_b"]
    return jax.nn.log_softmax(logits, -1), jnp.stack([hf, hb], 0), ctx


def decoder_forward_ref(params, input_ids, encoder_outputs, mask, hidden=None):
    if hidden is None:
        hidden = jnp.zeros((LD * DD, B, HD), jnp.float32)
    logps, ctxs = [], []
    for s in range(input_ids.shape[0]):
        lp, hidden, ctx = _ref_step(params, input_ids[s], encoder_outputs, mask, hidden)
        logps.append(lp)
        ctxs.append(ctx)
    return jnp.stack(logps, 0), hidden, jnp.stack(ctxs, 0)


# --------------------------------------------------------------------------
if __name__ == "__main__":
    key = jax.random.PRNGKey(0)
    kp, ki, ke = jax.random.split(key, 3)
    params = init_params(kp)
    packed = pack_params(params)     # one-time re-layout, outside the decode path

    input_ids = jax.random.randint(ki, (S, B), 1, VOCAB_IN, dtype=jnp.int32)  # [S, B]
    encoder_outputs = 0.5 * jax.random.normal(ke, (B, T, ENC), dtype=jnp.float32)
    lengths = jnp.array([T, 5, 3, T, 6, 2, T, 4], dtype=jnp.int32)
    mask = (jnp.arange(T)[None, :] < lengths[:, None]).astype(jnp.float32)    # [B, T]

    fwd = jax.jit(decoder_forward)
    logp, next_hidden, context = fwd(packed, input_ids, encoder_outputs, mask)
    jax.block_until_ready((logp, next_hidden, context))

    ref_logp, ref_h, ref_ctx = decoder_forward_ref(
        params, input_ids, encoder_outputs, mask, hidden=None)

    assert logp.shape == (S, B, V)
    assert next_hidden.shape == (LD * DD, B, HD)
    assert context.shape == (S, B, ENC)
    assert jnp.allclose(logp, ref_logp, atol=1e-4, rtol=1e-4)
    assert jnp.allclose(next_hidden, ref_h, atol=1e-4, rtol=1e-4)
    assert jnp.allclose(context, ref_ctx, atol=1e-4, rtol=1e-4)
    # log_softmax rows must sum to 1 in prob space
    assert jnp.allclose(jnp.sum(jnp.exp(logp), axis=-1), 1.0, atol=1e-4)

    print("KERNEL_OK")
</pallas_src>

<mosaic_0001>
module attributes {stable_mosaic.version = 11 : i64} {
  func.func @decoder_kernel(%arg0: memref<8x8x384xf32, #tpu.memory_space<vmem>>, %arg1: memref<8x8x128xf32, #tpu.memory_space<vmem>>, %arg2: memref<8x8xf32, #tpu.memory_space<vmem>>, %arg3: memref<8x128xf32, #tpu.memory_space<vmem>>, %arg4: memref<128x128xf32, #tpu.memory_space<vmem>>, %arg5: memref<1x128xf32, #tpu.memory_space<vmem>>, %arg6: memref<128x512xf32, #tpu.memory_space<vmem>>, %arg7: memref<128x384xf32, #tpu.memory_space<vmem>>, %arg8: memref<1x384xf32, #tpu.memory_space<vmem>>, %arg9: memref<1x384xf32, #tpu.memory_space<vmem>>, %arg10: memref<128x128xf32, #tpu.memory_space<vmem>>, %arg11: memref<1x128xf32, #tpu.memory_space<vmem>>, %arg12: memref<8x8x128xf32, #tpu.memory_space<vmem>>, %arg13: memref<8x8x128xf32, #tpu.memory_space<vmem>>, %arg14: memref<8x128xf32, #tpu.memory_space<vmem>>) attributes {dimension_semantics = [], scalar_prefetch = 0 : i64, scratch_operands = 0 : i64, tpu.core_type = #tpu.core_type<tc>} {
    %c0 = arith.constant 0 : index
    %c0_0 = arith.constant 0 : index
    %c0_1 = arith.constant 0 : index
    %0 = vector.load %arg1[%c0, %c0_0, %c0_1] : memref<8x8x128xf32, #tpu.memory_space<vmem>>, vector<8x8x128xf32>
    %c0_2 = arith.constant 0 : index
    %c0_3 = arith.constant 0 : index
    %1 = vector.load %arg2[%c0_2, %c0_3] : memref<8x8xf32, #tpu.memory_space<vmem>>, vector<8x8xf32>
    %cst = arith.constant 0.000000e+00 : f32
    %2 = vector.broadcast %cst : f32 to vector<8x8xf32>
    %3 = arith.cmpf ogt, %1, %2 : vector<8x8xf32>
    %4 = vector.shape_cast %0 : vector<8x8x128xf32> to vector<64x128xf32>
    %c0_4 = arith.constant 0 : index
    %c0_5 = arith.constant 0 : index
    %5 = vector.load %arg4[%c0_4, %c0_5] : memref<128x128xf32, #tpu.memory_space<vmem>>, vector<128x128xf32>
    %cst_6 = arith.constant dense<0.000000e+00> : vector<64x128xf32>
    %6 = tpu.matmul %4, %5, %cst_6 {dimension_numbers = #tpu.dot_dimension_numbers<[1], [0], [0], [1], [0, 0, 1, 1], [], []>} : vector<64x128xf32>, vector<128x128xf32>, vector<64x128xf32> -> vector<64x128xf32>
    %7 = vector.shape_cast %6 : vector<64x128xf32> to vector<8x8x128xf32>
    %c0_7 = arith.constant 0 : index
    %c0_8 = arith.constant 0 : index
    %8 = vector.load %arg5[%c0_7, %c0_8] : memref<1x128xf32, #tpu.memory_space<vmem>>, vector<1x128xf32>
    %9 = vector.shape_cast %8 : vector<1x128xf32> to vector<1x1x128xf32>
    %c0_9 = arith.constant 0 : index
    %c0_10 = arith.constant 0 : index
    %10 = vector.load %arg8[%c0_9, %c0_10] : memref<1x384xf32, #tpu.memory_space<vmem>>, vector<1x384xf32>
    %11 = vector.shape_cast %10 : vector<1x384xf32> to vector<1x384xf32>
    %12 = vector.broadcast %11 : vector<1x384xf32> to vector<8x384xf32>
    %c0_11 = arith.constant 0 : index
    %c0_12 = arith.constant 0 : index
    %13 = vector.load %arg9[%c0_11, %c0_12] : memref<1x384xf32, #tpu.memory_space<vmem>>, vector<1x384xf32>
    %14 = vector.shape_cast %13 : vector<1x384xf32> to vector<1x384xf32>
    %15 = vector.broadcast %14 : vector<1x384xf32> to vector<8x384xf32>
    %c0_13 = arith.constant 0 : index
    %c0_14 = arith.constant 0 : index
    %16 = vector.load %arg11[%c0_13, %c0_14] : memref<1x128xf32, #tpu.memory_space<vmem>>, vector<1x128xf32>
    %17 = vector.shape_cast %16 : vector<1x128xf32> to vector<1x128xf32>
    %18 = vector.broadcast %17 : vector<1x128xf32> to vector<8x128xf32>
    %c0_15 = arith.constant 0 : index
    %c0_16 = arith.constant 0 : index
    %19 = vector.load %arg3[%c0_15, %c0_16] : memref<8x128xf32, #tpu.memory_space<vmem>>, vector<8x128xf32>
    %c0_i32 = arith.constant 0 : i32
    %c0_17 = arith.constant 0 : index
    %c0_18 = arith.constant 0 : index
    %20 = vector.load %arg6[%c0_17, %c0_18] : memref<128x512xf32, #tpu.memory_space<vmem>>, vector<128x512xf32>
    %cst_19 = arith.constant dense<0.000000e+00> : vector<8x512xf32>
    %21 = tpu.matmul %19, %20, %cst_19 {dimension_numbers = #tpu.dot_dimension_numbers<[1], [0], [0], [1], [0, 0, 1, 1], [], []>} : vector<8x128xf32>, vector<128x512xf32>, vector<8x512xf32> -> vector<8x512xf32>
    %22 = vector.extract_strided_slice %21 {offsets = [0, 0], sizes = [8, 128], strides = [1, 1]} : vector<8x512xf32> to vector<8x128xf32>
    %23 = vector.extract_strided_slice %21 {offsets = [0, 128], sizes = [8, 384], strides = [1, 1]} : vector<8x512xf32> to vector<8x384xf32>
    %24 = arith.addf %23, %15 : vector<8x384xf32>
    %25 = vector.shape_cast %22 : vector<8x128xf32> to vector<8x1x128xf32>
    %26 = vector.broadcast %25 : vector<8x1x128xf32> to vector<8x8x128xf32>
    %27 = arith.addf %26, %7 : vector<8x8x128xf32>
    %28 = math.tanh %27 : vector<8x8x128xf32>
    %29 = vector.broadcast %9 : vector<1x1x128xf32> to vector<8x8x128xf32>
    %30 = arith.mulf %28, %29 : vector<8x8x128xf32>
    %cst_20 = arith.constant dense<0.000000e+00> : vector<8x8xf32>
    %31 = vector.multi_reduction <add>, %30, %cst_20 [2] : vector<8x8x128xf32> to vector<8x8xf32>
    %cst_21 = arith.constant -1.000000e+09 : f32
    %32 = vector.broadcast %cst_21 : f32 to vector<8x8xf32>
    %33 = arith.select %3, %31, %32 : vector<8x8xi1>, vector<8x8xf32>
    %cst_22 = arith.constant dense<0xFF800000> : vector<8xf32>
    %34 = vector.multi_reduction <maximumf>, %33, %cst_22 [1] : vector<8x8xf32> to vector<8xf32>
    %35 = vector.shape_cast %34 : vector<8xf32> to vector<8x1xf32>
    %36 = vector.broadcast %35 : vector<8x1xf32> to vector<8x8xf32>
    %37 = arith.subf %33, %36 : vector<8x8xf32>
    %38 = math.exp %37 : vector<8x8xf32>
    %cst_23 = arith.constant dense<0.000000e+00> : vector<8xf32>
    %39 = vector.multi_reduction <add>, %38, %cst_23 [1] : vector<8x8xf32> to vector<8xf32>
    %40 = vector.shape_cast %39 : vector<8xf32> to vector<8x1xf32>
    %41 = vector.broadcast %40 : vector<8x1xf32> to vector<8x8xf32>
    %42 = arith.divf %38, %41 : vector<8x8xf32>
    %43 = vector.shape_cast %42 : vector<8x8xf32> to vector<8x8x1xf32>
    %44 = vector.broadcast %43 : vector<8x8x1xf32> to vector<8x8x128xf32>
    %45 = arith.mulf %44, %0 : vector<8x8x128xf32>
    %cst_24 = arith.constant dense<0.000000e+00> : vector<8x128xf32>
    %46 = vector.multi_reduction <add>, %45, %cst_24 [1] : vector<8x8x128xf32> to vector<8x128xf32>
    %47 = arith.index_cast %c0_i32 : i32 to index
    %c0_25 = arith.constant 0 : index
    %c0_26 = arith.constant 0 : index
    %48 = vector.load %arg0[%47, %c0_25, %c0_26] : memref<8x8x384xf32, #tpu.memory_space<vmem>>, vector<1x8x384xf32>
    %49 = vector.shape_cast %48 : vector<1x8x384xf32> to vector<8x384xf32>
    %c0_27 = arith.constant 0 : index
    %c0_28 = arith.constant 0 : index
    %50 = vector.load %arg7[%c0_27, %c0_28] : memref<128x384xf32, #tpu.memory_space<vmem>>, vector<128x384xf32>
    %cst_29 = arith.constant dense<0.000000e+00> : vector<8x384xf32>
    %51 = tpu.matmul %46, %50, %cst_29 {dimension_numbers = #tpu.dot_dimension_numbers<[1], [0], [0], [1], [0, 0, 1, 1], [], []>} : vector<8x128xf32>, vector<128x384xf32>, vector<8x384xf32> -> vector<8x384xf32>
    %52 = arith.addf %49, %51 : vector<8x384xf32>
    %53 = arith.addf %52, %12 : vector<8x384xf32>
    %54 = vector.extract_strided_slice %53 {offsets = [0, 0], sizes = [8, 128], strides = [1, 1]} : vector<8x384xf32> to vector<8x128xf32>
    %55 = vector.extract_strided_slice %24 {offsets = [0, 0], sizes = [8, 128], strides = [1, 1]} : vector<8x384xf32> to vector<8x128xf32>
    %56 = arith.addf %54, %55 : vector<8x128xf32>
    %57 = arith.negf %56 : vector<8x128xf32>
    %58 = math.exp %57 : vector<8x128xf32>
    %cst_30 = arith.constant 1.000000e+00 : f32
    %59 = vector.broadcast %cst_30 : f32 to vector<8x128xf32>
    %60 = arith.addf %59, %58 : vector<8x128xf32>
    %61 = arith.divf %59, %60 : vector<8x128xf32>
    %62 = vector.extract_strided_slice %53 {offsets = [0, 128], sizes = [8, 128], strides = [1, 1]} : vector<8x384xf32> to vector<8x128xf32>
    %63 = vector.extract_strided_slice %24 {offsets = [0, 128], sizes = [8, 128], strides = [1, 1]} : vector<8x384xf32> to vector<8x128xf32>
    %64 = arith.addf %62, %63 : vector<8x128xf32>
    %65 = arith.negf %64 : vector<8x128xf32>
    %66 = math.exp %65 : vector<8x128xf32>
    %cst_31 = arith.constant 1.000000e+00 : f32
    %67 = vector.broadcast %cst_31 : f32 to vector<8x128xf32>
    %68 = arith.addf %67, %66 : vector<8x128xf32>
    %69 = arith.divf %67, %68 : vector<8x128xf32>
    %70 = vector.extract_strided_slice %53 {offsets = [0, 256], sizes = [8, 128], strides = [1, 1]} : vector<8x384xf32> to vector<8x128xf32>
    %71 = vector.extract_strided_slice %24 {offsets = [0, 256], sizes = [8, 128], strides = [1, 1]} : vector<8x384xf32> to vector<8x128xf32>
    %72 = arith.mulf %61, %71 : vector<8x128xf32>
    %73 = arith.addf %70, %72 : vector<8x128xf32>
    %74 = math.tanh %73 : vector<8x128xf32>
    %cst_32 = arith.constant 1.000000e+00 : f32
    %75 = vector.broadcast %cst_32 : f32 to vector<8x128xf32>
    %76 = arith.subf %75, %69 : vector<8x128xf32>
    %77 = arith.mulf %76, %74 : vector<8x128xf32>
    %78 = arith.mulf %69, %19 : vector<8x128xf32>
    %79 = arith.addf %77, %78 : vector<8x128xf32>
    %c0_33 = arith.constant 0 : index
    %c0_34 = arith.constant 0 : index
    %80 = vector.load %arg10[%c0_33, %c0_34] : memref<128x128xf32, #tpu.memory_space<vmem>>, vector<128x128xf32>
    %cst_35 = arith.constant dense<0.000000e+00> : vector<8x128xf32>
    %81 = tpu.matmul %79, %80, %cst_35 {dimension_numbers = #tpu.dot_dimension_numbers<[1], [0], [0], [1], [0, 0, 1, 1], [], []>} : vector<8x128xf32>, vector<128x128xf32>, vector<8x128xf32> -> vector<8x128xf32>
    %82 = arith.addf %81, %18 : vector<8x128xf32>
    %cst_36 = arith.constant dense<0xFF800000> : vector<8xf32>
    %83 = vector.multi_reduction <maximumf>, %82, %cst_36 [1] : vector<8x128xf32> to vector<8xf32>
    %84 = vector.shape_cast %83 : vector<8xf32> to vector<8x1xf32>
    %85 = vector.broadcast %84 : vector<8x1xf32> to vector<8x128xf32>
    %86 = arith.subf %82, %85 : vector<8x128xf32>
    %87 = math.exp %86 : vector<8x128xf32>
    %cst_37 = arith.constant dense<0.000000e+00> : vector<8xf32>
    %88 = vector.multi_reduction <add>, %87, %cst_37 [1] : vector<8x128xf32> to vector<8xf32>
    %89 = vector.shape_cast %88 : vector<8xf32> to vector<8x1xf32>
    %90 = math.log %89 : vector<8x1xf32>
    %91 = vector.broadcast %90 : vector<8x1xf32> to vector<8x128xf32>
    %92 = arith.subf %86, %91 : vector<8x128xf32>
    %93 = arith.index_cast %c0_i32 : i32 to index
    %c0_38 = arith.constant 0 : index
    %c0_39 = arith.constant 0 : index
    %94 = vector.load %arg12[%93, %c0_38, %c0_39] : memref<8x8x128xf32, #tpu.memory_space<vmem>>, vector<1x8x128xf32>
    %95 = vector.shape_cast %94 : vector<1x8x128xf32> to vector<8x128xf32>
    %96 = vector.shape_cast %92 : vector<8x128xf32> to vector<1x8x128xf32>
    tpu.vector_store %arg12[%93, %c0_38, %c0_39], %96 {strides = array<i32>} : memref<8x8x128xf32, #tpu.memory_space<vmem>>, vector<1x8x128xf32>,
    %97 = arith.index_cast %c0_i32 : i32 to index
    %c0_40 = arith.constant 0 : index
    %c0_41 = arith.constant 0 : index
    %98 = vector.load %arg13[%97, %c0_40, %c0_41] : memref<8x8x128xf32, #tpu.memory_space<vmem>>, vector<1x8x128xf32>
    %99 = vector.shape_cast %98 : vector<1x8x128xf32> to vector<8x128xf32>
    %100 = vector.shape_cast %46 : vector<8x128xf32> to vector<1x8x128xf32>
    tpu.vector_store %arg13[%97, %c0_40, %c0_41], %100 {strides = array<i32>} : memref<8x8x128xf32, #tpu.memory_space<vmem>>, vector<1x8x128xf32>,
    %c1_i32 = arith.constant 1 : i32
    %c0_42 = arith.constant 0 : index
    %c0_43 = arith.constant 0 : index
    %101 = vector.load %arg6[%c0_42, %c0_43] : memref<128x512xf32, #tpu.memory_space<vmem>>, vector<128x512xf32>
    %cst_44 = arith.constant dense<0.000000e+00> : vector<8x512xf32>
    %102 = tpu.matmul %79, %101, %cst_44 {dimension_numbers = #tpu.dot_dimension_numbers<[1], [0], [0], [1], [0, 0, 1, 1], [], []>} : vector<8x128xf32>, vector<128x512xf32>, vector<8x512xf32> -> vector<8x512xf32>
    %103 = vector.extract_strided_slice %102 {offsets = [0, 0], sizes = [8, 128], strides = [1, 1]} : vector<8x512xf32> to vector<8x128xf32>
    %104 = vector.extract_strided_slice %102 {offsets = [0, 128], sizes = [8, 384], strides = [1, 1]} : vector<8x512xf32> to vector<8x384xf32>
    %105 = arith.addf %104, %15 : vector<8x384xf32>
    %106 = vector.shape_cast %103 : vector<8x128xf32> to vector<8x1x128xf32>
    %107 = vector.broadcast %106 : vector<8x1x128xf32> to vector<8x8x128xf32>
    %108 = arith.addf %107, %7 : vector<8x8x128xf32>
    %109 = math.tanh %108 : vector<8x8x128xf32>
    %110 = vector.broadcast %9 : vector<1x1x128xf32> to vector<8x8x128xf32>
    %111 = arith.mulf %109, %110 : vector<8x8x128xf32>
    %cst_45 = arith.constant dense<0.000000e+00> : vector<8x8xf32>
    %112 = vector.multi_reduction <add>, %111, %cst_45 [2] : vector<8x8x128xf32> to vector<8x8xf32>
    %cst_46 = arith.constant -1.000000e+09 : f32
    %113 = vector.broadcast %cst_46 : f32 to vector<8x8xf32>
    %114 = arith.select %3, %112, %113 : vector<8x8xi1>, vector<8x8xf32>
    %cst_47 = arith.constant dense<0xFF800000> : vector<8xf32>
    %115 = vector.multi_reduction <maximumf>, %114, %cst_47 [1] : vector<8x8xf32> to vector<8xf32>
    %116 = vector.shape_cast %115 : vector<8xf32> to vector<8x1xf32>
    %117 = vector.broadcast %116 : vector<8x1xf32> to vector<8x8xf32>
    %118 = arith.subf %114, %117 : vector<8x8xf32>
    %119 = math.exp %118 : vector<8x8xf32>
    %cst_48 = arith.constant dense<0.000000e+00> : vector<8xf32>
    %120 = vector.multi_reduction <add>, %119, %cst_48 [1] : vector<8x8xf32> to vector<8xf32>
    %121 = vector.shape_cast %120 : vector<8xf32> to vector<8x1xf32>
    %122 = vector.broadcast %121 : vector<8x1xf32> to vector<8x8xf32>
    %123 = arith.divf %119, %122 : vector<8x8xf32>
    %124 = vector.shape_cast %123 : vector<8x8xf32> to vector<8x8x1xf32>
    %125 = vector.broadcast %124 : vector<8x8x1xf32> to vector<8x8x128xf32>
    %126 = arith.mulf %125, %0 : vector<8x8x128xf32>
    %cst_49 = arith.constant dense<0.000000e+00> : vector<8x128xf32>
    %127 = vector.multi_reduction <add>, %126, %cst_49 [1] : vector<8x8x128xf32> to vector<8x128xf32>
    %128 = arith.index_cast %c1_i32 : i32 to index
    %c0_50 = arith.constant 0 : index
    %c0_51 = arith.constant 0 : index
    %129 = vector.load %arg0[%128, %c0_50, %c0_51] : memref<8x8x384xf32, #tpu.memory_space<vmem>>, vector<1x8x384xf32>
    %130 = vector.shape_cast %129 : vector<1x8x384xf32> to vector<8x384xf32>
    %c0_52 = arith.constant 0 : index
    %c0_53 = arith.constant 0 : index
    %131 = vector.load %arg7[%c0_52, %c0_53] : memref<128x384xf32, #tpu.memory_space<vmem>>, vector<128x384xf32>
    %cst_54 = arith.constant dense<0.000000e+00> : vector<8x384xf32>
    %132 = tpu.matmul %127, %131, %cst_54 {dimension_numbers = #tpu.dot_dimension_numbers<[1], [0], [0], [1], [0, 0, 1, 1], [], []>} : vector<8x128xf32>, vector<128x384xf32>, vector<8x384xf32> -> vector<8x384xf32>
    %133 = arith.addf %130, %132 : vector<8x384xf32>
    %134 = arith.addf %133, %12 : vector<8x384xf32>
    %135 = vector.extract_strided_slice %134 {offsets = [0, 0], sizes = [8, 128], strides = [1, 1]} : vector<8x384xf32> to vector<8x128xf32>
    %136 = vector.extract_strided_slice %105 {offsets = [0, 0], sizes = [8, 128], strides = [1, 1]} : vector<8x384xf32> to vector<8x128xf32>
    %137 = arith.addf %135, %136 : vector<8x128xf32>
    %138 = arith.negf %137 : vector<8x128xf32>
    %139 = math.exp %138 : vector<8x128xf32>
    %cst_55 = arith.constant 1.000000e+00 : f32
    %140 = vector.broadcast %cst_55 : f32 to vector<8x128xf32>
    %141 = arith.addf %140, %139 : vector<8x128xf32>
    %142 = arith.divf %140, %141 : vector<8x128xf32>
    %143 = vector.extract_strided_slice %134 {offsets = [0, 128], sizes = [8, 128], strides = [1, 1]} : vector<8x384xf32> to vector<8x128xf32>
    %144 = vector.extract_strided_slice %105 {offsets = [0, 128], sizes = [8, 128], strides = [1, 1]} : vector<8x384xf32> to vector<8x128xf32>
    %145 = arith.addf %143, %144 : vector<8x128xf32>
    %146 = arith.negf %145 : vector<8x128xf32>
    %147 = math.exp %146 : vector<8x128xf32>
    %cst_56 = arith.constant 1.000000e+00 : f32
    %148 = vector.broadcast %cst_56 : f32 to vector<8x128xf32>
    %149 = arith.addf %148, %147 : vector<8x128xf32>
    %150 = arith.divf %148, %149 : vector<8x128xf32>
    %151 = vector.extract_strided_slice %134 {offsets = [0, 256], sizes = [8, 128], strides = [1, 1]} : vector<8x384xf32> to vector<8x128xf32>
    %152 = vector.extract_strided_slice %105 {offsets = [0, 256], sizes = [8, 128], strides = [1, 1]} : vector<8x384xf32> to vector<8x128xf32>
    %153 = arith.mulf %142, %152 : vector<8x128xf32>
    %154 = arith.addf %151, %153 : vector<8x128xf32>
    %155 = math.tanh %154 : vector<8x128xf32>
    %cst_57 = arith.constant 1.000000e+00 : f32
    %156 = vector.broadcast %cst_57 : f32 to vector<8x128xf32>
    %157 = arith.subf %156, %150 : vector<8x128xf32>
    %158 = arith.mulf %157, %155 : vector<8x128xf32>
    %159 = arith.mulf %150, %79 : vector<8x128xf32>
    %160 = arith.addf %158, %159 : vector<8x128xf32>
    %c0_58 = arith.constant 0 : index
    %c0_59 = arith.constant 0 : index
    %161 = vector.load %arg10[%c0_58, %c0_59] : memref<128x128xf32, #tpu.memory_space<vmem>>, vector<128x128xf32>
    %cst_60 = arith.constant dense<0.000000e+00> : vector<8x128xf32>
    %162 = tpu.matmul %160, %161, %cst_60 {dimension_numbers = #tpu.dot_dimension_numbers<[1], [0], [0], [1], [0, 0, 1, 1], [], []>} : vector<8x128xf32>, vector<128x128xf32>, vector<8x128xf32> -> vector<8x128xf32>
    %163 = arith.addf %162, %18 : vector<8x128xf32>
    %cst_61 = arith.constant dense<0xFF800000> : vector<8xf32>
    %164 = vector.multi_reduction <maximumf>, %163, %cst_61 [1] : vector<8x128xf32> to vector<8xf32>
    %165 = vector.shape_cast %164 : vector<8xf32> to vector<8x1xf32>
    %166 = vector.broadcast %165 : vector<8x1xf32> to vector<8x128xf32>
    %167 = arith.subf %163, %166 : vector<8x128xf32>
    %168 = math.exp %167 : vector<8x128xf32>
    %cst_62 = arith.constant dense<0.000000e+00> : vector<8xf32>
    %169 = vector.multi_reduction <add>, %168, %cst_62 [1] : vector<8x128xf32> to vector<8xf32>
    %170 = vector.shape_cast %169 : vector<8xf32> to vector<8x1xf32>
    %171 = math.log %170 : vector<8x1xf32>
    %172 = vector.broadcast %171 : vector<8x1xf32> to vector<8x128xf32>
    %173 = arith.subf %167, %172 : vector<8x128xf32>
    %174 = arith.index_cast %c1_i32 : i32 to index
    %c0_63 = arith.constant 0 : index
    %c0_64 = arith.constant 0 : index
    %175 = vector.load %arg12[%174, %c0_63, %c0_64] : memref<8x8x128xf32, #tpu.memory_space<vmem>>, vector<1x8x128xf32>
    %176 = vector.shape_cast %175 : vector<1x8x128xf32> to vector<8x128xf32>
    %177 = vector.shape_cast %173 : vector<8x128xf32> to vector<1x8x128xf32>
    tpu.vector_store %arg12[%174, %c0_63, %c0_64], %177 {strides = array<i32>} : memref<8x8x128xf32, #tpu.memory_space<vmem>>, vector<1x8x128xf32>,
    %178 = arith.index_cast %c1_i32 : i32 to index
    %c0_65 = arith.constant 0 : index
    %c0_66 = arith.constant 0 : index
    %179 = vector.load %arg13[%178, %c0_65, %c0_66] : memref<8x8x128xf32, #tpu.memory_space<vmem>>, vector<1x8x128xf32>
    %180 = vector.shape_cast %179 : vector<1x8x128xf32> to vector<8x128xf32>
    %181 = vector.shape_cast %127 : vector<8x128xf32> to vector<1x8x128xf32>
    tpu.vector_store %arg13[%178, %c0_65, %c0_66], %181 {strides = array<i32>} : memref<8x8x128xf32, #tpu.memory_space<vmem>>, vector<1x8x128xf32>,
    %c2_i32 = arith.constant 2 : i32
    %c0_67 = arith.constant 0 : index
    %c0_68 = arith.constant 0 : index
    %182 = vector.load %arg6[%c0_67, %c0_68] : memref<128x512xf32, #tpu.memory_space<vmem>>, vector<128x512xf32>
    %cst_69 = arith.constant dense<0.000000e+00> : vector<8x512xf32>
    %183 = tpu.matmul %160, %182, %cst_69 {dimension_numbers = #tpu.dot_dimension_numbers<[1], [0], [0], [1], [0, 0, 1, 1], [], []>} : vector<8x128xf32>, vector<128x512xf32>, vector<8x512xf32> -> vector<8x512xf32>
    %184 = vector.extract_strided_slice %183 {offsets = [0, 0], sizes = [8, 128], strides = [1, 1]} : vector<8x512xf32> to vector<8x128xf32>
    %185 = vector.extract_strided_slice %183 {offsets = [0, 128], sizes = [8, 384], strides = [1, 1]} : vector<8x512xf32> to vector<8x384xf32>
    %186 = arith.addf %185, %15 : vector<8x384xf32>
    %187 = vector.shape_cast %184 : vector<8x128xf32> to vector<8x1x128xf32>
    %188 = vector.broadcast %187 : vector<8x1x128xf32> to vector<8x8x128xf32>
    %189 = arith.addf %188, %7 : vector<8x8x128xf32>
    %190 = math.tanh %189 : vector<8x8x128xf32>
    %191 = vector.broadcast %9 : vector<1x1x128xf32> to vector<8x8x128xf32>
    %192 = arith.mulf %190, %191 : vector<8x8x128xf32>
    %cst_70 = arith.constant dense<0.000000e+00> : vector<8x8xf32>
    %193 = vector.multi_reduction <add>, %192, %cst_70 [2] : vector<8x8x128xf32> to vector<8x8xf32>
    %cst_71 = arith.constant -1.000000e+09 : f32
    %194 = vector.broadcast %cst_71 : f32 to vector<8x8xf32>
    %195 = arith.select %3, %193, %194 : vector<8x8xi1>, vector<8x8xf32>
    %cst_72 = arith.constant dense<0xFF800000> : vector<8xf32>
    %196 = vector.multi_reduction <maximumf>, %195, %cst_72 [1] : vector<8x8xf32> to vector<8xf32>
    %197 = vector.shape_cast %196 : vector<8xf32> to vector<8x1xf32>
    %198 = vector.broadcast %197 : vector<8x1xf32> to vector<8x8xf32>
    %199 = arith.subf %195, %198 : vector<8x8xf32>
    %200 = math.exp %199 : vector<8x8xf32>
    %cst_73 = arith.constant dense<0.000000e+00> : vector<8xf32>
    %201 = vector.multi_reduction <add>, %200, %cst_73 [1] : vector<8x8xf32> to vector<8xf32>
    %202 = vector.shape_cast %201 : vector<8xf32> to vector<8x1xf32>
    %203 = vector.broadcast %202 : vector<8x1xf32> to vector<8x8xf32>
    %204 = arith.divf %200, %203 : vector<8x8xf32>
    %205 = vector.shape_cast %204 : vector<8x8xf32> to vector<8x8x1xf32>
    %206 = vector.broadcast %205 : vector<8x8x1xf32> to vector<8x8x128xf32>
    %207 = arith.mulf %206, %0 : vector<8x8x128xf32>
    %cst_74 = arith.constant dense<0.000000e+00> : vector<8x128xf32>
    %208 = vector.multi_reduction <add>, %207, %cst_74 [1] : vector<8x8x128xf32> to vector<8x128xf32>
    %209 = arith.index_cast %c2_i32 : i32 to index
    %c0_75 = arith.constant 0 : index
    %c0_76 = arith.constant 0 : index
    %210 = vector.load %arg0[%209, %c0_75, %c0_76] : memref<8x8x384xf32, #tpu.memory_space<vmem>>, vector<1x8x384xf32>
    %211 = vector.shape_cast %210 : vector<1x8x384xf32> to vector<8x384xf32>
    %c0_77 = arith.constant 0 : index
    %c0_78 = arith.constant 0 : index
    %212 = vector.load %arg7[%c0_77, %c0_78] : memref<128x384xf32, #tpu.memory_space<vmem>>, vector<128x384xf32>
    %cst_79 = arith.constant dense<0.000000e+00> : vector<8x384xf32>
    %213 = tpu.matmul %208, %212, %cst_79 {dimension_numbers = #tpu.dot_dimension_numbers<[1], [0], [0], [1], [0, 0, 1, 1], [], []>} : vector<8x128xf32>, vector<128x384xf32>, vector<8x384xf32> -> vector<8x384xf32>
    %214 = arith.addf %211, %213 : vector<8x384xf32>
    %215 = arith.addf %214, %12 : vector<8x384xf32>
    %216 = vector.extract_strided_slice %215 {offsets = [0, 0], sizes = [8, 128], strides = [1, 1]} : vector<8x384xf32> to vector<8x128xf32>
    %217 = vector.extract_strided_slice %186 {offsets = [0, 0], sizes = [8, 128], strides = [1, 1]} : vector<8x384xf32> to vector<8x128xf32>
    %218 = arith.addf %216, %217 : vector<8x128xf32>
    %219 = arith.negf %218 : vector<8x128xf32>
    %220 = math.exp %219 : vector<8x128xf32>
    %cst_80 = arith.constant 1.000000e+00 : f32
    %221 = vector.broadcast %cst_80 : f32 to vector<8x128xf32>
    %222 = arith.addf %221, %220 : vector<8x128xf32>
    %223 = arith.divf %221, %222 : vector<8x128xf32>
    %224 = vector.extract_strided_slice %215 {offsets = [0, 128], sizes = [8, 128], strides = [1, 1]} : vector<8x384xf32> to vector<8x128xf32>
    %225 = vector.extract_strided_slice %186 {offsets = [0, 128], sizes = [8, 128], strides = [1, 1]} : vector<8x384xf32> to vector<8x128xf32>
    %226 = arith.addf %224, %225 : vector<8x128xf32>
    %227 = arith.negf %226 : vector<8x128xf32>
    %228 = math.exp %227 : vector<8x128xf32>
    %cst_81 = arith.constant 1.000000e+00 : f32
    %229 = vector.broadcast %cst_81 : f32 to vector<8x128xf32>
    %230 = arith.addf %229, %228 : vector<8x128xf32>
    %231 = arith.divf %229, %230 : vector<8x128xf32>
    %232 = vector.extract_strided_slice %215 {offsets = [0, 256], sizes = [8, 128], strides = [1, 1]} : vector<8x384xf32> to vector<8x128xf32>
    %233 = vector.extract_strided_slice %186 {offsets = [0, 256], sizes = [8, 128], strides = [1, 1]} : vector<8x384xf32> to vector<8x128xf32>
    %234 = arith.mulf %223, %233 : vector<8x128xf32>
    %235 = arith.addf %232, %234 : vector<8x128xf32>
    %236 = math.tanh %235 : vector<8x128xf32>
    %cst_82 = arith.constant 1.000000e+00 : f32
    %237 = vector.broadcast %cst_82 : f32 to vector<8x128xf32>
    %238 = arith.subf %237, %231 : vector<8x128xf32>
    %239 = arith.mulf %238, %236 : vector<8x128xf32>
    %240 = arith.mulf %231, %160 : vector<8x128xf32>
    %241 = arith.addf %239, %240 : vector<8x128xf32>
    %c0_83 = arith.constant 0 : index
    %c0_84 = arith.constant 0 : index
    %242 = vector.load %arg10[%c0_83, %c0_84] : memref<128x128xf32, #tpu.memory_space<vmem>>, vector<128x128xf32>
    %cst_85 = arith.constant dense<0.000000e+00> : vector<8x128xf32>
    %243 = tpu.matmul %241, %242, %cst_85 {dimension_numbers = #tpu.dot_dimension_numbers<[1], [0], [0], [1], [0, 0, 1, 1], [], []>} : vector<8x128xf32>, vector<128x128xf32>, vector<8x128xf32> -> vector<8x128xf32>
    %244 = arith.addf %243, %18 : vector<8x128xf32>
    %cst_86 = arith.constant dense<0xFF800000> : vector<8xf32>
    %245 = vector.multi_reduction <maximumf>, %244, %cst_86 [1] : vector<8x128xf32> to vector<8xf32>
    %246 = vector.shape_cast %245 : vector<8xf32> to vector<8x1xf32>
    %247 = vector.broadcast %246 : vector<8x1xf32> to vector<8x128xf32>
    %248 = arith.subf %244, %247 : vector<8x128xf32>
    %249 = math.exp %248 : vector<8x128xf32>
    %cst_87 = arith.constant dense<0.000000e+00> : vector<8xf32>
    %250 = vector.multi_reduction <add>, %249, %cst_87 [1] : vector<8x128xf32> to vector<8xf32>
    %251 = vector.shape_cast %250 : vector<8xf32> to vector<8x1xf32>
    %252 = math.log %251 : vector<8x1xf32>
    %253 = vector.broadcast %252 : vector<8x1xf32> to vector<8x128xf32>
    %254 = arith.subf %248, %253 : vector<8x128xf32>
    %255 = arith.index_cast %c2_i32 : i32 to index
    %c0_88 = arith.constant 0 : index
    %c0_89 = arith.constant 0 : index
    %256 = vector.load %arg12[%255, %c0_88, %c0_89] : memref<8x8x128xf32, #tpu.memory_space<vmem>>, vector<1x8x128xf32>
    %257 = vector.shape_cast %256 : vector<1x8x128xf32> to vector<8x128xf32>
    %258 = vector.shape_cast %254 : vector<8x128xf32> to vector<1x8x128xf32>
    tpu.vector_store %arg12[%255, %c0_88, %c0_89], %258 {strides = array<i32>} : memref<8x8x128xf32, #tpu.memory_space<vmem>>, vector<1x8x128xf32>,
    %259 = arith.index_cast %c2_i32 : i32 to index
    %c0_90 = arith.constant 0 : index
    %c0_91 = arith.constant 0 : index
    %260 = vector.load %arg13[%259, %c0_90, %c0_91] : memref<8x8x128xf32, #tpu.memory_space<vmem>>, vector<1x8x128xf32>
    %261 = vector.shape_cast %260 : vector<1x8x128xf32> to vector<8x128xf32>
    %262 = vector.shape_cast %208 : vector<8x128xf32> to vector<1x8x128xf32>
    tpu.vector_store %arg13[%259, %c0_90, %c0_91], %262 {strides = array<i32>} : memref<8x8x128xf32, #tpu.memory_space<vmem>>, vector<1x8x128xf32>,
    %c3_i32 = arith.constant 3 : i32
    %c0_92 = arith.constant 0 : index
    %c0_93 = arith.constant 0 : index
    %263 = vector.load %arg6[%c0_92, %c0_93] : memref<128x512xf32, #tpu.memory_space<vmem>>, vector<128x512xf32>
    %cst_94 = arith.constant dense<0.000000e+00> : vector<8x512xf32>
    %264 = tpu.matmul %241, %263, %cst_94 {dimension_numbers = #tpu.dot_dimension_numbers<[1], [0], [0], [1], [0, 0, 1, 1], [], []>} : vector<8x128xf32>, vector<128x512xf32>, vector<8x512xf32> -> vector<8x512xf32>
    %265 = vector.extract_strided_slice %264 {offsets = [0, 0], sizes = [8, 128], strides = [1, 1]} : vector<8x512xf32> to vector<8x128xf32>
    %266 = vector.extract_strided_slice %264 {offsets = [0, 128], sizes = [8, 384], strides = [1, 1]} : vector<8x512xf32> to vector<8x384xf32>
    %267 = arith.addf %266, %15 : vector<8x384xf32>
    %268 = vector.shape_cast %265 : vector<8x128xf32> to vector<8x1x128xf32>
    %269 = vector.broadcast %268 : vector<8x1x128xf32> to vector<8x8x128xf32>
    %270 = arith.addf %269, %7 : vector<8x8x128xf32>
    %271 = math.tanh %270 : vector<8x8x128xf32>
    %272 = vector.broadcast %9 : vector<1x1x128xf32> to vector<8x8x128xf32>
    %273 = arith.mulf %271, %272 : vector<8x8x128xf32>
    %cst_95 = arith.constant dense<0.000000e+00> : vector<8x8xf32>
    %274 = vector.multi_reduction <add>, %273, %cst_95 [2] : vector<8x8x128xf32> to vector<8x8xf32>
    %cst_96 = arith.constant -1.000000e+09 : f32
    %275 = vector.broadcast %cst_96 : f32 to vector<8x8xf32>
    %276 = arith.select %3, %274, %275 : vector<8x8xi1>, vector<8x8xf32>
    %cst_97 = arith.constant dense<0xFF800000> : vector<8xf32>
    %277 = vector.multi_reduction <maximumf>, %276, %cst_97 [1] : vector<8x8xf32> to vector<8xf32>
    %278 = vector.shape_cast %277 : vector<8xf32> to vector<8x1xf32>
    %279 = vector.broadcast %278 : vector<8x1xf32> to vector<8x8xf32>
    %280 = arith.subf %276, %279 : vector<8x8xf32>
    %281 = math.exp %280 : vector<8x8xf32>
    %cst_98 = arith.constant dense<0.000000e+00> : vector<8xf32>
    %282 = vector.multi_reduction <add>, %281, %cst_98 [1] : vector<8x8xf32> to vector<8xf32>
    %283 = vector.shape_cast %282 : vector<8xf32> to vector<8x1xf32>
    %284 = vector.broadcast %283 : vector<8x1xf32> to vector<8x8xf32>
    %285 = arith.divf %281, %284 : vector<8x8xf32>
    %286 = vector.shape_cast %285 : vector<8x8xf32> to vector<8x8x1xf32>
    %287 = vector.broadcast %286 : vector<8x8x1xf32> to vector<8x8x128xf32>
    %288 = arith.mulf %287, %0 : vector<8x8x128xf32>
    %cst_99 = arith.constant dense<0.000000e+00> : vector<8x128xf32>
    %289 = vector.multi_reduction <add>, %288, %cst_99 [1] : vector<8x8x128xf32> to vector<8x128xf32>
    %290 = arith.index_cast %c3_i32 : i32 to index
    %c0_100 = arith.constant 0 : index
    %c0_101 = arith.constant 0 : index
    %291 = vector.load %arg0[%290, %c0_100, %c0_101] : memref<8x8x384xf32, #tpu.memory_space<vmem>>, vector<1x8x384xf32>
    %292 = vector.shape_cast %291 : vector<1x8x384xf32> to vector<8x384xf32>
    %c0_102 = arith.constant 0 : index
    %c0_103 = arith.constant 0 : index
    %293 = vector.load %arg7[%c0_102, %c0_103] : memref<128x384xf32, #tpu.memory_space<vmem>>, vector<128x384xf32>
    %cst_104 = arith.constant dense<0.000000e+00> : vector<8x384xf32>
    %294 = tpu.matmul %289, %293, %cst_104 {dimension_numbers = #tpu.dot_dimension_numbers<[1], [0], [0], [1], [0, 0, 1, 1], [], []>} : vector<8x128xf32>, vector<128x384xf32>, vector<8x384xf32> -> vector<8x384xf32>
    %295 = arith.addf %292, %294 : vector<8x384xf32>
    %296 = arith.addf %295, %12 : vector<8x384xf32>
    %297 = vector.extract_strided_slice %296 {offsets = [0, 0], sizes = [8, 128], strides = [1, 1]} : vector<8x384xf32> to vector<8x128xf32>
    %298 = vector.extract_strided_slice %267 {offsets = [0, 0], sizes = [8, 128], strides = [1, 1]} : vector<8x384xf32> to vector<8x128xf32>
    %299 = arith.addf %297, %298 : vector<8x128xf32>
    %300 = arith.negf %299 : vector<8x128xf32>
    %301 = math.exp %300 : vector<8x128xf32>
    %cst_105 = arith.constant 1.000000e+00 : f32
    %302 = vector.broadcast %cst_105 : f32 to vector<8x128xf32>
    %303 = arith.addf %302, %301 : vector<8x128xf32>
    %304 = arith.divf %302, %303 : vector<8x128xf32>
    %305 = vector.extract_strided_slice %296 {offsets = [0, 128], sizes = [8, 128], strides = [1, 1]} : vector<8x384xf32> to vector<8x128xf32>
    %306 = vector.extract_strided_slice %267 {offsets = [0, 128], sizes = [8, 128], strides = [1, 1]} : vector<8x384xf32> to vector<8x128xf32>
    %307 = arith.addf %305, %306 : vector<8x128xf32>
    %308 = arith.negf %307 : vector<8x128xf32>
    %309 = math.exp %308 : vector<8x128xf32>
    %cst_106 = arith.constant 1.000000e+00 : f32
    %310 = vector.broadcast %cst_106 : f32 to vector<8x128xf32>
    %311 = arith.addf %310, %309 : vector<8x128xf32>
    %312 = arith.divf %310, %311 : vector<8x128xf32>
    %313 = vector.extract_strided_slice %296 {offsets = [0, 256], sizes = [8, 128], strides = [1, 1]} : vector<8x384xf32> to vector<8x128xf32>
    %314 = vector.extract_strided_slice %267 {offsets = [0, 256], sizes = [8, 128], strides = [1, 1]} : vector<8x384xf32> to vector<8x128xf32>
    %315 = arith.mulf %304, %314 : vector<8x128xf32>
    %316 = arith.addf %313, %315 : vector<8x128xf32>
    %317 = math.tanh %316 : vector<8x128xf32>
    %cst_107 = arith.constant 1.000000e+00 : f32
    %318 = vector.broadcast %cst_107 : f32 to vector<8x128xf32>
    %319 = arith.subf %318, %312 : vector<8x128xf32>
    %320 = arith.mulf %319, %317 : vector<8x128xf32>
    %321 = arith.mulf %312, %241 : vector<8x128xf32>
    %322 = arith.addf %320, %321 : vector<8x128xf32>
    %c0_108 = arith.constant 0 : index
    %c0_109 = arith.constant 0 : index
    %323 = vector.load %arg10[%c0_108, %c0_109] : memref<128x128xf32, #tpu.memory_space<vmem>>, vector<128x128xf32>
    %cst_110 = arith.constant dense<0.000000e+00> : vector<8x128xf32>
    %324 = tpu.matmul %322, %323, %cst_110 {dimension_numbers = #tpu.dot_dimension_numbers<[1], [0], [0], [1], [0, 0, 1, 1], [], []>} : vector<8x128xf32>, vector<128x128xf32>, vector<8x128xf32> -> vector<8x128xf32>
    %325 = arith.addf %324, %18 : vector<8x128xf32>
    %cst_111 = arith.constant dense<0xFF800000> : vector<8xf32>
    %326 = vector.multi_reduction <maximumf>, %325, %cst_111 [1] : vector<8x128xf32> to vector<8xf32>
    %327 = vector.shape_cast %326 : vector<8xf32> to vector<8x1xf32>
    %328 = vector.broadcast %327 : vector<8x1xf32> to vector<8x128xf32>
    %329 = arith.subf %325, %328 : vector<8x128xf32>
    %330 = math.exp %329 : vector<8x128xf32>
    %cst_112 = arith.constant dense<0.000000e+00> : vector<8xf32>
    %331 = vector.multi_reduction <add>, %330, %cst_112 [1] : vector<8x128xf32> to vector<8xf32>
    %332 = vector.shape_cast %331 : vector<8xf32> to vector<8x1xf32>
    %333 = math.log %332 : vector<8x1xf32>
    %334 = vector.broadcast %333 : vector<8x1xf32> to vector<8x128xf32>
    %335 = arith.subf %329, %334 : vector<8x128xf32>
    %336 = arith.index_cast %c3_i32 : i32 to index
    %c0_113 = arith.constant 0 : index
    %c0_114 = arith.constant 0 : index
    %337 = vector.load %arg12[%336, %c0_113, %c0_114] : memref<8x8x128xf32, #tpu.memory_space<vmem>>, vector<1x8x128xf32>
    %338 = vector.shape_cast %337 : vector<1x8x128xf32> to vector<8x128xf32>
    %339 = vector.shape_cast %335 : vector<8x128xf32> to vector<1x8x128xf32>
    tpu.vector_store %arg12[%336, %c0_113, %c0_114], %339 {strides = array<i32>} : memref<8x8x128xf32, #tpu.memory_space<vmem>>, vector<1x8x128xf32>,
    %340 = arith.index_cast %c3_i32 : i32 to index
    %c0_115 = arith.constant 0 : index
    %c0_116 = arith.constant 0 : index
    %341 = vector.load %arg13[%340, %c0_115, %c0_116] : memref<8x8x128xf32, #tpu.memory_space<vmem>>, vector<1x8x128xf32>
    %342 = vector.shape_cast %341 : vector<1x8x128xf32> to vector<8x128xf32>
    %343 = vector.shape_cast %289 : vector<8x128xf32> to vector<1x8x128xf32>
    tpu.vector_store %arg13[%340, %c0_115, %c0_116], %343 {strides = array<i32>} : memref<8x8x128xf32, #tpu.memory_space<vmem>>, vector<1x8x128xf32>,
    %c4_i32 = arith.constant 4 : i32
    %c0_117 = arith.constant 0 : index
    %c0_118 = arith.constant 0 : index
    %344 = vector.load %arg6[%c0_117, %c0_118] : memref<128x512xf32, #tpu.memory_space<vmem>>, vector<128x512xf32>
    %cst_119 = arith.constant dense<0.000000e+00> : vector<8x512xf32>
    %345 = tpu.matmul %322, %344, %cst_119 {dimension_numbers = #tpu.dot_dimension_numbers<[1], [0], [0], [1], [0, 0, 1, 1], [], []>} : vector<8x128xf32>, vector<128x512xf32>, vector<8x512xf32> -> vector<8x512xf32>
    %346 = vector.extract_strided_slice %345 {offsets = [0, 0], sizes = [8, 128], strides = [1, 1]} : vector<8x512xf32> to vector<8x128xf32>
    %347 = vector.extract_strided_slice %345 {offsets = [0, 128], sizes = [8, 384], strides = [1, 1]} : vector<8x512xf32> to vector<8x384xf32>
    %348 = arith.addf %347, %15 : vector<8x384xf32>
    %349 = vector.shape_cast %346 : vector<8x128xf32> to vector<8x1x128xf32>
    %350 = vector.broadcast %349 : vector<8x1x128xf32> to vector<8x8x128xf32>
    %351 = arith.addf %350, %7 : vector<8x8x128xf32>
    %352 = math.tanh %351 : vector<8x8x128xf32>
    %353 = vector.broadcast %9 : vector<1x1x128xf32> to vector<8x8x128xf32>
    %354 = arith.mulf %352, %353 : vector<8x8x128xf32>
    %cst_120 = arith.constant dense<0.000000e+00> : vector<8x8xf32>
    %355 = vector.multi_reduction <add>, %354, %cst_120 [2] : vector<8x8x128xf32> to vector<8x8xf32>
    %cst_121 = arith.constant -1.000000e+09 : f32
    %356 = vector.broadcast %cst_121 : f32 to vector<8x8xf32>
    %357 = arith.select %3, %355, %356 : vector<8x8xi1>, vector<8x8xf32>
    %cst_122 = arith.constant dense<0xFF800000> : vector<8xf32>
    %358 = vector.multi_reduction <maximumf>, %357, %cst_122 [1] : vector<8x8xf32> to vector<8xf32>
    %359 = vector.shape_cast %358 : vector<8xf32> to vector<8x1xf32>
    %360 = vector.broadcast %359 : vector<8x1xf32> to vector<8x8xf32>
    %361 = arith.subf %357, %360 : vector<8x8xf32>
    %362 = math.exp %361 : vector<8x8xf32>
    %cst_123 = arith.constant dense<0.000000e+00> : vector<8xf32>
    %363 = vector.multi_reduction <add>, %362, %cst_123 [1] : vector<8x8xf32> to vector<8xf32>
    %364 = vector.shape_cast %363 : vector<8xf32> to vector<8x1xf32>
    %365 = vector.broadcast %364 : vector<8x1xf32> to vector<8x8xf32>
    %366 = arith.divf %362, %365 : vector<8x8xf32>
    %367 = vector.shape_cast %366 : vector<8x8xf32> to vector<8x8x1xf32>
    %368 = vector.broadcast %367 : vector<8x8x1xf32> to vector<8x8x128xf32>
    %369 = arith.mulf %368, %0 : vector<8x8x128xf32>
    %cst_124 = arith.constant dense<0.000000e+00> : vector<8x128xf32>
    %370 = vector.multi_reduction <add>, %369, %cst_124 [1] : vector<8x8x128xf32> to vector<8x128xf32>
    %371 = arith.index_cast %c4_i32 : i32 to index
    %c0_125 = arith.constant 0 : index
    %c0_126 = arith.constant 0 : index
    %372 = vector.load %arg0[%371, %c0_125, %c0_126] : memref<8x8x384xf32, #tpu.memory_space<vmem>>, vector<1x8x384xf32>
    %373 = vector.shape_cast %372 : vector<1x8x384xf32> to vector<8x384xf32>
    %c0_127 = arith.constant 0 : index
    %c0_128 = arith.constant 0 : index
    %374 = vector.load %arg7[%c0_127, %c0_128] : memref<128x384xf32, #tpu.memory_space<vmem>>, vector<128x384xf32>
    %cst_129 = arith.constant dense<0.000000e+00> : vector<8x384xf32>
    %375 = tpu.matmul %370, %374, %cst_129 {dimension_numbers = #tpu.dot_dimension_numbers<[1], [0], [0], [1], [0, 0, 1, 1], [], []>} : vector<8x128xf32>, vector<128x384xf32>, vector<8x384xf32> -> vector<8x384xf32>
    %376 = arith.addf %373, %375 : vector<8x384xf32>
    %377 = arith.addf %376, %12 : vector<8x384xf32>
    %378 = vector.extract_strided_slice %377 {offsets = [0, 0], sizes = [8, 128], strides = [1, 1]} : vector<8x384xf32> to vector<8x128xf32>
    %379 = vector.extract_strided_slice %348 {offsets = [0, 0], sizes = [8, 128], strides = [1, 1]} : vector<8x384xf32> to vector<8x128xf32>
    %380 = arith.addf %378, %379 : vector<8x128xf32>
    %381 = arith.negf %380 : vector<8x128xf32>
    %382 = math.exp %381 : vector<8x128xf32>
    %cst_130 = arith.constant 1.000000e+00 : f32
    %383 = vector.broadcast %cst_130 : f32 to vector<8x128xf32>
    %384 = arith.addf %383, %382 : vector<8x128xf32>
    %385 = arith.divf %383, %384 : vector<8x128xf32>
    %386 = vector.extract_strided_slice %377 {offsets = [0, 128], sizes = [8, 128], strides = [1, 1]} : vector<8x384xf32> to vector<8x128xf32>
    %387 = vector.extract_strided_slice %348 {offsets = [0, 128], sizes = [8, 128], strides = [1, 1]} : vector<8x384xf32> to vector<8x128xf32>
    %388 = arith.addf %386, %387 : vector<8x128xf32>
    %389 = arith.negf %388 : vector<8x128xf32>
    %390 = math.exp %389 : vector<8x128xf32>
    %cst_131 = arith.constant 1.000000e+00 : f32
    %391 = vector.broadcast %cst_131 : f32 to vector<8x128xf32>
    %392 = arith.addf %391, %390 : vector<8x128xf32>
    %393 = arith.divf %391, %392 : vector<8x128xf32>
    %394 = vector.extract_strided_slice %377 {offsets = [0, 256], sizes = [8, 128], strides = [1, 1]} : vector<8x384xf32> to vector<8x128xf32>
    %395 = vector.extract_strided_slice %348 {offsets = [0, 256], sizes = [8, 128], strides = [1, 1]} : vector<8x384xf32> to vector<8x128xf32>
    %396 = arith.mulf %385, %395 : vector<8x128xf32>
    %397 = arith.addf %394, %396 : vector<8x128xf32>
    %398 = math.tanh %397 : vector<8x128xf32>
    %cst_132 = arith.constant 1.000000e+00 : f32
    %399 = vector.broadcast %cst_132 : f32 to vector<8x128xf32>
    %400 = arith.subf %399, %393 : vector<8x128xf32>
    %401 = arith.mulf %400, %398 : vector<8x128xf32>
    %402 = arith.mulf %393, %322 : vector<8x128xf32>
    %403 = arith.addf %401, %402 : vector<8x128xf32>
    %c0_133 = arith.constant 0 : index
    %c0_134 = arith.constant 0 : index
    %404 = vector.load %arg10[%c0_133, %c0_134] : memref<128x128xf32, #tpu.memory_space<vmem>>, vector<128x128xf32>
    %cst_135 = arith.constant dense<0.000000e+00> : vector<8x128xf32>
    %405 = tpu.matmul %403, %404, %cst_135 {dimension_numbers = #tpu.dot_dimension_numbers<[1], [0], [0], [1], [0, 0, 1, 1], [], []>} : vector<8x128xf32>, vector<128x128xf32>, vector<8x128xf32> -> vector<8x128xf32>
    %406 = arith.addf %405, %18 : vector<8x128xf32>
    %cst_136 = arith.constant dense<0xFF800000> : vector<8xf32>
    %407 = vector.multi_reduction <maximumf>, %406, %cst_136 [1] : vector<8x128xf32> to vector<8xf32>
    %408 = vector.shape_cast %407 : vector<8xf32> to vector<8x1xf32>
    %409 = vector.broadcast %408 : vector<8x1xf32> to vector<8x128xf32>
    %410 = arith.subf %406, %409 : vector<8x128xf32>
    %411 = math.exp %410 : vector<8x128xf32>
    %cst_137 = arith.constant dense<0.000000e+00> : vector<8xf32>
    %412 = vector.multi_reduction <add>, %411, %cst_137 [1] : vector<8x128xf32> to vector<8xf32>
    %413 = vector.shape_cast %412 : vector<8xf32> to vector<8x1xf32>
    %414 = math.log %413 : vector<8x1xf32>
    %415 = vector.broadcast %414 : vector<8x1xf32> to vector<8x128xf32>
    %416 = arith.subf %410, %415 : vector<8x128xf32>
    %417 = arith.index_cast %c4_i32 : i32 to index
    %c0_138 = arith.constant 0 : index
    %c0_139 = arith.constant 0 : index
    %418 = vector.load %arg12[%417, %c0_138, %c0_139] : memref<8x8x128xf32, #tpu.memory_space<vmem>>, vector<1x8x128xf32>
    %419 = vector.shape_cast %418 : vector<1x8x128xf32> to vector<8x128xf32>
    %420 = vector.shape_cast %416 : vector<8x128xf32> to vector<1x8x128xf32>
    tpu.vector_store %arg12[%417, %c0_138, %c0_139], %420 {strides = array<i32>} : memref<8x8x128xf32, #tpu.memory_space<vmem>>, vector<1x8x128xf32>,
    %421 = arith.index_cast %c4_i32 : i32 to index
    %c0_140 = arith.constant 0 : index
    %c0_141 = arith.constant 0 : index
    %422 = vector.load %arg13[%421, %c0_140, %c0_141] : memref<8x8x128xf32, #tpu.memory_space<vmem>>, vector<1x8x128xf32>
    %423 = vector.shape_cast %422 : vector<1x8x128xf32> to vector<8x128xf32>
    %424 = vector.shape_cast %370 : vector<8x128xf32> to vector<1x8x128xf32>
    tpu.vector_store %arg13[%421, %c0_140, %c0_141], %424 {strides = array<i32>} : memref<8x8x128xf32, #tpu.memory_space<vmem>>, vector<1x8x128xf32>,
    %c5_i32 = arith.constant 5 : i32
    %c0_142 = arith.constant 0 : index
    %c0_143 = arith.constant 0 : index
    %425 = vector.load %arg6[%c0_142, %c0_143] : memref<128x512xf32, #tpu.memory_space<vmem>>, vector<128x512xf32>
    %cst_144 = arith.constant dense<0.000000e+00> : vector<8x512xf32>
    %426 = tpu.matmul %403, %425, %cst_144 {dimension_numbers = #tpu.dot_dimension_numbers<[1], [0], [0], [1], [0, 0, 1, 1], [], []>} : vector<8x128xf32>, vector<128x512xf32>, vector<8x512xf32> -> vector<8x512xf32>
    %427 = vector.extract_strided_slice %426 {offsets = [0, 0], sizes = [8, 128], strides = [1, 1]} : vector<8x512xf32> to vector<8x128xf32>
    %428 = vector.extract_strided_slice %426 {offsets = [0, 128], sizes = [8, 384], strides = [1, 1]} : vector<8x512xf32> to vector<8x384xf32>
    %429 = arith.addf %428, %15 : vector<8x384xf32>
    %430 = vector.shape_cast %427 : vector<8x128xf32> to vector<8x1x128xf32>
    %431 = vector.broadcast %430 : vector<8x1x128xf32> to vector<8x8x128xf32>
    %432 = arith.addf %431, %7 : vector<8x8x128xf32>
    %433 = math.tanh %432 : vector<8x8x128xf32>
    %434 = vector.broadcast %9 : vector<1x1x128xf32> to vector<8x8x128xf32>
    %435 = arith.mulf %433, %434 : vector<8x8x128xf32>
    %cst_145 = arith.constant dense<0.000000e+00> : vector<8x8xf32>
    %436 = vector.multi_reduction <add>, %435, %cst_145 [2] : vector<8x8x128xf32> to vector<8x8xf32>
    %cst_146 = arith.constant -1.000000e+09 : f32
    %437 = vector.broadcast %cst_146 : f32 to vector<8x8xf32>
    %438 = arith.select %3, %436, %437 : vector<8x8xi1>, vector<8x8xf32>
    %cst_147 = arith.constant dense<0xFF800000> : vector<8xf32>
    %439 = vector.multi_reduction <maximumf>, %438, %cst_147 [1] : vector<8x8xf32> to vector<8xf32>
    %440 = vector.shape_cast %439 : vector<8xf32> to vector<8x1xf32>
    %441 = vector.broadcast %440 : vector<8x1xf32> to vector<8x8xf32>
    %442 = arith.subf %438, %441 : vector<8x8xf32>
    %443 = math.exp %442 : vector<8x8xf32>
    %cst_148 = arith.constant dense<0.000000e+00> : vector<8xf32>
    %444 = vector.multi_reduction <add>, %443, %cst_148 [1] : vector<8x8xf32> to vector<8xf32>
    %445 = vector.shape_cast %444 : vector<8xf32> to vector<8x1xf32>
    %446 = vector.broadcast %445 : vector<8x1xf32> to vector<8x8xf32>
    %447 = arith.divf %443, %446 : vector<8x8xf32>
    %448 = vector.shape_cast %447 : vector<8x8xf32> to vector<8x8x1xf32>
    %449 = vector.broadcast %448 : vector<8x8x1xf32> to vector<8x8x128xf32>
    %450 = arith.mulf %449, %0 : vector<8x8x128xf32>
    %cst_149 = arith.constant dense<0.000000e+00> : vector<8x128xf32>
    %451 = vector.multi_reduction <add>, %450, %cst_149 [1] : vector<8x8x128xf32> to vector<8x128xf32>
    %452 = arith.index_cast %c5_i32 : i32 to index
    %c0_150 = arith.constant 0 : index
    %c0_151 = arith.constant 0 : index
    %453 = vector.load %arg0[%452, %c0_150, %c0_151] : memref<8x8x384xf32, #tpu.memory_space<vmem>>, vector<1x8x384xf32>
    %454 = vector.shape_cast %453 : vector<1x8x384xf32> to vector<8x384xf32>
    %c0_152 = arith.constant 0 : index
    %c0_153 = arith.constant 0 : index
    %455 = vector.load %arg7[%c0_152, %c0_153] : memref<128x384xf32, #tpu.memory_space<vmem>>, vector<128x384xf32>
    %cst_154 = arith.constant dense<0.000000e+00> : vector<8x384xf32>
    %456 = tpu.matmul %451, %455, %cst_154 {dimension_numbers = #tpu.dot_dimension_numbers<[1], [0], [0], [1], [0, 0, 1, 1], [], []>} : vector<8x128xf32>, vector<128x384xf32>, vector<8x384xf32> -> vector<8x384xf32>
    %457 = arith.addf %454, %456 : vector<8x384xf32>
    %458 = arith.addf %457, %12 : vector<8x384xf32>
    %459 = vector.extract_strided_slice %458 {offsets = [0, 0], sizes = [8, 128], strides = [1, 1]} : vector<8x384xf32> to vector<8x128xf32>
    %460 = vector.extract_strided_slice %429 {offsets = [0, 0], sizes = [8, 128], strides = [1, 1]} : vector<8x384xf32> to vector<8x128xf32>
    %461 = arith.addf %459, %460 : vector<8x128xf32>
    %462 = arith.negf %461 : vector<8x128xf32>
    %463 = math.exp %462 : vector<8x128xf32>
    %cst_155 = arith.constant 1.000000e+00 : f32
    %464 = vector.broadcast %cst_155 : f32 to vector<8x128xf32>
    %465 = arith.addf %464, %463 : vector<8x128xf32>
    %466 = arith.divf %464, %465 : vector<8x128xf32>
    %467 = vector.extract_strided_slice %458 {offsets = [0, 128], sizes = [8, 128], strides = [1, 1]} : vector<8x384xf32> to vector<8x128xf32>
    %468 = vector.extract_strided_slice %429 {offsets = [0, 128], sizes = [8, 128], strides = [1, 1]} : vector<8x384xf32> to vector<8x128xf32>
    %469 = arith.addf %467, %468 : vector<8x128xf32>
    %470 = arith.negf %469 : vector<8x128xf32>
    %471 = math.exp %470 : vector<8x128xf32>
    %cst_156 = arith.constant 1.000000e+00 : f32
    %472 = vector.broadcast %cst_156 : f32 to vector<8x128xf32>
    %473 = arith.addf %472, %471 : vector<8x128xf32>
    %474 = arith.divf %472, %473 : vector<8x128xf32>
    %475 = vector.extract_strided_slice %458 {offsets = [0, 256], sizes = [8, 128], strides = [1, 1]} : vector<8x384xf32> to vector<8x128xf32>
    %476 = vector.extract_strided_slice %429 {offsets = [0, 256], sizes = [8, 128], strides = [1, 1]} : vector<8x384xf32> to vector<8x128xf32>
    %477 = arith.mulf %466, %476 : vector<8x128xf32>
    %478 = arith.addf %475, %477 : vector<8x128xf32>
    %479 = math.tanh %478 : vector<8x128xf32>
    %cst_157 = arith.constant 1.000000e+00 : f32
    %480 = vector.broadcast %cst_157 : f32 to vector<8x128xf32>
    %481 = arith.subf %480, %474 : vector<8x128xf32>
    %482 = arith.mulf %481, %479 : vector<8x128xf32>
    %483 = arith.mulf %474, %403 : vector<8x128xf32>
    %484 = arith.addf %482, %483 : vector<8x128xf32>
    %c0_158 = arith.constant 0 : index
    %c0_159 = arith.constant 0 : index
    %485 = vector.load %arg10[%c0_158, %c0_159] : memref<128x128xf32, #tpu.memory_space<vmem>>, vector<128x128xf32>
    %cst_160 = arith.constant dense<0.000000e+00> : vector<8x128xf32>
    %486 = tpu.matmul %484, %485, %cst_160 {dimension_numbers = #tpu.dot_dimension_numbers<[1], [0], [0], [1], [0, 0, 1, 1], [], []>} : vector<8x128xf32>, vector<128x128xf32>, vector<8x128xf32> -> vector<8x128xf32>
    %487 = arith.addf %486, %18 : vector<8x128xf32>
    %cst_161 = arith.constant dense<0xFF800000> : vector<8xf32>
    %488 = vector.multi_reduction <maximumf>, %487, %cst_161 [1] : vector<8x128xf32> to vector<8xf32>
    %489 = vector.shape_cast %488 : vector<8xf32> to vector<8x1xf32>
    %490 = vector.broadcast %489 : vector<8x1xf32> to vector<8x128xf32>
    %491 = arith.subf %487, %490 : vector<8x128xf32>
    %492 = math.exp %491 : vector<8x128xf32>
    %cst_162 = arith.constant dense<0.000000e+00> : vector<8xf32>
    %493 = vector.multi_reduction <add>, %492, %cst_162 [1] : vector<8x128xf32> to vector<8xf32>
    %494 = vector.shape_cast %493 : vector<8xf32> to vector<8x1xf32>
    %495 = math.log %494 : vector<8x1xf32>
    %496 = vector.broadcast %495 : vector<8x1xf32> to vector<8x128xf32>
    %497 = arith.subf %491, %496 : vector<8x128xf32>
    %498 = arith.index_cast %c5_i32 : i32 to index
    %c0_163 = arith.constant 0 : index
    %c0_164 = arith.constant 0 : index
    %499 = vector.load %arg12[%498, %c0_163, %c0_164] : memref<8x8x128xf32, #tpu.memory_space<vmem>>, vector<1x8x128xf32>
    %500 = vector.shape_cast %499 : vector<1x8x128xf32> to vector<8x128xf32>
    %501 = vector.shape_cast %497 : vector<8x128xf32> to vector<1x8x128xf32>
    tpu.vector_store %arg12[%498, %c0_163, %c0_164], %501 {strides = array<i32>} : memref<8x8x128xf32, #tpu.memory_space<vmem>>, vector<1x8x128xf32>,
    %502 = arith.index_cast %c5_i32 : i32 to index
    %c0_165 = arith.constant 0 : index
    %c0_166 = arith.constant 0 : index
    %503 = vector.load %arg13[%502, %c0_165, %c0_166] : memref<8x8x128xf32, #tpu.memory_space<vmem>>, vector<1x8x128xf32>
    %504 = vector.shape_cast %503 : vector<1x8x128xf32> to vector<8x128xf32>
    %505 = vector.shape_cast %451 : vector<8x128xf32> to vector<1x8x128xf32>
    tpu.vector_store %arg13[%502, %c0_165, %c0_166], %505 {strides = array<i32>} : memref<8x8x128xf32, #tpu.memory_space<vmem>>, vector<1x8x128xf32>,
    %c6_i32 = arith.constant 6 : i32
    %c0_167 = arith.constant 0 : index
    %c0_168 = arith.constant 0 : index
    %506 = vector.load %arg6[%c0_167, %c0_168] : memref<128x512xf32, #tpu.memory_space<vmem>>, vector<128x512xf32>
    %cst_169 = arith.constant dense<0.000000e+00> : vector<8x512xf32>
    %507 = tpu.matmul %484, %506, %cst_169 {dimension_numbers = #tpu.dot_dimension_numbers<[1], [0], [0], [1], [0, 0, 1, 1], [], []>} : vector<8x128xf32>, vector<128x512xf32>, vector<8x512xf32> -> vector<8x512xf32>
    %508 = vector.extract_strided_slice %507 {offsets = [0, 0], sizes = [8, 128], strides = [1, 1]} : vector<8x512xf32> to vector<8x128xf32>
    %509 = vector.extract_strided_slice %507 {offsets = [0, 128], sizes = [8, 384], strides = [1, 1]} : vector<8x512xf32> to vector<8x384xf32>
    %510 = arith.addf %509, %15 : vector<8x384xf32>
    %511 = vector.shape_cast %508 : vector<8x128xf32> to vector<8x1x128xf32>
    %512 = vector.broadcast %511 : vector<8x1x128xf32> to vector<8x8x128xf32>
    %513 = arith.addf %512, %7 : vector<8x8x128xf32>
    %514 = math.tanh %513 : vector<8x8x128xf32>
    %515 = vector.broadcast %9 : vector<1x1x128xf32> to vector<8x8x128xf32>
    %516 = arith.mulf %514, %515 : vector<8x8x128xf32>
    %cst_170 = arith.constant dense<0.000000e+00> : vector<8x8xf32>
    %517 = vector.multi_reduction <add>, %516, %cst_170 [2] : vector<8x8x128xf32> to vector<8x8xf32>
    %cst_171 = arith.constant -1.000000e+09 : f32
    %518 = vector.broadcast %cst_171 : f32 to vector<8x8xf32>
    %519 = arith.select %3, %517, %518 : vector<8x8xi1>, vector<8x8xf32>
    %cst_172 = arith.constant dense<0xFF800000> : vector<8xf32>
    %520 = vector.multi_reduction <maximumf>, %519, %cst_172 [1] : vector<8x8xf32> to vector<8xf32>
    %521 = vector.shape_cast %520 : vector<8xf32> to vector<8x1xf32>
    %522 = vector.broadcast %521 : vector<8x1xf32> to vector<8x8xf32>
    %523 = arith.subf %519, %522 : vector<8x8xf32>
    %524 = math.exp %523 : vector<8x8xf32>
    %cst_173 = arith.constant dense<0.000000e+00> : vector<8xf32>
    %525 = vector.multi_reduction <add>, %524, %cst_173 [1] : vector<8x8xf32> to vector<8xf32>
    %526 = vector.shape_cast %525 : vector<8xf32> to vector<8x1xf32>
    %527 = vector.broadcast %526 : vector<8x1xf32> to vector<8x8xf32>
    %528 = arith.divf %524, %527 : vector<8x8xf32>
    %529 = vector.shape_cast %528 : vector<8x8xf32> to vector<8x8x1xf32>
    %530 = vector.broadcast %529 : vector<8x8x1xf32> to vector<8x8x128xf32>
    %531 = arith.mulf %530, %0 : vector<8x8x128xf32>
    %cst_174 = arith.constant dense<0.000000e+00> : vector<8x128xf32>
    %532 = vector.multi_reduction <add>, %531, %cst_174 [1] : vector<8x8x128xf32> to vector<8x128xf32>
    %533 = arith.index_cast %c6_i32 : i32 to index
    %c0_175 = arith.constant 0 : index
    %c0_176 = arith.constant 0 : index
    %534 = vector.load %arg0[%533, %c0_175, %c0_176] : memref<8x8x384xf32, #tpu.memory_space<vmem>>, vector<1x8x384xf32>
    %535 = vector.shape_cast %534 : vector<1x8x384xf32> to vector<8x384xf32>
    %c0_177 = arith.constant 0 : index
    %c0_178 = arith.constant 0 : index
    %536 = vector.load %arg7[%c0_177, %c0_178] : memref<128x384xf32, #tpu.memory_space<vmem>>, vector<128x384xf32>
    %cst_179 = arith.constant dense<0.000000e+00> : vector<8x384xf32>
    %537 = tpu.matmul %532, %536, %cst_179 {dimension_numbers = #tpu.dot_dimension_numbers<[1], [0], [0], [1], [0, 0, 1, 1], [], []>} : vector<8x128xf32>, vector<128x384xf32>, vector<8x384xf32> -> vector<8x384xf32>
    %538 = arith.addf %535, %537 : vector<8x384xf32>
    %539 = arith.addf %538, %12 : vector<8x384xf32>
    %540 = vector.extract_strided_slice %539 {offsets = [0, 0], sizes = [8, 128], strides = [1, 1]} : vector<8x384xf32> to vector<8x128xf32>
    %541 = vector.extract_strided_slice %510 {offsets = [0, 0], sizes = [8, 128], strides = [1, 1]} : vector<8x384xf32> to vector<8x128xf32>
    %542 = arith.addf %540, %541 : vector<8x128xf32>
    %543 = arith.negf %542 : vector<8x128xf32>
    %544 = math.exp %543 : vector<8x128xf32>
    %cst_180 = arith.constant 1.000000e+00 : f32
    %545 = vector.broadcast %cst_180 : f32 to vector<8x128xf32>
    %546 = arith.addf %545, %544 : vector<8x128xf32>
    %547 = arith.divf %545, %546 : vector<8x128xf32>
    %548 = vector.extract_strided_slice %539 {offsets = [0, 128], sizes = [8, 128], strides = [1, 1]} : vector<8x384xf32> to vector<8x128xf32>
    %549 = vector.extract_strided_slice %510 {offsets = [0, 128], sizes = [8, 128], strides = [1, 1]} : vector<8x384xf32> to vector<8x128xf32>
    %550 = arith.addf %548, %549 : vector<8x128xf32>
    %551 = arith.negf %550 : vector<8x128xf32>
    %552 = math.exp %551 : vector<8x128xf32>
    %cst_181 = arith.constant 1.000000e+00 : f32
    %553 = vector.broadcast %cst_181 : f32 to vector<8x128xf32>
    %554 = arith.addf %553, %552 : vector<8x128xf32>
    %555 = arith.divf %553, %554 : vector<8x128xf32>
    %556 = vector.extract_strided_slice %539 {offsets = [0, 256], sizes = [8, 128], strides = [1, 1]} : vector<8x384xf32> to vector<8x128xf32>
    %557 = vector.extract_strided_slice %510 {offsets = [0, 256], sizes = [8, 128], strides = [1, 1]} : vector<8x384xf32> to vector<8x128xf32>
    %558 = arith.mulf %547, %557 : vector<8x128xf32>
    %559 = arith.addf %556, %558 : vector<8x128xf32>
    %560 = math.tanh %559 : vector<8x128xf32>
    %cst_182 = arith.constant 1.000000e+00 : f32
    %561 = vector.broadcast %cst_182 : f32 to vector<8x128xf32>
    %562 = arith.subf %561, %555 : vector<8x128xf32>
    %563 = arith.mulf %562, %560 : vector<8x128xf32>
    %564 = arith.mulf %555, %484 : vector<8x128xf32>
    %565 = arith.addf %563, %564 : vector<8x128xf32>
    %c0_183 = arith.constant 0 : index
    %c0_184 = arith.constant 0 : index
    %566 = vector.load %arg10[%c0_183, %c0_184] : memref<128x128xf32, #tpu.memory_space<vmem>>, vector<128x128xf32>
    %cst_185 = arith.constant dense<0.000000e+00> : vector<8x128xf32>
    %567 = tpu.matmul %565, %566, %cst_185 {dimension_numbers = #tpu.dot_dimension_numbers<[1], [0], [0], [1], [0, 0, 1, 1], [], []>} : vector<8x128xf32>, vector<128x128xf32>, vector<8x128xf32> -> vector<8x128xf32>
    %568 = arith.addf %567, %18 : vector<8x128xf32>
    %cst_186 = arith.constant dense<0xFF800000> : vector<8xf32>
    %569 = vector.multi_reduction <maximumf>, %568, %cst_186 [1] : vector<8x128xf32> to vector<8xf32>
    %570 = vector.shape_cast %569 : vector<8xf32> to vector<8x1xf32>
    %571 = vector.broadcast %570 : vector<8x1xf32> to vector<8x128xf32>
    %572 = arith.subf %568, %571 : vector<8x128xf32>
    %573 = math.exp %572 : vector<8x128xf32>
    %cst_187 = arith.constant dense<0.000000e+00> : vector<8xf32>
    %574 = vector.multi_reduction <add>, %573, %cst_187 [1] : vector<8x128xf32> to vector<8xf32>
    %575 = vector.shape_cast %574 : vector<8xf32> to vector<8x1xf32>
    %576 = math.log %575 : vector<8x1xf32>
    %577 = vector.broadcast %576 : vector<8x1xf32> to vector<8x128xf32>
    %578 = arith.subf %572, %577 : vector<8x128xf32>
    %579 = arith.index_cast %c6_i32 : i32 to index
    %c0_188 = arith.constant 0 : index
    %c0_189 = arith.constant 0 : index
    %580 = vector.load %arg12[%579, %c0_188, %c0_189] : memref<8x8x128xf32, #tpu.memory_space<vmem>>, vector<1x8x128xf32>
    %581 = vector.shape_cast %580 : vector<1x8x128xf32> to vector<8x128xf32>
    %582 = vector.shape_cast %578 : vector<8x128xf32> to vector<1x8x128xf32>
    tpu.vector_store %arg12[%579, %c0_188, %c0_189], %582 {strides = array<i32>} : memref<8x8x128xf32, #tpu.memory_space<vmem>>, vector<1x8x128xf32>,
    %583 = arith.index_cast %c6_i32 : i32 to index
    %c0_190 = arith.constant 0 : index
    %c0_191 = arith.constant 0 : index
    %584 = vector.load %arg13[%583, %c0_190, %c0_191] : memref<8x8x128xf32, #tpu.memory_space<vmem>>, vector<1x8x128xf32>
    %585 = vector.shape_cast %584 : vector<1x8x128xf32> to vector<8x128xf32>
    %586 = vector.shape_cast %532 : vector<8x128xf32> to vector<1x8x128xf32>
    tpu.vector_store %arg13[%583, %c0_190, %c0_191], %586 {strides = array<i32>} : memref<8x8x128xf32, #tpu.memory_space<vmem>>, vector<1x8x128xf32>,
    %c7_i32 = arith.constant 7 : i32
    %c0_192 = arith.constant 0 : index
    %c0_193 = arith.constant 0 : index
    %587 = vector.load %arg6[%c0_192, %c0_193] : memref<128x512xf32, #tpu.memory_space<vmem>>, vector<128x512xf32>
    %cst_194 = arith.constant dense<0.000000e+00> : vector<8x512xf32>
    %588 = tpu.matmul %565, %587, %cst_194 {dimension_numbers = #tpu.dot_dimension_numbers<[1], [0], [0], [1], [0, 0, 1, 1], [], []>} : vector<8x128xf32>, vector<128x512xf32>, vector<8x512xf32> -> vector<8x512xf32>
    %589 = vector.extract_strided_slice %588 {offsets = [0, 0], sizes = [8, 128], strides = [1, 1]} : vector<8x512xf32> to vector<8x128xf32>
    %590 = vector.extract_strided_slice %588 {offsets = [0, 128], sizes = [8, 384], strides = [1, 1]} : vector<8x512xf32> to vector<8x384xf32>
    %591 = arith.addf %590, %15 : vector<8x384xf32>
    %592 = vector.shape_cast %589 : vector<8x128xf32> to vector<8x1x128xf32>
    %593 = vector.broadcast %592 : vector<8x1x128xf32> to vector<8x8x128xf32>
    %594 = arith.addf %593, %7 : vector<8x8x128xf32>
    %595 = math.tanh %594 : vector<8x8x128xf32>
    %596 = vector.broadcast %9 : vector<1x1x128xf32> to vector<8x8x128xf32>
    %597 = arith.mulf %595, %596 : vector<8x8x128xf32>
    %cst_195 = arith.constant dense<0.000000e+00> : vector<8x8xf32>
    %598 = vector.multi_reduction <add>, %597, %cst_195 [2] : vector<8x8x128xf32> to vector<8x8xf32>
    %cst_196 = arith.constant -1.000000e+09 : f32
    %599 = vector.broadcast %cst_196 : f32 to vector<8x8xf32>
    %600 = arith.select %3, %598, %599 : vector<8x8xi1>, vector<8x8xf32>
    %cst_197 = arith.constant dense<0xFF800000> : vector<8xf32>
    %601 = vector.multi_reduction <maximumf>, %600, %cst_197 [1] : vector<8x8xf32> to vector<8xf32>
    %602 = vector.shape_cast %601 : vector<8xf32> to vector<8x1xf32>
    %603 = vector.broadcast %602 : vector<8x1xf32> to vector<8x8xf32>
    %604 = arith.subf %600, %603 : vector<8x8xf32>
    %605 = math.exp %604 : vector<8x8xf32>
    %cst_198 = arith.constant dense<0.000000e+00> : vector<8xf32>
    %606 = vector.multi_reduction <add>, %605, %cst_198 [1] : vector<8x8xf32> to vector<8xf32>
    %607 = vector.shape_cast %606 : vector<8xf32> to vector<8x1xf32>
    %608 = vector.broadcast %607 : vector<8x1xf32> to vector<8x8xf32>
    %609 = arith.divf %605, %608 : vector<8x8xf32>
    %610 = vector.shape_cast %609 : vector<8x8xf32> to vector<8x8x1xf32>
    %611 = vector.broadcast %610 : vector<8x8x1xf32> to vector<8x8x128xf32>
    %612 = arith.mulf %611, %0 : vector<8x8x128xf32>
    %cst_199 = arith.constant dense<0.000000e+00> : vector<8x128xf32>
    %613 = vector.multi_reduction <add>, %612, %cst_199 [1] : vector<8x8x128xf32> to vector<8x128xf32>
    %614 = arith.index_cast %c7_i32 : i32 to index
    %c0_200 = arith.constant 0 : index
    %c0_201 = arith.constant 0 : index
    %615 = vector.load %arg0[%614, %c0_200, %c0_201] : memref<8x8x384xf32, #tpu.memory_space<vmem>>, vector<1x8x384xf32>
    %616 = vector.shape_cast %615 : vector<1x8x384xf32> to vector<8x384xf32>
    %c0_202 = arith.constant 0 : index
    %c0_203 = arith.constant 0 : index
    %617 = vector.load %arg7[%c0_202, %c0_203] : memref<128x384xf32, #tpu.memory_space<vmem>>, vector<128x384xf32>
    %cst_204 = arith.constant dense<0.000000e+00> : vector<8x384xf32>
    %618 = tpu.matmul %613, %617, %cst_204 {dimension_numbers = #tpu.dot_dimension_numbers<[1], [0], [0], [1], [0, 0, 1, 1], [], []>} : vector<8x128xf32>, vector<128x384xf32>, vector<8x384xf32> -> vector<8x384xf32>
    %619 = arith.addf %616, %618 : vector<8x384xf32>
    %620 = arith.addf %619, %12 : vector<8x384xf32>
    %621 = vector.extract_strided_slice %620 {offsets = [0, 0], sizes = [8, 128], strides = [1, 1]} : vector<8x384xf32> to vector<8x128xf32>
    %622 = vector.extract_strided_slice %591 {offsets = [0, 0], sizes = [8, 128], strides = [1, 1]} : vector<8x384xf32> to vector<8x128xf32>
    %623 = arith.addf %621, %622 : vector<8x128xf32>
    %624 = arith.negf %623 : vector<8x128xf32>
    %625 = math.exp %624 : vector<8x128xf32>
    %cst_205 = arith.constant 1.000000e+00 : f32
    %626 = vector.broadcast %cst_205 : f32 to vector<8x128xf32>
    %627 = arith.addf %626, %625 : vector<8x128xf32>
    %628 = arith.divf %626, %627 : vector<8x128xf32>
    %629 = vector.extract_strided_slice %620 {offsets = [0, 128], sizes = [8, 128], strides = [1, 1]} : vector<8x384xf32> to vector<8x128xf32>
    %630 = vector.extract_strided_slice %591 {offsets = [0, 128], sizes = [8, 128], strides = [1, 1]} : vector<8x384xf32> to vector<8x128xf32>
    %631 = arith.addf %629, %630 : vector<8x128xf32>
    %632 = arith.negf %631 : vector<8x128xf32>
    %633 = math.exp %632 : vector<8x128xf32>
    %cst_206 = arith.constant 1.000000e+00 : f32
    %634 = vector.broadcast %cst_206 : f32 to vector<8x128xf32>
    %635 = arith.addf %634, %633 : vector<8x128xf32>
    %636 = arith.divf %634, %635 : vector<8x128xf32>
    %637 = vector.extract_strided_slice %620 {offsets = [0, 256], sizes = [8, 128], strides = [1, 1]} : vector<8x384xf32> to vector<8x128xf32>
    %638 = vector.extract_strided_slice %591 {offsets = [0, 256], sizes = [8, 128], strides = [1, 1]} : vector<8x384xf32> to vector<8x128xf32>
    %639 = arith.mulf %628, %638 : vector<8x128xf32>
    %640 = arith.addf %637, %639 : vector<8x128xf32>
    %641 = math.tanh %640 : vector<8x128xf32>
    %cst_207 = arith.constant 1.000000e+00 : f32
    %642 = vector.broadcast %cst_207 : f32 to vector<8x128xf32>
    %643 = arith.subf %642, %636 : vector<8x128xf32>
    %644 = arith.mulf %643, %641 : vector<8x128xf32>
    %645 = arith.mulf %636, %565 : vector<8x128xf32>
    %646 = arith.addf %644, %645 : vector<8x128xf32>
    %c0_208 = arith.constant 0 : index
    %c0_209 = arith.constant 0 : index
    %647 = vector.load %arg10[%c0_208, %c0_209] : memref<128x128xf32, #tpu.memory_space<vmem>>, vector<128x128xf32>
    %cst_210 = arith.constant dense<0.000000e+00> : vector<8x128xf32>
    %648 = tpu.matmul %646, %647, %cst_210 {dimension_numbers = #tpu.dot_dimension_numbers<[1], [0], [0], [1], [0, 0, 1, 1], [], []>} : vector<8x128xf32>, vector<128x128xf32>, vector<8x128xf32> -> vector<8x128xf32>
    %649 = arith.addf %648, %18 : vector<8x128xf32>
    %cst_211 = arith.constant dense<0xFF800000> : vector<8xf32>
    %650 = vector.multi_reduction <maximumf>, %649, %cst_211 [1] : vector<8x128xf32> to vector<8xf32>
    %651 = vector.shape_cast %650 : vector<8xf32> to vector<8x1xf32>
    %652 = vector.broadcast %651 : vector<8x1xf32> to vector<8x128xf32>
    %653 = arith.subf %649, %652 : vector<8x128xf32>
    %654 = math.exp %653 : vector<8x128xf32>
    %cst_212 = arith.constant dense<0.000000e+00> : vector<8xf32>
    %655 = vector.multi_reduction <add>, %654, %cst_212 [1] : vector<8x128xf32> to vector<8xf32>
    %656 = vector.shape_cast %655 : vector<8xf32> to vector<8x1xf32>
    %657 = math.log %656 : vector<8x1xf32>
    %658 = vector.broadcast %657 : vector<8x1xf32> to vector<8x128xf32>
    %659 = arith.subf %653, %658 : vector<8x128xf32>
    %660 = arith.index_cast %c7_i32 : i32 to index
    %c0_213 = arith.constant 0 : index
    %c0_214 = arith.constant 0 : index
    %661 = vector.load %arg12[%660, %c0_213, %c0_214] : memref<8x8x128xf32, #tpu.memory_space<vmem>>, vector<1x8x128xf32>
    %662 = vector.shape_cast %661 : vector<1x8x128xf32> to vector<8x128xf32>
    %663 = vector.shape_cast %659 : vector<8x128xf32> to vector<1x8x128xf32>
    tpu.vector_store %arg12[%660, %c0_213, %c0_214], %663 {strides = array<i32>} : memref<8x8x128xf32, #tpu.memory_space<vmem>>, vector<1x8x128xf32>,
    %664 = arith.index_cast %c7_i32 : i32 to index
    %c0_215 = arith.constant 0 : index
    %c0_216 = arith.constant 0 : index
    %665 = vector.load %arg13[%664, %c0_215, %c0_216] : memref<8x8x128xf32, #tpu.memory_space<vmem>>, vector<1x8x128xf32>
    %666 = vector.shape_cast %665 : vector<1x8x128xf32> to vector<8x128xf32>
    %667 = vector.shape_cast %613 : vector<8x128xf32> to vector<1x8x128xf32>
    tpu.vector_store %arg13[%664, %c0_215, %c0_216], %667 {strides = array<i32>} : memref<8x8x128xf32, #tpu.memory_space<vmem>>, vector<1x8x128xf32>,
    %c8_i32 = arith.constant 8 : i32
    %c0_217 = arith.constant 0 : index
    %c0_218 = arith.constant 0 : index
    %668 = vector.load %arg14[%c0_217, %c0_218] : memref<8x128xf32, #tpu.memory_space<vmem>>, vector<8x128xf32>
    tpu.vector_store %arg14[%c0_217, %c0_218], %646 {strides = array<i32>} : memref<8x128xf32, #tpu.memory_space<vmem>>, vector<8x128xf32>,
    return
  }
}

</mosaic_0001>

<llo_original>
// kernel: decoder_forward.1
$region0: #{decoder_forward.1}
  #allocation0 [shape = 'u32[]', space=smem, size = 0x4, offset = 0x4, fixed_abs, tag = 'smem constant byte address 0x4 - core index']
  #allocation1 [shape = 'u32[144,128]{1,0:T(1,128)}', space=vmem, size = 0x12000, scoped, tag = 'internal scratch']
  %s0 = inlined_call_operand.vmem [shape: f32[8,8,384], index: 0, kind: input, shape index: {}]
  %s1 = inlined_call_operand.vmem [shape: f32[8,8,128], index: 1, kind: input, shape index: {}]
  %s2 = inlined_call_operand.vmem [shape: f32[8,8], index: 2, kind: input, shape index: {}]
  %s3 = inlined_call_operand.vmem [shape: f32[8,128], index: 3, kind: input, shape index: {}]
  %s4 = inlined_call_operand.vmem [shape: f32[128,128], index: 4, kind: input, shape index: {}]
  %s5 = inlined_call_operand.vmem [shape: f32[1,128], index: 5, kind: input, shape index: {}]
  %s6 = inlined_call_operand.vmem [shape: f32[128,512], index: 6, kind: input, shape index: {}]
  %s7 = inlined_call_operand.vmem [shape: f32[128,384], index: 7, kind: input, shape index: {}]
  %s8 = inlined_call_operand.vmem [shape: f32[1,384], index: 8, kind: input, shape index: {}]
  %s9 = inlined_call_operand.vmem [shape: f32[1,384], index: 9, kind: input, shape index: {}]
  %s10 = inlined_call_operand.vmem [shape: f32[128,128], index: 10, kind: input, shape index: {}]
  %s11 = inlined_call_operand.vmem [shape: f32[1,128], index: 11, kind: input, shape index: {}]
  %s12 = inlined_call_operand.hbm [shape: f32[8,8,128], index: 12, kind: output, shape index: {0}]
  %s13 = inlined_call_operand.hbm [shape: f32[8,8,128], index: 13, kind: output, shape index: {1}]
  %s14 = inlined_call_operand.vmem [shape: f32[8,128], index: 14, kind: output, shape index: {2}]
  %15 = xla_tuple %s12, %s13, %s14
  %s16 = sld [smem:[#allocation0]]
  $region74: #{decoder_forward.1} parent=0
    _
  %s18 = ssub.s32 1, %s16
  %s19 = scalar_select 0, %s18, %s16
  $region1: #{decoder_forward.1} parent=0
    #allocation2 [shape = 'u8[32768]{0}', space=vmem, size = 0x8000, scoped, tag = 'output window, operand 0, single buffered']
    #allocation3 [shape = 's32[1]{0}', space=sflag, size = 0x4, scoped, tag = 'scoped memory for decoder_forward.1']
    #allocation4 [shape = 'u8[32768]{0}', space=vmem, size = 0x8000, scoped, tag = 'output window, operand 1, single buffered']
    #allocation5 [shape = 's32[1]{0}', space=sflag, size = 0x4, scoped, tag = 'scoped memory for decoder_forward.1']
    %20 = vsyncpa [#allocation3], 0
    %21 = vsyncpa [#allocation5], 0
    // Predicated region
    $region2: #{decoder_forward.1} parent=1 // pred_check
      _
    $region3: #{decoder_forward.1} parent=1 // pred_check_branch
      %23 = sbr.rel (0) target = $region5
    $region4: #{decoder_forward.1} parent=1 // pred_region
      _
    $region5: #{decoder_forward.1} parent=1 // pred_fallthru
      _
    // Predicated region
    $region6: #{decoder_forward.1} parent=1 // pred_check
      _
    $region7: #{decoder_forward.1} parent=1 // pred_check_branch
      %25 = sbr.rel (0) target = $region9
    $region8: #{decoder_forward.1} parent=1 // pred_region
      _
    $region9: #{decoder_forward.1} parent=1 // pred_fallthru
      _
    // Predicated region
    $region10: #{decoder_forward.1} parent=1 // pred_check
      _
    $region11: #{decoder_forward.1} parent=1 // pred_check_branch
      %27 = sbr.rel (0) target = $region13
    $region12: #{decoder_forward.1} parent=1 // pred_region
      _
    $region13: #{decoder_forward.1} parent=1 // pred_fallthru
      _
    // Predicated region
    $region14: #{decoder_forward.1} parent=1 // pred_check
      _
    $region15: #{decoder_forward.1} parent=1 // pred_check_branch
      %29 = sbr.rel (0) target = $region17
    $region16: #{decoder_forward.1} parent=1 // pred_region
      _
    $region17: #{decoder_forward.1} parent=1 // pred_fallthru
      _
    // Predicated region
    $region18: #{decoder_forward.1} parent=1 // pred_check
      _
    $region19: #{decoder_forward.1} parent=1 // pred_check_branch
      %31 = sbr.rel (0) target = $region21
    $region20: #{decoder_forward.1} parent=1 // pred_region
      _
    $region21: #{decoder_forward.1} parent=1 // pred_fallthru
      _
    // Predicated region
    $region22: #{decoder_forward.1} parent=1 // pred_check
      _
    $region23: #{decoder_forward.1} parent=1 // pred_check_branch
      %33 = sbr.rel (0) target = $region25
    $region24: #{decoder_forward.1} parent=1 // pred_region
      _
    $region25: #{decoder_forward.1} parent=1 // pred_fallthru
      _
    // Predicated region
    $region26: #{decoder_forward.1} parent=1 // pred_check
      _
    $region27: #{decoder_forward.1} parent=1 // pred_check_branch
      %35 = sbr.rel (0) target = $region29
    $region28: #{decoder_forward.1} parent=1 // pred_region
      _
    $region29: #{decoder_forward.1} parent=1 // pred_fallthru
      _
    // Predicated region
    $region30: #{decoder_forward.1} parent=1 // pred_check
      _
    $region31: #{decoder_forward.1} parent=1 // pred_check_branch
      %37 = sbr.rel (0) target = $region33
    $region32: #{decoder_forward.1} parent=1 // pred_region
      _
    $region33: #{decoder_forward.1} parent=1 // pred_fallthru
      _
    // Predicated region
    $region34: #{decoder_forward.1} parent=1 // pred_check
      _
    $region35: #{decoder_forward.1} parent=1 // pred_check_branch
      %39 = sbr.rel (0) target = $region37
    $region36: #{decoder_forward.1} parent=1 // pred_region
      _
    $region37: #{decoder_forward.1} parent=1 // pred_fallthru
      _
    // Predicated region
    $region38: #{decoder_forward.1} parent=1 // pred_check
      _
    $region39: #{decoder_forward.1} parent=1 // pred_check_branch
      %41 = sbr.rel (0) target = $region41
    $region40: #{decoder_forward.1} parent=1 // pred_region
      _
    $region41: #{decoder_forward.1} parent=1 // pred_fallthru
      _
    // Predicated region
    $region42: #{decoder_forward.1} parent=1 // pred_check
      _
    $region43: #{decoder_forward.1} parent=1 // pred_check_branch
      %43 = sbr.rel (0) target = $region45
    $region44: #{decoder_forward.1} parent=1 // pred_region
      _
    $region45: #{decoder_forward.1} parent=1 // pred_fallthru
      _
    // Predicated region
    $region46: #{decoder_forward.1} parent=1 // pred_check
      _
    $region47: #{decoder_forward.1} parent=1 // pred_check_branch
      %45 = sbr.rel (0) target = $region49
    $region48: #{decoder_forward.1} parent=1 // pred_region
      _
    $region49: #{decoder_forward.1} parent=1 // pred_fallthru
      _
    %v46 = vld [vmem:[%s1] sm:$0xff]
    %v47 = vld [vmem:[%s1 + $0x8] sm:$0xff]
    %v48 = vld [vmem:[%s1 + $0x10] sm:$0xff]
    %v49 = vld [vmem:[%s1 + $0x18] sm:$0xff]
    %v50 = vld [vmem:[%s1 + $0x20] sm:$0xff]
    %v51 = vld [vmem:[%s1 + $0x28] sm:$0xff]
    %v52 = vld [vmem:[%s1 + $0x30] sm:$0xff]
    %v53 = vld [vmem:[%s1 + $0x38] sm:$0xff]
    %v54 = vld [vmem:[%s2] sm:$0xff]
    %vm55 = vcmp.gt.f32.partialorder %v54, 0.0
    %v56 = vld [vmem:[%s4] sm:$0xff]
    %v57 = vld [vmem:[%s4 + $0x8] sm:$0xff]
    %v58 = vld [vmem:[%s4 + $0x10] sm:$0xff]
    %v59 = vld [vmem:[%s4 + $0x18] sm:$0xff]
    %v60 = vld [vmem:[%s4 + $0x20] sm:$0xff]
    %v61 = vld [vmem:[%s4 + $0x28] sm:$0xff]
    %v62 = vld [vmem:[%s4 + $0x30] sm:$0xff]
    %v63 = vld [vmem:[%s4 + $0x38] sm:$0xff]
    %v64 = vld [vmem:[%s4 + $0x40] sm:$0xff]
    %v65 = vld [vmem:[%s4 + $0x48] sm:$0xff]
    %v66 = vld [vmem:[%s4 + $0x50] sm:$0xff]
    %v67 = vld [vmem:[%s4 + $0x58] sm:$0xff]
    %v68 = vld [vmem:[%s4 + $0x60] sm:$0xff]
    %v69 = vld [vmem:[%s4 + $0x68] sm:$0xff]
    %v70 = vld [vmem:[%s4 + $0x70] sm:$0xff]
    %v71 = vld [vmem:[%s4 + $0x78] sm:$0xff]
    %72 = vmatprep.subr.mxu0 0.0
    %73 = vmatpush1.msra.mxu0 %v71
    %74 = vmatprep.subr.mxu0 0.0
    %75 = vmatpush1.msra.mxu0 %v70
    %76 = vmatprep.subr.mxu0 0.0
    %77 = vmatpush1.msra.mxu0 %v69
    %78 = vmatprep.subr.mxu0 0.0
    %79 = vmatpush1.msra.mxu0 %v68
    %80 = vmatprep.subr.mxu0 0.0
    %81 = vmatpush1.msra.mxu0 %v67
    %82 = vmatprep.subr.mxu0 0.0
    %83 = vmatpush1.msra.mxu0 %v66
    %84 = vmatprep.subr.mxu0 0.0
    %85 = vmatpush1.msra.mxu0 %v65
    %86 = vmatprep.subr.mxu0 0.0
    %87 = vmatpush1.msra.mxu0 %v64
    %88 = vmatprep.subr.mxu0 0.0
    %89 = vmatpush1.msra.mxu0 %v63
    %90 = vmatprep.subr.mxu0 0.0
    %91 = vmatpush1.msra.mxu0 %v62
    %92 = vmatprep.subr.mxu0 0.0
    %93 = vmatpush1.msra.mxu0 %v61
    %94 = vmatprep.subr.mxu0 0.0
    %95 = vmatpush1.msra.mxu0 %v60
    %96 = vmatprep.subr.mxu0 0.0
    %97 = vmatpush1.msra.mxu0 %v59
    %98 = vmatprep.subr.mxu0 0.0
    %99 = vmatpush1.msra.mxu0 %v58
    %100 = vmatprep.subr.mxu0 0.0
    %101 = vmatpush1.msra.mxu0 %v57
    %102 = vmatprep.subr.mxu0 0.0
    %103 = vmatpush1.msra.mxu0 %v56
    %104 = vmatprep.subr.mxu0 0.0
    %105 = vmatpush2.msra.mxu0 0.0
    %106 = vmatprep.subr.mxu0 0.0
    %107 = vmatpush2.msra.mxu0 0.0
    %108 = vmatprep.subr.mxu0 0.0
    %109 = vmatpush2.msra.mxu0 0.0
    %110 = vmatprep.subr.mxu0 0.0
    %111 = vmatpush2.msra.mxu0 0.0
    %112 = vmatprep.subr.mxu0 0.0
    %113 = vmatpush2.msra.mxu0 0.0
    %114 = vmatprep.subr.mxu0 0.0
    %115 = vmatpush2.msra.mxu0 0.0
    %116 = vmatprep.subr.mxu0 0.0
    %117 = vmatpush2.msra.mxu0 0.0
    %118 = vmatprep.subr.mxu0 0.0
    %119 = vmatpush2.msra.mxu0 0.0
    %120 = vmatprep.subr.mxu0 0.0
    %121 = vmatpush2.msra.mxu0 0.0
    %122 = vmatprep.subr.mxu0 0.0
    %123 = vmatpush2.msra.mxu0 0.0
    %124 = vmatprep.subr.mxu0 0.0
    %125 = vmatpush2.msra.mxu0 0.0
    %126 = vmatprep.subr.mxu0 0.0
    %127 = vmatpush2.msra.mxu0 0.0
    %128 = vmatprep.subr.mxu0 0.0
    %129 = vmatpush2.msra.mxu0 0.0
    %130 = vmatprep.subr.mxu0 0.0
    %131 = vmatpush2.msra.mxu0 0.0
    %132 = vmatprep.subr.mxu0 0.0
    %133 = vmatpush2.msra.mxu0 0.0
    %134 = vmatprep.subr.mxu0 0.0
    %135 = vmatpush2.msra.mxu0 0.0
    %136 = vmatprep.mubr.f32.mxu0 0.0
    %137 = vmatmul.mubr.f32.gmra.mxu0 %v46
    %v138 = vpop.f32.mrf.mxu0
    %v139 = vadd.f32 0.0, %v138
    %v140 = vpop.f32.mrf.mxu0
    %141 = vmatprep.mubr.f32.mxu0 0.0
    %142 = vmatmul.mubr.f32.gmra.mxu0 %v47
    %v143 = vpop.f32.mrf.mxu0
    %v144 = vadd.f32 0.0, %v143
    %v145 = vpop.f32.mrf.mxu0
    %146 = vmatprep.mubr.f32.mxu0 0.0
    %147 = vmatmul.mubr.f32.gmra.mxu0 %v48
    %v148 = vpop.f32.mrf.mxu0
    %v149 = vadd.f32 0.0, %v148
    %v150 = vpop.f32.mrf.mxu0
    %151 = vmatprep.mubr.f32.mxu0 0.0
    %152 = vmatmul.mubr.f32.gmra.mxu0 %v49
    %v153 = vpop.f32.mrf.mxu0
    %v154 = vadd.f32 0.0, %v153
    %v155 = vpop.f32.mrf.mxu0
    %156 = vmatprep.mubr.f32.mxu0 0.0
    %157 = vmatmul.mubr.f32.gmra.mxu0 %v50
    %v158 = vpop.f32.mrf.mxu0
    %v159 = vadd.f32 0.0, %v158
    %v160 = vpop.f32.mrf.mxu0
    %161 = vmatprep.mubr.f32.mxu0 0.0
    %162 = vmatmul.mubr.f32.gmra.mxu0 %v51
    %v163 = vpop.f32.mrf.mxu0
    %v164 = vadd.f32 0.0, %v163
    %v165 = vpop.f32.mrf.mxu0
    %166 = vmatprep.mubr.f32.mxu0 0.0
    %167 = vmatmul.mubr.f32.gmra.mxu0 %v52
    %v168 = vpop.f32.mrf.mxu0
    %v169 = vadd.f32 0.0, %v168
    %v170 = vpop.f32.mrf.mxu0
    %171 = vmatprep.mubr.f32.mxu0 0.0
    %172 = vmatmul.mubr.f32.gmra.mxu0 %v53
    %v173 = vpop.f32.mrf.mxu0
    %v174 = vadd.f32 0.0, %v173
    %v175 = vpop.f32.mrf.mxu0
    %176 = vdwg.mxu0
    %v177 = vld [vmem:[%s5] sm:$0x1]
    %v178 = vld [vmem:[%s8] sm:$0x7]
    %v180 = vlaneseq
    %v181 = vshrl.u32 %v180, 7
    %v182 = vsub.s32 0, %v181
    %v183 = vrot.slane %v178, %v182
    %v184 = vlaneseq
    %v185 = vshrl.u32 %v184, 7
    %v186 = vsub.s32 1, %v185
    %v187 = vrot.slane %v178, %v186
    %v188 = vlaneseq
    %v189 = vshrl.u32 %v188, 7
    %v190 = vsub.s32 2, %v189
    %v191 = vrot.slane %v178, %v190
    %v195 = vld [vmem:[%s9] sm:$0x7]
    %v197 = vlaneseq
    %v198 = vshrl.u32 %v197, 7
    %v199 = vsub.s32 0, %v198
    %v200 = vrot.slane %v195, %v199
    %v201 = vlaneseq
    %v202 = vshrl.u32 %v201, 7
    %v203 = vsub.s32 1, %v202
    %v204 = vrot.slane %v195, %v203
    %v205 = vlaneseq
    %v206 = vshrl.u32 %v205, 7
    %v207 = vsub.s32 2, %v206
    %v208 = vrot.slane %v195, %v207
    %v212 = vld [vmem:[%s11] sm:$0x1]
    %v214 = vlaneseq
    %v215 = vshrl.u32 %v214, 7
    %v216 = vsub.s32 0, %v215
    %v217 = vrot.slane %v212, %v216
    %v219 = vld [vmem:[%s3] sm:$0xff]
    %v220 = vld [vmem:[%s6] sm:$0xff]
    %v221 = vld [vmem:[%s6 + $0x8] sm:$0xff]
    %v222 = vld [vmem:[%s6 + $0x10] sm:$0xff]
    %v223 = vld [vmem:[%s6 + $0x18] sm:$0xff]
    %v224 = vld [vmem:[%s6 + $0x20] sm:$0xff]
    %v225 = vld [vmem:[%s6 + $0x28] sm:$0xff]
    %v226 = vld [vmem:[%s6 + $0x30] sm:$0xff]
    %v227 = vld [vmem:[%s6 + $0x38] sm:$0xff]
    %v228 = vld [vmem:[%s6 + $0x40] sm:$0xff]
    %v229 = vld [vmem:[%s6 + $0x48] sm:$0xff]
    %v230 = vld [vmem:[%s6 + $0x50] sm:$0xff]
    %v231 = vld [vmem:[%s6 + $0x58] sm:$0xff]
    %v232 = vld [vmem:[%s6 + $0x60] sm:$0xff]
    %v233 = vld [vmem:[%s6 + $0x68] sm:$0xff]
    %v234 = vld [vmem:[%s6 + $0x70] sm:$0xff]
    %v235 = vld [vmem:[%s6 + $0x78] sm:$0xff]
    %v236 = vld [vmem:[%s6 + $0x80] sm:$0xff]
    %v237 = vld [vmem:[%s6 + $0x88] sm:$0xff]
    %v238 = vld [vmem:[%s6 + $0x90] sm:$0xff]
    %v239 = vld [vmem:[%s6 + $0x98] sm:$0xff]
    %v240 = vld [vmem:[%s6 + $0xa0] sm:$0xff]
    %v241 = vld [vmem:[%s6 + $0xa8] sm:$0xff]
    %v242 = vld [vmem:[%s6 + $0xb0] sm:$0xff]
    %v243 = vld [vmem:[%s6 + $0xb8] sm:$0xff]
    %v244 = vld [vmem:[%s6 + $0xc0] sm:$0xff]
    %v245 = vld [vmem:[%s6 + $0xc8] sm:$0xff]
    %v246 = vld [vmem:[%s6 + $0xd0] sm:$0xff]
    %v247 = vld [vmem:[%s6 + $0xd8] sm:$0xff]
    %v248 = vld [vmem:[%s6 + $0xe0] sm:$0xff]
    %v249 = vld [vmem:[%s6 + $0xe8] sm:$0xff]
    %v250 = vld [vmem:[%s6 + $0xf0] sm:$0xff]
    %v251 = vld [vmem:[%s6 + $0xf8] sm:$0xff]
    %v252 = vld [vmem:[%s6 + $0x100] sm:$0xff]
    %v253 = vld [vmem:[%s6 + $0x108] sm:$0xff]
    %v254 = vld [vmem:[%s6 + $0x110] sm:$0xff]
    %v255 = vld [vmem:[%s6 + $0x118] sm:$0xff]
    %v256 = vld [vmem:[%s6 + $0x120] sm:$0xff]
    %v257 = vld [vmem:[%s6 + $0x128] sm:$0xff]
    %v258 = vld [vmem:[%s6 + $0x130] sm:$0xff]
    %v259 = vld [vmem:[%s6 + $0x138] sm:$0xff]
    %v260 = vld [vmem:[%s6 + $0x140] sm:$0xff]
    %v261 = vld [vmem:[%s6 + $0x148] sm:$0xff]
    %v262 = vld [vmem:[%s6 + $0x150] sm:$0xff]
    %v263 = vld [vmem:[%s6 + $0x158] sm:$0xff]
    %v264 = vld [vmem:[%s6 + $0x160] sm:$0xff]
    %v265 = vld [vmem:[%s6 + $0x168] sm:$0xff]
    %v266 = vld [vmem:[%s6 + $0x170] sm:$0xff]
    %v267 = vld [vmem:[%s6 + $0x178] sm:$0xff]
    %v268 = vld [vmem:[%s6 + $0x180] sm:$0xff]
    %v269 = vld [vmem:[%s6 + $0x188] sm:$0xff]
    %v270 = vld [vmem:[%s6 + $0x190] sm:$0xff]
    %v271 = vld [vmem:[%s6 + $0x198] sm:$0xff]
    %v272 = vld [vmem:[%s6 + $0x1a0] sm:$0xff]
    %v273 = vld [vmem:[%s6 + $0x1a8] sm:$0xff]
    %v274 = vld [vmem:[%s6 + $0x1b0] sm:$0xff]
    %v275 = vld [vmem:[%s6 + $0x1b8] sm:$0xff]
    %v276 = vld [vmem:[%s6 + $0x1c0] sm:$0xff]
    %v277 = vld [vmem:[%s6 + $0x1c8] sm:$0xff]
    %v278 = vld [vmem:[%s6 + $0x1d0] sm:$0xff]
    %v279 = vld [vmem:[%s6 + $0x1d8] sm:$0xff]
    %v280 = vld [vmem:[%s6 + $0x1e0] sm:$0xff]
    %v281 = vld [vmem:[%s6 + $0x1e8] sm:$0xff]
    %v282 = vld [vmem:[%s6 + $0x1f0] sm:$0xff]
    %v283 = vld [vmem:[%s6 + $0x1f8] sm:$0xff]
    %284 = vmatprep.subr.mxu0 %v281
    %285 = vmatpush1.msra.mxu0 %v280
    %286 = vmatprep.subr.mxu0 %v277
    %287 = vmatpush1.msra.mxu0 %v276
    %288 = vmatprep.subr.mxu0 %v273
    %289 = vmatpush1.msra.mxu0 %v272
    %290 = vmatprep.subr.mxu0 %v269
    %291 = vmatpush1.msra.mxu0 %v268
    %292 = vmatprep.subr.mxu0 %v265
    %293 = vmatpush1.msra.mxu0 %v264
    %294 = vmatprep.subr.mxu0 %v261
    %295 = vmatpush1.msra.mxu0 %v260
    %296 = vmatprep.subr.mxu0 %v257
    %297 = vmatpush1.msra.mxu0 %v256
    %298 = vmatprep.subr.mxu0 %v253
    %299 = vmatpush1.msra.mxu0 %v252
    %300 = vmatprep.subr.mxu0 %v249
    %301 = vmatpush1.msra.mxu0 %v248
    %302 = vmatprep.subr.mxu0 %v245
    %303 = vmatpush1.msra.mxu0 %v244
    %304 = vmatprep.subr.mxu0 %v241
    %305 = vmatpush1.msra.mxu0 %v240
    %306 = vmatprep.subr.mxu0 %v237
    %307 = vmatpush1.msra.mxu0 %v236
    %308 = vmatprep.subr.mxu0 %v233
    %309 = vmatpush1.msra.mxu0 %v232
    %310 = vmatprep.subr.mxu0 %v229
    %311 = vmatpush1.msra.mxu0 %v228
    %312 = vmatprep.subr.mxu0 %v225
    %313 = vmatpush1.msra.mxu0 %v224
    %314 = vmatprep.subr.mxu0 %v221
    %315 = vmatpush1.msra.mxu0 %v220
    %316 = vmatprep.subr.mxu0 0.0
    %317 = vmatpush2.msra.mxu0 0.0
    %318 = vmatprep.subr.mxu0 0.0
    %319 = vmatpush2.msra.mxu0 0.0
    %320 = vmatprep.subr.mxu0 0.0
    %321 = vmatpush2.msra.mxu0 0.0
    %322 = vmatprep.subr.mxu0 0.0
    %323 = vmatpush2.msra.mxu0 0.0
    %324 = vmatprep.subr.mxu0 0.0
    %325 = vmatpush2.msra.mxu0 0.0
    %326 = vmatprep.subr.mxu0 0.0
    %327 = vmatpush2.msra.mxu0 0.0
    %328 = vmatprep.subr.mxu0 0.0
    %329 = vmatpush2.msra.mxu0 0.0
    %330 = vmatprep.subr.mxu0 0.0
    %331 = vmatpush2.msra.mxu0 0.0
    %332 = vmatprep.subr.mxu0 0.0
    %333 = vmatpush2.msra.mxu0 0.0
    %334 = vmatprep.subr.mxu0 0.0
    %335 = vmatpush2.msra.mxu0 0.0
    %336 = vmatprep.subr.mxu0 0.0
    %337 = vmatpush2.msra.mxu0 0.0
    %338 = vmatprep.subr.mxu0 0.0
    %339 = vmatpush2.msra.mxu0 0.0
    %340 = vmatprep.subr.mxu0 0.0
    %341 = vmatpush2.msra.mxu0 0.0
    %342 = vmatprep.subr.mxu0 0.0
    %343 = vmatpush2.msra.mxu0 0.0
    %344 = vmatprep.subr.mxu0 0.0
    %345 = vmatpush2.msra.mxu0 0.0
    %346 = vmatprep.subr.mxu0 0.0
    %347 = vmatpush2.msra.mxu0 0.0
    %348 = vmatprep.mubr.f32.mxu0 0.0
    %349 = vmatmul.mubr.f32.gmra.mxu0 %v219
    %v350 = vpop.f32.mrf.mxu0
    %v351 = vadd.f32 0.0, %v350
    %v352 = vpop.f32.mrf.mxu0
    %v353 = vadd.f32 0.0, %v352
    %354 = vdwg.mxu0
    %355 = vmatprep.subr.mxu0 %v283
    %356 = vmatpush1.msra.mxu0 %v282
    %357 = vmatprep.subr.mxu0 %v279
    %358 = vmatpush1.msra.mxu0 %v278
    %359 = vmatprep.subr.mxu0 %v275
    %360 = vmatpush1.msra.mxu0 %v274
    %361 = vmatprep.subr.mxu0 %v271
    %362 = vmatpush1.msra.mxu0 %v270
    %363 = vmatprep.subr.mxu0 %v267
    %364 = vmatpush1.msra.mxu0 %v266
    %365 = vmatprep.subr.mxu0 %v263
    %366 = vmatpush1.msra.mxu0 %v262
    %367 = vmatprep.subr.mxu0 %v259
    %368 = vmatpush1.msra.mxu0 %v258
    %369 = vmatprep.subr.mxu0 %v255
    %370 = vmatpush1.msra.mxu0 %v254
    %371 = vmatprep.subr.mxu0 %v251
    %372 = vmatpush1.msra.mxu0 %v250
    %373 = vmatprep.subr.mxu0 %v247
    %374 = vmatpush1.msra.mxu0 %v246
    %375 = vmatprep.subr.mxu0 %v243
    %376 = vmatpush1.msra.mxu0 %v242
    %377 = vmatprep.subr.mxu0 %v239
    %378 = vmatpush1.msra.mxu0 %v238
    %379 = vmatprep.subr.mxu0 %v235
    %380 = vmatpush1.msra.mxu0 %v234
    %381 = vmatprep.subr.mxu0 %v231
    %382 = vmatpush1.msra.mxu0 %v230
    %383 = vmatprep.subr.mxu0 %v227
    %384 = vmatpush1.msra.mxu0 %v226
    %385 = vmatprep.subr.mxu0 %v223
    %386 = vmatpush1.msra.mxu0 %v222
    %387 = vmatprep.subr.mxu0 0.0
    %388 = vmatpush2.msra.mxu0 0.0
    %389 = vmatprep.subr.mxu0 0.0
    %390 = vmatpush2.msra.mxu0 0.0
    %391 = vmatprep.subr.mxu0 0.0
    %392 = vmatpush2.msra.mxu0 0.0
    %393 = vmatprep.subr.mxu0 0.0
    %394 = vmatpush2.msra.mxu0 0.0
    %395 = vmatprep.subr.mxu0 0.0
    %396 = vmatpush2.msra.mxu0 0.0
    %397 = vmatprep.subr.mxu0 0.0
    %398 = vmatpush2.msra.mxu0 0.0
    %399 = vmatprep.subr.mxu0 0.0
    %400 = vmatpush2.msra.mxu0 0.0
    %401 = vmatprep.subr.mxu0 0.0
    %402 = vmatpush2.msra.mxu0 0.0
    %403 = vmatprep.subr.mxu0 0.0
    %404 = vmatpush2.msra.mxu0 0.0
    %405 = vmatprep.subr.mxu0 0.0
    %406 = vmatpush2.msra.mxu0 0.0
    %407 = vmatprep.subr.mxu0 0.0
    %408 = vmatpush2.msra.mxu0 0.0
    %409 = vmatprep.subr.mxu0 0.0
    %410 = vmatpush2.msra.mxu0 0.0
    %411 = vmatprep.subr.mxu0 0.0
    %412 = vmatpush2.msra.mxu0 0.0
    %413 = vmatprep.subr.mxu0 0.0
    %414 = vmatpush2.msra.mxu0 0.0
    %415 = vmatprep.subr.mxu0 0.0
    %416 = vmatpush2.msra.mxu0 0.0
    %417 = vmatprep.subr.mxu0 0.0
    %418 = vmatpush2.msra.mxu0 0.0
    %419 = vmatprep.mubr.f32.mxu0 0.0
    %420 = vmatmul.mubr.f32.gmra.mxu0 %v219
    %v421 = vpop.f32.mrf.mxu0
    %v422 = vadd.f32 0.0, %v421
    %v423 = vpop.f32.mrf.mxu0
    %v424 = vadd.f32 0.0, %v423
    %425 = vdwg.mxu0
    %v426 = vadd.f32 %v353, %v200
    %v427 = vadd.f32 %v422, %v204
    %v428 = vadd.f32 %v424, %v208
    %v430 = vcombine.high %v351, %v351
    %v432 = vunpack.c.l.s4 1966171168
    %v433 = vunpack.c.0.s8 %v432
    %v434 = vlaneseq
    %v435 = vshrl.u32 %v434, 7
    %v436 = vsub.s32 %v433, %v435
    %v437 = vrot.slane %v351, %v436
    %v439 = vunpack.c.l.s4 1966171168
    %v440 = vunpack.c.0.s8 %v439
    %v441 = vlaneseq
    %v442 = vshrl.u32 %v441, 7
    %v443 = vsub.s32 %v440, %v442
    %v444 = vrot.slane %v430, %v443
    %v445 = vcombine.high %v437, %v437
    %v446 = vcombine.high %v444, %v444
    %v448 = vunpack.c.l.s4 1966171168
    %v449 = vunpack.c.0.s8 %v448
    %v450 = vlaneseq
    %v451 = vshrl.u32 %v450, 7
    %v452 = vsub.s32 %v449, %v451
    %v453 = vrot.slane %v437, %v452
    %v455 = vunpack.c.l.s4 1966171168
    %v456 = vunpack.c.0.s8 %v455
    %v457 = vlaneseq
    %v458 = vshrl.u32 %v457, 7
    %v459 = vsub.s32 %v456, %v458
    %v460 = vrot.slane %v444, %v459
    %v462 = vunpack.c.l.s4 1966171168
    %v463 = vunpack.c.0.s8 %v462
    %v464 = vlaneseq
    %v465 = vshrl.u32 %v464, 7
    %v466 = vsub.s32 %v463, %v465
    %v467 = vrot.slane %v445, %v466
    %v469 = vunpack.c.l.s4 1966171168
    %v470 = vunpack.c.0.s8 %v469
    %v471 = vlaneseq
    %v472 = vshrl.u32 %v471, 7
    %v473 = vsub.s32 %v470, %v472
    %v474 = vrot.slane %v446, %v473
    %v475 = vcombine.high %v453, %v453
    %v476 = vcombine.high %v460, %v460
    %v477 = vcombine.high %v467, %v467
    %v478 = vcombine.high %v474, %v474
    %v479 = vlaneseq
    %v480 = vshrl.u32 %v479, 7
    %v481 = vsub.s32 0, %v480
    %v482 = vrot.slane %v453, %v481
    %v483 = vlaneseq
    %v484 = vshrl.u32 %v483, 7
    %v485 = vsub.s32 0, %v484
    %v486 = vrot.slane %v467, %v485
    %v487 = vlaneseq
    %v488 = vshrl.u32 %v487, 7
    %v489 = vsub.s32 0, %v488
    %v490 = vrot.slane %v475, %v489
    %v491 = vlaneseq
    %v492 = vshrl.u32 %v491, 7
    %v493 = vsub.s32 0, %v492
    %v494 = vrot.slane %v477, %v493
    %v495 = vlaneseq
    %v496 = vshrl.u32 %v495, 7
    %v497 = vsub.s32 0, %v496
    %v498 = vrot.slane %v460, %v497
    %v499 = vlaneseq
    %v500 = vshrl.u32 %v499, 7
    %v501 = vsub.s32 0, %v500
    %v502 = vrot.slane %v474, %v501
    %v503 = vlaneseq
    %v504 = vshrl.u32 %v503, 7
    %v505 = vsub.s32 0, %v504
    %v506 = vrot.slane %v476, %v505
    %v507 = vlaneseq
    %v508 = vshrl.u32 %v507, 7
    %v509 = vsub.s32 0, %v508
    %v510 = vrot.slane %v478, %v509
    %v519 = vadd.f32 %v482, %v139
    %v520 = vadd.f32 %v486, %v144
    %v521 = vadd.f32 %v490, %v149
    %v522 = vadd.f32 %v494, %v154
    %v523 = vadd.f32 %v498, %v159
    %v524 = vadd.f32 %v502, %v164
    %v525 = vadd.f32 %v506, %v169
    %v526 = vadd.f32 %v510, %v174
    %v527 = vtanh.pop %v519
    %v528 = vtanh.pop %v520
    %v529 = vtanh.pop %v521
    %v530 = vtanh.pop %v522
    %v531 = vtanh.pop %v523
    %v532 = vtanh.pop %v524
    %v533 = vtanh.pop %v525
    %v534 = vtanh.pop %v526
    %v536 = vlaneseq
    %v537 = vshrl.u32 %v536, 7
    %v538 = vsub.s32 0, %v537
    %v539 = vrot.slane %v177, %v538
    %v541 = vmul.f32 %v527, %v539
    %v542 = vmul.f32 %v528, %v539
    %v543 = vmul.f32 %v529, %v539
    %v544 = vmul.f32 %v530, %v539
    %v545 = vmul.f32 %v531, %v539
    %v546 = vmul.f32 %v532, %v539
    %v547 = vmul.f32 %v533, %v539
    %v548 = vmul.f32 %v534, %v539
    %549 = vadd.xlane.f32.xlu0 %v541
    %v550 = vpop.xlane.xlu0 %549
    %551 = vadd.xlane.f32.xlu0 %v542
    %v552 = vpop.xlane.xlu0 %551
    %553 = vadd.xlane.f32.xlu0 %v543
    %v554 = vpop.xlane.xlu0 %553
    %555 = vadd.xlane.f32.xlu0 %v544
    %v556 = vpop.xlane.xlu0 %555
    %557 = vadd.xlane.f32.xlu0 %v545
    %v558 = vpop.xlane.xlu0 %557
    %559 = vadd.xlane.f32.xlu0 %v546
    %v560 = vpop.xlane.xlu0 %559
    %561 = vadd.xlane.f32.xlu0 %v547
    %v562 = vpop.xlane.xlu0 %561
    %563 = vadd.xlane.f32.xlu0 %v548
    %v564 = vpop.xlane.xlu0 %563
    %v573 = vlaneseq
    %v574 = vand.u32 %v573, 127
    %v575 = vlaneseq
    %v576 = vshrl.u32 %v575, 7
    %v577 = vsub.s32 %v574, %v576
    %v578 = vrot.slane %v550, %v577
    %v579 = vlaneseq
    %v580 = vshrl.u32 %v579, 7
    %v581 = vsub.s32 %v574, %v580
    %v582 = vrot.slane %v552, %v581
    %v583 = vlaneseq
    %v584 = vshrl.u32 %v583, 7
    %v585 = vsub.s32 %v574, %v584
    %v586 = vrot.slane %v554, %v585
    %v587 = vlaneseq
    %v588 = vshrl.u32 %v587, 7
    %v589 = vsub.s32 %v574, %v588
    %v590 = vrot.slane %v556, %v589
    %v591 = vlaneseq
    %v592 = vshrl.u32 %v591, 7
    %v593 = vsub.s32 %v574, %v592
    %v594 = vrot.slane %v558, %v593
    %v595 = vlaneseq
    %v596 = vshrl.u32 %v595, 7
    %v597 = vsub.s32 %v574, %v596
    %v598 = vrot.slane %v560, %v597
    %v599 = vlaneseq
    %v600 = vshrl.u32 %v599, 7
    %v601 = vsub.s32 %v574, %v600
    %v602 = vrot.slane %v562, %v601
    %v603 = vlaneseq
    %v604 = vshrl.u32 %v603, 7
    %v605 = vsub.s32 %v574, %v604
    %v606 = vrot.slane %v564, %v605
    %vm607 = vcmask 1041409
    %v608 = vsel %vm607, %v582, %v578
    %vm609 = vcmask 1042434
    %v610 = vsel %vm609, %v586, %v608
    %vm611 = vcmask 1043459
    %v612 = vsel %vm611, %v590, %v610
    %vm613 = vcmask 1044484
    %v614 = vsel %vm613, %v594, %v612
    %vm615 = vcmask 1045509
    %v616 = vsel %vm615, %v598, %v614
    %vm617 = vcmask 1046534
    %v618 = vsel %vm617, %v602, %v616
    %vm619 = vcmask 1047559
    %v620 = vsel %vm619, %v606, %v618
    %v622 = vsel %vm55, %v620, -1e+09
    %vm623 = vcmask 64512
    %v624 = vsel %vm623, %v622, -inf
    %625 = vmax.xlane.f32.xlu0 %v624
    %v626 = vpop.xlane.xlu0 %625
    %v627 = vsub.f32 %v622, %v626
    %v628 = vmul.f32 %v627, 1.442695
    %v629 = vpow.pop %v628
    %v630 = vsel %vm623, %v629, 0.0
    %631 = vadd.xlane.f32.xlu0 %v630
    %v632 = vpop.xlane.xlu0 %631
    %v633 = vrcp.pop %v632
    %v634 = vmul.f32 %v629, %v633
    %v635 = vlaneseq
    %v636 = vshrl.u32 %v635, 7
    %v637 = vsub.s32 0, %v636
    %v638 = vrot.slane %v634, %v637
    %640 = vbcast.lane.b32.xlu0 %v638, 256
    %v641 = vpop.permute.xlu0 %640
    %v642 = vlaneseq
    %v643 = vshrl.u32 %v642, 7
    %v644 = vsub.s32 1, %v643
    %v645 = vrot.slane %v634, %v644
    %647 = vbcast.lane.b32.xlu0 %v645, 256
    %v648 = vpop.permute.xlu0 %647
    %v649 = vlaneseq
    %v650 = vshrl.u32 %v649, 7
    %v651 = vsub.s32 2, %v650
    %v652 = vrot.slane %v634, %v651
    %654 = vbcast.lane.b32.xlu0 %v652, 256
    %v655 = vpop.permute.xlu0 %654
    %v656 = vlaneseq
    %v657 = vshrl.u32 %v656, 7
    %v658 = vsub.s32 3, %v657
    %v659 = vrot.slane %v634, %v658
    %661 = vbcast.lane.b32.xlu0 %v659, 256
    %v662 = vpop.permute.xlu0 %661
    %v663 = vlaneseq
    %v664 = vshrl.u32 %v663, 7
    %v665 = vsub.s32 4, %v664
    %v666 = vrot.slane %v634, %v665
    %668 = vbcast.lane.b32.xlu0 %v666, 256
    %v669 = vpop.permute.xlu0 %668
    %v670 = vlaneseq
    %v671 = vshrl.u32 %v670, 7
    %v672 = vsub.s32 5, %v671
    %v673 = vrot.slane %v634, %v672
    %675 = vbcast.lane.b32.xlu0 %v673, 256
    %v676 = vpop.permute.xlu0 %675
    %v677 = vlaneseq
    %v678 = vshrl.u32 %v677, 7
    %v679 = vsub.s32 6, %v678
    %v680 = vrot.slane %v634, %v679
    %682 = vbcast.lane.b32.xlu0 %v680, 256
    %v683 = vpop.permute.xlu0 %682
    %v684 = vlaneseq
    %v685 = vshrl.u32 %v684, 7
    %v686 = vsub.s32 7, %v685
    %v687 = vrot.slane %v634, %v686
    %689 = vbcast.lane.b32.xlu0 %v687, 256
    %v690 = vpop.permute.xlu0 %689
    %v691 = vmul.f32 %v641, %v46
    %v692 = vmul.f32 %v648, %v47
    %v693 = vmul.f32 %v655, %v48
    %v694 = vmul.f32 %v662, %v49
    %v695 = vmul.f32 %v669, %v50
    %v696 = vmul.f32 %v676, %v51
    %v697 = vmul.f32 %v683, %v52
    %v698 = vmul.f32 %v690, %v53
    %v699 = vrot.slane %v691, 4
    %v700 = vadd.f32 %v691, %v699
    %v701 = vrot.slane %v700, 2
    %v702 = vadd.f32 %v700, %v701
    %v703 = vrot.slane %v702, 1
    %v704 = vadd.f32 %v702, %v703
    %v705 = vrot.slane %v692, 4
    %v706 = vadd.f32 %v692, %v705
    %v707 = vrot.slane %v706, 2
    %v708 = vadd.f32 %v706, %v707
    %v709 = vrot.slane %v708, 1
    %v710 = vadd.f32 %v708, %v709
    %v711 = vrot.slane %v693, 4
    %v712 = vadd.f32 %v693, %v711
    %v713 = vrot.slane %v712, 2
    %v714 = vadd.f32 %v712, %v713
    %v715 = vrot.slane %v714, 1
    %v716 = vadd.f32 %v714, %v715
    %v717 = vrot.slane %v694, 4
    %v718 = vadd.f32 %v694, %v717
    %v719 = vrot.slane %v718, 2
    %v720 = vadd.f32 %v718, %v719
    %v721 = vrot.slane %v720, 1
    %v722 = vadd.f32 %v720, %v721
    %v723 = vrot.slane %v695, 4
    %v724 = vadd.f32 %v695, %v723
    %v725 = vrot.slane %v724, 2
    %v726 = vadd.f32 %v724, %v725
    %v727 = vrot.slane %v726, 1
    %v728 = vadd.f32 %v726, %v727
    %v729 = vrot.slane %v696, 4
    %v730 = vadd.f32 %v696, %v729
    %v731 = vrot.slane %v730, 2
    %v732 = vadd.f32 %v730, %v731
    %v733 = vrot.slane %v732, 1
    %v734 = vadd.f32 %v732, %v733
    %v735 = vrot.slane %v697, 4
    %v736 = vadd.f32 %v697, %v735
    %v737 = vrot.slane %v736, 2
    %v738 = vadd.f32 %v736, %v737
    %v739 = vrot.slane %v738, 1
    %v740 = vadd.f32 %v738, %v739
    %v741 = vrot.slane %v698, 4
    %v742 = vadd.f32 %v698, %v741
    %v743 = vrot.slane %v742, 2
    %v744 = vadd.f32 %v742, %v743
    %v745 = vrot.slane %v744, 1
    %v746 = vadd.f32 %v744, %v745
    %v747 = vld [vmem:[%s0] sm:$0xff]
    %v748 = vld [vmem:[%s0 + $0x8] sm:$0xff]
    %v749 = vld [vmem:[%s0 + $0x10] sm:$0xff]
    %v750 = vld [vmem:[%s7] sm:$0xff]
    %v751 = vld [vmem:[%s7 + $0x8] sm:$0xff]
    %v752 = vld [vmem:[%s7 + $0x10] sm:$0xff]
    %v753 = vld [vmem:[%s7 + $0x18] sm:$0xff]
    %v754 = vld [vmem:[%s7 + $0x20] sm:$0xff]
    %v755 = vld [vmem:[%s7 + $0x28] sm:$0xff]
    %v756 = vld [vmem:[%s7 + $0x30] sm:$0xff]
    %v757 = vld [vmem:[%s7 + $0x38] sm:$0xff]
    %v758 = vld [vmem:[%s7 + $0x40] sm:$0xff]
    %v759 = vld [vmem:[%s7 + $0x48] sm:$0xff]
    %v760 = vld [vmem:[%s7 + $0x50] sm:$0xff]
    %v761 = vld [vmem:[%s7 + $0x58] sm:$0xff]
    %v762 = vld [vmem:[%s7 + $0x60] sm:$0xff]
    %v763 = vld [vmem:[%s7 + $0x68] sm:$0xff]
    %v764 = vld [vmem:[%s7 + $0x70] sm:$0xff]
    %v765 = vld [vmem:[%s7 + $0x78] sm:$0xff]
    %v766 = vld [vmem:[%s7 + $0x80] sm:$0xff]
    %v767 = vld [vmem:[%s7 + $0x88] sm:$0xff]
    %v768 = vld [vmem:[%s7 + $0x90] sm:$0xff]
    %v769 = vld [vmem:[%s7 + $0x98] sm:$0xff]
    %v770 = vld [vmem:[%s7 + $0xa0] sm:$0xff]
    %v771 = vld [vmem:[%s7 + $0xa8] sm:$0xff]
    %v772 = vld [vmem:[%s7 + $0xb0] sm:$0xff]
    %v773 = vld [vmem:[%s7 + $0xb8] sm:$0xff]
    %v774 = vld [vmem:[%s7 + $0xc0] sm:$0xff]
    %v775 = vld [vmem:[%s7 + $0xc8] sm:$0xff]
    %v776 = vld [vmem:[%s7 + $0xd0] sm:$0xff]
    %v777 = vld [vmem:[%s7 + $0xd8] sm:$0xff]
    %v778 = vld [vmem:[%s7 + $0xe0] sm:$0xff]
    %v779 = vld [vmem:[%s7 + $0xe8] sm:$0xff]
    %v780 = vld [vmem:[%s7 + $0xf0] sm:$0xff]
    %v781 = vld [vmem:[%s7 + $0xf8] sm:$0xff]
    %v782 = vld [vmem:[%s7 + $0x100] sm:$0xff]
    %v783 = vld [vmem:[%s7 + $0x108] sm:$0xff]
    %v784 = vld [vmem:[%s7 + $0x110] sm:$0xff]
    %v785 = vld [vmem:[%s7 + $0x118] sm:$0xff]
    %v786 = vld [vmem:[%s7 + $0x120] sm:$0xff]
    %v787 = vld [vmem:[%s7 + $0x128] sm:$0xff]
    %v788 = vld [vmem:[%s7 + $0x130] sm:$0xff]
    %v789 = vld [vmem:[%s7 + $0x138] sm:$0xff]
    %v790 = vld [vmem:[%s7 + $0x140] sm:$0xff]
    %v791 = vld [vmem:[%s7 + $0x148] sm:$0xff]
    %v792 = vld [vmem:[%s7 + $0x150] sm:$0xff]
    %v793 = vld [vmem:[%s7 + $0x158] sm:$0xff]
    %v794 = vld [vmem:[%s7 + $0x160] sm:$0xff]
    %v795 = vld [vmem:[%s7 + $0x168] sm:$0xff]
    %v796 = vld [vmem:[%s7 + $0x170] sm:$0xff]
    %v797 = vld [vmem:[%s7 + $0x178] sm:$0xff]
    %v806 = vsel %vm607, %v710, %v704
    %v807 = vsel %vm609, %v716, %v806
    %v808 = vsel %vm611, %v722, %v807
    %v809 = vsel %vm613, %v728, %v808
    %v810 = vsel %vm615, %v734, %v809
    %v811 = vsel %vm617, %v740, %v810
    %v812 = vsel %vm619, %v746, %v811
    %814 = vmatprep.subr.mxu0 %v796
    %815 = vmatpush1.msra.mxu0 %v795
    %816 = vmatprep.subr.mxu0 %v793
    %817 = vmatpush1.msra.mxu0 %v792
    %818 = vmatprep.subr.mxu0 %v790
    %819 = vmatpush1.msra.mxu0 %v789
    %820 = vmatprep.subr.mxu0 %v787
    %821 = vmatpush1.msra.mxu0 %v786
    %822 = vmatprep.subr.mxu0 %v784
    %823 = vmatpush1.msra.mxu0 %v783
    %824 = vmatprep.subr.mxu0 %v781
    %825 = vmatpush1.msra.mxu0 %v780
    %826 = vmatprep.subr.mxu0 %v778
    %827 = vmatpush1.msra.mxu0 %v777
    %828 = vmatprep.subr.mxu0 %v775
    %829 = vmatpush1.msra.mxu0 %v774
    %830 = vmatprep.subr.mxu0 %v772
    %831 = vmatpush1.msra.mxu0 %v771
    %832 = vmatprep.subr.mxu0 %v769
    %833 = vmatpush1.msra.mxu0 %v768
    %834 = vmatprep.subr.mxu0 %v766
    %835 = vmatpush1.msra.mxu0 %v765
    %836 = vmatprep.subr.mxu0 %v763
    %837 = vmatpush1.msra.mxu0 %v762
    %838 = vmatprep.subr.mxu0 %v760
    %839 = vmatpush1.msra.mxu0 %v759
    %840 = vmatprep.subr.mxu0 %v757
    %841 = vmatpush1.msra.mxu0 %v756
    %842 = vmatprep.subr.mxu0 %v754
    %843 = vmatpush1.msra.mxu0 %v753
    %844 = vmatprep.subr.mxu0 %v751
    %845 = vmatpush1.msra.mxu0 %v750
    %846 = vmatprep.subr.mxu0 0.0
    %847 = vmatpush2.msra.mxu0 0.0
    %848 = vmatprep.subr.mxu0 0.0
    %849 = vmatpush2.msra.mxu0 0.0
    %850 = vmatprep.subr.mxu0 0.0
    %851 = vmatpush2.msra.mxu0 0.0
    %852 = vmatprep.subr.mxu0 0.0
    %853 = vmatpush2.msra.mxu0 0.0
    %854 = vmatprep.subr.mxu0 0.0
    %855 = vmatpush2.msra.mxu0 0.0
    %856 = vmatprep.subr.mxu0 0.0
    %857 = vmatpush2.msra.mxu0 0.0
    %858 = vmatprep.subr.mxu0 0.0
    %859 = vmatpush2.msra.mxu0 0.0
    %860 = vmatprep.subr.mxu0 0.0
    %861 = vmatpush2.msra.mxu0 0.0
    %862 = vmatprep.subr.mxu0 0.0
    %863 = vmatpush2.msra.mxu0 0.0
    %864 = vmatprep.subr.mxu0 0.0
    %865 = vmatpush2.msra.mxu0 0.0
    %866 = vmatprep.subr.mxu0 0.0
    %867 = vmatpush2.msra.mxu0 0.0
    %868 = vmatprep.subr.mxu0 0.0
    %869 = vmatpush2.msra.mxu0 0.0
    %870 = vmatprep.subr.mxu0 0.0
    %871 = vmatpush2.msra.mxu0 0.0
    %872 = vmatprep.subr.mxu0 0.0
    %873 = vmatpush2.msra.mxu0 0.0
    %874 = vmatprep.subr.mxu0 0.0
    %875 = vmatpush2.msra.mxu0 0.0
    %876 = vmatprep.subr.mxu0 0.0
    %877 = vmatpush2.msra.mxu0 0.0
    %878 = vmatprep.mubr.f32.mxu0 0.0
    %879 = vmatmul.mubr.f32.gmra.mxu0 %v812
    %v880 = vpop.f32.mrf.mxu0
    %v881 = vadd.f32 0.0, %v880
    %v882 = vpop.f32.mrf.mxu0
    %v883 = vadd.f32 0.0, %v882
    %884 = vdwg.mxu0
    %885 = vmatprep.subr.mxu0 0.0
    %886 = vmatpush1.msra.mxu0 %v797
    %887 = vmatprep.subr.mxu0 0.0
    %888 = vmatpush1.msra.mxu0 %v794
    %889 = vmatprep.subr.mxu0 0.0
    %890 = vmatpush1.msra.mxu0 %v791
    %891 = vmatprep.subr.mxu0 0.0
    %892 = vmatpush1.msra.mxu0 %v788
    %893 = vmatprep.subr.mxu0 0.0
    %894 = vmatpush1.msra.mxu0 %v785
    %895 = vmatprep.subr.mxu0 0.0
    %896 = vmatpush1.msra.mxu0 %v782
    %897 = vmatprep.subr.mxu0 0.0
    %898 = vmatpush1.msra.mxu0 %v779
    %899 = vmatprep.subr.mxu0 0.0
    %900 = vmatpush1.msra.mxu0 %v776
    %901 = vmatprep.subr.mxu0 0.0
    %902 = vmatpush1.msra.mxu0 %v773
    %903 = vmatprep.subr.mxu0 0.0
    %904 = vmatpush1.msra.mxu0 %v770
    %905 = vmatprep.subr.mxu0 0.0
    %906 = vmatpush1.msra.mxu0 %v767
    %907 = vmatprep.subr.mxu0 0.0
    %908 = vmatpush1.msra.mxu0 %v764
    %909 = vmatprep.subr.mxu0 0.0
    %910 = vmatpush1.msra.mxu0 %v761
    %911 = vmatprep.subr.mxu0 0.0
    %912 = vmatpush1.msra.mxu0 %v758
    %913 = vmatprep.subr.mxu0 0.0
    %914 = vmatpush1.msra.mxu0 %v755
    %915 = vmatprep.subr.mxu0 0.0
    %916 = vmatpush1.msra.mxu0 %v752
    %917 = vmatprep.subr.mxu0 0.0
    %918 = vmatpush2.msra.mxu0 0.0
    %919 = vmatprep.subr.mxu0 0.0
    %920 = vmatpush2.msra.mxu0 0.0
    %921 = vmatprep.subr.mxu0 0.0
    %922 = vmatpush2.msra.mxu0 0.0
    %923 = vmatprep.subr.mxu0 0.0
    %924 = vmatpush2.msra.mxu0 0.0
    %925 = vmatprep.subr.mxu0 0.0
    %926 = vmatpush2.msra.mxu0 0.0
    %927 = vmatprep.subr.mxu0 0.0
    %928 = vmatpush2.msra.mxu0 0.0
    %929 = vmatprep.subr.mxu0 0.0
    %930 = vmatpush2.msra.mxu0 0.0
    %931 = vmatprep.subr.mxu0 0.0
    %932 = vmatpush2.msra.mxu0 0.0
    %933 = vmatprep.subr.mxu0 0.0
    %934 = vmatpush2.msra.mxu0 0.0
    %935 = vmatprep.subr.mxu0 0.0
    %936 = vmatpush2.msra.mxu0 0.0
    %937 = vmatprep.subr.mxu0 0.0
    %938 = vmatpush2.msra.mxu0 0.0
    %939 = vmatprep.subr.mxu0 0.0
    %940 = vmatpush2.msra.mxu0 0.0
    %941 = vmatprep.subr.mxu0 0.0
    %942 = vmatpush2.msra.mxu0 0.0
    %943 = vmatprep.subr.mxu0 0.0
    %944 = vmatpush2.msra.mxu0 0.0
    %945 = vmatprep.subr.mxu0 0.0
    %946 = vmatpush2.msra.mxu0 0.0
    %947 = vmatprep.subr.mxu0 0.0
    %948 = vmatpush2.msra.mxu0 0.0
    %949 = vmatprep.mubr.f32.mxu0 0.0
    %950 = vmatmul.mubr.f32.gmra.mxu0 %v812
    %v951 = vpop.f32.mrf.mxu0
    %v952 = vadd.f32 0.0, %v951
    %v953 = vpop.f32.mrf.mxu0
    %954 = vdwg.mxu0
    %v955 = vadd.f32 %v747, %v881
    %v956 = vadd.f32 %v748, %v883
    %v957 = vadd.f32 %v749, %v952
    %v958 = vadd.f32 %v955, %v183
    %v959 = vadd.f32 %v956, %v187
    %v960 = vadd.f32 %v957, %v191
    %v961 = vadd.f32 %v958, %v426
    %v962 = vxor.u32 %v961, 2147483648
    %v963 = vmul.f32 %v962, 1.442695
    %v964 = vpow.pop %v963
    %v965 = vadd.f32 %v964, 1.0
    %v966 = vrcp.pop %v965
    %v967 = vmul.f32 1.0, %v966
    %v968 = vadd.f32 %v959, %v427
    %v969 = vxor.u32 %v968, 2147483648
    %v970 = vmul.f32 %v969, 1.442695
    %v971 = vpow.pop %v970
    %v972 = vadd.f32 %v971, 1.0
    %v973 = vrcp.pop %v972
    %v974 = vmul.f32 1.0, %v973
    %v975 = vmul.f32 %v967, %v428
    %v976 = vadd.f32 %v960, %v975
    %v977 = vtanh.pop %v976
    %v978 = vsub.f32 1.0, %v974
    %v979 = vmul.f32 %v978, %v977
    %v980 = vmul.f32 %v974, %v219
    %v981 = vadd.f32 %v979, %v980
    %v982 = vld [vmem:[%s10] sm:$0xff]
    %v983 = vld [vmem:[%s10 + $0x8] sm:$0xff]
    %v984 = vld [vmem:[%s10 + $0x10] sm:$0xff]
    %v985 = vld [vmem:[%s10 + $0x18] sm:$0xff]
    %v986 = vld [vmem:[%s10 + $0x20] sm:$0xff]
    %v987 = vld [vmem:[%s10 + $0x28] sm:$0xff]
    %v988 = vld [vmem:[%s10 + $0x30] sm:$0xff]
    %v989 = vld [vmem:[%s10 + $0x38] sm:$0xff]
    %v990 = vld [vmem:[%s10 + $0x40] sm:$0xff]
    %v991 = vld [vmem:[%s10 + $0x48] sm:$0xff]
    %v992 = vld [vmem:[%s10 + $0x50] sm:$0xff]
    %v993 = vld [vmem:[%s10 + $0x58] sm:$0xff]
    %v994 = vld [vmem:[%s10 + $0x60] sm:$0xff]
    %v995 = vld [vmem:[%s10 + $0x68] sm:$0xff]
    %v996 = vld [vmem:[%s10 + $0x70] sm:$0xff]
    %v997 = vld [vmem:[%s10 + $0x78] sm:$0xff]
    %998 = vmatprep.subr.mxu0 0.0
    %999 = vmatpush1.msra.mxu0 %v997
    %1000 = vmatprep.subr.mxu0 0.0
    %1001 = vmatpush1.msra.mxu0 %v996
    %1002 = vmatprep.subr.mxu0 0.0
    %1003 = vmatpush1.msra.mxu0 %v995
    %1004 = vmatprep.subr.mxu0 0.0
    %1005 = vmatpush1.msra.mxu0 %v994
    %1006 = vmatprep.subr.mxu0 0.0
    %1007 = vmatpush1.msra.mxu0 %v993
    %1008 = vmatprep.subr.mxu0 0.0
    %1009 = vmatpush1.msra.mxu0 %v992
    %1010 = vmatprep.subr.mxu0 0.0
    %1011 = vmatpush1.msra.mxu0 %v991
    %1012 = vmatprep.subr.mxu0 0.0
    %1013 = vmatpush1.msra.mxu0 %v990
    %1014 = vmatprep.subr.mxu0 0.0
    %1015 = vmatpush1.msra.mxu0 %v989
    %1016 = vmatprep.subr.mxu0 0.0
    %1017 = vmatpush1.msra.mxu0 %v988
    %1018 = vmatprep.subr.mxu0 0.0
    %1019 = vmatpush1.msra.mxu0 %v987
    %1020 = vmatprep.subr.mxu0 0.0
    %1021 = vmatpush1.msra.mxu0 %v986
    %1022 = vmatprep.subr.mxu0 0.0
    %1023 = vmatpush1.msra.mxu0 %v985
    %1024 = vmatprep.subr.mxu0 0.0
    %1025 = vmatpush1.msra.mxu0 %v984
    %1026 = vmatprep.subr.mxu0 0.0
    %1027 = vmatpush1.msra.mxu0 %v983
    %1028 = vmatprep.subr.mxu0 0.0
    %1029 = vmatpush1.msra.mxu0 %v982
    %1030 = vmatprep.subr.mxu0 0.0
    %1031 = vmatpush2.msra.mxu0 0.0
    %1032 = vmatprep.subr.mxu0 0.0
    %1033 = vmatpush2.msra.mxu0 0.0
    %1034 = vmatprep.subr.mxu0 0.0
    %1035 = vmatpush2.msra.mxu0 0.0
    %1036 = vmatprep.subr.mxu0 0.0
    %1037 = vmatpush2.msra.mxu0 0.0
    %1038 = vmatprep.subr.mxu0 0.0
    %1039 = vmatpush2.msra.mxu0 0.0
    %1040 = vmatprep.subr.mxu0 0.0
    %1041 = vmatpush2.msra.mxu0 0.0
    %1042 = vmatprep.subr.mxu0 0.0
    %1043 = vmatpush2.msra.mxu0 0.0
    %1044 = vmatprep.subr.mxu0 0.0
    %1045 = vmatpush2.msra.mxu0 0.0
    %1046 = vmatprep.subr.mxu0 0.0
    %1047 = vmatpush2.msra.mxu0 0.0
    %1048 = vmatprep.subr.mxu0 0.0
    %1049 = vmatpush2.msra.mxu0 0.0
    %1050 = vmatprep.subr.mxu0 0.0
    %1051 = vmatpush2.msra.mxu0 0.0
    %1052 = vmatprep.subr.mxu0 0.0
    %1053 = vmatpush2.msra.mxu0 0.0
    %1054 = vmatprep.subr.mxu0 0.0
    %1055 = vmatpush2.msra.mxu0 0.0
    %1056 = vmatprep.subr.mxu0 0.0
    %1057 = vmatpush2.msra.mxu0 0.0
    %1058 = vmatprep.subr.mxu0 0.0
    %1059 = vmatpush2.msra.mxu0 0.0
    %1060 = vmatprep.subr.mxu0 0.0
    %1061 = vmatpush2.msra.mxu0 0.0
    %1062 = vmatprep.mubr.f32.mxu0 0.0
    %1063 = vmatmul.mubr.f32.gmra.mxu0 %v981
    %v1064 = vpop.f32.mrf.mxu0
    %v1065 = vadd.f32 %v217, %v1064
    %v1066 = vpop.f32.mrf.mxu0
    %1067 = vdwg.mxu0
    %1068 = vmax.xlane.f32.xlu0 %v1065
    %v1069 = vpop.xlane.xlu0 %1068
    %v1070 = vsub.f32 %v1065, %v1069
    %v1071 = vmul.f32 %v1070, 1.442695
    %v1072 = vpow.pop %v1071
    %1073 = vadd.xlane.f32.xlu0 %v1072
    %v1074 = vpop.xlane.xlu0 %1073
    %v1075 = vlog2.pop %v1074
    %v1076 = vmul.f32 %v1075, 0.6931472
    %v1077 = vsub.f32 %v1070, %v1076
    %1078 = vst [vmem:[#allocation2] sm:$0xff] %v1077
    %1079 = vst [vmem:[#allocation4] sm:$0xff] %v812
    %v1080 = vld [vmem:[%s6] sm:$0xff]
    %v1081 = vld [vmem:[%s6 + $0x8] sm:$0xff]
    %v1082 = vld [vmem:[%s6 + $0x10] sm:$0xff]
    %v1083 = vld [vmem:[%s6 + $0x18] sm:$0xff]
    %v1084 = vld [vmem:[%s6 + $0x20] sm:$0xff]
    %v1085 = vld [vmem:[%s6 + $0x28] sm:$0xff]
    %v1086 = vld [vmem:[%s6 + $0x30] sm:$0xff]
    %v1087 = vld [vmem:[%s6 + $0x38] sm:$0xff]
    %v1088 = vld [vmem:[%s6 + $0x40] sm:$0xff]
    %v1089 = vld [vmem:[%s6 + $0x48] sm:$0xff]
    %v1090 = vld [vmem:[%s6 + $0x50] sm:$0xff]
    %v1091 = vld [vmem:[%s6 + $0x58] sm:$0xff]
    %v1092 = vld [vmem:[%s6 + $0x60] sm:$0xff]
    %v1093 = vld [vmem:[%s6 + $0x68] sm:$0xff]
    %v1094 = vld [vmem:[%s6 + $0x70] sm:$0xff]
    %v1095 = vld [vmem:[%s6 + $0x78] sm:$0xff]
    %v1096 = vld [vmem:[%s6 + $0x80] sm:$0xff]
    %v1097 = vld [vmem:[%s6 + $0x88] sm:$0xff]
    %v1098 = vld [vmem:[%s6 + $0x90] sm:$0xff]
    %v1099 = vld [vmem:[%s6 + $0x98] sm:$0xff]
    %v1100 = vld [vmem:[%s6 + $0xa0] sm:$0xff]
    %v1101 = vld [vmem:[%s6 + $0xa8] sm:$0xff]
    %v1102 = vld [vmem:[%s6 + $0xb0] sm:$0xff]
    %v1103 = vld [vmem:[%s6 + $0xb8] sm:$0xff]
    %v1104 = vld [vmem:[%s6 + $0xc0] sm:$0xff]
    %v1105 = vld [vmem:[%s6 + $0xc8] sm:$0xff]
    %v1106 = vld [vmem:[%s6 + $0xd0] sm:$0xff]
    %v1107 = vld [vmem:[%s6 + $0xd8] sm:$0xff]
    %v1108 = vld [vmem:[%s6 + $0xe0] sm:$0xff]
    %v1109 = vld [vmem:[%s6 + $0xe8] sm:$0xff]
    %v1110 = vld [vmem:[%s6 + $0xf0] sm:$0xff]
    %v1111 = vld [vmem:[%s6 + $0xf8] sm:$0xff]
    %v1112 = vld [vmem:[%s6 + $0x100] sm:$0xff]
    %v1113 = vld [vmem:[%s6 + $0x108] sm:$0xff]
    %v1114 = vld [vmem:[%s6 + $0x110] sm:$0xff]
    %v1115 = vld [vmem:[%s6 + $0x118] sm:$0xff]
    %v1116 = vld [vmem:[%s6 + $0x120] sm:$0xff]
    %v1117 = vld [vmem:[%s6 + $0x128] sm:$0xff]
    %v1118 = vld [vmem:[%s6 + $0x130] sm:$0xff]
    %v1119 = vld [vmem:[%s6 + $0x138] sm:$0xff]
    %v1120 = vld [vmem:[%s6 + $0x140] sm:$0xff]
    %v1121 = vld [vmem:[%s6 + $0x148] sm:$0xff]
    %v1122 = vld [vmem:[%s6 + $0x150] sm:$0xff]
    %v1123 = vld [vmem:[%s6 + $0x158] sm:$0xff]
    %v1124 = vld [vmem:[%s6 + $0x160] sm:$0xff]
    %v1125 = vld [vmem:[%s6 + $0x168] sm:$0xff]
    %v1126 = vld [vmem:[%s6 + $0x170] sm:$0xff]
    %v1127 = vld [vmem:[%s6 + $0x178] sm:$0xff]
    %v1128 = vld [vmem:[%s6 + $0x180] sm:$0xff]
    %v1129 = vld [vmem:[%s6 + $0x188] sm:$0xff]
    %v1130 = vld [vmem:[%s6 + $0x190] sm:$0xff]
    %v1131 = vld [vmem:[%s6 + $0x198] sm:$0xff]
    %v1132 = vld [vmem:[%s6 + $0x1a0] sm:$0xff]
    %v1133 = vld [vmem:[%s6 + $0x1a8] sm:$0xff]
    %v1134 = vld [vmem:[%s6 + $0x1b0] sm:$0xff]
    %v1135 = vld [vmem:[%s6 + $0x1b8] sm:$0xff]
    %v1136 = vld [vmem:[%s6 + $0x1c0] sm:$0xff]
    %v1137 = vld [vmem:[%s6 + $0x1c8] sm:$0xff]
    %v1138 = vld [vmem:[%s6 + $0x1d0] sm:$0xff]
    %v1139 = vld [vmem:[%s6 + $0x1d8] sm:$0xff]
    %v1140 = vld [vmem:[%s6 + $0x1e0] sm:$0xff]
    %v1141 = vld [vmem:[%s6 + $0x1e8] sm:$0xff]
    %v1142 = vld [vmem:[%s6 + $0x1f0] sm:$0xff]
    %v1143 = vld [vmem:[%s6 + $0x1f8] sm:$0xff]
    %1144 = vmatprep.subr.mxu0 %v1141
    %1145 = vmatpush1.msra.mxu0 %v1140
    %1146 = vmatprep.subr.mxu0 %v1137
    %1147 = vmatpush1.msra.mxu0 %v1136
    %1148 = vmatprep.subr.mxu0 %v1133
    %1149 = vmatpush1.msra.mxu0 %v1132
    %1150 = vmatprep.subr.mxu0 %v1129
    %1151 = vmatpush1.msra.mxu0 %v1128
    %1152 = vmatprep.subr.mxu0 %v1125
    %1153 = vmatpush1.msra.mxu0 %v1124
    %1154 = vmatprep.subr.mxu0 %v1121
    %1155 = vmatpush1.msra.mxu0 %v1120
    %1156 = vmatprep.subr.mxu0 %v1117
    %1157 = vmatpush1.msra.mxu0 %v1116
    %1158 = vmatprep.subr.mxu0 %v1113
    %1159 = vmatpush1.msra.mxu0 %v1112
    %1160 = vmatprep.subr.mxu0 %v1109
    %1161 = vmatpush1.msra.mxu0 %v1108
    %1162 = vmatprep.subr.mxu0 %v1105
    %1163 = vmatpush1.msra.mxu0 %v1104
    %1164 = vmatprep.subr.mxu0 %v1101
    %1165 = vmatpush1.msra.mxu0 %v1100
    %1166 = vmatprep.subr.mxu0 %v1097
    %1167 = vmatpush1.msra.mxu0 %v1096
    %1168 = vmatprep.subr.mxu0 %v1093
    %1169 = vmatpush1.msra.mxu0 %v1092
    %1170 = vmatprep.subr.mxu0 %v1089
    %1171 = vmatpush1.msra.mxu0 %v1088
    %1172 = vmatprep.subr.mxu0 %v1085
    %1173 = vmatpush1.msra.mxu0 %v1084
    %1174 = vmatprep.subr.mxu0 %v1081
    %1175 = vmatpush1.msra.mxu0 %v1080
    %1176 = vmatprep.subr.mxu0 0.0
    %1177 = vmatpush2.msra.mxu0 0.0
    %1178 = vmatprep.subr.mxu0 0.0
    %1179 = vmatpush2.msra.mxu0 0.0
    %1180 = vmatprep.subr.mxu0 0.0
    %1181 = vmatpush2.msra.mxu0 0.0
    %1182 = vmatprep.subr.mxu0 0.0
    %1183 = vmatpush2.msra.mxu0 0.0
    %1184 = vmatprep.subr.mxu0 0.0
    %1185 = vmatpush2.msra.mxu0 0.0
    %1186 = vmatprep.subr.mxu0 0.0
    %1187 = vmatpush2.msra.mxu0 0.0
    %1188 = vmatprep.subr.mxu0 0.0
    %1189 = vmatpush2.msra.mxu0 0.0
    %1190 = vmatprep.subr.mxu0 0.0
    %1191 = vmatpush2.msra.mxu0 0.0
    %1192 = vmatprep.subr.mxu0 0.0
    %1193 = vmatpush2.msra.mxu0 0.0
    %1194 = vmatprep.subr.mxu0 0.0
    %1195 = vmatpush2.msra.mxu0 0.0
    %1196 = vmatprep.subr.mxu0 0.0
    %1197 = vmatpush2.msra.mxu0 0.0
    %1198 = vmatprep.subr.mxu0 0.0
    %1199 = vmatpush2.msra.mxu0 0.0
    %1200 = vmatprep.subr.mxu0 0.0
    %1201 = vmatpush2.msra.mxu0 0.0
    %1202 = vmatprep.subr.mxu0 0.0
    %1203 = vmatpush2.msra.mxu0 0.0
    %1204 = vmatprep.subr.mxu0 0.0
    %1205 = vmatpush2.msra.mxu0 0.0
    %1206 = vmatprep.subr.mxu0 0.0
    %1207 = vmatpush2.msra.mxu0 0.0
    %1208 = vmatprep.mubr.f32.mxu0 0.0
    %1209 = vmatmul.mubr.f32.gmra.mxu0 %v981
    %v1210 = vpop.f32.mrf.mxu0
    %v1211 = vadd.f32 0.0, %v1210
    %v1212 = vpop.f32.mrf.mxu0
    %v1213 = vadd.f32 0.0, %v1212
    %1214 = vdwg.mxu0
    %1215 = vmatprep.subr.mxu0 %v1143
    %1216 = vmatpush1.msra.mxu0 %v1142
    %1217 = vmatprep.subr.mxu0 %v1139
    %1218 = vmatpush1.msra.mxu0 %v1138
    %1219 = vmatprep.subr.mxu0 %v1135
    %1220 = vmatpush1.msra.mxu0 %v1134
    %1221 = vmatprep.subr.mxu0 %v1131
    %1222 = vmatpush1.msra.mxu0 %v1130
    %1223 = vmatprep.subr.mxu0 %v1127
    %1224 = vmatpush1.msra.mxu0 %v1126
    %1225 = vmatprep.subr.mxu0 %v1123
    %1226 = vmatpush1.msra.mxu0 %v1122
    %1227 = vmatprep.subr.mxu0 %v1119
    %1228 = vmatpush1.msra.mxu0 %v1118
    %1229 = vmatprep.subr.mxu0 %v1115
    %1230 = vmatpush1.msra.mxu0 %v1114
    %1231 = vmatprep.subr.mxu0 %v1111
    %1232 = vmatpush1.msra.mxu0 %v1110
    %1233 = vmatprep.subr.mxu0 %v1107
    %1234 = vmatpush1.msra.mxu0 %v1106
    %1235 = vmatprep.subr.mxu0 %v1103
    %1236 = vmatpush1.msra.mxu0 %v1102
    %1237 = vmatprep.subr.mxu0 %v1099
    %1238 = vmatpush1.msra.mxu0 %v1098
    %1239 = vmatprep.subr.mxu0 %v1095
    %1240 = vmatpush1.msra.mxu0 %v1094
    %1241 = vmatprep.subr.mxu0 %v1091
    %1242 = vmatpush1.msra.mxu0 %v1090
    %1243 = vmatprep.subr.mxu0 %v1087
    %1244 = vmatpush1.msra.mxu0 %v1086
    %1245 = vmatprep.subr.mxu0 %v1083
    %1246 = vmatpush1.msra.mxu0 %v1082
    %1247 = vmatprep.subr.mxu0 0.0
    %1248 = vmatpush2.msra.mxu0 0.0
    %1249 = vmatprep.subr.mxu0 0.0
    %1250 = vmatpush2.msra.mxu0 0.0
    %1251 = vmatprep.subr.mxu0 0.0
    %1252 = vmatpush2.msra.mxu0 0.0
    %1253 = vmatprep.subr.mxu0 0.0
    %1254 = vmatpush2.msra.mxu0 0.0
    %1255 = vmatprep.subr.mxu0 0.0
    %1256 = vmatpush2.msra.mxu0 0.0
    %1257 = vmatprep.subr.mxu0 0.0
    %1258 = vmatpush2.msra.mxu0 0.0
    %1259 = vmatprep.subr.mxu0 0.0
    %1260 = vmatpush2.msra.mxu0 0.0
    %1261 = vmatprep.subr.mxu0 0.0
    %1262 = vmatpush2.msra.mxu0 0.0
    %1263 = vmatprep.subr.mxu0 0.0
    %1264 = vmatpush2.msra.mxu0 0.0
    %1265 = vmatprep.subr.mxu0 0.0
    %1266 = vmatpush2.msra.mxu0 0.0
    %1267 = vmatprep.subr.mxu0 0.0
    %1268 = vmatpush2.msra.mxu0 0.0
    %1269 = vmatprep.subr.mxu0 0.0
    %1270 = vmatpush2.msra.mxu0 0.0
    %1271 = vmatprep.subr.mxu0 0.0
    %1272 = vmatpush2.msra.mxu0 0.0
    %1273 = vmatprep.subr.mxu0 0.0
    %1274 = vmatpush2.msra.mxu0 0.0
    %1275 = vmatprep.subr.mxu0 0.0
    %1276 = vmatpush2.msra.mxu0 0.0
    %1277 = vmatprep.subr.mxu0 0.0
    %1278 = vmatpush2.msra.mxu0 0.0
    %1279 = vmatprep.mubr.f32.mxu0 0.0
    %1280 = vmatmul.mubr.f32.gmra.mxu0 %v981
    %v1281 = vpop.f32.mrf.mxu0
    %v1282 = vadd.f32 0.0, %v1281
    %v1283 = vpop.f32.mrf.mxu0
    %v1284 = vadd.f32 0.0, %v1283
    %1285 = vdwg.mxu0
    %v1286 = vadd.f32 %v1213, %v200
    %v1287 = vadd.f32 %v1282, %v204
    %v1288 = vadd.f32 %v1284, %v208
    %v1290 = vcombine.high %v1211, %v1211
    %v1292 = vunpack.c.l.s4 1966171168
    %v1293 = vunpack.c.0.s8 %v1292
    %v1294 = vlaneseq
    %v1295 = vshrl.u32 %v1294, 7
    %v1296 = vsub.s32 %v1293, %v1295
    %v1297 = vrot.slane %v1211, %v1296
    %v1299 = vunpack.c.l.s4 1966171168
    %v1300 = vunpack.c.0.s8 %v1299
    %v1301 = vlaneseq
    %v1302 = vshrl.u32 %v1301, 7
    %v1303 = vsub.s32 %v1300, %v1302
    %v1304 = vrot.slane %v1290, %v1303
    %v1305 = vcombine.high %v1297, %v1297
    %v1306 = vcombine.high %v1304, %v1304
    %v1308 = vunpack.c.l.s4 1966171168
    %v1309 = vunpack.c.0.s8 %v1308
    %v1310 = vlaneseq
    %v1311 = vshrl.u32 %v1310, 7
    %v1312 = vsub.s32 %v1309, %v1311
    %v1313 = vrot.slane %v1297, %v1312
    %v1315 = vunpack.c.l.s4 1966171168
    %v1316 = vunpack.c.0.s8 %v1315
    %v1317 = vlaneseq
    %v1318 = vshrl.u32 %v1317, 7
    %v1319 = vsub.s32 %v1316, %v1318
    %v1320 = vrot.slane %v1304, %v1319
    %v1322 = vunpack.c.l.s4 1966171168
    %v1323 = vunpack.c.0.s8 %v1322
    %v1324 = vlaneseq
    %v1325 = vshrl.u32 %v1324, 7
    %v1326 = vsub.s32 %v1323, %v1325
    %v1327 = vrot.slane %v1305, %v1326
    %v1329 = vunpack.c.l.s4 1966171168
    %v1330 = vunpack.c.0.s8 %v1329
    %v1331 = vlaneseq
    %v1332 = vshrl.u32 %v1331, 7
    %v1333 = vsub.s32 %v1330, %v1332
    %v1334 = vrot.slane %v1306, %v1333
    %v1335 = vcombine.high %v1313, %v1313
    %v1336 = vcombine.high %v1320, %v1320
    %v1337 = vcombine.high %v1327, %v1327
    %v1338 = vcombine.high %v1334, %v1334
    %v1339 = vlaneseq
    %v1340 = vshrl.u32 %v1339, 7
    %v1341 = vsub.s32 0, %v1340
    %v1342 = vrot.slane %v1313, %v1341
    %v1343 = vlaneseq
    %v1344 = vshrl.u32 %v1343, 7
    %v1345 = vsub.s32 0, %v1344
    %v1346 = vrot.slane %v1327, %v1345
    %v1347 = vlaneseq
    %v1348 = vshrl.u32 %v1347, 7
    %v1349 = vsub.s32 0, %v1348
    %v1350 = vrot.slane %v1335, %v1349
    %v1351 = vlaneseq
    %v1352 = vshrl.u32 %v1351, 7
    %v1353 = vsub.s32 0, %v1352
    %v1354 = vrot.slane %v1337, %v1353
    %v1355 = vlaneseq
    %v1356 = vshrl.u32 %v1355, 7
    %v1357 = vsub.s32 0, %v1356
    %v1358 = vrot.slane %v1320, %v1357
    %v1359 = vlaneseq
    %v1360 = vshrl.u32 %v1359, 7
    %v1361 = vsub.s32 0, %v1360
    %v1362 = vrot.slane %v1334, %v1361
    %v1363 = vlaneseq
    %v1364 = vshrl.u32 %v1363, 7
    %v1365 = vsub.s32 0, %v1364
    %v1366 = vrot.slane %v1336, %v1365
    %v1367 = vlaneseq
    %v1368 = vshrl.u32 %v1367, 7
    %v1369 = vsub.s32 0, %v1368
    %v1370 = vrot.slane %v1338, %v1369
    %v1379 = vadd.f32 %v1342, %v139
    %v1380 = vadd.f32 %v1346, %v144
    %v1381 = vadd.f32 %v1350, %v149
    %v1382 = vadd.f32 %v1354, %v154
    %v1383 = vadd.f32 %v1358, %v159
    %v1384 = vadd.f32 %v1362, %v164
    %v1385 = vadd.f32 %v1366, %v169
    %v1386 = vadd.f32 %v1370, %v174
    %v1387 = vtanh.pop %v1379
    %v1388 = vtanh.pop %v1380
    %v1389 = vtanh.pop %v1381
    %v1390 = vtanh.pop %v1382
    %v1391 = vtanh.pop %v1383
    %v1392 = vtanh.pop %v1384
    %v1393 = vtanh.pop %v1385
    %v1394 = vtanh.pop %v1386
    %v1395 = vmul.f32 %v1387, %v539
    %v1396 = vmul.f32 %v1388, %v539
    %v1397 = vmul.f32 %v1389, %v539
    %v1398 = vmul.f32 %v1390, %v539
    %v1399 = vmul.f32 %v1391, %v539
    %v1400 = vmul.f32 %v1392, %v539
    %v1401 = vmul.f32 %v1393, %v539
    %v1402 = vmul.f32 %v1394, %v539
    %1403 = vadd.xlane.f32.xlu0 %v1395
    %v1404 = vpop.xlane.xlu0 %1403
    %1405 = vadd.xlane.f32.xlu0 %v1396
    %v1406 = vpop.xlane.xlu0 %1405
    %1407 = vadd.xlane.f32.xlu0 %v1397
    %v1408 = vpop.xlane.xlu0 %1407
    %1409 = vadd.xlane.f32.xlu0 %v1398
    %v1410 = vpop.xlane.xlu0 %1409
    %1411 = vadd.xlane.f32.xlu0 %v1399
    %v1412 = vpop.xlane.xlu0 %1411
    %1413 = vadd.xlane.f32.xlu0 %v1400
    %v1414 = vpop.xlane.xlu0 %1413
    %1415 = vadd.xlane.f32.xlu0 %v1401
    %v1416 = vpop.xlane.xlu0 %1415
    %1417 = vadd.xlane.f32.xlu0 %v1402
    %v1418 = vpop.xlane.xlu0 %1417
    %v1427 = vlaneseq
    %v1428 = vshrl.u32 %v1427, 7
    %v1429 = vsub.s32 %v574, %v1428
    %v1430 = vrot.slane %v1404, %v1429
    %v1431 = vlaneseq
    %v1432 = vshrl.u32 %v1431, 7
    %v1433 = vsub.s32 %v574, %v1432
    %v1434 = vrot.slane %v1406, %v1433
    %v1435 = vlaneseq
    %v1436 = vshrl.u32 %v1435, 7
    %v1437 = vsub.s32 %v574, %v1436
    %v1438 = vrot.slane %v1408, %v1437
    %v1439 = vlaneseq
    %v1440 = vshrl.u32 %v1439, 7
    %v1441 = vsub.s32 %v574, %v1440
    %v1442 = vrot.slane %v1410, %v1441
    %v1443 = vlaneseq
    %v1444 = vshrl.u32 %v1443, 7
    %v1445 = vsub.s32 %v574, %v1444
    %v1446 = vrot.slane %v1412, %v1445
    %v1447 = vlaneseq
    %v1448 = vshrl.u32 %v1447, 7
    %v1449 = vsub.s32 %v574, %v1448
    %v1450 = vrot.slane %v1414, %v1449
    %v1451 = vlaneseq
    %v1452 = vshrl.u32 %v1451, 7
    %v1453 = vsub.s32 %v574, %v1452
    %v1454 = vrot.slane %v1416, %v1453
    %v1455 = vlaneseq
    %v1456 = vshrl.u32 %v1455, 7
    %v1457 = vsub.s32 %v574, %v1456
    %v1458 = vrot.slane %v1418, %v1457
    %v1459 = vsel %vm607, %v1434, %v1430
    %v1460 = vsel %vm609, %v1438, %v1459
    %v1461 = vsel %vm611, %v1442, %v1460
    %v1462 = vsel %vm613, %v1446, %v1461
    %v1463 = vsel %vm615, %v1450, %v1462
    %v1464 = vsel %vm617, %v1454, %v1463
    %v1465 = vsel %vm619, %v1458, %v1464
    %v1467 = vsel %vm55, %v1465, -1e+09
    %v1468 = vsel %vm623, %v1467, -inf
    %1469 = vmax.xlane.f32.xlu0 %v1468
    %v1470 = vpop.xlane.xlu0 %1469
    %v1471 = vsub.f32 %v1467, %v1470
    %v1472 = vmul.f32 %v1471, 1.442695
    %v1473 = vpow.pop %v1472
    %v1474 = vsel %vm623, %v1473, 0.0
    %1475 = vadd.xlane.f32.xlu0 %v1474
    %v1476 = vpop.xlane.xlu0 %1475
    %v1477 = vrcp.pop %v1476
    %v1478 = vmul.f32 %v1473, %v1477
    %v1479 = vlaneseq
    %v1480 = vshrl.u32 %v1479, 7
    %v1481 = vsub.s32 0, %v1480
    %v1482 = vrot.slane %v1478, %v1481
    %1484 = vbcast.lane.b32.xlu0 %v1482, 256
    %v1485 = vpop.permute.xlu0 %1484
    %v1486 = vlaneseq
    %v1487 = vshrl.u32 %v1486, 7
    %v1488 = vsub.s32 1, %v1487
    %v1489 = vrot.slane %v1478, %v1488
    %1491 = vbcast.lane.b32.xlu0 %v1489, 256
    %v1492 = vpop.permute.xlu0 %1491
    %v1493 = vlaneseq
    %v1494 = vshrl.u32 %v1493, 7
    %v1495 = vsub.s32 2, %v1494
    %v1496 = vrot.slane %v1478, %v1495
    %1498 = vbcast.lane.b32.xlu0 %v1496, 256
    %v1499 = vpop.permute.xlu0 %1498
    %v1500 = vlaneseq
    %v1501 = vshrl.u32 %v1500, 7
    %v1502 = vsub.s32 3, %v1501
    %v1503 = vrot.slane %v1478, %v1502
    %1505 = vbcast.lane.b32.xlu0 %v1503, 256
    %v1506 = vpop.permute.xlu0 %1505
    %v1507 = vlaneseq
    %v1508 = vshrl.u32 %v1507, 7
    %v1509 = vsub.s32 4, %v1508
    %v1510 = vrot.slane %v1478, %v1509
    %1512 = vbcast.lane.b32.xlu0 %v1510, 256
    %v1513 = vpop.permute.xlu0 %1512
    %v1514 = vlaneseq
    %v1515 = vshrl.u32 %v1514, 7
    %v1516 = vsub.s32 5, %v1515
    %v1517 = vrot.slane %v1478, %v1516
    %1519 = vbcast.lane.b32.xlu0 %v1517, 256
    %v1520 = vpop.permute.xlu0 %1519
    %v1521 = vlaneseq
    %v1522 = vshrl.u32 %v1521, 7
    %v1523 = vsub.s32 6, %v1522
    %v1524 = vrot.slane %v1478, %v1523
    %1526 = vbcast.lane.b32.xlu0 %v1524, 256
    %v1527 = vpop.permute.xlu0 %1526
    %v1528 = vlaneseq
    %v1529 = vshrl.u32 %v1528, 7
    %v1530 = vsub.s32 7, %v1529
    %v1531 = vrot.slane %v1478, %v1530
    %1533 = vbcast.lane.b32.xlu0 %v1531, 256
    %v1534 = vpop.permute.xlu0 %1533
    %v1535 = vmul.f32 %v1485, %v46
    %v1536 = vmul.f32 %v1492, %v47
    %v1537 = vmul.f32 %v1499, %v48
    %v1538 = vmul.f32 %v1506, %v49
    %v1539 = vmul.f32 %v1513, %v50
    %v1540 = vmul.f32 %v1520, %v51
    %v1541 = vmul.f32 %v1527, %v52
    %v1542 = vmul.f32 %v1534, %v53
    %v1543 = vrot.slane %v1535, 4
    %v1544 = vadd.f32 %v1535, %v1543
    %v1545 = vrot.slane %v1544, 2
    %v1546 = vadd.f32 %v1544, %v1545
    %v1547 = vrot.slane %v1546, 1
    %v1548 = vadd.f32 %v1546, %v1547
    %v1549 = vrot.slane %v1536, 4
    %v1550 = vadd.f32 %v1536, %v1549
    %v1551 = vrot.slane %v1550, 2
    %v1552 = vadd.f32 %v1550, %v1551
    %v1553 = vrot.slane %v1552, 1
    %v1554 = vadd.f32 %v1552, %v1553
    %v1555 = vrot.slane %v1537, 4
    %v1556 = vadd.f32 %v1537, %v1555
    %v1557 = vrot.slane %v1556, 2
    %v1558 = vadd.f32 %v1556, %v1557
    %v1559 = vrot.slane %v1558, 1
    %v1560 = vadd.f32 %v1558, %v1559
    %v1561 = vrot.slane %v1538, 4
    %v1562 = vadd.f32 %v1538, %v1561
    %v1563 = vrot.slane %v1562, 2
    %v1564 = vadd.f32 %v1562, %v1563
    %v1565 = vrot.slane %v1564, 1
    %v1566 = vadd.f32 %v1564, %v1565
    %v1567 = vrot.slane %v1539, 4
    %v1568 = vadd.f32 %v1539, %v1567
    %v1569 = vrot.slane %v1568, 2
    %v1570 = vadd.f32 %v1568, %v1569
    %v1571 = vrot.slane %v1570, 1
    %v1572 = vadd.f32 %v1570, %v1571
    %v1573 = vrot.slane %v1540, 4
    %v1574 = vadd.f32 %v1540, %v1573
    %v1575 = vrot.slane %v1574, 2
    %v1576 = vadd.f32 %v1574, %v1575
    %v1577 = vrot.slane %v1576, 1
    %v1578 = vadd.f32 %v1576, %v1577
    %v1579 = vrot.slane %v1541, 4
    %v1580 = vadd.f32 %v1541, %v1579
    %v1581 = vrot.slane %v1580, 2
    %v1582 = vadd.f32 %v1580, %v1581
    %v1583 = vrot.slane %v1582, 1
    %v1584 = vadd.f32 %v1582, %v1583
    %v1585 = vrot.slane %v1542, 4
    %v1586 = vadd.f32 %v1542, %v1585
    %v1587 = vrot.slane %v1586, 2
    %v1588 = vadd.f32 %v1586, %v1587
    %v1589 = vrot.slane %v1588, 1
    %v1590 = vadd.f32 %v1588, %v1589
    %s1591 = scalar_lea.vmem %s0, 24
    %v1592 = vld [vmem:[%s1591] sm:$0xff]
    %v1593 = vld [vmem:[%s1591 + $0x8] sm:$0xff]
    %v1594 = vld [vmem:[%s1591 + $0x10] sm:$0xff]
    %v1595 = vld [vmem:[%s7] sm:$0xff]
    %v1596 = vld [vmem:[%s7 + $0x8] sm:$0xff]
    %v1597 = vld [vmem:[%s7 + $0x10] sm:$0xff]
    %v1598 = vld [vmem:[%s7 + $0x18] sm:$0xff]
    %v1599 = vld [vmem:[%s7 + $0x20] sm:$0xff]
    %v1600 = vld [vmem:[%s7 + $0x28] sm:$0xff]
    %v1601 = vld [vmem:[%s7 + $0x30] sm:$0xff]
    %v1602 = vld [vmem:[%s7 + $0x38] sm:$0xff]
    %v1603 = vld [vmem:[%s7 + $0x40] sm:$0xff]
    %v1604 = vld [vmem:[%s7 + $0x48] sm:$0xff]
    %v1605 = vld [vmem:[%s7 + $0x50] sm:$0xff]
    %v1606 = vld [vmem:[%s7 + $0x58] sm:$0xff]
    %v1607 = vld [vmem:[%s7 + $0x60] sm:$0xff]
    %v1608 = vld [vmem:[%s7 + $0x68] sm:$0xff]
    %v1609 = vld [vmem:[%s7 + $0x70] sm:$0xff]
    %v1610 = vld [vmem:[%s7 + $0x78] sm:$0xff]
    %v1611 = vld [vmem:[%s7 + $0x80] sm:$0xff]
    %v1612 = vld [vmem:[%s7 + $0x88] sm:$0xff]
    %v1613 = vld [vmem:[%s7 + $0x90] sm:$0xff]
    %v1614 = vld [vmem:[%s7 + $0x98] sm:$0xff]
    %v1615 = vld [vmem:[%s7 + $0xa0] sm:$0xff]
    %v1616 = vld [vmem:[%s7 + $0xa8] sm:$0xff]
    %v1617 = vld [vmem:[%s7 + $0xb0] sm:$0xff]
    %v1618 = vld [vmem:[%s7 + $0xb8] sm:$0xff]
    %v1619 = vld [vmem:[%s7 + $0xc0] sm:$0xff]
    %v1620 = vld [vmem:[%s7 + $0xc8] sm:$0xff]
    %v1621 = vld [vmem:[%s7 + $0xd0] sm:$0xff]
    %v1622 = vld [vmem:[%s7 + $0xd8] sm:$0xff]
    %v1623 = vld [vmem:[%s7 + $0xe0] sm:$0xff]
    %v1624 = vld [vmem:[%s7 + $0xe8] sm:$0xff]
    %v1625 = vld [vmem:[%s7 + $0xf0] sm:$0xff]
    %v1626 = vld [vmem:[%s7 + $0xf8] sm:$0xff]
    %v1627 = vld [vmem:[%s7 + $0x100] sm:$0xff]
    %v1628 = vld [vmem:[%s7 + $0x108] sm:$0xff]
    %v1629 = vld [vmem:[%s7 + $0x110] sm:$0xff]
    %v1630 = vld [vmem:[%s7 + $0x118] sm:$0xff]
    %v1631 = vld [vmem:[%s7 + $0x120] sm:$0xff]
    %v1632 = vld [vmem:[%s7 + $0x128] sm:$0xff]
    %v1633 = vld [vmem:[%s7 + $0x130] sm:$0xff]
    %v1634 = vld [vmem:[%s7 + $0x138] sm:$0xff]
    %v1635 = vld [vmem:[%s7 + $0x140] sm:$0xff]
    %v1636 = vld [vmem:[%s7 + $0x148] sm:$0xff]
    %v1637 = vld [vmem:[%s7 + $0x150] sm:$0xff]
    %v1638 = vld [vmem:[%s7 + $0x158] sm:$0xff]
    %v1639 = vld [vmem:[%s7 + $0x160] sm:$0xff]
    %v1640 = vld [vmem:[%s7 + $0x168] sm:$0xff]
    %v1641 = vld [vmem:[%s7 + $0x170] sm:$0xff]
    %v1642 = vld [vmem:[%s7 + $0x178] sm:$0xff]
    %v1651 = vsel %vm607, %v1554, %v1548
    %v1652 = vsel %vm609, %v1560, %v1651
    %v1653 = vsel %vm611, %v1566, %v1652
    %v1654 = vsel %vm613, %v1572, %v1653
    %v1655 = vsel %vm615, %v1578, %v1654
    %v1656 = vsel %vm617, %v1584, %v1655
    %v1657 = vsel %vm619, %v1590, %v1656
    %1659 = vmatprep.subr.mxu0 %v1641
    %1660 = vmatpush1.msra.mxu0 %v1640
    %1661 = vmatprep.subr.mxu0 %v1638
    %1662 = vmatpush1.msra.mxu0 %v1637
    %1663 = vmatprep.subr.mxu0 %v1635
    %1664 = vmatpush1.msra.mxu0 %v1634
    %1665 = vmatprep.subr.mxu0 %v1632
    %1666 = vmatpush1.msra.mxu0 %v1631
    %1667 = vmatprep.subr.mxu0 %v1629
    %1668 = vmatpush1.msra.mxu0 %v1628
    %1669 = vmatprep.subr.mxu0 %v1626
    %1670 = vmatpush1.msra.mxu0 %v1625
    %1671 = vmatprep.subr.mxu0 %v1623
    %1672 = vmatpush1.msra.mxu0 %v1622
    %1673 = vmatprep.subr.mxu0 %v1620
    %1674 = vmatpush1.msra.mxu0 %v1619
    %1675 = vmatprep.subr.mxu0 %v1617
    %1676 = vmatpush1.msra.mxu0 %v1616
    %1677 = vmatprep.subr.mxu0 %v1614
    %1678 = vmatpush1.msra.mxu0 %v1613
    %1679 = vmatprep.subr.mxu0 %v1611
    %1680 = vmatpush1.msra.mxu0 %v1610
    %1681 = vmatprep.subr.mxu0 %v1608
    %1682 = vmatpush1.msra.mxu0 %v1607
    %1683 = vmatprep.subr.mxu0 %v1605
    %1684 = vmatpush1.msra.mxu0 %v1604
    %1685 = vmatprep.subr.mxu0 %v1602
    %1686 = vmatpush1.msra.mxu0 %v1601
    %1687 = vmatprep.subr.mxu0 %v1599
    %1688 = vmatpush1.msra.mxu0 %v1598
    %1689 = vmatprep.subr.mxu0 %v1596
    %1690 = vmatpush1.msra.mxu0 %v1595
    %1691 = vmatprep.subr.mxu0 0.0
    %1692 = vmatpush2.msra.mxu0 0.0
    %1693 = vmatprep.subr.mxu0 0.0
    %1694 = vmatpush2.msra.mxu0 0.0
    %1695 = vmatprep.subr.mxu0 0.0
    %1696 = vmatpush2.msra.mxu0 0.0
    %1697 = vmatprep.subr.mxu0 0.0
    %1698 = vmatpush2.msra.mxu0 0.0
    %1699 = vmatprep.subr.mxu0 0.0
    %1700 = vmatpush2.msra.mxu0 0.0
    %1701 = vmatprep.subr.mxu0 0.0
    %1702 = vmatpush2.msra.mxu0 0.0
    %1703 = vmatprep.subr.mxu0 0.0
    %1704 = vmatpush2.msra.mxu0 0.0
    %1705 = vmatprep.subr.mxu0 0.0
    %1706 = vmatpush2.msra.mxu0 0.0
    %1707 = vmatprep.subr.mxu0 0.0
    %1708 = vmatpush2.msra.mxu0 0.0
    %1709 = vmatprep.subr.mxu0 0.0
    %1710 = vmatpush2.msra.mxu0 0.0
    %1711 = vmatprep.subr.mxu0 0.0
    %1712 = vmatpush2.msra.mxu0 0.0
    %1713 = vmatprep.subr.mxu0 0.0
    %1714 = vmatpush2.msra.mxu0 0.0
    %1715 = vmatprep.subr.mxu0 0.0
    %1716 = vmatpush2.msra.mxu0 0.0
    %1717 = vmatprep.subr.mxu0 0.0
    %1718 = vmatpush2.msra.mxu0 0.0
    %1719 = vmatprep.subr.mxu0 0.0
    %1720 = vmatpush2.msra.mxu0 0.0
    %1721 = vmatprep.subr.mxu0 0.0
    %1722 = vmatpush2.msra.mxu0 0.0
    %1723 = vmatprep.mubr.f32.mxu0 0.0
    %1724 = vmatmul.mubr.f32.gmra.mxu0 %v1657
    %v1725 = vpop.f32.mrf.mxu0
    %v1726 = vadd.f32 0.0, %v1725
    %v1727 = vpop.f32.mrf.mxu0
    %v1728 = vadd.f32 0.0, %v1727
    %1729 = vdwg.mxu0
    %1730 = vmatprep.subr.mxu0 0.0
    %1731 = vmatpush1.msra.mxu0 %v1642
    %1732 = vmatprep.subr.mxu0 0.0
    %1733 = vmatpush1.msra.mxu0 %v1639
    %1734 = vmatprep.subr.mxu0 0.0
    %1735 = vmatpush1.msra.mxu0 %v1636
    %1736 = vmatprep.subr.mxu0 0.0
    %1737 = vmatpush1.msra.mxu0 %v1633
    %1738 = vmatprep.subr.mxu0 0.0
    %1739 = vmatpush1.msra.mxu0 %v1630
    %1740 = vmatprep.subr.mxu0 0.0
    %1741 = vmatpush1.msra.mxu0 %v1627
    %1742 = vmatprep.subr.mxu0 0.0
    %1743 = vmatpush1.msra.mxu0 %v1624
    %1744 = vmatprep.subr.mxu0 0.0
    %1745 = vmatpush1.msra.mxu0 %v1621
    %1746 = vmatprep.subr.mxu0 0.0
    %1747 = vmatpush1.msra.mxu0 %v1618
    %1748 = vmatprep.subr.mxu0 0.0
    %1749 = vmatpush1.msra.mxu0 %v1615
    %1750 = vmatprep.subr.mxu0 0.0
    %1751 = vmatpush1.msra.mxu0 %v1612
    %1752 = vmatprep.subr.mxu0 0.0
    %1753 = vmatpush1.msra.mxu0 %v1609
    %1754 = vmatprep.subr.mxu0 0.0
    %1755 = vmatpush1.msra.mxu0 %v1606
    %1756 = vmatprep.subr.mxu0 0.0
    %1757 = vmatpush1.msra.mxu0 %v1603
    %1758 = vmatprep.subr.mxu0 0.0
    %1759 = vmatpush1.msra.mxu0 %v1600
    %1760 = vmatprep.subr.mxu0 0.0
    %1761 = vmatpush1.msra.mxu0 %v1597
    %1762 = vmatprep.subr.mxu0 0.0
    %1763 = vmatpush2.msra.mxu0 0.0
    %1764 = vmatprep.subr.mxu0 0.0
    %1765 = vmatpush2.msra.mxu0 0.0
    %1766 = vmatprep.subr.mxu0 0.0
    %1767 = vmatpush2.msra.mxu0 0.0
    %1768 = vmatprep.subr.mxu0 0.0
    %1769 = vmatpush2.msra.mxu0 0.0
    %1770 = vmatprep.subr.mxu0 0.0
    %1771 = vmatpush2.msra.mxu0 0.0
    %1772 = vmatprep.subr.mxu0 0.0
    %1773 = vmatpush2.msra.mxu0 0.0
    %1774 = vmatprep.subr.mxu0 0.0
    %1775 = vmatpush2.msra.mxu0 0.0
    %1776 = vmatprep.subr.mxu0 0.0
    %1777 = vmatpush2.msra.mxu0 0.0
    %1778 = vmatprep.subr.mxu0 0.0
    %1779 = vmatpush2.msra.mxu0 0.0
    %1780 = vmatprep.subr.mxu0 0.0
    %1781 = vmatpush2.msra.mxu0 0.0
    %1782 = vmatprep.subr.mxu0 0.0
    %1783 = vmatpush2.msra.mxu0 0.0
    %1784 = vmatprep.subr.mxu0 0.0
    %1785 = vmatpush2.msra.mxu0 0.0
    %1786 = vmatprep.subr.mxu0 0.0
    %1787 = vmatpush2.msra.mxu0 0.0
    %1788 = vmatprep.subr.mxu0 0.0
    %1789 = vmatpush2.msra.mxu0 0.0
    %1790 = vmatprep.subr.mxu0 0.0
    %1791 = vmatpush2.msra.mxu0 0.0
    %1792 = vmatprep.subr.mxu0 0.0
    %1793 = vmatpush2.msra.mxu0 0.0
    %1794 = vmatprep.mubr.f32.mxu0 0.0
    %1795 = vmatmul.mubr.f32.gmra.mxu0 %v1657
    %v1796 = vpop.f32.mrf.mxu0
    %v1797 = vadd.f32 0.0, %v1796
    %v1798 = vpop.f32.mrf.mxu0
    %1799 = vdwg.mxu0
    %v1800 = vadd.f32 %v1592, %v1726
    %v1801 = vadd.f32 %v1593, %v1728
    %v1802 = vadd.f32 %v1594, %v1797
    %v1803 = vadd.f32 %v1800, %v183
    %v1804 = vadd.f32 %v1801, %v187
    %v1805 = vadd.f32 %v1802, %v191
    %v1806 = vadd.f32 %v1803, %v1286
    %v1807 = vxor.u32 %v1806, 2147483648
    %v1808 = vmul.f32 %v1807, 1.442695
    %v1809 = vpow.pop %v1808
    %v1810 = vadd.f32 %v1809, 1.0
    %v1811 = vrcp.pop %v1810
    %v1812 = vmul.f32 1.0, %v1811
    %v1813 = vadd.f32 %v1804, %v1287
    %v1814 = vxor.u32 %v1813, 2147483648
    %v1815 = vmul.f32 %v1814, 1.442695
    %v1816 = vpow.pop %v1815
    %v1817 = vadd.f32 %v1816, 1.0
    %v1818 = vrcp.pop %v1817
    %v1819 = vmul.f32 1.0, %v1818
    %v1820 = vmul.f32 %v1812, %v1288
    %v1821 = vadd.f32 %v1805, %v1820
    %v1822 = vtanh.pop %v1821
    %v1823 = vsub.f32 1.0, %v1819
    %v1824 = vmul.f32 %v1823, %v1822
    %v1825 = vmul.f32 %v1819, %v981
    %v1826 = vadd.f32 %v1824, %v1825
    %v1827 = vld [vmem:[%s10] sm:$0xff]
    %v1828 = vld [vmem:[%s10 + $0x8] sm:$0xff]
    %v1829 = vld [vmem:[%s10 + $0x10] sm:$0xff]
    %v1830 = vld [vmem:[%s10 + $0x18] sm:$0xff]
    %v1831 = vld [vmem:[%s10 + $0x20] sm:$0xff]
    %v1832 = vld [vmem:[%s10 + $0x28] sm:$0xff]
    %v1833 = vld [vmem:[%s10 + $0x30] sm:$0xff]
    %v1834 = vld [vmem:[%s10 + $0x38] sm:$0xff]
    %v1835 = vld [vmem:[%s10 + $0x40] sm:$0xff]
    %v1836 = vld [vmem:[%s10 + $0x48] sm:$0xff]
    %v1837 = vld [vmem:[%s10 + $0x50] sm:$0xff]
    %v1838 = vld [vmem:[%s10 + $0x58] sm:$0xff]
    %v1839 = vld [vmem:[%s10 + $0x60] sm:$0xff]
    %v1840 = vld [vmem:[%s10 + $0x68] sm:$0xff]
    %v1841 = vld [vmem:[%s10 + $0x70] sm:$0xff]
    %v1842 = vld [vmem:[%s10 + $0x78] sm:$0xff]
    %1843 = vmatprep.subr.mxu0 0.0
    %1844 = vmatpush1.msra.mxu0 %v1842
    %1845 = vmatprep.subr.mxu0 0.0
    %1846 = vmatpush1.msra.mxu0 %v1841
    %1847 = vmatprep.subr.mxu0 0.0
    %1848 = vmatpush1.msra.mxu0 %v1840
    %1849 = vmatprep.subr.mxu0 0.0
    %1850 = vmatpush1.msra.mxu0 %v1839
    %1851 = vmatprep.subr.mxu0 0.0
    %1852 = vmatpush1.msra.mxu0 %v1838
    %1853 = vmatprep.subr.mxu0 0.0
    %1854 = vmatpush1.msra.mxu0 %v1837
    %1855 = vmatprep.subr.mxu0 0.0
    %1856 = vmatpush1.msra.mxu0 %v1836
    %1857 = vmatprep.subr.mxu0 0.0
    %1858 = vmatpush1.msra.mxu0 %v1835
    %1859 = vmatprep.subr.mxu0 0.0
    %1860 = vmatpush1.msra.mxu0 %v1834
    %1861 = vmatprep.subr.mxu0 0.0
    %1862 = vmatpush1.msra.mxu0 %v1833
    %1863 = vmatprep.subr.mxu0 0.0
    %1864 = vmatpush1.msra.mxu0 %v1832
    %1865 = vmatprep.subr.mxu0 0.0
    %1866 = vmatpush1.msra.mxu0 %v1831
    %1867 = vmatprep.subr.mxu0 0.0
    %1868 = vmatpush1.msra.mxu0 %v1830
    %1869 = vmatprep.subr.mxu0 0.0
    %1870 = vmatpush1.msra.mxu0 %v1829
    %1871 = vmatprep.subr.mxu0 0.0
    %1872 = vmatpush1.msra.mxu0 %v1828
    %1873 = vmatprep.subr.mxu0 0.0
    %1874 = vmatpush1.msra.mxu0 %v1827
    %1875 = vmatprep.subr.mxu0 0.0
    %1876 = vmatpush2.msra.mxu0 0.0
    %1877 = vmatprep.subr.mxu0 0.0
    %1878 = vmatpush2.msra.mxu0 0.0
    %1879 = vmatprep.subr.mxu0 0.0
    %1880 = vmatpush2.msra.mxu0 0.0
    %1881 = vmatprep.subr.mxu0 0.0
    %1882 = vmatpush2.msra.mxu0 0.0
    %1883 = vmatprep.subr.mxu0 0.0
    %1884 = vmatpush2.msra.mxu0 0.0
    %1885 = vmatprep.subr.mxu0 0.0
    %1886 = vmatpush2.msra.mxu0 0.0
    %1887 = vmatprep.subr.mxu0 0.0
    %1888 = vmatpush2.msra.mxu0 0.0
    %1889 = vmatprep.subr.mxu0 0.0
    %1890 = vmatpush2.msra.mxu0 0.0
    %1891 = vmatprep.subr.mxu0 0.0
    %1892 = vmatpush2.msra.mxu0 0.0
    %1893 = vmatprep.subr.mxu0 0.0
    %1894 = vmatpush2.msra.mxu0 0.0
    %1895 = vmatprep.subr.mxu0 0.0
    %1896 = vmatpush2.msra.mxu0 0.0
    %1897 = vmatprep.subr.mxu0 0.0
    %1898 = vmatpush2.msra.mxu0 0.0
    %1899 = vmatprep.subr.mxu0 0.0
    %1900 = vmatpush2.msra.mxu0 0.0
    %1901 = vmatprep.subr.mxu0 0.0
    %1902 = vmatpush2.msra.mxu0 0.0
    %1903 = vmatprep.subr.mxu0 0.0
    %1904 = vmatpush2.msra.mxu0 0.0
    %1905 = vmatprep.subr.mxu0 0.0
    %1906 = vmatpush2.msra.mxu0 0.0
    %1907 = vmatprep.mubr.f32.mxu0 0.0
    %1908 = vmatmul.mubr.f32.gmra.mxu0 %v1826
    %v1909 = vpop.f32.mrf.mxu0
    %v1910 = vadd.f32 %v217, %v1909
    %v1911 = vpop.f32.mrf.mxu0
    %1912 = vdwg.mxu0
    %1913 = vmax.xlane.f32.xlu0 %v1910
    %v1914 = vpop.xlane.xlu0 %1913
    %v1915 = vsub.f32 %v1910, %v1914
    %v1916 = vmul.f32 %v1915, 1.442695
    %v1917 = vpow.pop %v1916
    %1918 = vadd.xlane.f32.xlu0 %v1917
    %v1919 = vpop.xlane.xlu0 %1918
    %v1920 = vlog2.pop %v1919
    %v1921 = vmul.f32 %v1920, 0.6931472
    %v1922 = vsub.f32 %v1915, %v1921
    %s1923 = scalar_lea.vmem [#allocation2], 8
    %1924 = vst [vmem:[%s1923] sm:$0xff] %v1922
    %s1925 = scalar_lea.vmem [#allocation4], 8
    %1926 = vst [vmem:[%s1925] sm:$0xff] %v1657
    %v1927 = vld [vmem:[%s6] sm:$0xff]
    %v1928 = vld [vmem:[%s6 + $0x8] sm:$0xff]
    %v1929 = vld [vmem:[%s6 + $0x10] sm:$0xff]
    %v1930 = vld [vmem:[%s6 + $0x18] sm:$0xff]
    %v1931 = vld [vmem:[%s6 + $0x20] sm:$0xff]
    %v1932 = vld [vmem:[%s6 + $0x28] sm:$0xff]
    %v1933 = vld [vmem:[%s6 + $0x30] sm:$0xff]
    %v1934 = vld [vmem:[%s6 + $0x38] sm:$0xff]
    %v1935 = vld [vmem:[%s6 + $0x40] sm:$0xff]
    %v1936 = vld [vmem:[%s6 + $0x48] sm:$0xff]
    %v1937 = vld [vmem:[%s6 + $0x50] sm:$0xff]
    %v1938 = vld [vmem:[%s6 + $0x58] sm:$0xff]
    %v1939 = vld [vmem:[%s6 + $0x60] sm:$0xff]
    %v1940 = vld [vmem:[%s6 + $0x68] sm:$0xff]
    %v1941 = vld [vmem:[%s6 + $0x70] sm:$0xff]
    %v1942 = vld [vmem:[%s6 + $0x78] sm:$0xff]
    %v1943 = vld [vmem:[%s6 + $0x80] sm:$0xff]
    %v1944 = vld [vmem:[%s6 + $0x88] sm:$0xff]
    %v1945 = vld [vmem:[%s6 + $0x90] sm:$0xff]
    %v1946 = vld [vmem:[%s6 + $0x98] sm:$0xff]
    %v1947 = vld [vmem:[%s6 + $0xa0] sm:$0xff]
    %v1948 = vld [vmem:[%s6 + $0xa8] sm:$0xff]
    %v1949 = vld [vmem:[%s6 + $0xb0] sm:$0xff]
    %v1950 = vld [vmem:[%s6 + $0xb8] sm:$0xff]
    %v1951 = vld [vmem:[%s6 + $0xc0] sm:$0xff]
    %v1952 = vld [vmem:[%s6 + $0xc8] sm:$0xff]
    %v1953 = vld [vmem:[%s6 + $0xd0] sm:$0xff]
    %v1954 = vld [vmem:[%s6 + $0xd8] sm:$0xff]
    %v1955 = vld [vmem:[%s6 + $0xe0] sm:$0xff]
    %v1956 = vld [vmem:[%s6 + $0xe8] sm:$0xff]
    %v1957 = vld [vmem:[%s6 + $0xf0] sm:$0xff]
    %v1958 = vld [vmem:[%s6 + $0xf8] sm:$0xff]
    %v1959 = vld [vmem:[%s6 + $0x100] sm:$0xff]
    %v1960 = vld [vmem:[%s6 + $0x108] sm:$0xff]
    %v1961 = vld [vmem:[%s6 + $0x110] sm:$0xff]
    %v1962 = vld [vmem:[%s6 + $0x118] sm:$0xff]
    %v1963 = vld [vmem:[%s6 + $0x120] sm:$0xff]
    %v1964 = vld [vmem:[%s6 + $0x128] sm:$0xff]
    %v1965 = vld [vmem:[%s6 + $0x130] sm:$0xff]
    %v1966 = vld [vmem:[%s6 + $0x138] sm:$0xff]
    %v1967 = vld [vmem:[%s6 + $0x140] sm:$0xff]
    %v1968 = vld [vmem:[%s6 + $0x148] sm:$0xff]
    %v1969 = vld [vmem:[%s6 + $0x150] sm:$0xff]
    %v1970 = vld [vmem:[%s6 + $0x158] sm:$0xff]
    %v1971 = vld [vmem:[%s6 + $0x160] sm:$0xff]
    %v1972 = vld [vmem:[%s6 + $0x168] sm:$0xff]
    %v1973 = vld [vmem:[%s6 + $0x170] sm:$0xff]
    %v1974 = vld [vmem:[%s6 + $0x178] sm:$0xff]
    %v1975 = vld [vmem:[%s6 + $0x180] sm:$0xff]
    %v1976 = vld [vmem:[%s6 + $0x188] sm:$0xff]
    %v1977 = vld [vmem:[%s6 + $0x190] sm:$0xff]
    %v1978 = vld [vmem:[%s6 + $0x198] sm:$0xff]
    %v1979 = vld [vmem:[%s6 + $0x1a0] sm:$0xff]
    %v1980 = vld [vmem:[%s6 + $0x1a8] sm:$0xff]
    %v1981 = vld [vmem:[%s6 + $0x1b0] sm:$0xff]
    %v1982 = vld [vmem:[%s6 + $0x1b8] sm:$0xff]
    %v1983 = vld [vmem:[%s6 + $0x1c0] sm:$0xff]
    %v1984 = vld [vmem:[%s6 + $0x1c8] sm:$0xff]
    %v1985 = vld [vmem:[%s6 + $0x1d0] sm:$0xff]
    %v1986 = vld [vmem:[%s6 + $0x1d8] sm:$0xff]
    %v1987 = vld [vmem:[%s6 + $0x1e0] sm:$0xff]
    %v1988 = vld [vmem:[%s6 + $0x1e8] sm:$0xff]
    %v1989 = vld [vmem:[%s6 + $0x1f0] sm:$0xff]
    %v1990 = vld [vmem:[%s6 + $0x1f8] sm:$0xff]
    %1991 = vmatprep.subr.mxu0 %v1988
    %1992 = vmatpush1.msra.mxu0 %v1987
    %1993 = vmatprep.subr.mxu0 %v1984
    %1994 = vmatpush1.msra.mxu0 %v1983
    %1995 = vmatprep.subr.mxu0 %v1980
    %1996 = vmatpush1.msra.mxu0 %v1979
    %1997 = vmatprep.subr.mxu0 %v1976
    %1998 = vmatpush1.msra.mxu0 %v1975
    %1999 = vmatprep.subr.mxu0 %v1972
    %2000 = vmatpush1.msra.mxu0 %v1971
    %2001 = vmatprep.subr.mxu0 %v1968
    %2002 = vmatpush1.msra.mxu0 %v1967
    %2003 = vmatprep.subr.mxu0 %v1964
    %2004 = vmatpush1.msra.mxu0 %v1963
    %2005 = vmatprep.subr.mxu0 %v1960
    %2006 = vmatpush1.msra.mxu0 %v1959
    %2007 = vmatprep.subr.mxu0 %v1956
    %2008 = vmatpush1.msra.mxu0 %v1955
    %2009 = vmatprep.subr.mxu0 %v1952
    %2010 = vmatpush1.msra.mxu0 %v1951
    %2011 = vmatprep.subr.mxu0 %v1948
    %2012 = vmatpush1.msra.mxu0 %v1947
    %2013 = vmatprep.subr.mxu0 %v1944
    %2014 = vmatpush1.msra.mxu0 %v1943
    %2015 = vmatprep.subr.mxu0 %v1940
    %2016 = vmatpush1.msra.mxu0 %v1939
    %2017 = vmatprep.subr.mxu0 %v1936
    %2018 = vmatpush1.msra.mxu0 %v1935
    %2019 = vmatprep.subr.mxu0 %v1932
    %2020 = vmatpush1.msra.mxu0 %v1931
    %2021 = vmatprep.subr.mxu0 %v1928
    %2022 = vmatpush1.msra.mxu0 %v1927
    %2023 = vmatprep.subr.mxu0 0.0
    %2024 = vmatpush2.msra.mxu0 0.0
    %2025 = vmatprep.subr.mxu0 0.0
    %2026 = vmatpush2.msra.mxu0 0.0
    %2027 = vmatprep.subr.mxu0 0.0
    %2028 = vmatpush2.msra.mxu0 0.0
    %2029 = vmatprep.subr.mxu0 0.0
    %2030 = vmatpush2.msra.mxu0 0.0
    %2031 = vmatprep.subr.mxu0 0.0
    %2032 = vmatpush2.msra.mxu0 0.0
    %2033 = vmatprep.subr.mxu0 0.0
    %2034 = vmatpush2.msra.mxu0 0.0
    %2035 = vmatprep.subr.mxu0 0.0
    %2036 = vmatpush2.msra.mxu0 0.0
    %2037 = vmatprep.subr.mxu0 0.0
    %2038 = vmatpush2.msra.mxu0 0.0
    %2039 = vmatprep.subr.mxu0 0.0
    %2040 = vmatpush2.msra.mxu0 0.0
    %2041 = vmatprep.subr.mxu0 0.0
    %2042 = vmatpush2.msra.mxu0 0.0
    %2043 = vmatprep.subr.mxu0 0.0
    %2044 = vmatpush2.msra.mxu0 0.0
    %2045 = vmatprep.subr.mxu0 0.0
    %2046 = vmatpush2.msra.mxu0 0.0
    %2047 = vmatprep.subr.mxu0 0.0
    %2048 = vmatpush2.msra.mxu0 0.0
    %2049 = vmatprep.subr.mxu0 0.0
    %2050 = vmatpush2.msra.mxu0 0.0
    %2051 = vmatprep.subr.mxu0 0.0
    %2052 = vmatpush2.msra.mxu0 0.0
    %2053 = vmatprep.subr.mxu0 0.0
    %2054 = vmatpush2.msra.mxu0 0.0
    %2055 = vmatprep.mubr.f32.mxu0 0.0
    %2056 = vmatmul.mubr.f32.gmra.mxu0 %v1826
    %v2057 = vpop.f32.mrf.mxu0
    %v2058 = vadd.f32 0.0, %v2057
    %v2059 = vpop.f32.mrf.mxu0
    %v2060 = vadd.f32 0.0, %v2059
    %2061 = vdwg.mxu0
    %2062 = vmatprep.subr.mxu0 %v1990
    %2063 = vmatpush1.msra.mxu0 %v1989
    %2064 = vmatprep.subr.mxu0 %v1986
    %2065 = vmatpush1.msra.mxu0 %v1985
    %2066 = vmatprep.subr.mxu0 %v1982
    %2067 = vmatpush1.msra.mxu0 %v1981
    %2068 = vmatprep.subr.mxu0 %v1978
    %2069 = vmatpush1.msra.mxu0 %v1977
    %2070 = vmatprep.subr.mxu0 %v1974
    %2071 = vmatpush1.msra.mxu0 %v1973
    %2072 = vmatprep.subr.mxu0 %v1970
    %2073 = vmatpush1.msra.mxu0 %v1969
    %2074 = vmatprep.subr.mxu0 %v1966
    %2075 = vmatpush1.msra.mxu0 %v1965
    %2076 = vmatprep.subr.mxu0 %v1962
    %2077 = vmatpush1.msra.mxu0 %v1961
    %2078 = vmatprep.subr.mxu0 %v1958
    %2079 = vmatpush1.msra.mxu0 %v1957
    %2080 = vmatprep.subr.mxu0 %v1954
    %2081 = vmatpush1.msra.mxu0 %v1953
    %2082 = vmatprep.subr.mxu0 %v1950
    %2083 = vmatpush1.msra.mxu0 %v1949
    %2084 = vmatprep.subr.mxu0 %v1946
    %2085 = vmatpush1.msra.mxu0 %v1945
    %2086 = vmatprep.subr.mxu0 %v1942
    %2087 = vmatpush1.msra.mxu0 %v1941
    %2088 = vmatprep.subr.mxu0 %v1938
    %2089 = vmatpush1.msra.mxu0 %v1937
    %2090 = vmatprep.subr.mxu0 %v1934
    %2091 = vmatpush1.msra.mxu0 %v1933
    %2092 = vmatprep.subr.mxu0 %v1930
    %2093 = vmatpush1.msra.mxu0 %v1929
    %2094 = vmatprep.subr.mxu0 0.0
    %2095 = vmatpush2.msra.mxu0 0.0
    %2096 = vmatprep.subr.mxu0 0.0
    %2097 = vmatpush2.msra.mxu0 0.0
    %2098 = vmatprep.subr.mxu0 0.0
    %2099 = vmatpush2.msra.mxu0 0.0
    %2100 = vmatprep.subr.mxu0 0.0
    %2101 = vmatpush2.msra.mxu0 0.0
    %2102 = vmatprep.subr.mxu0 0.0
    %2103 = vmatpush2.msra.mxu0 0.0
    %2104 = vmatprep.subr.mxu0 0.0
    %2105 = vmatpush2.msra.mxu0 0.0
    %2106 = vmatprep.subr.mxu0 0.0
    %2107 = vmatpush2.msra.mxu0 0.0
    %2108 = vmatprep.subr.mxu0 0.0
    %2109 = vmatpush2.msra.mxu0 0.0
    %2110 = vmatprep.subr.mxu0 0.0
    %2111 = vmatpush2.msra.mxu0 0.0
    %2112 = vmatprep.subr.mxu0 0.0
    %2113 = vmatpush2.msra.mxu0 0.0
    %2114 = vmatprep.subr.mxu0 0.0
    %2115 = vmatpush2.msra.mxu0 0.0
    %2116 = vmatprep.subr.mxu0 0.0
    %2117 = vmatpush2.msra.mxu0 0.0
    %2118 = vmatprep.subr.mxu0 0.0
    %2119 = vmatpush2.msra.mxu0 0.0
    %2120 = vmatprep.subr.mxu0 0.0
    %2121 = vmatpush2.msra.mxu0 0.0
    %2122 = vmatprep.subr.mxu0 0.0
    %2123 = vmatpush2.msra.mxu0 0.0
    %2124 = vmatprep.subr.mxu0 0.0
    %2125 = vmatpush2.msra.mxu0 0.0
    %2126 = vmatprep.mubr.f32.mxu0 0.0
    %2127 = vmatmul.mubr.f32.gmra.mxu0 %v1826
    %v2128 = vpop.f32.mrf.mxu0
    %v2129 = vadd.f32 0.0, %v2128
    %v2130 = vpop.f32.mrf.mxu0
    %v2131 = vadd.f32 0.0, %v2130
    %2132 = vdwg.mxu0
    %v2133 = vadd.f32 %v2060, %v200
    %v2134 = vadd.f32 %v2129, %v204
    %v2135 = vadd.f32 %v2131, %v208
    %v2137 = vcombine.high %v2058, %v2058
    %v2139 = vunpack.c.l.s4 1966171168
    %v2140 = vunpack.c.0.s8 %v2139
    %v2141 = vlaneseq
    %v2142 = vshrl.u32 %v2141, 7
    %v2143 = vsub.s32 %v2140, %v2142
    %v2144 = vrot.slane %v2058, %v2143
    %v2146 = vunpack.c.l.s4 1966171168
    %v2147 = vunpack.c.0.s8 %v2146
    %v2148 = vlaneseq
    %v2149 = vshrl.u32 %v2148, 7
    %v2150 = vsub.s32 %v2147, %v2149
    %v2151 = vrot.slane %v2137, %v2150
    %v2152 = vcombine.high %v2144, %v2144
    %v2153 = vcombine.high %v2151, %v2151
    %v2155 = vunpack.c.l.s4 1966171168
    %v2156 = vunpack.c.0.s8 %v2155
    %v2157 = vlaneseq
    %v2158 = vshrl.u32 %v2157, 7
    %v2159 = vsub.s32 %v2156, %v2158
    %v2160 = vrot.slane %v2144, %v2159
    %v2162 = vunpack.c.l.s4 1966171168
    %v2163 = vunpack.c.0.s8 %v2162
    %v2164 = vlaneseq
    %v2165 = vshrl.u32 %v2164, 7
    %v2166 = vsub.s32 %v2163, %v2165
    %v2167 = vrot.slane %v2151, %v2166
    %v2169 = vunpack.c.l.s4 1966171168
    %v2170 = vunpack.c.0.s8 %v2169
    %v2171 = vlaneseq
    %v2172 = vshrl.u32 %v2171, 7
    %v2173 = vsub.s32 %v2170, %v2172
    %v2174 = vrot.slane %v2152, %v2173
    %v2176 = vunpack.c.l.s4 1966171168
    %v2177 = vunpack.c.0.s8 %v2176
    %v2178 = vlaneseq
    %v2179 = vshrl.u32 %v2178, 7
    %v2180 = vsub.s32 %v2177, %v2179
    %v2181 = vrot.slane %v2153, %v2180
    %v2182 = vcombine.high %v2160, %v2160
    %v2183 = vcombine.high %v2167, %v2167
    %v2184 = vcombine.high %v2174, %v2174
    %v2185 = vcombine.high %v2181, %v2181
    %v2186 = vlaneseq
    %v2187 = vshrl.u32 %v2186, 7
    %v2188 = vsub.s32 0, %v2187
    %v2189 = vrot.slane %v2160, %v2188
    %v2190 = vlaneseq
    %v2191 = vshrl.u32 %v2190, 7
    %v2192 = vsub.s32 0, %v2191
    %v2193 = vrot.slane %v2174, %v2192
    %v2194 = vlaneseq
    %v2195 = vshrl.u32 %v2194, 7
    %v2196 = vsub.s32 0, %v2195
    %v2197 = vrot.slane %v2182, %v2196
    %v2198 = vlaneseq
    %v2199 = vshrl.u32 %v2198, 7
    %v2200 = vsub.s32 0, %v2199
    %v2201 = vrot.slane %v2184, %v2200
    %v2202 = vlaneseq
    %v2203 = vshrl.u32 %v2202, 7
    %v2204 = vsub.s32 0, %v2203
    %v2205 = vrot.slane %v2167, %v2204
    %v2206 = vlaneseq
    %v2207 = vshrl.u32 %v2206, 7
    %v2208 = vsub.s32 0, %v2207
    %v2209 = vrot.slane %v2181, %v2208
    %v2210 = vlaneseq
    %v2211 = vshrl.u32 %v2210, 7
    %v2212 = vsub.s32 0, %v2211
    %v2213 = vrot.slane %v2183, %v2212
    %v2214 = vlaneseq
    %v2215 = vshrl.u32 %v2214, 7
    %v2216 = vsub.s32 0, %v2215
    %v2217 = vrot.slane %v2185, %v2216
    %v2226 = vadd.f32 %v2189, %v139
    %v2227 = vadd.f32 %v2193, %v144
    %v2228 = vadd.f32 %v2197, %v149
    %v2229 = vadd.f32 %v2201, %v154
    %v2230 = vadd.f32 %v2205, %v159
    %v2231 = vadd.f32 %v2209, %v164
    %v2232 = vadd.f32 %v2213, %v169
    %v2233 = vadd.f32 %v2217, %v174
    %v2234 = vtanh.pop %v2226
    %v2235 = vtanh.pop %v2227
    %v2236 = vtanh.pop %v2228
    %v2237 = vtanh.pop %v2229
    %v2238 = vtanh.pop %v2230
    %v2239 = vtanh.pop %v2231
    %v2240 = vtanh.pop %v2232
    %v2241 = vtanh.pop %v2233
    %v2242 = vmul.f32 %v2234, %v539
    %v2243 = vmul.f32 %v2235, %v539
    %v2244 = vmul.f32 %v2236, %v539
    %v2245 = vmul.f32 %v2237, %v539
    %v2246 = vmul.f32 %v2238, %v539
    %v2247 = vmul.f32 %v2239, %v539
    %v2248 = vmul.f32 %v2240, %v539
    %v2249 = vmul.f32 %v2241, %v539
    %2250 = vadd.xlane.f32.xlu0 %v2242
    %v2251 = vpop.xlane.xlu0 %2250
    %2252 = vadd.xlane.f32.xlu0 %v2243
    %v2253 = vpop.xlane.xlu0 %2252
    %2254 = vadd.xlane.f32.xlu0 %v2244
    %v2255 = vpop.xlane.xlu0 %2254
    %2256 = vadd.xlane.f32.xlu0 %v2245
    %v2257 = vpop.xlane.xlu0 %2256
    %2258 = vadd.xlane.f32.xlu0 %v2246
    %v2259 = vpop.xlane.xlu0 %2258
    %2260 = vadd.xlane.f32.xlu0 %v2247
    %v2261 = vpop.xlane.xlu0 %2260
    %2262 = vadd.xlane.f32.xlu0 %v2248
    %v2263 = vpop.xlane.xlu0 %2262
    %2264 = vadd.xlane.f32.xlu0 %v2249
    %v2265 = vpop.xlane.xlu0 %2264
    %v2274 = vlaneseq
    %v2275 = vshrl.u32 %v2274, 7
    %v2276 = vsub.s32 %v574, %v2275
    %v2277 = vrot.slane %v2251, %v2276
    %v2278 = vlaneseq
    %v2279 = vshrl.u32 %v2278, 7
    %v2280 = vsub.s32 %v574, %v2279
    %v2281 = vrot.slane %v2253, %v2280
    %v2282 = vlaneseq
    %v2283 = vshrl.u32 %v2282, 7
    %v2284 = vsub.s32 %v574, %v2283
    %v2285 = vrot.slane %v2255, %v2284
    %v2286 = vlaneseq
    %v2287 = vshrl.u32 %v2286, 7
    %v2288 = vsub.s32 %v574, %v2287
    %v2289 = vrot.slane %v2257, %v2288
    %v2290 = vlaneseq
    %v2291 = vshrl.u32 %v2290, 7
    %v2292 = vsub.s32 %v574, %v2291
    %v2293 = vrot.slane %v2259, %v2292
    %v2294 = vlaneseq
    %v2295 = vshrl.u32 %v2294, 7
    %v2296 = vsub.s32 %v574, %v2295
    %v2297 = vrot.slane %v2261, %v2296
    %v2298 = vlaneseq
    %v2299 = vshrl.u32 %v2298, 7
    %v2300 = vsub.s32 %v574, %v2299
    %v2301 = vrot.slane %v2263, %v2300
    %v2302 = vlaneseq
    %v2303 = vshrl.u32 %v2302, 7
    %v2304 = vsub.s32 %v574, %v2303
    %v2305 = vrot.slane %v2265, %v2304
    %v2306 = vsel %vm607, %v2281, %v2277
    %v2307 = vsel %vm609, %v2285, %v2306
    %v2308 = vsel %vm611, %v2289, %v2307
    %v2309 = vsel %vm613, %v2293, %v2308
    %v2310 = vsel %vm615, %v2297, %v2309
    %v2311 = vsel %vm617, %v2301, %v2310
    %v2312 = vsel %vm619, %v2305, %v2311
    %v2314 = vsel %vm55, %v2312, -1e+09
    %v2315 = vsel %vm623, %v2314, -inf
    %2316 = vmax.xlane.f32.xlu0 %v2315
    %v2317 = vpop.xlane.xlu0 %2316
    %v2318 = vsub.f32 %v2314, %v2317
    %v2319 = vmul.f32 %v2318, 1.442695
    %v2320 = vpow.pop %v2319
    %v2321 = vsel %vm623, %v2320, 0.0
    %2322 = vadd.xlane.f32.xlu0 %v2321
    %v2323 = vpop.xlane.xlu0 %2322
    %v2324 = vrcp.pop %v2323
    %v2325 = vmul.f32 %v2320, %v2324
    %v2326 = vlaneseq
    %v2327 = vshrl.u32 %v2326, 7
    %v2328 = vsub.s32 0, %v2327
    %v2329 = vrot.slane %v2325, %v2328
    %2331 = vbcast.lane.b32.xlu0 %v2329, 256
    %v2332 = vpop.permute.xlu0 %2331
    %v2333 = vlaneseq
    %v2334 = vshrl.u32 %v2333, 7
    %v2335 = vsub.s32 1, %v2334
    %v2336 = vrot.slane %v2325, %v2335
    %2338 = vbcast.lane.b32.xlu0 %v2336, 256
    %v2339 = vpop.permute.xlu0 %2338
    %v2340 = vlaneseq
    %v2341 = vshrl.u32 %v2340, 7
    %v2342 = vsub.s32 2, %v2341
    %v2343 = vrot.slane %v2325, %v2342
    %2345 = vbcast.lane.b32.xlu0 %v2343, 256
    %v2346 = vpop.permute.xlu0 %2345
    %v2347 = vlaneseq
    %v2348 = vshrl.u32 %v2347, 7
    %v2349 = vsub.s32 3, %v2348
    %v2350 = vrot.slane %v2325, %v2349
    %2352 = vbcast.lane.b32.xlu0 %v2350, 256
    %v2353 = vpop.permute.xlu0 %2352
    %v2354 = vlaneseq
    %v2355 = vshrl.u32 %v2354, 7
    %v2356 = vsub.s32 4, %v2355
    %v2357 = vrot.slane %v2325, %v2356
    %2359 = vbcast.lane.b32.xlu0 %v2357, 256
    %v2360 = vpop.permute.xlu0 %2359
    %v2361 = vlaneseq
    %v2362 = vshrl.u32 %v2361, 7
    %v2363 = vsub.s32 5, %v2362
    %v2364 = vrot.slane %v2325, %v2363
    %2366 = vbcast.lane.b32.xlu0 %v2364, 256
    %v2367 = vpop.permute.xlu0 %2366
    %v2368 = vlaneseq
    %v2369 = vshrl.u32 %v2368, 7
    %v2370 = vsub.s32 6, %v2369
    %v2371 = vrot.slane %v2325, %v2370
    %2373 = vbcast.lane.b32.xlu0 %v2371, 256
    %v2374 = vpop.permute.xlu0 %2373
    %v2375 = vlaneseq
    %v2376 = vshrl.u32 %v2375, 7
    %v2377 = vsub.s32 7, %v2376
    %v2378 = vrot.slane %v2325, %v2377
    %2380 = vbcast.lane.b32.xlu0 %v2378, 256
    %v2381 = vpop.permute.xlu0 %2380
    %v2382 = vmul.f32 %v2332, %v46
    %v2383 = vmul.f32 %v2339, %v47
    %v2384 = vmul.f32 %v2346, %v48
    %v2385 = vmul.f32 %v2353, %v49
    %v2386 = vmul.f32 %v2360, %v50
    %v2387 = vmul.f32 %v2367, %v51
    %v2388 = vmul.f32 %v2374, %v52
    %v2389 = vmul.f32 %v2381, %v53
    %v2390 = vrot.slane %v2382, 4
    %v2391 = vadd.f32 %v2382, %v2390
    %v2392 = vrot.slane %v2391, 2
    %v2393 = vadd.f32 %v2391, %v2392
    %v2394 = vrot.slane %v2393, 1
    %v2395 = vadd.f32 %v2393, %v2394
    %v2396 = vrot.slane %v2383, 4
    %v2397 = vadd.f32 %v2383, %v2396
    %v2398 = vrot.slane %v2397, 2
    %v2399 = vadd.f32 %v2397, %v2398
    %v2400 = vrot.slane %v2399, 1
    %v2401 = vadd.f32 %v2399, %v2400
    %v2402 = vrot.slane %v2384, 4
    %v2403 = vadd.f32 %v2384, %v2402
    %v2404 = vrot.slane %v2403, 2
    %v2405 = vadd.f32 %v2403, %v2404
    %v2406 = vrot.slane %v2405, 1
    %v2407 = vadd.f32 %v2405, %v2406
    %v2408 = vrot.slane %v2385, 4
    %v2409 = vadd.f32 %v2385, %v2408
    %v2410 = vrot.slane %v2409, 2
    %v2411 = vadd.f32 %v2409, %v2410
    %v2412 = vrot.slane %v2411, 1
    %v2413 = vadd.f32 %v2411, %v2412
    %v2414 = vrot.slane %v2386, 4
    %v2415 = vadd.f32 %v2386, %v2414
    %v2416 = vrot.slane %v2415, 2
    %v2417 = vadd.f32 %v2415, %v2416
    %v2418 = vrot.slane %v2417, 1
    %v2419 = vadd.f32 %v2417, %v2418
    %v2420 = vrot.slane %v2387, 4
    %v2421 = vadd.f32 %v2387, %v2420
    %v2422 = vrot.slane %v2421, 2
    %v2423 = vadd.f32 %v2421, %v2422
    %v2424 = vrot.slane %v2423, 1
    %v2425 = vadd.f32 %v2423, %v2424
    %v2426 = vrot.slane %v2388, 4
    %v2427 = vadd.f32 %v2388, %v2426
    %v2428 = vrot.slane %v2427, 2
    %v2429 = vadd.f32 %v2427, %v2428
    %v2430 = vrot.slane %v2429, 1
    %v2431 = vadd.f32 %v2429, %v2430
    %v2432 = vrot.slane %v2389, 4
    %v2433 = vadd.f32 %v2389, %v2432
    %v2434 = vrot.slane %v2433, 2
    %v2435 = vadd.f32 %v2433, %v2434
    %v2436 = vrot.slane %v2435, 1
    %v2437 = vadd.f32 %v2435, %v2436
    %s2438 = scalar_lea.vmem %s0, 48
    %v2439 = vld [vmem:[%s2438] sm:$0xff]
    %v2440 = vld [vmem:[%s2438 + $0x8] sm:$0xff]
    %v2441 = vld [vmem:[%s2438 + $0x10] sm:$0xff]
    %v2442 = vld [vmem:[%s7] sm:$0xff]
    %v2443 = vld [vmem:[%s7 + $0x8] sm:$0xff]
    %v2444 = vld [vmem:[%s7 + $0x10] sm:$0xff]
    %v2445 = vld [vmem:[%s7 + $0x18] sm:$0xff]
    %v2446 = vld [vmem:[%s7 + $0x20] sm:$0xff]
    %v2447 = vld [vmem:[%s7 + $0x28] sm:$0xff]
    %v2448 = vld [vmem:[%s7 + $0x30] sm:$0xff]
    %v2449 = vld [vmem:[%s7 + $0x38] sm:$0xff]
    %v2450 = vld [vmem:[%s7 + $0x40] sm:$0xff]
    %v2451 = vld [vmem:[%s7 + $0x48] sm:$0xff]
    %v2452 = vld [vmem:[%s7 + $0x50] sm:$0xff]
    %v2453 = vld [vmem:[%s7 + $0x58] sm:$0xff]
    %v2454 = vld [vmem:[%s7 + $0x60] sm:$0xff]
    %v2455 = vld [vmem:[%s7 + $0x68] sm:$0xff]
    %v2456 = vld [vmem:[%s7 + $0x70] sm:$0xff]
    %v2457 = vld [vmem:[%s7 + $0x78] sm:$0xff]
    %v2458 = vld [vmem:[%s7 + $0x80] sm:$0xff]
    %v2459 = vld [vmem:[%s7 + $0x88] sm:$0xff]
    %v2460 = vld [vmem:[%s7 + $0x90] sm:$0xff]
    %v2461 = vld [vmem:[%s7 + $0x98] sm:$0xff]
    %v2462 = vld [vmem:[%s7 + $0xa0] sm:$0xff]
    %v2463 = vld [vmem:[%s7 + $0xa8] sm:$0xff]
    %v2464 = vld [vmem:[%s7 + $0xb0] sm:$0xff]
    %v2465 = vld [vmem:[%s7 + $0xb8] sm:$0xff]
    %v2466 = vld [vmem:[%s7 + $0xc0] sm:$0xff]
    %v2467 = vld [vmem:[%s7 + $0xc8] sm:$0xff]
    %v2468 = vld [vmem:[%s7 + $0xd0] sm:$0xff]
    %v2469 = vld [vmem:[%s7 + $0xd8] sm:$0xff]
    %v2470 = vld [vmem:[%s7 + $0xe0] sm:$0xff]
    %v2471 = vld [vmem:[%s7 + $0xe8] sm:$0xff]
    %v2472 = vld [vmem:[%s7 + $0xf0] sm:$0xff]
    %v2473 = vld [vmem:[%s7 + $0xf8] sm:$0xff]
    %v2474 = vld [vmem:[%s7 + $0x100] sm:$0xff]
    %v2475 = vld [vmem:[%s7 + $0x108] sm:$0xff]
    %v2476 = vld [vmem:[%s7 + $0x110] sm:$0xff]
    %v2477 = vld [vmem:[%s7 + $0x118] sm:$0xff]
    %v2478 = vld [vmem:[%s7 + $0x120] sm:$0xff]
    %v2479 = vld [vmem:[%s7 + $0x128] sm:$0xff]
    %v2480 = vld [vmem:[%s7 + $0x130] sm:$0xff]
    %v2481 = vld [vmem:[%s7 + $0x138] sm:$0xff]
    %v2482 = vld [vmem:[%s7 + $0x140] sm:$0xff]
    %v2483 = vld [vmem:[%s7 + $0x148] sm:$0xff]
    %v2484 = vld [vmem:[%s7 + $0x150] sm:$0xff]
    %v2485 = vld [vmem:[%s7 + $0x158] sm:$0xff]
    %v2486 = vld [vmem:[%s7 + $0x160] sm:$0xff]
    %v2487 = vld [vmem:[%s7 + $0x168] sm:$0xff]
    %v2488 = vld [vmem:[%s7 + $0x170] sm:$0xff]
    %v2489 = vld [vmem:[%s7 + $0x178] sm:$0xff]
    %v2498 = vsel %vm607, %v2401, %v2395
    %v2499 = vsel %vm609, %v2407, %v2498
    %v2500 = vsel %vm611, %v2413, %v2499
    %v2501 = vsel %vm613, %v2419, %v2500
    %v2502 = vsel %vm615, %v2425, %v2501
    %v2503 = vsel %vm617, %v2431, %v2502
    %v2504 = vsel %vm619, %v2437, %v2503
    %2506 = vmatprep.subr.mxu0 %v2488
    %2507 = vmatpush1.msra.mxu0 %v2487
    %2508 = vmatprep.subr.mxu0 %v2485
    %2509 = vmatpush1.msra.mxu0 %v2484
    %2510 = vmatprep.subr.mxu0 %v2482
    %2511 = vmatpush1.msra.mxu0 %v2481
    %2512 = vmatprep.subr.mxu0 %v2479
    %2513 = vmatpush1.msra.mxu0 %v2478
    %2514 = vmatprep.subr.mxu0 %v2476
    %2515 = vmatpush1.msra.mxu0 %v2475
    %2516 = vmatprep.subr.mxu0 %v2473
    %2517 = vmatpush1.msra.mxu0 %v2472
    %2518 = vmatprep.subr.mxu0 %v2470
    %2519 = vmatpush1.msra.mxu0 %v2469
    %2520 = vmatprep.subr.mxu0 %v2467
    %2521 = vmatpush1.msra.mxu0 %v2466
    %2522 = vmatprep.subr.mxu0 %v2464
    %2523 = vmatpush1.msra.mxu0 %v2463
    %2524 = vmatprep.subr.mxu0 %v2461
    %2525 = vmatpush1.msra.mxu0 %v2460
    %2526 = vmatprep.subr.mxu0 %v2458
    %2527 = vmatpush1.msra.mxu0 %v2457
    %2528 = vmatprep.subr.mxu0 %v2455
    %2529 = vmatpush1.msra.mxu0 %v2454
    %2530 = vmatprep.subr.mxu0 %v2452
    %2531 = vmatpush1.msra.mxu0 %v2451
    %2532 = vmatprep.subr.mxu0 %v2449
    %2533 = vmatpush1.msra.mxu0 %v2448
    %2534 = vmatprep.subr.mxu0 %v2446
    %2535 = vmatpush1.msra.mxu0 %v2445
    %2536 = vmatprep.subr.mxu0 %v2443
    %2537 = vmatpush1.msra.mxu0 %v2442
    %2538 = vmatprep.subr.mxu0 0.0
    %2539 = vmatpush2.msra.mxu0 0.0
    %2540 = vmatprep.subr.mxu0 0.0
    %2541 = vmatpush2.msra.mxu0 0.0
    %2542 = vmatprep.subr.mxu0 0.0
    %2543 = vmatpush2.msra.mxu0 0.0
    %2544 = vmatprep.subr.mxu0 0.0
    %2545 = vmatpush2.msra.mxu0 0.0
    %2546 = vmatprep.subr.mxu0 0.0
    %2547 = vmatpush2.msra.mxu0 0.0
    %2548 = vmatprep.subr.mxu0 0.0
    %2549 = vmatpush2.msra.mxu0 0.0
    %2550 = vmatprep.subr.mxu0 0.0
    %2551 = vmatpush2.msra.mxu0 0.0
    %2552 = vmatprep.subr.mxu0 0.0
    %2553 = vmatpush2.msra.mxu0 0.0
    %2554 = vmatprep.subr.mxu0 0.0
    %2555 = vmatpush2.msra.mxu0 0.0
    %2556 = vmatprep.subr.mxu0 0.0
    %2557 = vmatpush2.msra.mxu0 0.0
    %2558 = vmatprep.subr.mxu0 0.0
    %2559 = vmatpush2.msra.mxu0 0.0
    %2560 = vmatprep.subr.mxu0 0.0
    %2561 = vmatpush2.msra.mxu0 0.0
    %2562 = vmatprep.subr.mxu0 0.0
    %2563 = vmatpush2.msra.mxu0 0.0
    %2564 = vmatprep.subr.mxu0 0.0
    %2565 = vmatpush2.msra.mxu0 0.0
    %2566 = vmatprep.subr.mxu0 0.0
    %2567 = vmatpush2.msra.mxu0 0.0
    %2568 = vmatprep.subr.mxu0 0.0
    %2569 = vmatpush2.msra.mxu0 0.0
    %2570 = vmatprep.mubr.f32.mxu0 0.0
    %2571 = vmatmul.mubr.f32.gmra.mxu0 %v2504
    %v2572 = vpop.f32.mrf.mxu0
    %v2573 = vadd.f32 0.0, %v2572
    %v2574 = vpop.f32.mrf.mxu0
    %v2575 = vadd.f32 0.0, %v2574
    %2576 = vdwg.mxu0
    %2577 = vmatprep.subr.mxu0 0.0
    %2578 = vmatpush1.msra.mxu0 %v2489
    %2579 = vmatprep.subr.mxu0 0.0
    %2580 = vmatpush1.msra.mxu0 %v2486
    %2581 = vmatprep.subr.mxu0 0.0
    %2582 = vmatpush1.msra.mxu0 %v2483
    %2583 = vmatprep.subr.mxu0 0.0
    %2584 = vmatpush1.msra.mxu0 %v2480
    %2585 = vmatprep.subr.mxu0 0.0
    %2586 = vmatpush1.msra.mxu0 %v2477
    %2587 = vmatprep.subr.mxu0 0.0
    %2588 = vmatpush1.msra.mxu0 %v2474
    %2589 = vmatprep.subr.mxu0 0.0
    %2590 = vmatpush1.msra.mxu0 %v2471
    %2591 = vmatprep.subr.mxu0 0.0
    %2592 = vmatpush1.msra.mxu0 %v2468
    %2593 = vmatprep.subr.mxu0 0.0
    %2594 = vmatpush1.msra.mxu0 %v2465
    %2595 = vmatprep.subr.mxu0 0.0
    %2596 = vmatpush1.msra.mxu0 %v2462
    %2597 = vmatprep.subr.mxu0 0.0
    %2598 = vmatpush1.msra.mxu0 %v2459
    %2599 = vmatprep.subr.mxu0 0.0
    %2600 = vmatpush1.msra.mxu0 %v2456
    %2601 = vmatprep.subr.mxu0 0.0
    %2602 = vmatpush1.msra.mxu0 %v2453
    %2603 = vmatprep.subr.mxu0 0.0
    %2604 = vmatpush1.msra.mxu0 %v2450
    %2605 = vmatprep.subr.mxu0 0.0
    %2606 = vmatpush1.msra.mxu0 %v2447
    %2607 = vmatprep.subr.mxu0 0.0
    %2608 = vmatpush1.msra.mxu0 %v2444
    %2609 = vmatprep.subr.mxu0 0.0
    %2610 = vmatpush2.msra.mxu0 0.0
    %2611 = vmatprep.subr.mxu0 0.0
    %2612 = vmatpush2.msra.mxu0 0.0
    %2613 = vmatprep.subr.mxu0 0.0
    %2614 = vmatpush2.msra.mxu0 0.0
    %2615 = vmatprep.subr.mxu0 0.0
    %2616 = vmatpush2.msra.mxu0 0.0
    %2617 = vmatprep.subr.mxu0 0.0
    %2618 = vmatpush2.msra.mxu0 0.0
    %2619 = vmatprep.subr.mxu0 0.0
    %2620 = vmatpush2.msra.mxu0 0.0
    %2621 = vmatprep.subr.mxu0 0.0
    %2622 = vmatpush2.msra.mxu0 0.0
    %2623 = vmatprep.subr.mxu0 0.0
    %2624 = vmatpush2.msra.mxu0 0.0
    %2625 = vmatprep.subr.mxu0 0.0
    %2626 = vmatpush2.msra.mxu0 0.0
    %2627 = vmatprep.subr.mxu0 0.0
    %2628 = vmatpush2.msra.mxu0 0.0
    %2629 = vmatprep.subr.mxu0 0.0
    %2630 = vmatpush2.msra.mxu0 0.0
    %2631 = vmatprep.subr.mxu0 0.0
    %2632 = vmatpush2.msra.mxu0 0.0
    %2633 = vmatprep.subr.mxu0 0.0
    %2634 = vmatpush2.msra.mxu0 0.0
    %2635 = vmatprep.subr.mxu0 0.0
    %2636 = vmatpush2.msra.mxu0 0.0
    %2637 = vmatprep.subr.mxu0 0.0
    %2638 = vmatpush2.msra.mxu0 0.0
    %2639 = vmatprep.subr.mxu0 0.0
    %2640 = vmatpush2.msra.mxu0 0.0
    %2641 = vmatprep.mubr.f32.mxu0 0.0
    %2642 = vmatmul.mubr.f32.gmra.mxu0 %v2504
    %v2643 = vpop.f32.mrf.mxu0
    %v2644 = vadd.f32 0.0, %v2643
    %v2645 = vpop.f32.mrf.mxu0
    %2646 = vdwg.mxu0
    %v2647 = vadd.f32 %v2439, %v2573
    %v2648 = vadd.f32 %v2440, %v2575
    %v2649 = vadd.f32 %v2441, %v2644
    %v2650 = vadd.f32 %v2647, %v183
    %v2651 = vadd.f32 %v2648, %v187
    %v2652 = vadd.f32 %v2649, %v191
    %v2653 = vadd.f32 %v2650, %v2133
    %v2654 = vxor.u32 %v2653, 2147483648
    %v2655 = vmul.f32 %v2654, 1.442695
    %v2656 = vpow.pop %v2655
    %v2657 = vadd.f32 %v2656, 1.0
    %v2658 = vrcp.pop %v2657
    %v2659 = vmul.f32 1.0, %v2658
    %v2660 = vadd.f32 %v2651, %v2134
    %v2661 = vxor.u32 %v2660, 2147483648
    %v2662 = vmul.f32 %v2661, 1.442695
    %v2663 = vpow.pop %v2662
    %v2664 = vadd.f32 %v2663, 1.0
    %v2665 = vrcp.pop %v2664
    %v2666 = vmul.f32 1.0, %v2665
    %v2667 = vmul.f32 %v2659, %v2135
    %v2668 = vadd.f32 %v2652, %v2667
    %v2669 = vtanh.pop %v2668
    %v2670 = vsub.f32 1.0, %v2666
    %v2671 = vmul.f32 %v2670, %v2669
    %v2672 = vmul.f32 %v2666, %v1826
    %v2673 = vadd.f32 %v2671, %v2672
    %v2674 = vld [vmem:[%s10] sm:$0xff]
    %v2675 = vld [vmem:[%s10 + $0x8] sm:$0xff]
    %v2676 = vld [vmem:[%s10 + $0x10] sm:$0xff]
    %v2677 = vld [vmem:[%s10 + $0x18] sm:$0xff]
    %v2678 = vld [vmem:[%s10 + $0x20] sm:$0xff]
    %v2679 = vld [vmem:[%s10 + $0x28] sm:$0xff]
    %v2680 = vld [vmem:[%s10 + $0x30] sm:$0xff]
    %v2681 = vld [vmem:[%s10 + $0x38] sm:$0xff]
    %v2682 = vld [vmem:[%s10 + $0x40] sm:$0xff]
    %v2683 = vld [vmem:[%s10 + $0x48] sm:$0xff]
    %v2684 = vld [vmem:[%s10 + $0x50] sm:$0xff]
    %v2685 = vld [vmem:[%s10 + $0x58] sm:$0xff]
    %v2686 = vld [vmem:[%s10 + $0x60] sm:$0xff]
    %v2687 = vld [vmem:[%s10 + $0x68] sm:$0xff]
    %v2688 = vld [vmem:[%s10 + $0x70] sm:$0xff]
    %v2689 = vld [vmem:[%s10 + $0x78] sm:$0xff]
    %2690 = vmatprep.subr.mxu0 0.0
    %2691 = vmatpush1.msra.mxu0 %v2689
    %2692 = vmatprep.subr.mxu0 0.0
    %2693 = vmatpush1.msra.mxu0 %v2688
    %2694 = vmatprep.subr.mxu0 0.0
    %2695 = vmatpush1.msra.mxu0 %v2687
    %2696 = vmatprep.subr.mxu0 0.0
    %2697 = vmatpush1.msra.mxu0 %v2686
    %2698 = vmatprep.subr.mxu0 0.0
    %2699 = vmatpush1.msra.mxu0 %v2685
    %2700 = vmatprep.subr.mxu0 0.0
    %2701 = vmatpush1.msra.mxu0 %v2684
    %2702 = vmatprep.subr.mxu0 0.0
    %2703 = vmatpush1.msra.mxu0 %v2683
    %2704 = vmatprep.subr.mxu0 0.0
    %2705 = vmatpush1.msra.mxu0 %v2682
    %2706 = vmatprep.subr.mxu0 0.0
    %2707 = vmatpush1.msra.mxu0 %v2681
    %2708 = vmatprep.subr.mxu0 0.0
    %2709 = vmatpush1.msra.mxu0 %v2680
    %2710 = vmatprep.subr.mxu0 0.0
    %2711 = vmatpush1.msra.mxu0 %v2679
    %2712 = vmatprep.subr.mxu0 0.0
    %2713 = vmatpush1.msra.mxu0 %v2678
    %2714 = vmatprep.subr.mxu0 0.0
    %2715 = vmatpush1.msra.mxu0 %v2677
    %2716 = vmatprep.subr.mxu0 0.0
    %2717 = vmatpush1.msra.mxu0 %v2676
    %2718 = vmatprep.subr.mxu0 0.0
    %2719 = vmatpush1.msra.mxu0 %v2675
    %2720 = vmatprep.subr.mxu0 0.0
    %2721 = vmatpush1.msra.mxu0 %v2674
    %2722 = vmatprep.subr.mxu0 0.0
    %2723 = vmatpush2.msra.mxu0 0.0
    %2724 = vmatprep.subr.mxu0 0.0
    %2725 = vmatpush2.msra.mxu0 0.0
    %2726 = vmatprep.subr.mxu0 0.0
    %2727 = vmatpush2.msra.mxu0 0.0
    %2728 = vmatprep.subr.mxu0 0.0
    %2729 = vmatpush2.msra.mxu0 0.0
    %2730 = vmatprep.subr.mxu0 0.0
    %2731 = vmatpush2.msra.mxu0 0.0
    %2732 = vmatprep.subr.mxu0 0.0
    %2733 = vmatpush2.msra.mxu0 0.0
    %2734 = vmatprep.subr.mxu0 0.0
    %2735 = vmatpush2.msra.mxu0 0.0
    %2736 = vmatprep.subr.mxu0 0.0
    %2737 = vmatpush2.msra.mxu0 0.0
    %2738 = vmatprep.subr.mxu0 0.0
    %2739 = vmatpush2.msra.mxu0 0.0
    %2740 = vmatprep.subr.mxu0 0.0
    %2741 = vmatpush2.msra.mxu0 0.0
    %2742 = vmatprep.subr.mxu0 0.0
    %2743 = vmatpush2.msra.mxu0 0.0
    %2744 = vmatprep.subr.mxu0 0.0
    %2745 = vmatpush2.msra.mxu0 0.0
    %2746 = vmatprep.subr.mxu0 0.0
    %2747 = vmatpush2.msra.mxu0 0.0
    %2748 = vmatprep.subr.mxu0 0.0
    %2749 = vmatpush2.msra.mxu0 0.0
    %2750 = vmatprep.subr.mxu0 0.0
    %2751 = vmatpush2.msra.mxu0 0.0
    %2752 = vmatprep.subr.mxu0 0.0
    %2753 = vmatpush2.msra.mxu0 0.0
    %2754 = vmatprep.mubr.f32.mxu0 0.0
    %2755 = vmatmul.mubr.f32.gmra.mxu0 %v2673
    %v2756 = vpop.f32.mrf.mxu0
    %v2757 = vadd.f32 %v217, %v2756
    %v2758 = vpop.f32.mrf.mxu0
    %2759 = vdwg.mxu0
    %2760 = vmax.xlane.f32.xlu0 %v2757
    %v2761 = vpop.xlane.xlu0 %2760
    %v2762 = vsub.f32 %v2757, %v2761
    %v2763 = vmul.f32 %v2762, 1.442695
    %v2764 = vpow.pop %v2763
    %2765 = vadd.xlane.f32.xlu0 %v2764
    %v2766 = vpop.xlane.xlu0 %2765
    %v2767 = vlog2.pop %v2766
    %v2768 = vmul.f32 %v2767, 0.6931472
    %v2769 = vsub.f32 %v2762, %v2768
    %s2770 = scalar_lea.vmem [#allocation2], 16
    %2771 = vst [vmem:[%s2770] sm:$0xff] %v2769
    %s2772 = scalar_lea.vmem [#allocation4], 16
    %2773 = vst [vmem:[%s2772] sm:$0xff] %v2504
    %v2774 = vld [vmem:[%s6] sm:$0xff]
    %v2775 = vld [vmem:[%s6 + $0x8] sm:$0xff]
    %v2776 = vld [vmem:[%s6 + $0x10] sm:$0xff]
    %v2777 = vld [vmem:[%s6 + $0x18] sm:$0xff]
    %v2778 = vld [vmem:[%s6 + $0x20] sm:$0xff]
    %v2779 = vld [vmem:[%s6 + $0x28] sm:$0xff]
    %v2780 = vld [vmem:[%s6 + $0x30] sm:$0xff]
    %v2781 = vld [vmem:[%s6 + $0x38] sm:$0xff]
    %v2782 = vld [vmem:[%s6 + $0x40] sm:$0xff]
    %v2783 = vld [vmem:[%s6 + $0x48] sm:$0xff]
    %v2784 = vld [vmem:[%s6 + $0x50] sm:$0xff]
    %v2785 = vld [vmem:[%s6 + $0x58] sm:$0xff]
    %v2786 = vld [vmem:[%s6 + $0x60] sm:$0xff]
    %v2787 = vld [vmem:[%s6 + $0x68] sm:$0xff]
    %v2788 = vld [vmem:[%s6 + $0x70] sm:$0xff]
    %v2789 = vld [vmem:[%s6 + $0x78] sm:$0xff]
    %v2790 = vld [vmem:[%s6 + $0x80] sm:$0xff]
    %v2791 = vld [vmem:[%s6 + $0x88] sm:$0xff]
    %v2792 = vld [vmem:[%s6 + $0x90] sm:$0xff]
    %v2793 = vld [vmem:[%s6 + $0x98] sm:$0xff]
    %v2794 = vld [vmem:[%s6 + $0xa0] sm:$0xff]
    %v2795 = vld [vmem:[%s6 + $0xa8] sm:$0xff]
    %v2796 = vld [vmem:[%s6 + $0xb0] sm:$0xff]
    %v2797 = vld [vmem:[%s6 + $0xb8] sm:$0xff]
    %v2798 = vld [vmem:[%s6 + $0xc0] sm:$0xff]
    %v2799 = vld [vmem:[%s6 + $0xc8] sm:$0xff]
    %v2800 = vld [vmem:[%s6 + $0xd0] sm:$0xff]
    %v2801 = vld [vmem:[%s6 + $0xd8] sm:$0xff]
    %v2802 = vld [vmem:[%s6 + $0xe0] sm:$0xff]
    %v2803 = vld [vmem:[%s6 + $0xe8] sm:$0xff]
    %v2804 = vld [vmem:[%s6 + $0xf0] sm:$0xff]
    %v2805 = vld [vmem:[%s6 + $0xf8] sm:$0xff]
    %v2806 = vld [vmem:[%s6 + $0x100] sm:$0xff]
    %v2807 = vld [vmem:[%s6 + $0x108] sm:$0xff]
    %v2808 = vld [vmem:[%s6 + $0x110] sm:$0xff]
    %v2809 = vld [vmem:[%s6 + $0x118] sm:$0xff]
    %v2810 = vld [vmem:[%s6 + $0x120] sm:$0xff]
    %v2811 = vld [vmem:[%s6 + $0x128] sm:$0xff]
    %v2812 = vld [vmem:[%s6 + $0x130] sm:$0xff]
    %v2813 = vld [vmem:[%s6 + $0x138] sm:$0xff]
    %v2814 = vld [vmem:[%s6 + $0x140] sm:$0xff]
    %v2815 = vld [vmem:[%s6 + $0x148] sm:$0xff]
    %v2816 = vld [vmem:[%s6 + $0x150] sm:$0xff]
    %v2817 = vld [vmem:[%s6 + $0x158] sm:$0xff]
    %v2818 = vld [vmem:[%s6 + $0x160] sm:$0xff]
    %v2819 = vld [vmem:[%s6 + $0x168] sm:$0xff]
    %v2820 = vld [vmem:[%s6 + $0x170] sm:$0xff]
    %v2821 = vld [vmem:[%s6 + $0x178] sm:$0xff]
    %v2822 = vld [vmem:[%s6 + $0x180] sm:$0xff]
    %v2823 = vld [vmem:[%s6 + $0x188] sm:$0xff]
    %v2824 = vld [vmem:[%s6 + $0x190] sm:$0xff]
    %v2825 = vld [vmem:[%s6 + $0x198] sm:$0xff]
    %v2826 = vld [vmem:[%s6 + $0x1a0] sm:$0xff]
    %v2827 = vld [vmem:[%s6 + $0x1a8] sm:$0xff]
    %v2828 = vld [vmem:[%s6 + $0x1b0] sm:$0xff]
    %v2829 = vld [vmem:[%s6 + $0x1b8] sm:$0xff]
    %v2830 = vld [vmem:[%s6 + $0x1c0] sm:$0xff]
    %v2831 = vld [vmem:[%s6 + $0x1c8] sm:$0xff]
    %v2832 = vld [vmem:[%s6 + $0x1d0] sm:$0xff]
    %v2833 = vld [vmem:[%s6 + $0x1d8] sm:$0xff]
    %v2834 = vld [vmem:[%s6 + $0x1e0] sm:$0xff]
    %v2835 = vld [vmem:[%s6 + $0x1e8] sm:$0xff]
    %v2836 = vld [vmem:[%s6 + $0x1f0] sm:$0xff]
    %v2837 = vld [vmem:[%s6 + $0x1f8] sm:$0xff]
    %2838 = vmatprep.subr.mxu0 %v2835
    %2839 = vmatpush1.msra.mxu0 %v2834
    %2840 = vmatprep.subr.mxu0 %v2831
    %2841 = vmatpush1.msra.mxu0 %v2830
    %2842 = vmatprep.subr.mxu0 %v2827
    %2843 = vmatpush1.msra.mxu0 %v2826
    %2844 = vmatprep.subr.mxu0 %v2823
    %2845 = vmatpush1.msra.mxu0 %v2822
    %2846 = vmatprep.subr.mxu0 %v2819
    %2847 = vmatpush1.msra.mxu0 %v2818
    %2848 = vmatprep.subr.mxu0 %v2815
    %2849 = vmatpush1.msra.mxu0 %v2814
    %2850 = vmatprep.subr.mxu0 %v2811
    %2851 = vmatpush1.msra.mxu0 %v2810
    %2852 = vmatprep.subr.mxu0 %v2807
    %2853 = vmatpush1.msra.mxu0 %v2806
    %2854 = vmatprep.subr.mxu0 %v2803
    %2855 = vmatpush1.msra.mxu0 %v2802
    %2856 = vmatprep.subr.mxu0 %v2799
    %2857 = vmatpush1.msra.mxu0 %v2798
    %2858 = vmatprep.subr.mxu0 %v2795
    %2859 = vmatpush1.msra.mxu0 %v2794
    %2860 = vmatprep.subr.mxu0 %v2791
    %2861 = vmatpush1.msra.mxu0 %v2790
    %2862 = vmatprep.subr.mxu0 %v2787
    %2863 = vmatpush1.msra.mxu0 %v2786
    %2864 = vmatprep.subr.mxu0 %v2783
    %2865 = vmatpush1.msra.mxu0 %v2782
    %2866 = vmatprep.subr.mxu0 %v2779
    %2867 = vmatpush1.msra.mxu0 %v2778
    %2868 = vmatprep.subr.mxu0 %v2775
    %2869 = vmatpush1.msra.mxu0 %v2774
    %2870 = vmatprep.subr.mxu0 0.0
    %2871 = vmatpush2.msra.mxu0 0.0
    %2872 = vmatprep.subr.mxu0 0.0
    %2873 = vmatpush2.msra.mxu0 0.0
    %2874 = vmatprep.subr.mxu0 0.0
    %2875 = vmatpush2.msra.mxu0 0.0
    %2876 = vmatprep.subr.mxu0 0.0
    %2877 = vmatpush2.msra.mxu0 0.0
    %2878 = vmatprep.subr.mxu0 0.0
    %2879 = vmatpush2.msra.mxu0 0.0
    %2880 = vmatprep.subr.mxu0 0.0
    %2881 = vmatpush2.msra.mxu0 0.0
    %2882 = vmatprep.subr.mxu0 0.0
    %2883 = vmatpush2.msra.mxu0 0.0
    %2884 = vmatprep.subr.mxu0 0.0
    %2885 = vmatpush2.msra.mxu0 0.0
    %2886 = vmatprep.subr.mxu0 0.0
    %2887 = vmatpush2.msra.mxu0 0.0
    %2888 = vmatprep.subr.mxu0 0.0
    %2889 = vmatpush2.msra.mxu0 0.0
    %2890 = vmatprep.subr.mxu0 0.0
    %2891 = vmatpush2.msra.mxu0 0.0
    %2892 = vmatprep.subr.mxu0 0.0
    %2893 = vmatpush2.msra.mxu0 0.0
    %2894 = vmatprep.subr.mxu0 0.0
    %2895 = vmatpush2.msra.mxu0 0.0
    %2896 = vmatprep.subr.mxu0 0.0
    %2897 = vmatpush2.msra.mxu0 0.0
    %2898 = vmatprep.subr.mxu0 0.0
    %2899 = vmatpush2.msra.mxu0 0.0
    %2900 = vmatprep.subr.mxu0 0.0
    %2901 = vmatpush2.msra.mxu0 0.0
    %2902 = vmatprep.mubr.f32.mxu0 0.0
    %2903 = vmatmul.mubr.f32.gmra.mxu0 %v2673
    %v2904 = vpop.f32.mrf.mxu0
    %v2905 = vadd.f32 0.0, %v2904
    %v2906 = vpop.f32.mrf.mxu0
    %v2907 = vadd.f32 0.0, %v2906
    %2908 = vdwg.mxu0
    %2909 = vmatprep.subr.mxu0 %v2837
    %2910 = vmatpush1.msra.mxu0 %v2836
    %2911 = vmatprep.subr.mxu0 %v2833
    %2912 = vmatpush1.msra.mxu0 %v2832
    %2913 = vmatprep.subr.mxu0 %v2829
    %2914 = vmatpush1.msra.mxu0 %v2828
    %2915 = vmatprep.subr.mxu0 %v2825
    %2916 = vmatpush1.msra.mxu0 %v2824
    %2917 = vmatprep.subr.mxu0 %v2821
    %2918 = vmatpush1.msra.mxu0 %v2820
    %2919 = vmatprep.subr.mxu0 %v2817
    %2920 = vmatpush1.msra.mxu0 %v2816
    %2921 = vmatprep.subr.mxu0 %v2813
    %2922 = vmatpush1.msra.mxu0 %v2812
    %2923 = vmatprep.subr.mxu0 %v2809
    %2924 = vmatpush1.msra.mxu0 %v2808
    %2925 = vmatprep.subr.mxu0 %v2805
    %2926 = vmatpush1.msra.mxu0 %v2804
    %2927 = vmatprep.subr.mxu0 %v2801
    %2928 = vmatpush1.msra.mxu0 %v2800
    %2929 = vmatprep.subr.mxu0 %v2797
    %2930 = vmatpush1.msra.mxu0 %v2796
    %2931 = vmatprep.subr.mxu0 %v2793
    %2932 = vmatpush1.msra.mxu0 %v2792
    %2933 = vmatprep.subr.mxu0 %v2789
    %2934 = vmatpush1.msra.mxu0 %v2788
    %2935 = vmatprep.subr.mxu0 %v2785
    %2936 = vmatpush1.msra.mxu0 %v2784
    %2937 = vmatprep.subr.mxu0 %v2781
    %2938 = vmatpush1.msra.mxu0 %v2780
    %2939 = vmatprep.subr.mxu0 %v2777
    %2940 = vmatpush1.msra.mxu0 %v2776
    %2941 = vmatprep.subr.mxu0 0.0
    %2942 = vmatpush2.msra.mxu0 0.0
    %2943 = vmatprep.subr.mxu0 0.0
    %2944 = vmatpush2.msra.mxu0 0.0
    %2945 = vmatprep.subr.mxu0 0.0
    %2946 = vmatpush2.msra.mxu0 0.0
    %2947 = vmatprep.subr.mxu0 0.0
    %2948 = vmatpush2.msra.mxu0 0.0
    %2949 = vmatprep.subr.mxu0 0.0
    %2950 = vmatpush2.msra.mxu0 0.0
    %2951 = vmatprep.subr.mxu0 0.0
    %2952 = vmatpush2.msra.mxu0 0.0
    %2953 = vmatprep.subr.mxu0 0.0
    %2954 = vmatpush2.msra.mxu0 0.0
    %2955 = vmatprep.subr.mxu0 0.0
    %2956 = vmatpush2.msra.mxu0 0.0
    %2957 = vmatprep.subr.mxu0 0.0
    %2958 = vmatpush2.msra.mxu0 0.0
    %2959 = vmatprep.subr.mxu0 0.0
    %2960 = vmatpush2.msra.mxu0 0.0
    %2961 = vmatprep.subr.mxu0 0.0
    %2962 = vmatpush2.msra.mxu0 0.0
    %2963 = vmatprep.subr.mxu0 0.0
    %2964 = vmatpush2.msra.mxu0 0.0
    %2965 = vmatprep.subr.mxu0 0.0
    %2966 = vmatpush2.msra.mxu0 0.0
    %2967 = vmatprep.subr.mxu0 0.0
    %2968 = vmatpush2.msra.mxu0 0.0
    %2969 = vmatprep.subr.mxu0 0.0
    %2970 = vmatpush2.msra.mxu0 0.0
    %2971 = vmatprep.subr.mxu0 0.0
    %2972 = vmatpush2.msra.mxu0 0.0
    %2973 = vmatprep.mubr.f32.mxu0 0.0
    %2974 = vmatmul.mubr.f32.gmra.mxu0 %v2673
    %v2975 = vpop.f32.mrf.mxu0
    %v2976 = vadd.f32 0.0, %v2975
    %v2977 = vpop.f32.mrf.mxu0
    %v2978 = vadd.f32 0.0, %v2977
    %2979 = vdwg.mxu0
    %v2980 = vadd.f32 %v2907, %v200
    %v2981 = vadd.f32 %v2976, %v204
    %v2982 = vadd.f32 %v2978, %v208
    %v2984 = vcombine.high %v2905, %v2905
    %v2986 = vunpack.c.l.s4 1966171168
    %v2987 = vunpack.c.0.s8 %v2986
    %v2988 = vlaneseq
    %v2989 = vshrl.u32 %v2988, 7
    %v2990 = vsub.s32 %v2987, %v2989
    %v2991 = vrot.slane %v2905, %v2990
    %v2993 = vunpack.c.l.s4 1966171168
    %v2994 = vunpack.c.0.s8 %v2993
    %v2995 = vlaneseq
    %v2996 = vshrl.u32 %v2995, 7
    %v2997 = vsub.s32 %v2994, %v2996
    %v2998 = vrot.slane %v2984, %v2997
    %v2999 = vcombine.high %v2991, %v2991
    %v3000 = vcombine.high %v2998, %v2998
    %v3002 = vunpack.c.l.s4 1966171168
    %v3003 = vunpack.c.0.s8 %v3002
    %v3004 = vlaneseq
    %v3005 = vshrl.u32 %v3004, 7
    %v3006 = vsub.s32 %v3003, %v3005
    %v3007 = vrot.slane %v2991, %v3006
    %v3009 = vunpack.c.l.s4 1966171168
    %v3010 = vunpack.c.0.s8 %v3009
    %v3011 = vlaneseq
    %v3012 = vshrl.u32 %v3011, 7
    %v3013 = vsub.s32 %v3010, %v3012
    %v3014 = vrot.slane %v2998, %v3013
    %v3016 = vunpack.c.l.s4 1966171168
    %v3017 = vunpack.c.0.s8 %v3016
    %v3018 = vlaneseq
    %v3019 = vshrl.u32 %v3018, 7
    %v3020 = vsub.s32 %v3017, %v3019
    %v3021 = vrot.slane %v2999, %v3020
    %v3023 = vunpack.c.l.s4 1966171168
    %v3024 = vunpack.c.0.s8 %v3023
    %v3025 = vlaneseq
    %v3026 = vshrl.u32 %v3025, 7
    %v3027 = vsub.s32 %v3024, %v3026
    %v3028 = vrot.slane %v3000, %v3027
    %v3029 = vcombine.high %v3007, %v3007
    %v3030 = vcombine.high %v3014, %v3014
    %v3031 = vcombine.high %v3021, %v3021
    %v3032 = vcombine.high %v3028, %v3028
    %v3033 = vlaneseq
    %v3034 = vshrl.u32 %v3033, 7
    %v3035 = vsub.s32 0, %v3034
    %v3036 = vrot.slane %v3007, %v3035
    %v3037 = vlaneseq
    %v3038 = vshrl.u32 %v3037, 7
    %v3039 = vsub.s32 0, %v3038
    %v3040 = vrot.slane %v3021, %v3039
    %v3041 = vlaneseq
    %v3042 = vshrl.u32 %v3041, 7
    %v3043 = vsub.s32 0, %v3042
    %v3044 = vrot.slane %v3029, %v3043
    %v3045 = vlaneseq
    %v3046 = vshrl.u32 %v3045, 7
    %v3047 = vsub.s32 0, %v3046
    %v3048 = vrot.slane %v3031, %v3047
    %v3049 = vlaneseq
    %v3050 = vshrl.u32 %v3049, 7
    %v3051 = vsub.s32 0, %v3050
    %v3052 = vrot.slane %v3014, %v3051
    %v3053 = vlaneseq
    %v3054 = vshrl.u32 %v3053, 7
    %v3055 = vsub.s32 0, %v3054
    %v3056 = vrot.slane %v3028, %v3055
    %v3057 = vlaneseq
    %v3058 = vshrl.u32 %v3057, 7
    %v3059 = vsub.s32 0, %v3058
    %v3060 = vrot.slane %v3030, %v3059
    %v3061 = vlaneseq
    %v3062 = vshrl.u32 %v3061, 7
    %v3063 = vsub.s32 0, %v3062
    %v3064 = vrot.slane %v3032, %v3063
    %v3073 = vadd.f32 %v3036, %v139
    %v3074 = vadd.f32 %v3040, %v144
    %v3075 = vadd.f32 %v3044, %v149
    %v3076 = vadd.f32 %v3048, %v154
    %v3077 = vadd.f32 %v3052, %v159
    %v3078 = vadd.f32 %v3056, %v164
    %v3079 = vadd.f32 %v3060, %v169
    %v3080 = vadd.f32 %v3064, %v174
    %v3081 = vtanh.pop %v3073
    %v3082 = vtanh.pop %v3074
    %v3083 = vtanh.pop %v3075
    %v3084 = vtanh.pop %v3076
    %v3085 = vtanh.pop %v3077
    %v3086 = vtanh.pop %v3078
    %v3087 = vtanh.pop %v3079
    %v3088 = vtanh.pop %v3080
    %v3089 = vmul.f32 %v3081, %v539
    %v3090 = vmul.f32 %v3082, %v539
    %v3091 = vmul.f32 %v3083, %v539
    %v3092 = vmul.f32 %v3084, %v539
    %v3093 = vmul.f32 %v3085, %v539
    %v3094 = vmul.f32 %v3086, %v539
    %v3095 = vmul.f32 %v3087, %v539
    %v3096 = vmul.f32 %v3088, %v539
    %3097 = vadd.xlane.f32.xlu0 %v3089
    %v3098 = vpop.xlane.xlu0 %3097
    %3099 = vadd.xlane.f32.xlu0 %v3090
    %v3100 = vpop.xlane.xlu0 %3099
    %3101 = vadd.xlane.f32.xlu0 %v3091
    %v3102 = vpop.xlane.xlu0 %3101
    %3103 = vadd.xlane.f32.xlu0 %v3092
    %v3104 = vpop.xlane.xlu0 %3103
    %3105 = vadd.xlane.f32.xlu0 %v3093
    %v3106 = vpop.xlane.xlu0 %3105
    %3107 = vadd.xlane.f32.xlu0 %v3094
    %v3108 = vpop.xlane.xlu0 %3107
    %3109 = vadd.xlane.f32.xlu0 %v3095
    %v3110 = vpop.xlane.xlu0 %3109
    %3111 = vadd.xlane.f32.xlu0 %v3096
    %v3112 = vpop.xlane.xlu0 %3111
    %v3121 = vlaneseq
    %v3122 = vshrl.u32 %v3121, 7
    %v3123 = vsub.s32 %v574, %v3122
    %v3124 = vrot.slane %v3098, %v3123
    %v3125 = vlaneseq
    %v3126 = vshrl.u32 %v3125, 7
    %v3127 = vsub.s32 %v574, %v3126
    %v3128 = vrot.slane %v3100, %v3127
    %v3129 = vlaneseq
    %v3130 = vshrl.u32 %v3129, 7
    %v3131 = vsub.s32 %v574, %v3130
    %v3132 = vrot.slane %v3102, %v3131
    %v3133 = vlaneseq
    %v3134 = vshrl.u32 %v3133, 7
    %v3135 = vsub.s32 %v574, %v3134
    %v3136 = vrot.slane %v3104, %v3135
    %v3137 = vlaneseq
    %v3138 = vshrl.u32 %v3137, 7
    %v3139 = vsub.s32 %v574, %v3138
    %v3140 = vrot.slane %v3106, %v3139
    %v3141 = vlaneseq
    %v3142 = vshrl.u32 %v3141, 7
    %v3143 = vsub.s32 %v574, %v3142
    %v3144 = vrot.slane %v3108, %v3143
    %v3145 = vlaneseq
    %v3146 = vshrl.u32 %v3145, 7
    %v3147 = vsub.s32 %v574, %v3146
    %v3148 = vrot.slane %v3110, %v3147
    %v3149 = vlaneseq
    %v3150 = vshrl.u32 %v3149, 7
    %v3151 = vsub.s32 %v574, %v3150
    %v3152 = vrot.slane %v3112, %v3151
    %v3153 = vsel %vm607, %v3128, %v3124
    %v3154 = vsel %vm609, %v3132, %v3153
    %v3155 = vsel %vm611, %v3136, %v3154
    %v3156 = vsel %vm613, %v3140, %v3155
    %v3157 = vsel %vm615, %v3144, %v3156
    %v3158 = vsel %vm617, %v3148, %v3157
    %v3159 = vsel %vm619, %v3152, %v3158
    %v3161 = vsel %vm55, %v3159, -1e+09
    %v3162 = vsel %vm623, %v3161, -inf
    %3163 = vmax.xlane.f32.xlu0 %v3162
    %v3164 = vpop.xlane.xlu0 %3163
    %v3165 = vsub.f32 %v3161, %v3164
    %v3166 = vmul.f32 %v3165, 1.442695
    %v3167 = vpow.pop %v3166
    %v3168 = vsel %vm623, %v3167, 0.0
    %3169 = vadd.xlane.f32.xlu0 %v3168
    %v3170 = vpop.xlane.xlu0 %3169
    %v3171 = vrcp.pop %v3170
    %v3172 = vmul.f32 %v3167, %v3171
    %v3173 = vlaneseq
    %v3174 = vshrl.u32 %v3173, 7
    %v3175 = vsub.s32 0, %v3174
    %v3176 = vrot.slane %v3172, %v3175
    %3178 = vbcast.lane.b32.xlu0 %v3176, 256
    %v3179 = vpop.permute.xlu0 %3178
    %v3180 = vlaneseq
    %v3181 = vshrl.u32 %v3180, 7
    %v3182 = vsub.s32 1, %v3181
    %v3183 = vrot.slane %v3172, %v3182
    %3185 = vbcast.lane.b32.xlu0 %v3183, 256
    %v3186 = vpop.permute.xlu0 %3185
    %v3187 = vlaneseq
    %v3188 = vshrl.u32 %v3187, 7
    %v3189 = vsub.s32 2, %v3188
    %v3190 = vrot.slane %v3172, %v3189
    %3192 = vbcast.lane.b32.xlu0 %v3190, 256
    %v3193 = vpop.permute.xlu0 %3192
    %v3194 = vlaneseq
    %v3195 = vshrl.u32 %v3194, 7
    %v3196 = vsub.s32 3, %v3195
    %v3197 = vrot.slane %v3172, %v3196
    %3199 = vbcast.lane.b32.xlu0 %v3197, 256
    %v3200 = vpop.permute.xlu0 %3199
    %v3201 = vlaneseq
    %v3202 = vshrl.u32 %v3201, 7
    %v3203 = vsub.s32 4, %v3202
    %v3204 = vrot.slane %v3172, %v3203
    %3206 = vbcast.lane.b32.xlu0 %v3204, 256
    %v3207 = vpop.permute.xlu0 %3206
    %v3208 = vlaneseq
    %v3209 = vshrl.u32 %v3208, 7
    %v3210 = vsub.s32 5, %v3209
    %v3211 = vrot.slane %v3172, %v3210
    %3213 = vbcast.lane.b32.xlu0 %v3211, 256
    %v3214 = vpop.permute.xlu0 %3213
    %v3215 = vlaneseq
    %v3216 = vshrl.u32 %v3215, 7
    %v3217 = vsub.s32 6, %v3216
    %v3218 = vrot.slane %v3172, %v3217
    %3220 = vbcast.lane.b32.xlu0 %v3218, 256
    %v3221 = vpop.permute.xlu0 %3220
    %v3222 = vlaneseq
    %v3223 = vshrl.u32 %v3222, 7
    %v3224 = vsub.s32 7, %v3223
    %v3225 = vrot.slane %v3172, %v3224
    %3227 = vbcast.lane.b32.xlu0 %v3225, 256
    %v3228 = vpop.permute.xlu0 %3227
    %v3229 = vmul.f32 %v3179, %v46
    %v3230 = vmul.f32 %v3186, %v47
    %v3231 = vmul.f32 %v3193, %v48
    %v3232 = vmul.f32 %v3200, %v49
    %v3233 = vmul.f32 %v3207, %v50
    %v3234 = vmul.f32 %v3214, %v51
    %v3235 = vmul.f32 %v3221, %v52
    %v3236 = vmul.f32 %v3228, %v53
    %v3237 = vrot.slane %v3229, 4
    %v3238 = vadd.f32 %v3229, %v3237
    %v3239 = vrot.slane %v3238, 2
    %v3240 = vadd.f32 %v3238, %v3239
    %v3241 = vrot.slane %v3240, 1
    %v3242 = vadd.f32 %v3240, %v3241
    %v3243 = vrot.slane %v3230, 4
    %v3244 = vadd.f32 %v3230, %v3243
    %v3245 = vrot.slane %v3244, 2
    %v3246 = vadd.f32 %v3244, %v3245
    %v3247 = vrot.slane %v3246, 1
    %v3248 = vadd.f32 %v3246, %v3247
    %v3249 = vrot.slane %v3231, 4
    %v3250 = vadd.f32 %v3231, %v3249
    %v3251 = vrot.slane %v3250, 2
    %v3252 = vadd.f32 %v3250, %v3251
    %v3253 = vrot.slane %v3252, 1
    %v3254 = vadd.f32 %v3252, %v3253
    %v3255 = vrot.slane %v3232, 4
    %v3256 = vadd.f32 %v3232, %v3255
    %v3257 = vrot.slane %v3256, 2
    %v3258 = vadd.f32 %v3256, %v3257
    %v3259 = vrot.slane %v3258, 1
    %v3260 = vadd.f32 %v3258, %v3259
    %v3261 = vrot.slane %v3233, 4
    %v3262 = vadd.f32 %v3233, %v3261
    %v3263 = vrot.slane %v3262, 2
    %v3264 = vadd.f32 %v3262, %v3263
    %v3265 = vrot.slane %v3264, 1
    %v3266 = vadd.f32 %v3264, %v3265
    %v3267 = vrot.slane %v3234, 4
    %v3268 = vadd.f32 %v3234, %v3267
    %v3269 = vrot.slane %v3268, 2
    %v3270 = vadd.f32 %v3268, %v3269
    %v3271 = vrot.slane %v3270, 1
    %v3272 = vadd.f32 %v3270, %v3271
    %v3273 = vrot.slane %v3235, 4
    %v3274 = vadd.f32 %v3235, %v3273
    %v3275 = vrot.slane %v3274, 2
    %v3276 = vadd.f32 %v3274, %v3275
    %v3277 = vrot.slane %v3276, 1
    %v3278 = vadd.f32 %v3276, %v3277
    %v3279 = vrot.slane %v3236, 4
    %v3280 = vadd.f32 %v3236, %v3279
    %v3281 = vrot.slane %v3280, 2
    %v3282 = vadd.f32 %v3280, %v3281
    %v3283 = vrot.slane %v3282, 1
    %v3284 = vadd.f32 %v3282, %v3283
    %s3285 = scalar_lea.vmem %s0, 72
    %v3286 = vld [vmem:[%s3285] sm:$0xff]
    %v3287 = vld [vmem:[%s3285 + $0x8] sm:$0xff]
    %v3288 = vld [vmem:[%s3285 + $0x10] sm:$0xff]
    %v3289 = vld [vmem:[%s7] sm:$0xff]
    %v3290 = vld [vmem:[%s7 + $0x8] sm:$0xff]
    %v3291 = vld [vmem:[%s7 + $0x10] sm:$0xff]
    %v3292 = vld [vmem:[%s7 + $0x18] sm:$0xff]
    %v3293 = vld [vmem:[%s7 + $0x20] sm:$0xff]
    %v3294 = vld [vmem:[%s7 + $0x28] sm:$0xff]
    %v3295 = vld [vmem:[%s7 + $0x30] sm:$0xff]
    %v3296 = vld [vmem:[%s7 + $0x38] sm:$0xff]
    %v3297 = vld [vmem:[%s7 + $0x40] sm:$0xff]
    %v3298 = vld [vmem:[%s7 + $0x48] sm:$0xff]
    %v3299 = vld [vmem:[%s7 + $0x50] sm:$0xff]
    %v3300 = vld [vmem:[%s7 + $0x58] sm:$0xff]
    %v3301 = vld [vmem:[%s7 + $0x60] sm:$0xff]
    %v3302 = vld [vmem:[%s7 + $0x68] sm:$0xff]
    %v3303 = vld [vmem:[%s7 + $0x70] sm:$0xff]
    %v3304 = vld [vmem:[%s7 + $0x78] sm:$0xff]
    %v3305 = vld [vmem:[%s7 + $0x80] sm:$0xff]
    %v3306 = vld [vmem:[%s7 + $0x88] sm:$0xff]
    %v3307 = vld [vmem:[%s7 + $0x90] sm:$0xff]
    %v3308 = vld [vmem:[%s7 + $0x98] sm:$0xff]
    %v3309 = vld [vmem:[%s7 + $0xa0] sm:$0xff]
    %v3310 = vld [vmem:[%s7 + $0xa8] sm:$0xff]
    %v3311 = vld [vmem:[%s7 + $0xb0] sm:$0xff]
    %v3312 = vld [vmem:[%s7 + $0xb8] sm:$0xff]
    %v3313 = vld [vmem:[%s7 + $0xc0] sm:$0xff]
    %v3314 = vld [vmem:[%s7 + $0xc8] sm:$0xff]
    %v3315 = vld [vmem:[%s7 + $0xd0] sm:$0xff]
    %v3316 = vld [vmem:[%s7 + $0xd8] sm:$0xff]
    %v3317 = vld [vmem:[%s7 + $0xe0] sm:$0xff]
    %v3318 = vld [vmem:[%s7 + $0xe8] sm:$0xff]
    %v3319 = vld [vmem:[%s7 + $0xf0] sm:$0xff]
    %v3320 = vld [vmem:[%s7 + $0xf8] sm:$0xff]
    %v3321 = vld [vmem:[%s7 + $0x100] sm:$0xff]
    %v3322 = vld [vmem:[%s7 + $0x108] sm:$0xff]
    %v3323 = vld [vmem:[%s7 + $0x110] sm:$0xff]
    %v3324 = vld [vmem:[%s7 + $0x118] sm:$0xff]
    %v3325 = vld [vmem:[%s7 + $0x120] sm:$0xff]
    %v3326 = vld [vmem:[%s7 + $0x128] sm:$0xff]
    %v3327 = vld [vmem:[%s7 + $0x130] sm:$0xff]
    %v3328 = vld [vmem:[%s7 + $0x138] sm:$0xff]
    %v3329 = vld [vmem:[%s7 + $0x140] sm:$0xff]
    %v3330 = vld [vmem:[%s7 + $0x148] sm:$0xff]
    %v3331 = vld [vmem:[%s7 + $0x150] sm:$0xff]
    %v3332 = vld [vmem:[%s7 + $0x158] sm:$0xff]
    %v3333 = vld [vmem:[%s7 + $0x160] sm:$0xff]
    %v3334 = vld [vmem:[%s7 + $0x168] sm:$0xff]
    %v3335 = vld [vmem:[%s7 + $0x170] sm:$0xff]
    %v3336 = vld [vmem:[%s7 + $0x178] sm:$0xff]
    %v3345 = vsel %vm607, %v3248, %v3242
    %v3346 = vsel %vm609, %v3254, %v3345
    %v3347 = vsel %vm611, %v3260, %v3346
    %v3348 = vsel %vm613, %v3266, %v3347
    %v3349 = vsel %vm615, %v3272, %v3348
    %v3350 = vsel %vm617, %v3278, %v3349
    %v3351 = vsel %vm619, %v3284, %v3350
    %3353 = vmatprep.subr.mxu0 %v3335
    %3354 = vmatpush1.msra.mxu0 %v3334
    %3355 = vmatprep.subr.mxu0 %v3332
    %3356 = vmatpush1.msra.mxu0 %v3331
    %3357 = vmatprep.subr.mxu0 %v3329
    %3358 = vmatpush1.msra.mxu0 %v3328
    %3359 = vmatprep.subr.mxu0 %v3326
    %3360 = vmatpush1.msra.mxu0 %v3325
    %3361 = vmatprep.subr.mxu0 %v3323
    %3362 = vmatpush1.msra.mxu0 %v3322
    %3363 = vmatprep.subr.mxu0 %v3320
    %3364 = vmatpush1.msra.mxu0 %v3319
    %3365 = vmatprep.subr.mxu0 %v3317
    %3366 = vmatpush1.msra.mxu0 %v3316
    %3367 = vmatprep.subr.mxu0 %v3314
    %3368 = vmatpush1.msra.mxu0 %v3313
    %3369 = vmatprep.subr.mxu0 %v3311
    %3370 = vmatpush1.msra.mxu0 %v3310
    %3371 = vmatprep.subr.mxu0 %v3308
    %3372 = vmatpush1.msra.mxu0 %v3307
    %3373 = vmatprep.subr.mxu0 %v3305
    %3374 = vmatpush1.msra.mxu0 %v3304
    %3375 = vmatprep.subr.mxu0 %v3302
    %3376 = vmatpush1.msra.mxu0 %v3301
    %3377 = vmatprep.subr.mxu0 %v3299
    %3378 = vmatpush1.msra.mxu0 %v3298
    %3379 = vmatprep.subr.mxu0 %v3296
    %3380 = vmatpush1.msra.mxu0 %v3295
    %3381 = vmatprep.subr.mxu0 %v3293
    %3382 = vmatpush1.msra.mxu0 %v3292
    %3383 = vmatprep.subr.mxu0 %v3290
    %3384 = vmatpush1.msra.mxu0 %v3289
    %3385 = vmatprep.subr.mxu0 0.0
    %3386 = vmatpush2.msra.mxu0 0.0
    %3387 = vmatprep.subr.mxu0 0.0
    %3388 = vmatpush2.msra.mxu0 0.0
    %3389 = vmatprep.subr.mxu0 0.0
    %3390 = vmatpush2.msra.mxu0 0.0
    %3391 = vmatprep.subr.mxu0 0.0
    %3392 = vmatpush2.msra.mxu0 0.0
    %3393 = vmatprep.subr.mxu0 0.0
    %3394 = vmatpush2.msra.mxu0 0.0
    %3395 = vmatprep.subr.mxu0 0.0
    %3396 = vmatpush2.msra.mxu0 0.0
    %3397 = vmatprep.subr.mxu0 0.0
    %3398 = vmatpush2.msra.mxu0 0.0
    %3399 = vmatprep.subr.mxu0 0.0
    %3400 = vmatpush2.msra.mxu0 0.0
    %3401 = vmatprep.subr.mxu0 0.0
    %3402 = vmatpush2.msra.mxu0 0.0
    %3403 = vmatprep.subr.mxu0 0.0
    %3404 = vmatpush2.msra.mxu0 0.0
    %3405 = vmatprep.subr.mxu0 0.0
    %3406 = vmatpush2.msra.mxu0 0.0
    %3407 = vmatprep.subr.mxu0 0.0
    %3408 = vmatpush2.msra.mxu0 0.0
    %3409 = vmatprep.subr.mxu0 0.0
    %3410 = vmatpush2.msra.mxu0 0.0
    %3411 = vmatprep.subr.mxu0 0.0
    %3412 = vmatpush2.msra.mxu0 0.0
    %3413 = vmatprep.subr.mxu0 0.0
    %3414 = vmatpush2.msra.mxu0 0.0
    %3415 = vmatprep.subr.mxu0 0.0
    %3416 = vmatpush2.msra.mxu0 0.0
    %3417 = vmatprep.mubr.f32.mxu0 0.0
    %3418 = vmatmul.mubr.f32.gmra.mxu0 %v3351
    %v3419 = vpop.f32.mrf.mxu0
    %v3420 = vadd.f32 0.0, %v3419
    %v3421 = vpop.f32.mrf.mxu0
    %v3422 = vadd.f32 0.0, %v3421
    %3423 = vdwg.mxu0
    %3424 = vmatprep.subr.mxu0 0.0
    %3425 = vmatpush1.msra.mxu0 %v3336
    %3426 = vmatprep.subr.mxu0 0.0
    %3427 = vmatpush1.msra.mxu0 %v3333
    %3428 = vmatprep.subr.mxu0 0.0
    %3429 = vmatpush1.msra.mxu0 %v3330
    %3430 = vmatprep.subr.mxu0 0.0
    %3431 = vmatpush1.msra.mxu0 %v3327
    %3432 = vmatprep.subr.mxu0 0.0
    %3433 = vmatpush1.msra.mxu0 %v3324
    %3434 = vmatprep.subr.mxu0 0.0
    %3435 = vmatpush1.msra.mxu0 %v3321
    %3436 = vmatprep.subr.mxu0 0.0
    %3437 = vmatpush1.msra.mxu0 %v3318
    %3438 = vmatprep.subr.mxu0 0.0
    %3439 = vmatpush1.msra.mxu0 %v3315
    %3440 = vmatprep.subr.mxu0 0.0
    %3441 = vmatpush1.msra.mxu0 %v3312
    %3442 = vmatprep.subr.mxu0 0.0
    %3443 = vmatpush1.msra.mxu0 %v3309
    %3444 = vmatprep.subr.mxu0 0.0
    %3445 = vmatpush1.msra.mxu0 %v3306
    %3446 = vmatprep.subr.mxu0 0.0
    %3447 = vmatpush1.msra.mxu0 %v3303
    %3448 = vmatprep.subr.mxu0 0.0
    %3449 = vmatpush1.msra.mxu0 %v3300
    %3450 = vmatprep.subr.mxu0 0.0
    %3451 = vmatpush1.msra.mxu0 %v3297
    %3452 = vmatprep.subr.mxu0 0.0
    %3453 = vmatpush1.msra.mxu0 %v3294
    %3454 = vmatprep.subr.mxu0 0.0
    %3455 = vmatpush1.msra.mxu0 %v3291
    %3456 = vmatprep.subr.mxu0 0.0
    %3457 = vmatpush2.msra.mxu0 0.0
    %3458 = vmatprep.subr.mxu0 0.0
    %3459 = vmatpush2.msra.mxu0 0.0
    %3460 = vmatprep.subr.mxu0 0.0
    %3461 = vmatpush2.msra.mxu0 0.0
    %3462 = vmatprep.subr.mxu0 0.0
    %3463 = vmatpush2.msra.mxu0 0.0
    %3464 = vmatprep.subr.mxu0 0.0
    %3465 = vmatpush2.msra.mxu0 0.0
    %3466 = vmatprep.subr.mxu0 0.0
    %3467 = vmatpush2.msra.mxu0 0.0
    %3468 = vmatprep.subr.mxu0 0.0
    %3469 = vmatpush2.msra.mxu0 0.0
    %3470 = vmatprep.subr.mxu0 0.0
    %3471 = vmatpush2.msra.mxu0 0.0
    %3472 = vmatprep.subr.mxu0 0.0
    %3473 = vmatpush2.msra.mxu0 0.0
    %3474 = vmatprep.subr.mxu0 0.0
    %3475 = vmatpush2.msra.mxu0 0.0
    %3476 = vmatprep.subr.mxu0 0.0
    %3477 = vmatpush2.msra.mxu0 0.0
    %3478 = vmatprep.subr.mxu0 0.0
    %3479 = vmatpush2.msra.mxu0 0.0
    %3480 = vmatprep.subr.mxu0 0.0
    %3481 = vmatpush2.msra.mxu0 0.0
    %3482 = vmatprep.subr.mxu0 0.0
    %3483 = vmatpush2.msra.mxu0 0.0
    %3484 = vmatprep.subr.mxu0 0.0
    %3485 = vmatpush2.msra.mxu0 0.0
    %3486 = vmatprep.subr.mxu0 0.0
    %3487 = vmatpush2.msra.mxu0 0.0
    %3488 = vmatprep.mubr.f32.mxu0 0.0
    %3489 = vmatmul.mubr.f32.gmra.mxu0 %v3351
    %v3490 = vpop.f32.mrf.mxu0
    %v3491 = vadd.f32 0.0, %v3490
    %v3492 = vpop.f32.mrf.mxu0
    %3493 = vdwg.mxu0
    %v3494 = vadd.f32 %v3286, %v3420
    %v3495 = vadd.f32 %v3287, %v3422
    %v3496 = vadd.f32 %v3288, %v3491
    %v3497 = vadd.f32 %v3494, %v183
    %v3498 = vadd.f32 %v3495, %v187
    %v3499 = vadd.f32 %v3496, %v191
    %v3500 = vadd.f32 %v3497, %v2980
    %v3501 = vxor.u32 %v3500, 2147483648
    %v3502 = vmul.f32 %v3501, 1.442695
    %v3503 = vpow.pop %v3502
    %v3504 = vadd.f32 %v3503, 1.0
    %v3505 = vrcp.pop %v3504
    %v3506 = vmul.f32 1.0, %v3505
    %v3507 = vadd.f32 %v3498, %v2981
    %v3508 = vxor.u32 %v3507, 2147483648
    %v3509 = vmul.f32 %v3508, 1.442695
    %v3510 = vpow.pop %v3509
    %v3511 = vadd.f32 %v3510, 1.0
    %v3512 = vrcp.pop %v3511
    %v3513 = vmul.f32 1.0, %v3512
    %v3514 = vmul.f32 %v3506, %v2982
    %v3515 = vadd.f32 %v3499, %v3514
    %v3516 = vtanh.pop %v3515
    %v3517 = vsub.f32 1.0, %v3513
    %v3518 = vmul.f32 %v3517, %v3516
    %v3519 = vmul.f32 %v3513, %v2673
    %v3520 = vadd.f32 %v3518, %v3519
    %v3521 = vld [vmem:[%s10] sm:$0xff]
    %v3522 = vld [vmem:[%s10 + $0x8] sm:$0xff]
    %v3523 = vld [vmem:[%s10 + $0x10] sm:$0xff]
    %v3524 = vld [vmem:[%s10 + $0x18] sm:$0xff]
    %v3525 = vld [vmem:[%s10 + $0x20] sm:$0xff]
    %v3526 = vld [vmem:[%s10 + $0x28] sm:$0xff]
    %v3527 = vld [vmem:[%s10 + $0x30] sm:$0xff]
    %v3528 = vld [vmem:[%s10 + $0x38] sm:$0xff]
    %v3529 = vld [vmem:[%s10 + $0x40] sm:$0xff]
    %v3530 = vld [vmem:[%s10 + $0x48] sm:$0xff]
    %v3531 = vld [vmem:[%s10 + $0x50] sm:$0xff]
    %v3532 = vld [vmem:[%s10 + $0x58] sm:$0xff]
    %v3533 = vld [vmem:[%s10 + $0x60] sm:$0xff]
    %v3534 = vld [vmem:[%s10 + $0x68] sm:$0xff]
    %v3535 = vld [vmem:[%s10 + $0x70] sm:$0xff]
    %v3536 = vld [vmem:[%s10 + $0x78] sm:$0xff]
    %3537 = vmatprep.subr.mxu0 0.0
    %3538 = vmatpush1.msra.mxu0 %v3536
    %3539 = vmatprep.subr.mxu0 0.0
    %3540 = vmatpush1.msra.mxu0 %v3535
    %3541 = vmatprep.subr.mxu0 0.0
    %3542 = vmatpush1.msra.mxu0 %v3534
    %3543 = vmatprep.subr.mxu0 0.0
    %3544 = vmatpush1.msra.mxu0 %v3533
    %3545 = vmatprep.subr.mxu0 0.0
    %3546 = vmatpush1.msra.mxu0 %v3532
    %3547 = vmatprep.subr.mxu0 0.0
    %3548 = vmatpush1.msra.mxu0 %v3531
    %3549 = vmatprep.subr.mxu0 0.0
    %3550 = vmatpush1.msra.mxu0 %v3530
    %3551 = vmatprep.subr.mxu0 0.0
    %3552 = vmatpush1.msra.mxu0 %v3529
    %3553 = vmatprep.subr.mxu0 0.0
    %3554 = vmatpush1.msra.mxu0 %v3528
    %3555 = vmatprep.subr.mxu0 0.0
    %3556 = vmatpush1.msra.mxu0 %v3527
    %3557 = vmatprep.subr.mxu0 0.0
    %3558 = vmatpush1.msra.mxu0 %v3526
    %3559 = vmatprep.subr.mxu0 0.0
    %3560 = vmatpush1.msra.mxu0 %v3525
    %3561 = vmatprep.subr.mxu0 0.0
    %3562 = vmatpush1.msra.mxu0 %v3524
    %3563 = vmatprep.subr.mxu0 0.0
    %3564 = vmatpush1.msra.mxu0 %v3523
    %3565 = vmatprep.subr.mxu0 0.0
    %3566 = vmatpush1.msra.mxu0 %v3522
    %3567 = vmatprep.subr.mxu0 0.0
    %3568 = vmatpush1.msra.mxu0 %v3521
    %3569 = vmatprep.subr.mxu0 0.0
    %3570 = vmatpush2.msra.mxu0 0.0
    %3571 = vmatprep.subr.mxu0 0.0
    %3572 = vmatpush2.msra.mxu0 0.0
    %3573 = vmatprep.subr.mxu0 0.0
    %3574 = vmatpush2.msra.mxu0 0.0
    %3575 = vmatprep.subr.mxu0 0.0
    %3576 = vmatpush2.msra.mxu0 0.0
    %3577 = vmatprep.subr.mxu0 0.0
    %3578 = vmatpush2.msra.mxu0 0.0
    %3579 = vmatprep.subr.mxu0 0.0
    %3580 = vmatpush2.msra.mxu0 0.0
    %3581 = vmatprep.subr.mxu0 0.0
    %3582 = vmatpush2.msra.mxu0 0.0
    %3583 = vmatprep.subr.mxu0 0.0
    %3584 = vmatpush2.msra.mxu0 0.0
    %3585 = vmatprep.subr.mxu0 0.0
    %3586 = vmatpush2.msra.mxu0 0.0
    %3587 = vmatprep.subr.mxu0 0.0
    %3588 = vmatpush2.msra.mxu0 0.0
    %3589 = vmatprep.subr.mxu0 0.0
    %3590 = vmatpush2.msra.mxu0 0.0
    %3591 = vmatprep.subr.mxu0 0.0
    %3592 = vmatpush2.msra.mxu0 0.0
    %3593 = vmatprep.subr.mxu0 0.0
    %3594 = vmatpush2.msra.mxu0 0.0
    %3595 = vmatprep.subr.mxu0 0.0
    %3596 = vmatpush2.msra.mxu0 0.0
    %3597 = vmatprep.subr.mxu0 0.0
    %3598 = vmatpush2.msra.mxu0 0.0
    %3599 = vmatprep.subr.mxu0 0.0
    %3600 = vmatpush2.msra.mxu0 0.0
    %3601 = vmatprep.mubr.f32.mxu0 0.0
    %3602 = vmatmul.mubr.f32.gmra.mxu0 %v3520
    %v3603 = vpop.f32.mrf.mxu0
    %v3604 = vadd.f32 %v217, %v3603
    %v3605 = vpop.f32.mrf.mxu0
    %3606 = vdwg.mxu0
    %3607 = vmax.xlane.f32.xlu0 %v3604
    %v3608 = vpop.xlane.xlu0 %3607
    %v3609 = vsub.f32 %v3604, %v3608
    %v3610 = vmul.f32 %v3609, 1.442695
    %v3611 = vpow.pop %v3610
    %3612 = vadd.xlane.f32.xlu0 %v3611
    %v3613 = vpop.xlane.xlu0 %3612
    %v3614 = vlog2.pop %v3613
    %v3615 = vmul.f32 %v3614, 0.6931472
    %v3616 = vsub.f32 %v3609, %v3615
    %s3617 = scalar_lea.vmem [#allocation2], 24
    %3618 = vst [vmem:[%s3617] sm:$0xff] %v3616
    %s3619 = scalar_lea.vmem [#allocation4], 24
    %3620 = vst [vmem:[%s3619] sm:$0xff] %v3351
    %v3621 = vld [vmem:[%s6] sm:$0xff]
    %v3622 = vld [vmem:[%s6 + $0x8] sm:$0xff]
    %v3623 = vld [vmem:[%s6 + $0x10] sm:$0xff]
    %v3624 = vld [vmem:[%s6 + $0x18] sm:$0xff]
    %v3625 = vld [vmem:[%s6 + $0x20] sm:$0xff]
    %v3626 = vld [vmem:[%s6 + $0x28] sm:$0xff]
    %v3627 = vld [vmem:[%s6 + $0x30] sm:$0xff]
    %v3628 = vld [vmem:[%s6 + $0x38] sm:$0xff]
    %v3629 = vld [vmem:[%s6 + $0x40] sm:$0xff]
    %v3630 = vld [vmem:[%s6 + $0x48] sm:$0xff]
    %v3631 = vld [vmem:[%s6 + $0x50] sm:$0xff]
    %v3632 = vld [vmem:[%s6 + $0x58] sm:$0xff]
    %v3633 = vld [vmem:[%s6 + $0x60] sm:$0xff]
    %v3634 = vld [vmem:[%s6 + $0x68] sm:$0xff]
    %v3635 = vld [vmem:[%s6 + $0x70] sm:$0xff]
    %v3636 = vld [vmem:[%s6 + $0x78] sm:$0xff]
    %v3637 = vld [vmem:[%s6 + $0x80] sm:$0xff]
    %v3638 = vld [vmem:[%s6 + $0x88] sm:$0xff]
    %v3639 = vld [vmem:[%s6 + $0x90] sm:$0xff]
    %v3640 = vld [vmem:[%s6 + $0x98] sm:$0xff]
    %v3641 = vld [vmem:[%s6 + $0xa0] sm:$0xff]
    %v3642 = vld [vmem:[%s6 + $0xa8] sm:$0xff]
    %v3643 = vld [vmem:[%s6 + $0xb0] sm:$0xff]
    %v3644 = vld [vmem:[%s6 + $0xb8] sm:$0xff]
    %v3645 = vld [vmem:[%s6 + $0xc0] sm:$0xff]
    %v3646 = vld [vmem:[%s6 + $0xc8] sm:$0xff]
    %v3647 = vld [vmem:[%s6 + $0xd0] sm:$0xff]
    %v3648 = vld [vmem:[%s6 + $0xd8] sm:$0xff]
    %v3649 = vld [vmem:[%s6 + $0xe0] sm:$0xff]
    %v3650 = vld [vmem:[%s6 + $0xe8] sm:$0xff]
    %v3651 = vld [vmem:[%s6 + $0xf0] sm:$0xff]
    %v3652 = vld [vmem:[%s6 + $0xf8] sm:$0xff]
    %v3653 = vld [vmem:[%s6 + $0x100] sm:$0xff]
    %v3654 = vld [vmem:[%s6 + $0x108] sm:$0xff]
    %v3655 = vld [vmem:[%s6 + $0x110] sm:$0xff]
    %v3656 = vld [vmem:[%s6 + $0x118] sm:$0xff]
    %v3657 = vld [vmem:[%s6 + $0x120] sm:$0xff]
    %v3658 = vld [vmem:[%s6 + $0x128] sm:$0xff]
    %v3659 = vld [vmem:[%s6 + $0x130] sm:$0xff]
    %v3660 = vld [vmem:[%s6 + $0x138] sm:$0xff]
    %v3661 = vld [vmem:[%s6 + $0x140] sm:$0xff]
    %v3662 = vld [vmem:[%s6 + $0x148] sm:$0xff]
    %v3663 = vld [vmem:[%s6 + $0x150] sm:$0xff]
    %v3664 = vld [vmem:[%s6 + $0x158] sm:$0xff]
    %v3665 = vld [vmem:[%s6 + $0x160] sm:$0xff]
    %v3666 = vld [vmem:[%s6 + $0x168] sm:$0xff]
    %v3667 = vld [vmem:[%s6 + $0x170] sm:$0xff]
    %v3668 = vld [vmem:[%s6 + $0x178] sm:$0xff]
    %v3669 = vld [vmem:[%s6 + $0x180] sm:$0xff]
    %v3670 = vld [vmem:[%s6 + $0x188] sm:$0xff]
    %v3671 = vld [vmem:[%s6 + $0x190] sm:$0xff]
    %v3672 = vld [vmem:[%s6 + $0x198] sm:$0xff]
    %v3673 = vld [vmem:[%s6 + $0x1a0] sm:$0xff]
    %v3674 = vld [vmem:[%s6 + $0x1a8] sm:$0xff]
    %v3675 = vld [vmem:[%s6 + $0x1b0] sm:$0xff]
    %v3676 = vld [vmem:[%s6 + $0x1b8] sm:$0xff]
    %v3677 = vld [vmem:[%s6 + $0x1c0] sm:$0xff]
    %v3678 = vld [vmem:[%s6 + $0x1c8] sm:$0xff]
    %v3679 = vld [vmem:[%s6 + $0x1d0] sm:$0xff]
    %v3680 = vld [vmem:[%s6 + $0x1d8] sm:$0xff]
    %v3681 = vld [vmem:[%s6 + $0x1e0] sm:$0xff]
    %v3682 = vld [vmem:[%s6 + $0x1e8] sm:$0xff]
    %v3683 = vld [vmem:[%s6 + $0x1f0] sm:$0xff]
    %v3684 = vld [vmem:[%s6 + $0x1f8] sm:$0xff]
    %3685 = vmatprep.subr.mxu0 %v3682
    %3686 = vmatpush1.msra.mxu0 %v3681
    %3687 = vmatprep.subr.mxu0 %v3678
    %3688 = vmatpush1.msra.mxu0 %v3677
    %3689 = vmatprep.subr.mxu0 %v3674
    %3690 = vmatpush1.msra.mxu0 %v3673
    %3691 = vmatprep.subr.mxu0 %v3670
    %3692 = vmatpush1.msra.mxu0 %v3669
    %3693 = vmatprep.subr.mxu0 %v3666
    %3694 = vmatpush1.msra.mxu0 %v3665
    %3695 = vmatprep.subr.mxu0 %v3662
    %3696 = vmatpush1.msra.mxu0 %v3661
    %3697 = vmatprep.subr.mxu0 %v3658
    %3698 = vmatpush1.msra.mxu0 %v3657
    %3699 = vmatprep.subr.mxu0 %v3654
    %3700 = vmatpush1.msra.mxu0 %v3653
    %3701 = vmatprep.subr.mxu0 %v3650
    %3702 = vmatpush1.msra.mxu0 %v3649
    %3703 = vmatprep.subr.mxu0 %v3646
    %3704 = vmatpush1.msra.mxu0 %v3645
    %3705 = vmatprep.subr.mxu0 %v3642
    %3706 = vmatpush1.msra.mxu0 %v3641
    %3707 = vmatprep.subr.mxu0 %v3638
    %3708 = vmatpush1.msra.mxu0 %v3637
    %3709 = vmatprep.subr.mxu0 %v3634
    %3710 = vmatpush1.msra.mxu0 %v3633
    %3711 = vmatprep.subr.mxu0 %v3630
    %3712 = vmatpush1.msra.mxu0 %v3629
    %3713 = vmatprep.subr.mxu0 %v3626
    %3714 = vmatpush1.msra.mxu0 %v3625
    %3715 = vmatprep.subr.mxu0 %v3622
    %3716 = vmatpush1.msra.mxu0 %v3621
    %3717 = vmatprep.subr.mxu0 0.0
    %3718 = vmatpush2.msra.mxu0 0.0
    %3719 = vmatprep.subr.mxu0 0.0
    %3720 = vmatpush2.msra.mxu0 0.0
    %3721 = vmatprep.subr.mxu0 0.0
    %3722 = vmatpush2.msra.mxu0 0.0
    %3723 = vmatprep.subr.mxu0 0.0
    %3724 = vmatpush2.msra.mxu0 0.0
    %3725 = vmatprep.subr.mxu0 0.0
    %3726 = vmatpush2.msra.mxu0 0.0
    %3727 = vmatprep.subr.mxu0 0.0
    %3728 = vmatpush2.msra.mxu0 0.0
    %3729 = vmatprep.subr.mxu0 0.0
    %3730 = vmatpush2.msra.mxu0 0.0
    %3731 = vmatprep.subr.mxu0 0.0
    %3732 = vmatpush2.msra.mxu0 0.0
    %3733 = vmatprep.subr.mxu0 0.0
    %3734 = vmatpush2.msra.mxu0 0.0
    %3735 = vmatprep.subr.mxu0 0.0
    %3736 = vmatpush2.msra.mxu0 0.0
    %3737 = vmatprep.subr.mxu0 0.0
    %3738 = vmatpush2.msra.mxu0 0.0
    %3739 = vmatprep.subr.mxu0 0.0
    %3740 = vmatpush2.msra.mxu0 0.0
    %3741 = vmatprep.subr.mxu0 0.0
    %3742 = vmatpush2.msra.mxu0 0.0
    %3743 = vmatprep.subr.mxu0 0.0
    %3744 = vmatpush2.msra.mxu0 0.0
    %3745 = vmatprep.subr.mxu0 0.0
    %3746 = vmatpush2.msra.mxu0 0.0
    %3747 = vmatprep.subr.mxu0 0.0
    %3748 = vmatpush2.msra.mxu0 0.0
    %3749 = vmatprep.mubr.f32.mxu0 0.0
    %3750 = vmatmul.mubr.f32.gmra.mxu0 %v3520
    %v3751 = vpop.f32.mrf.mxu0
    %v3752 = vadd.f32 0.0, %v3751
    %v3753 = vpop.f32.mrf.mxu0
    %v3754 = vadd.f32 0.0, %v3753
    %3755 = vdwg.mxu0
    %3756 = vmatprep.subr.mxu0 %v3684
    %3757 = vmatpush1.msra.mxu0 %v3683
    %3758 = vmatprep.subr.mxu0 %v3680
    %3759 = vmatpush1.msra.mxu0 %v3679
    %3760 = vmatprep.subr.mxu0 %v3676
    %3761 = vmatpush1.msra.mxu0 %v3675
    %3762 = vmatprep.subr.mxu0 %v3672
    %3763 = vmatpush1.msra.mxu0 %v3671
    %3764 = vmatprep.subr.mxu0 %v3668
    %3765 = vmatpush1.msra.mxu0 %v3667
    %3766 = vmatprep.subr.mxu0 %v3664
    %3767 = vmatpush1.msra.mxu0 %v3663
    %3768 = vmatprep.subr.mxu0 %v3660
    %3769 = vmatpush1.msra.mxu0 %v3659
    %3770 = vmatprep.subr.mxu0 %v3656
    %3771 = vmatpush1.msra.mxu0 %v3655
    %3772 = vmatprep.subr.mxu0 %v3652
    %3773 = vmatpush1.msra.mxu0 %v3651
    %3774 = vmatprep.subr.mxu0 %v3648
    %3775 = vmatpush1.msra.mxu0 %v3647
    %3776 = vmatprep.subr.mxu0 %v3644
    %3777 = vmatpush1.msra.mxu0 %v3643
    %3778 = vmatprep.subr.mxu0 %v3640
    %3779 = vmatpush1.msra.mxu0 %v3639
    %3780 = vmatprep.subr.mxu0 %v3636
    %3781 = vmatpush1.msra.mxu0 %v3635
    %3782 = vmatprep.subr.mxu0 %v3632
    %3783 = vmatpush1.msra.mxu0 %v3631
    %3784 = vmatprep.subr.mxu0 %v3628
    %3785 = vmatpush1.msra.mxu0 %v3627
    %3786 = vmatprep.subr.mxu0 %v3624
    %3787 = vmatpush1.msra.mxu0 %v3623
    %3788 = vmatprep.subr.mxu0 0.0
    %3789 = vmatpush2.msra.mxu0 0.0
    %3790 = vmatprep.subr.mxu0 0.0
    %3791 = vmatpush2.msra.mxu0 0.0
    %3792 = vmatprep.subr.mxu0 0.0
    %3793 = vmatpush2.msra.mxu0 0.0
    %3794 = vmatprep.subr.mxu0 0.0
    %3795 = vmatpush2.msra.mxu0 0.0
    %3796 = vmatprep.subr.mxu0 0.0
    %3797 = vmatpush2.msra.mxu0 0.0
    %3798 = vmatprep.subr.mxu0 0.0
    %3799 = vmatpush2.msra.mxu0 0.0
    %3800 = vmatprep.subr.mxu0 0.0
    %3801 = vmatpush2.msra.mxu0 0.0
    %3802 = vmatprep.subr.mxu0 0.0
    %3803 = vmatpush2.msra.mxu0 0.0
    %3804 = vmatprep.subr.mxu0 0.0
    %3805 = vmatpush2.msra.mxu0 0.0
    %3806 = vmatprep.subr.mxu0 0.0
    %3807 = vmatpush2.msra.mxu0 0.0
    %3808 = vmatprep.subr.mxu0 0.0
    %3809 = vmatpush2.msra.mxu0 0.0
    %3810 = vmatprep.subr.mxu0 0.0
    %3811 = vmatpush2.msra.mxu0 0.0
    %3812 = vmatprep.subr.mxu0 0.0
    %3813 = vmatpush2.msra.mxu0 0.0
    %3814 = vmatprep.subr.mxu0 0.0
    %3815 = vmatpush2.msra.mxu0 0.0
    %3816 = vmatprep.subr.mxu0 0.0
    %3817 = vmatpush2.msra.mxu0 0.0
    %3818 = vmatprep.subr.mxu0 0.0
    %3819 = vmatpush2.msra.mxu0 0.0
    %3820 = vmatprep.mubr.f32.mxu0 0.0
    %3821 = vmatmul.mubr.f32.gmra.mxu0 %v3520
    %v3822 = vpop.f32.mrf.mxu0
    %v3823 = vadd.f32 0.0, %v3822
    %v3824 = vpop.f32.mrf.mxu0
    %v3825 = vadd.f32 0.0, %v3824
    %3826 = vdwg.mxu0
    %v3827 = vadd.f32 %v3754, %v200
    %v3828 = vadd.f32 %v3823, %v204
    %v3829 = vadd.f32 %v3825, %v208
    %v3831 = vcombine.high %v3752, %v3752
    %v3833 = vunpack.c.l.s4 1966171168
    %v3834 = vunpack.c.0.s8 %v3833
    %v3835 = vlaneseq
    %v3836 = vshrl.u32 %v3835, 7
    %v3837 = vsub.s32 %v3834, %v3836
    %v3838 = vrot.slane %v3752, %v3837
    %v3840 = vunpack.c.l.s4 1966171168
    %v3841 = vunpack.c.0.s8 %v3840
    %v3842 = vlaneseq
    %v3843 = vshrl.u32 %v3842, 7
    %v3844 = vsub.s32 %v3841, %v3843
    %v3845 = vrot.slane %v3831, %v3844
    %v3846 = vcombine.high %v3838, %v3838
    %v3847 = vcombine.high %v3845, %v3845
    %v3849 = vunpack.c.l.s4 1966171168
    %v3850 = vunpack.c.0.s8 %v3849
    %v3851 = vlaneseq
    %v3852 = vshrl.u32 %v3851, 7
    %v3853 = vsub.s32 %v3850, %v3852
    %v3854 = vrot.slane %v3838, %v3853
    %v3856 = vunpack.c.l.s4 1966171168
    %v3857 = vunpack.c.0.s8 %v3856
    %v3858 = vlaneseq
    %v3859 = vshrl.u32 %v3858, 7
    %v3860 = vsub.s32 %v3857, %v3859
    %v3861 = vrot.slane %v3845, %v3860
    %v3863 = vunpack.c.l.s4 1966171168
    %v3864 = vunpack.c.0.s8 %v3863
    %v3865 = vlaneseq
    %v3866 = vshrl.u32 %v3865, 7
    %v3867 = vsub.s32 %v3864, %v3866
    %v3868 = vrot.slane %v3846, %v3867
    %v3870 = vunpack.c.l.s4 1966171168
    %v3871 = vunpack.c.0.s8 %v3870
    %v3872 = vlaneseq
    %v3873 = vshrl.u32 %v3872, 7
    %v3874 = vsub.s32 %v3871, %v3873
    %v3875 = vrot.slane %v3847, %v3874
    %v3876 = vcombine.high %v3854, %v3854
    %v3877 = vcombine.high %v3861, %v3861
    %v3878 = vcombine.high %v3868, %v3868
    %v3879 = vcombine.high %v3875, %v3875
    %v3880 = vlaneseq
    %v3881 = vshrl.u32 %v3880, 7
    %v3882 = vsub.s32 0, %v3881
    %v3883 = vrot.slane %v3854, %v3882
    %v3884 = vlaneseq
    %v3885 = vshrl.u32 %v3884, 7
    %v3886 = vsub.s32 0, %v3885
    %v3887 = vrot.slane %v3868, %v3886
    %v3888 = vlaneseq
    %v3889 = vshrl.u32 %v3888, 7
    %v3890 = vsub.s32 0, %v3889
    %v3891 = vrot.slane %v3876, %v3890
    %v3892 = vlaneseq
    %v3893 = vshrl.u32 %v3892, 7
    %v3894 = vsub.s32 0, %v3893
    %v3895 = vrot.slane %v3878, %v3894
    %v3896 = vlaneseq
    %v3897 = vshrl.u32 %v3896, 7
    %v3898 = vsub.s32 0, %v3897
    %v3899 = vrot.slane %v3861, %v3898
    %v3900 = vlaneseq
    %v3901 = vshrl.u32 %v3900, 7
    %v3902 = vsub.s32 0, %v3901
    %v3903 = vrot.slane %v3875, %v3902
    %v3904 = vlaneseq
    %v3905 = vshrl.u32 %v3904, 7
    %v3906 = vsub.s32 0, %v3905
    %v3907 = vrot.slane %v3877, %v3906
    %v3908 = vlaneseq
    %v3909 = vshrl.u32 %v3908, 7
    %v3910 = vsub.s32 0, %v3909
    %v3911 = vrot.slane %v3879, %v3910
    %v3920 = vadd.f32 %v3883, %v139
    %v3921 = vadd.f32 %v3887, %v144
    %v3922 = vadd.f32 %v3891, %v149
    %v3923 = vadd.f32 %v3895, %v154
    %v3924 = vadd.f32 %v3899, %v159
    %v3925 = vadd.f32 %v3903, %v164
    %v3926 = vadd.f32 %v3907, %v169
    %v3927 = vadd.f32 %v3911, %v174
    %v3928 = vtanh.pop %v3920
    %v3929 = vtanh.pop %v3921
    %v3930 = vtanh.pop %v3922
    %v3931 = vtanh.pop %v3923
    %v3932 = vtanh.pop %v3924
    %v3933 = vtanh.pop %v3925
    %v3934 = vtanh.pop %v3926
    %v3935 = vtanh.pop %v3927
    %v3936 = vmul.f32 %v3928, %v539
    %v3937 = vmul.f32 %v3929, %v539
    %v3938 = vmul.f32 %v3930, %v539
    %v3939 = vmul.f32 %v3931, %v539
    %v3940 = vmul.f32 %v3932, %v539
    %v3941 = vmul.f32 %v3933, %v539
    %v3942 = vmul.f32 %v3934, %v539
    %v3943 = vmul.f32 %v3935, %v539
    %3944 = vadd.xlane.f32.xlu0 %v3936
    %v3945 = vpop.xlane.xlu0 %3944
    %3946 = vadd.xlane.f32.xlu0 %v3937
    %v3947 = vpop.xlane.xlu0 %3946
    %3948 = vadd.xlane.f32.xlu0 %v3938
    %v3949 = vpop.xlane.xlu0 %3948
    %3950 = vadd.xlane.f32.xlu0 %v3939
    %v3951 = vpop.xlane.xlu0 %3950
    %3952 = vadd.xlane.f32.xlu0 %v3940
    %v3953 = vpop.xlane.xlu0 %3952
    %3954 = vadd.xlane.f32.xlu0 %v3941
    %v3955 = vpop.xlane.xlu0 %3954
    %3956 = vadd.xlane.f32.xlu0 %v3942
    %v3957 = vpop.xlane.xlu0 %3956
    %3958 = vadd.xlane.f32.xlu0 %v3943
    %v3959 = vpop.xlane.xlu0 %3958
    %v3968 = vlaneseq
    %v3969 = vshrl.u32 %v3968, 7
    %v3970 = vsub.s32 %v574, %v3969
    %v3971 = vrot.slane %v3945, %v3970
    %v3972 = vlaneseq
    %v3973 = vshrl.u32 %v3972, 7
    %v3974 = vsub.s32 %v574, %v3973
    %v3975 = vrot.slane %v3947, %v3974
    %v3976 = vlaneseq
    %v3977 = vshrl.u32 %v3976, 7
    %v3978 = vsub.s32 %v574, %v3977
    %v3979 = vrot.slane %v3949, %v3978
    %v3980 = vlaneseq
    %v3981 = vshrl.u32 %v3980, 7
    %v3982 = vsub.s32 %v574, %v3981
    %v3983 = vrot.slane %v3951, %v3982
    %v3984 = vlaneseq
    %v3985 = vshrl.u32 %v3984, 7
    %v3986 = vsub.s32 %v574, %v3985
    %v3987 = vrot.slane %v3953, %v3986
    %v3988 = vlaneseq
    %v3989 = vshrl.u32 %v3988, 7
    %v3990 = vsub.s32 %v574, %v3989
    %v3991 = vrot.slane %v3955, %v3990
    %v3992 = vlaneseq
    %v3993 = vshrl.u32 %v3992, 7
    %v3994 = vsub.s32 %v574, %v3993
    %v3995 = vrot.slane %v3957, %v3994
    %v3996 = vlaneseq
    %v3997 = vshrl.u32 %v3996, 7
    %v3998 = vsub.s32 %v574, %v3997
    %v3999 = vrot.slane %v3959, %v3998
    %v4000 = vsel %vm607, %v3975, %v3971
    %v4001 = vsel %vm609, %v3979, %v4000
    %v4002 = vsel %vm611, %v3983, %v4001
    %v4003 = vsel %vm613, %v3987, %v4002
    %v4004 = vsel %vm615, %v3991, %v4003
    %v4005 = vsel %vm617, %v3995, %v4004
    %v4006 = vsel %vm619, %v3999, %v4005
    %v4008 = vsel %vm55, %v4006, -1e+09
    %v4009 = vsel %vm623, %v4008, -inf
    %4010 = vmax.xlane.f32.xlu0 %v4009
    %v4011 = vpop.xlane.xlu0 %4010
    %v4012 = vsub.f32 %v4008, %v4011
    %v4013 = vmul.f32 %v4012, 1.442695
    %v4014 = vpow.pop %v4013
    %v4015 = vsel %vm623, %v4014, 0.0
    %4016 = vadd.xlane.f32.xlu0 %v4015
    %v4017 = vpop.xlane.xlu0 %4016
    %v4018 = vrcp.pop %v4017
    %v4019 = vmul.f32 %v4014, %v4018
    %v4020 = vlaneseq
    %v4021 = vshrl.u32 %v4020, 7
    %v4022 = vsub.s32 0, %v4021
    %v4023 = vrot.slane %v4019, %v4022
    %4025 = vbcast.lane.b32.xlu0 %v4023, 256
    %v4026 = vpop.permute.xlu0 %4025
    %v4027 = vlaneseq
    %v4028 = vshrl.u32 %v4027, 7
    %v4029 = vsub.s32 1, %v4028
    %v4030 = vrot.slane %v4019, %v4029
    %4032 = vbcast.lane.b32.xlu0 %v4030, 256
    %v4033 = vpop.permute.xlu0 %4032
    %v4034 = vlaneseq
    %v4035 = vshrl.u32 %v4034, 7
    %v4036 = vsub.s32 2, %v4035
    %v4037 = vrot.slane %v4019, %v4036
    %4039 = vbcast.lane.b32.xlu0 %v4037, 256
    %v4040 = vpop.permute.xlu0 %4039
    %v4041 = vlaneseq
    %v4042 = vshrl.u32 %v4041, 7
    %v4043 = vsub.s32 3, %v4042
    %v4044 = vrot.slane %v4019, %v4043
    %4046 = vbcast.lane.b32.xlu0 %v4044, 256
    %v4047 = vpop.permute.xlu0 %4046
    %v4048 = vlaneseq
    %v4049 = vshrl.u32 %v4048, 7
    %v4050 = vsub.s32 4, %v4049
    %v4051 = vrot.slane %v4019, %v4050
    %4053 = vbcast.lane.b32.xlu0 %v4051, 256
    %v4054 = vpop.permute.xlu0 %4053
    %v4055 = vlaneseq
    %v4056 = vshrl.u32 %v4055, 7
    %v4057 = vsub.s32 5, %v4056
    %v4058 = vrot.slane %v4019, %v4057
    %4060 = vbcast.lane.b32.xlu0 %v4058, 256
    %v4061 = vpop.permute.xlu0 %4060
    %v4062 = vlaneseq
    %v4063 = vshrl.u32 %v4062, 7
    %v4064 = vsub.s32 6, %v4063
    %v4065 = vrot.slane %v4019, %v4064
    %4067 = vbcast.lane.b32.xlu0 %v4065, 256
    %v4068 = vpop.permute.xlu0 %4067
    %v4069 = vlaneseq
    %v4070 = vshrl.u32 %v4069, 7
    %v4071 = vsub.s32 7, %v4070
    %v4072 = vrot.slane %v4019, %v4071
    %4074 = vbcast.lane.b32.xlu0 %v4072, 256
    %v4075 = vpop.permute.xlu0 %4074
    %v4076 = vmul.f32 %v4026, %v46
    %v4077 = vmul.f32 %v4033, %v47
    %v4078 = vmul.f32 %v4040, %v48
    %v4079 = vmul.f32 %v4047, %v49
    %v4080 = vmul.f32 %v4054, %v50
    %v4081 = vmul.f32 %v4061, %v51
    %v4082 = vmul.f32 %v4068, %v52
    %v4083 = vmul.f32 %v4075, %v53
    %v4084 = vrot.slane %v4076, 4
    %v4085 = vadd.f32 %v4076, %v4084
    %v4086 = vrot.slane %v4085, 2
    %v4087 = vadd.f32 %v4085, %v4086
    %v4088 = vrot.slane %v4087, 1
    %v4089 = vadd.f32 %v4087, %v4088
    %v4090 = vrot.slane %v4077, 4
    %v4091 = vadd.f32 %v4077, %v4090
    %v4092 = vrot.slane %v4091, 2
    %v4093 = vadd.f32 %v4091, %v4092
    %v4094 = vrot.slane %v4093, 1
    %v4095 = vadd.f32 %v4093, %v4094
    %v4096 = vrot.slane %v4078, 4
    %v4097 = vadd.f32 %v4078, %v4096
    %v4098 = vrot.slane %v4097, 2
    %v4099 = vadd.f32 %v4097, %v4098
    %v4100 = vrot.slane %v4099, 1
    %v4101 = vadd.f32 %v4099, %v4100
    %v4102 = vrot.slane %v4079, 4
    %v4103 = vadd.f32 %v4079, %v4102
    %v4104 = vrot.slane %v4103, 2
    %v4105 = vadd.f32 %v4103, %v4104
    %v4106 = vrot.slane %v4105, 1
    %v4107 = vadd.f32 %v4105, %v4106
    %v4108 = vrot.slane %v4080, 4
    %v4109 = vadd.f32 %v4080, %v4108
    %v4110 = vrot.slane %v4109, 2
    %v4111 = vadd.f32 %v4109, %v4110
    %v4112 = vrot.slane %v4111, 1
    %v4113 = vadd.f32 %v4111, %v4112
    %v4114 = vrot.slane %v4081, 4
    %v4115 = vadd.f32 %v4081, %v4114
    %v4116 = vrot.slane %v4115, 2
    %v4117 = vadd.f32 %v4115, %v4116
    %v4118 = vrot.slane %v4117, 1
    %v4119 = vadd.f32 %v4117, %v4118
    %v4120 = vrot.slane %v4082, 4
    %v4121 = vadd.f32 %v4082, %v4120
    %v4122 = vrot.slane %v4121, 2
    %v4123 = vadd.f32 %v4121, %v4122
    %v4124 = vrot.slane %v4123, 1
    %v4125 = vadd.f32 %v4123, %v4124
    %v4126 = vrot.slane %v4083, 4
    %v4127 = vadd.f32 %v4083, %v4126
    %v4128 = vrot.slane %v4127, 2
    %v4129 = vadd.f32 %v4127, %v4128
    %v4130 = vrot.slane %v4129, 1
    %v4131 = vadd.f32 %v4129, %v4130
    %s4132 = scalar_lea.vmem %s0, 96
    %v4133 = vld [vmem:[%s4132] sm:$0xff]
    %v4134 = vld [vmem:[%s4132 + $0x8] sm:$0xff]
    %v4135 = vld [vmem:[%s4132 + $0x10] sm:$0xff]
    %v4136 = vld [vmem:[%s7] sm:$0xff]
    %v4137 = vld [vmem:[%s7 + $0x8] sm:$0xff]
    %v4138 = vld [vmem:[%s7 + $0x10] sm:$0xff]
    %v4139 = vld [vmem:[%s7 + $0x18] sm:$0xff]
    %v4140 = vld [vmem:[%s7 + $0x20] sm:$0xff]
    %v4141 = vld [vmem:[%s7 + $0x28] sm:$0xff]
    %v4142 = vld [vmem:[%s7 + $0x30] sm:$0xff]
    %v4143 = vld [vmem:[%s7 + $0x38] sm:$0xff]
    %v4144 = vld [vmem:[%s7 + $0x40] sm:$0xff]
    %v4145 = vld [vmem:[%s7 + $0x48] sm:$0xff]
    %v4146 = vld [vmem:[%s7 + $0x50] sm:$0xff]
    %v4147 = vld [vmem:[%s7 + $0x58] sm:$0xff]
    %v4148 = vld [vmem:[%s7 + $0x60] sm:$0xff]
    %v4149 = vld [vmem:[%s7 + $0x68] sm:$0xff]
    %v4150 = vld [vmem:[%s7 + $0x70] sm:$0xff]
    %v4151 = vld [vmem:[%s7 + $0x78] sm:$0xff]
    %v4152 = vld [vmem:[%s7 + $0x80] sm:$0xff]
    %v4153 = vld [vmem:[%s7 + $0x88] sm:$0xff]
    %v4154 = vld [vmem:[%s7 + $0x90] sm:$0xff]
    %v4155 = vld [vmem:[%s7 + $0x98] sm:$0xff]
    %v4156 = vld [vmem:[%s7 + $0xa0] sm:$0xff]
    %v4157 = vld [vmem:[%s7 + $0xa8] sm:$0xff]
    %v4158 = vld [vmem:[%s7 + $0xb0] sm:$0xff]
    %v4159 = vld [vmem:[%s7 + $0xb8] sm:$0xff]
    %v4160 = vld [vmem:[%s7 + $0xc0] sm:$0xff]
    %v4161 = vld [vmem:[%s7 + $0xc8] sm:$0xff]
    %v4162 = vld [vmem:[%s7 + $0xd0] sm:$0xff]
    %v4163 = vld [vmem:[%s7 + $0xd8] sm:$0xff]
    %v4164 = vld [vmem:[%s7 + $0xe0] sm:$0xff]
    %v4165 = vld [vmem:[%s7 + $0xe8] sm:$0xff]
    %v4166 = vld [vmem:[%s7 + $0xf0] sm:$0xff]
    %v4167 = vld [vmem:[%s7 + $0xf8] sm:$0xff]
    %v4168 = vld [vmem:[%s7 + $0x100] sm:$0xff]
    %v4169 = vld [vmem:[%s7 + $0x108] sm:$0xff]
    %v4170 = vld [vmem:[%s7 + $0x110] sm:$0xff]
    %v4171 = vld [vmem:[%s7 + $0x118] sm:$0xff]
    %v4172 = vld [vmem:[%s7 + $0x120] sm:$0xff]
    %v4173 = vld [vmem:[%s7 + $0x128] sm:$0xff]
    %v4174 = vld [vmem:[%s7 + $0x130] sm:$0xff]
    %v4175 = vld [vmem:[%s7 + $0x138] sm:$0xff]
    %v4176 = vld [vmem:[%s7 + $0x140] sm:$0xff]
    %v4177 = vld [vmem:[%s7 + $0x148] sm:$0xff]
    %v4178 = vld [vmem:[%s7 + $0x150] sm:$0xff]
    %v4179 = vld [vmem:[%s7 + $0x158] sm:$0xff]
    %v4180 = vld [vmem:[%s7 + $0x160] sm:$0xff]
    %v4181 = vld [vmem:[%s7 + $0x168] sm:$0xff]
    %v4182 = vld [vmem:[%s7 + $0x170] sm:$0xff]
    %v4183 = vld [vmem:[%s7 + $0x178] sm:$0xff]
    %v4192 = vsel %vm607, %v4095, %v4089
    %v4193 = vsel %vm609, %v4101, %v4192
    %v4194 = vsel %vm611, %v4107, %v4193
    %v4195 = vsel %vm613, %v4113, %v4194
    %v4196 = vsel %vm615, %v4119, %v4195
    %v4197 = vsel %vm617, %v4125, %v4196
    %v4198 = vsel %vm619, %v4131, %v4197
    %4200 = vmatprep.subr.mxu0 %v4182
    %4201 = vmatpush1.msra.mxu0 %v4181
    %4202 = vmatprep.subr.mxu0 %v4179
    %4203 = vmatpush1.msra.mxu0 %v4178
    %4204 = vmatprep.subr.mxu0 %v4176
    %4205 = vmatpush1.msra.mxu0 %v4175
    %4206 = vmatprep.subr.mxu0 %v4173
    %4207 = vmatpush1.msra.mxu0 %v4172
    %4208 = vmatprep.subr.mxu0 %v4170
    %4209 = vmatpush1.msra.mxu0 %v4169
    %4210 = vmatprep.subr.mxu0 %v4167
    %4211 = vmatpush1.msra.mxu0 %v4166
    %4212 = vmatprep.subr.mxu0 %v4164
    %4213 = vmatpush1.msra.mxu0 %v4163
    %4214 = vmatprep.subr.mxu0 %v4161
    %4215 = vmatpush1.msra.mxu0 %v4160
    %4216 = vmatprep.subr.mxu0 %v4158
    %4217 = vmatpush1.msra.mxu0 %v4157
    %4218 = vmatprep.subr.mxu0 %v4155
    %4219 = vmatpush1.msra.mxu0 %v4154
    %4220 = vmatprep.subr.mxu0 %v4152
    %4221 = vmatpush1.msra.mxu0 %v4151
    %4222 = vmatprep.subr.mxu0 %v4149
    %4223 = vmatpush1.msra.mxu0 %v4148
    %4224 = vmatprep.subr.mxu0 %v4146
    %4225 = vmatpush1.msra.mxu0 %v4145
    %4226 = vmatprep.subr.mxu0 %v4143
    %4227 = vmatpush1.msra.mxu0 %v4142
    %4228 = vmatprep.subr.mxu0 %v4140
    %4229 = vmatpush1.msra.mxu0 %v4139
    %4230 = vmatprep.subr.mxu0 %v4137
    %4231 = vmatpush1.msra.mxu0 %v4136
    %4232 = vmatprep.subr.mxu0 0.0
    %4233 = vmatpush2.msra.mxu0 0.0
    %4234 = vmatprep.subr.mxu0 0.0
    %4235 = vmatpush2.msra.mxu0 0.0
    %4236 = vmatprep.subr.mxu0 0.0
    %4237 = vmatpush2.msra.mxu0 0.0
    %4238 = vmatprep.subr.mxu0 0.0
    %4239 = vmatpush2.msra.mxu0 0.0
    %4240 = vmatprep.subr.mxu0 0.0
    %4241 = vmatpush2.msra.mxu0 0.0
    %4242 = vmatprep.subr.mxu0 0.0
    %4243 = vmatpush2.msra.mxu0 0.0
    %4244 = vmatprep.subr.mxu0 0.0
    %4245 = vmatpush2.msra.mxu0 0.0
    %4246 = vmatprep.subr.mxu0 0.0
    %4247 = vmatpush2.msra.mxu0 0.0
    %4248 = vmatprep.subr.mxu0 0.0
    %4249 = vmatpush2.msra.mxu0 0.0
    %4250 = vmatprep.subr.mxu0 0.0
    %4251 = vmatpush2.msra.mxu0 0.0
    %4252 = vmatprep.subr.mxu0 0.0
    %4253 = vmatpush2.msra.mxu0 0.0
    %4254 = vmatprep.subr.mxu0 0.0
    %4255 = vmatpush2.msra.mxu0 0.0
    %4256 = vmatprep.subr.mxu0 0.0
    %4257 = vmatpush2.msra.mxu0 0.0
    %4258 = vmatprep.subr.mxu0 0.0
    %4259 = vmatpush2.msra.mxu0 0.0
    %4260 = vmatprep.subr.mxu0 0.0
    %4261 = vmatpush2.msra.mxu0 0.0
    %4262 = vmatprep.subr.mxu0 0.0
    %4263 = vmatpush2.msra.mxu0 0.0
    %4264 = vmatprep.mubr.f32.mxu0 0.0
    %4265 = vmatmul.mubr.f32.gmra.mxu0 %v4198
    %v4266 = vpop.f32.mrf.mxu0
    %v4267 = vadd.f32 0.0, %v4266
    %v4268 = vpop.f32.mrf.mxu0
    %v4269 = vadd.f32 0.0, %v4268
    %4270 = vdwg.mxu0
    %4271 = vmatprep.subr.mxu0 0.0
    %4272 = vmatpush1.msra.mxu0 %v4183
    %4273 = vmatprep.subr.mxu0 0.0
    %4274 = vmatpush1.msra.mxu0 %v4180
    %4275 = vmatprep.subr.mxu0 0.0
    %4276 = vmatpush1.msra.mxu0 %v4177
    %4277 = vmatprep.subr.mxu0 0.0
    %4278 = vmatpush1.msra.mxu0 %v4174
    %4279 = vmatprep.subr.mxu0 0.0
    %4280 = vmatpush1.msra.mxu0 %v4171
    %4281 = vmatprep.subr.mxu0 0.0
    %4282 = vmatpush1.msra.mxu0 %v4168
    %4283 = vmatprep.subr.mxu0 0.0
    %4284 = vmatpush1.msra.mxu0 %v4165
    %4285 = vmatprep.subr.mxu0 0.0
    %4286 = vmatpush1.msra.mxu0 %v4162
    %4287 = vmatprep.subr.mxu0 0.0
    %4288 = vmatpush1.msra.mxu0 %v4159
    %4289 = vmatprep.subr.mxu0 0.0
    %4290 = vmatpush1.msra.mxu0 %v4156
    %4291 = vmatprep.subr.mxu0 0.0
    %4292 = vmatpush1.msra.mxu0 %v4153
    %4293 = vmatprep.subr.mxu0 0.0
    %4294 = vmatpush1.msra.mxu0 %v4150
    %4295 = vmatprep.subr.mxu0 0.0
    %4296 = vmatpush1.msra.mxu0 %v4147
    %4297 = vmatprep.subr.mxu0 0.0
    %4298 = vmatpush1.msra.mxu0 %v4144
    %4299 = vmatprep.subr.mxu0 0.0
    %4300 = vmatpush1.msra.mxu0 %v4141
    %4301 = vmatprep.subr.mxu0 0.0
    %4302 = vmatpush1.msra.mxu0 %v4138
    %4303 = vmatprep.subr.mxu0 0.0
    %4304 = vmatpush2.msra.mxu0 0.0
    %4305 = vmatprep.subr.mxu0 0.0
    %4306 = vmatpush2.msra.mxu0 0.0
    %4307 = vmatprep.subr.mxu0 0.0
    %4308 = vmatpush2.msra.mxu0 0.0
    %4309 = vmatprep.subr.mxu0 0.0
    %4310 = vmatpush2.msra.mxu0 0.0
    %4311 = vmatprep.subr.mxu0 0.0
    %4312 = vmatpush2.msra.mxu0 0.0
    %4313 = vmatprep.subr.mxu0 0.0
    %4314 = vmatpush2.msra.mxu0 0.0
    %4315 = vmatprep.subr.mxu0 0.0
    %4316 = vmatpush2.msra.mxu0 0.0
    %4317 = vmatprep.subr.mxu0 0.0
    %4318 = vmatpush2.msra.mxu0 0.0
    %4319 = vmatprep.subr.mxu0 0.0
    %4320 = vmatpush2.msra.mxu0 0.0
    %4321 = vmatprep.subr.mxu0 0.0
    %4322 = vmatpush2.msra.mxu0 0.0
    %4323 = vmatprep.subr.mxu0 0.0
    %4324 = vmatpush2.msra.mxu0 0.0
    %4325 = vmatprep.subr.mxu0 0.0
    %4326 = vmatpush2.msra.mxu0 0.0
    %4327 = vmatprep.subr.mxu0 0.0
    %4328 = vmatpush2.msra.mxu0 0.0
    %4329 = vmatprep.subr.mxu0 0.0
    %4330 = vmatpush2.msra.mxu0 0.0
    %4331 = vmatprep.subr.mxu0 0.0
    %4332 = vmatpush2.msra.mxu0 0.0
    %4333 = vmatprep.subr.mxu0 0.0
    %4334 = vmatpush2.msra.mxu0 0.0
    %4335 = vmatprep.mubr.f32.mxu0 0.0
    %4336 = vmatmul.mubr.f32.gmra.mxu0 %v4198
    %v4337 = vpop.f32.mrf.mxu0
    %v4338 = vadd.f32 0.0, %v4337
    %v4339 = vpop.f32.mrf.mxu0
    %4340 = vdwg.mxu0
    %v4341 = vadd.f32 %v4133, %v4267
    %v4342 = vadd.f32 %v4134, %v4269
    %v4343 = vadd.f32 %v4135, %v4338
    %v4344 = vadd.f32 %v4341, %v183
    %v4345 = vadd.f32 %v4342, %v187
    %v4346 = vadd.f32 %v4343, %v191
    %v4347 = vadd.f32 %v4344, %v3827
    %v4348 = vxor.u32 %v4347, 2147483648
    %v4349 = vmul.f32 %v4348, 1.442695
    %v4350 = vpow.pop %v4349
    %v4351 = vadd.f32 %v4350, 1.0
    %v4352 = vrcp.pop %v4351
    %v4353 = vmul.f32 1.0, %v4352
    %v4354 = vadd.f32 %v4345, %v3828
    %v4355 = vxor.u32 %v4354, 2147483648
    %v4356 = vmul.f32 %v4355, 1.442695
    %v4357 = vpow.pop %v4356
    %v4358 = vadd.f32 %v4357, 1.0
    %v4359 = vrcp.pop %v4358
    %v4360 = vmul.f32 1.0, %v4359
    %v4361 = vmul.f32 %v4353, %v3829
    %v4362 = vadd.f32 %v4346, %v4361
    %v4363 = vtanh.pop %v4362
    %v4364 = vsub.f32 1.0, %v4360
    %v4365 = vmul.f32 %v4364, %v4363
    %v4366 = vmul.f32 %v4360, %v3520
    %v4367 = vadd.f32 %v4365, %v4366
    %v4368 = vld [vmem:[%s10] sm:$0xff]
    %v4369 = vld [vmem:[%s10 + $0x8] sm:$0xff]
    %v4370 = vld [vmem:[%s10 + $0x10] sm:$0xff]
    %v4371 = vld [vmem:[%s10 + $0x18] sm:$0xff]
    %v4372 = vld [vmem:[%s10 + $0x20] sm:$0xff]
    %v4373 = vld [vmem:[%s10 + $0x28] sm:$0xff]
    %v4374 = vld [vmem:[%s10 + $0x30] sm:$0xff]
    %v4375 = vld [vmem:[%s10 + $0x38] sm:$0xff]
    %v4376 = vld [vmem:[%s10 + $0x40] sm:$0xff]
    %v4377 = vld [vmem:[%s10 + $0x48] sm:$0xff]
    %v4378 = vld [vmem:[%s10 + $0x50] sm:$0xff]
    %v4379 = vld [vmem:[%s10 + $0x58] sm:$0xff]
    %v4380 = vld [vmem:[%s10 + $0x60] sm:$0xff]
    %v4381 = vld [vmem:[%s10 + $0x68] sm:$0xff]
    %v4382 = vld [vmem:[%s10 + $0x70] sm:$0xff]
    %v4383 = vld [vmem:[%s10 + $0x78] sm:$0xff]
    %4384 = vmatprep.subr.mxu0 0.0
    %4385 = vmatpush1.msra.mxu0 %v4383
    %4386 = vmatprep.subr.mxu0 0.0
    %4387 = vmatpush1.msra.mxu0 %v4382
    %4388 = vmatprep.subr.mxu0 0.0
    %4389 = vmatpush1.msra.mxu0 %v4381
    %4390 = vmatprep.subr.mxu0 0.0
    %4391 = vmatpush1.msra.mxu0 %v4380
    %4392 = vmatprep.subr.mxu0 0.0
    %4393 = vmatpush1.msra.mxu0 %v4379
    %4394 = vmatprep.subr.mxu0 0.0
    %4395 = vmatpush1.msra.mxu0 %v4378
    %4396 = vmatprep.subr.mxu0 0.0
    %4397 = vmatpush1.msra.mxu0 %v4377
    %4398 = vmatprep.subr.mxu0 0.0
    %4399 = vmatpush1.msra.mxu0 %v4376
    %4400 = vmatprep.subr.mxu0 0.0
    %4401 = vmatpush1.msra.mxu0 %v4375
    %4402 = vmatprep.subr.mxu0 0.0
    %4403 = vmatpush1.msra.mxu0 %v4374
    %4404 = vmatprep.subr.mxu0 0.0
    %4405 = vmatpush1.msra.mxu0 %v4373
    %4406 = vmatprep.subr.mxu0 0.0
    %4407 = vmatpush1.msra.mxu0 %v4372
    %4408 = vmatprep.subr.mxu0 0.0
    %4409 = vmatpush1.msra.mxu0 %v4371
    %4410 = vmatprep.subr.mxu0 0.0
    %4411 = vmatpush1.msra.mxu0 %v4370
    %4412 = vmatprep.subr.mxu0 0.0
    %4413 = vmatpush1.msra.mxu0 %v4369
    %4414 = vmatprep.subr.mxu0 0.0
    %4415 = vmatpush1.msra.mxu0 %v4368
    %4416 = vmatprep.subr.mxu0 0.0
    %4417 = vmatpush2.msra.mxu0 0.0
    %4418 = vmatprep.subr.mxu0 0.0
    %4419 = vmatpush2.msra.mxu0 0.0
    %4420 = vmatprep.subr.mxu0 0.0
    %4421 = vmatpush2.msra.mxu0 0.0
    %4422 = vmatprep.subr.mxu0 0.0
    %4423 = vmatpush2.msra.mxu0 0.0
    %4424 = vmatprep.subr.mxu0 0.0
    %4425 = vmatpush2.msra.mxu0 0.0
    %4426 = vmatprep.subr.mxu0 0.0
    %4427 = vmatpush2.msra.mxu0 0.0
    %4428 = vmatprep.subr.mxu0 0.0
    %4429 = vmatpush2.msra.mxu0 0.0
    %4430 = vmatprep.subr.mxu0 0.0
    %4431 = vmatpush2.msra.mxu0 0.0
    %4432 = vmatprep.subr.mxu0 0.0
    %4433 = vmatpush2.msra.mxu0 0.0
    %4434 = vmatprep.subr.mxu0 0.0
    %4435 = vmatpush2.msra.mxu0 0.0
    %4436 = vmatprep.subr.mxu0 0.0
    %4437 = vmatpush2.msra.mxu0 0.0
    %4438 = vmatprep.subr.mxu0 0.0
    %4439 = vmatpush2.msra.mxu0 0.0
    %4440 = vmatprep.subr.mxu0 0.0
    %4441 = vmatpush2.msra.mxu0 0.0
    %4442 = vmatprep.subr.mxu0 0.0
    %4443 = vmatpush2.msra.mxu0 0.0
    %4444 = vmatprep.subr.mxu0 0.0
    %4445 = vmatpush2.msra.mxu0 0.0
    %4446 = vmatprep.subr.mxu0 0.0
    %4447 = vmatpush2.msra.mxu0 0.0
    %4448 = vmatprep.mubr.f32.mxu0 0.0
    %4449 = vmatmul.mubr.f32.gmra.mxu0 %v4367
    %v4450 = vpop.f32.mrf.mxu0
    %v4451 = vadd.f32 %v217, %v4450
    %v4452 = vpop.f32.mrf.mxu0
    %4453 = vdwg.mxu0
    %4454 = vmax.xlane.f32.xlu0 %v4451
    %v4455 = vpop.xlane.xlu0 %4454
    %v4456 = vsub.f32 %v4451, %v4455
    %v4457 = vmul.f32 %v4456, 1.442695
    %v4458 = vpow.pop %v4457
    %4459 = vadd.xlane.f32.xlu0 %v4458
    %v4460 = vpop.xlane.xlu0 %4459
    %v4461 = vlog2.pop %v4460
    %v4462 = vmul.f32 %v4461, 0.6931472
    %v4463 = vsub.f32 %v4456, %v4462
    %s4464 = scalar_lea.vmem [#allocation2], 32
    %4465 = vst [vmem:[%s4464] sm:$0xff] %v4463
    %s4466 = scalar_lea.vmem [#allocation4], 32
    %4467 = vst [vmem:[%s4466] sm:$0xff] %v4198
    %v4468 = vld [vmem:[%s6] sm:$0xff]
    %v4469 = vld [vmem:[%s6 + $0x8] sm:$0xff]
    %v4470 = vld [vmem:[%s6 + $0x10] sm:$0xff]
    %v4471 = vld [vmem:[%s6 + $0x18] sm:$0xff]
    %v4472 = vld [vmem:[%s6 + $0x20] sm:$0xff]
    %v4473 = vld [vmem:[%s6 + $0x28] sm:$0xff]
    %v4474 = vld [vmem:[%s6 + $0x30] sm:$0xff]
    %v4475 = vld [vmem:[%s6 + $0x38] sm:$0xff]
    %v4476 = vld [vmem:[%s6 + $0x40] sm:$0xff]
    %v4477 = vld [vmem:[%s6 + $0x48] sm:$0xff]
    %v4478 = vld [vmem:[%s6 + $0x50] sm:$0xff]
    %v4479 = vld [vmem:[%s6 + $0x58] sm:$0xff]
    %v4480 = vld [vmem:[%s6 + $0x60] sm:$0xff]
    %v4481 = vld [vmem:[%s6 + $0x68] sm:$0xff]
    %v4482 = vld [vmem:[%s6 + $0x70] sm:$0xff]
    %v4483 = vld [vmem:[%s6 + $0x78] sm:$0xff]
    %v4484 = vld [vmem:[%s6 + $0x80] sm:$0xff]
    %v4485 = vld [vmem:[%s6 + $0x88] sm:$0xff]
    %v4486 = vld [vmem:[%s6 + $0x90] sm:$0xff]
    %v4487 = vld [vmem:[%s6 + $0x98] sm:$0xff]
    %v4488 = vld [vmem:[%s6 + $0xa0] sm:$0xff]
    %v4489 = vld [vmem:[%s6 + $0xa8] sm:$0xff]
    %v4490 = vld [vmem:[%s6 + $0xb0] sm:$0xff]
    %v4491 = vld [vmem:[%s6 + $0xb8] sm:$0xff]
    %v4492 = vld [vmem:[%s6 + $0xc0] sm:$0xff]
    %v4493 = vld [vmem:[%s6 + $0xc8] sm:$0xff]
    %v4494 = vld [vmem:[%s6 + $0xd0] sm:$0xff]
    %v4495 = vld [vmem:[%s6 + $0xd8] sm:$0xff]
    %v4496 = vld [vmem:[%s6 + $0xe0] sm:$0xff]
    %v4497 = vld [vmem:[%s6 + $0xe8] sm:$0xff]
    %v4498 = vld [vmem:[%s6 + $0xf0] sm:$0xff]
    %v4499 = vld [vmem:[%s6 + $0xf8] sm:$0xff]
    %v4500 = vld [vmem:[%s6 + $0x100] sm:$0xff]
    %v4501 = vld [vmem:[%s6 + $0x108] sm:$0xff]
    %v4502 = vld [vmem:[%s6 + $0x110] sm:$0xff]
    %v4503 = vld [vmem:[%s6 + $0x118] sm:$0xff]
    %v4504 = vld [vmem:[%s6 + $0x120] sm:$0xff]
    %v4505 = vld [vmem:[%s6 + $0x128] sm:$0xff]
    %v4506 = vld [vmem:[%s6 + $0x130] sm:$0xff]
    %v4507 = vld [vmem:[%s6 + $0x138] sm:$0xff]
    %v4508 = vld [vmem:[%s6 + $0x140] sm:$0xff]
    %v4509 = vld [vmem:[%s6 + $0x148] sm:$0xff]
    %v4510 = vld [vmem:[%s6 + $0x150] sm:$0xff]
    %v4511 = vld [vmem:[%s6 + $0x158] sm:$0xff]
    %v4512 = vld [vmem:[%s6 + $0x160] sm:$0xff]
    %v4513 = vld [vmem:[%s6 + $0x168] sm:$0xff]
    %v4514 = vld [vmem:[%s6 + $0x170] sm:$0xff]
    %v4515 = vld [vmem:[%s6 + $0x178] sm:$0xff]
    %v4516 = vld [vmem:[%s6 + $0x180] sm:$0xff]
    %v4517 = vld [vmem:[%s6 + $0x188] sm:$0xff]
    %v4518 = vld [vmem:[%s6 + $0x190] sm:$0xff]
    %v4519 = vld [vmem:[%s6 + $0x198] sm:$0xff]
    %v4520 = vld [vmem:[%s6 + $0x1a0] sm:$0xff]
    %v4521 = vld [vmem:[%s6 + $0x1a8] sm:$0xff]
    %v4522 = vld [vmem:[%s6 + $0x1b0] sm:$0xff]
    %v4523 = vld [vmem:[%s6 + $0x1b8] sm:$0xff]
    %v4524 = vld [vmem:[%s6 + $0x1c0] sm:$0xff]
    %v4525 = vld [vmem:[%s6 + $0x1c8] sm:$0xff]
    %v4526 = vld [vmem:[%s6 + $0x1d0] sm:$0xff]
    %v4527 = vld [vmem:[%s6 + $0x1d8] sm:$0xff]
    %v4528 = vld [vmem:[%s6 + $0x1e0] sm:$0xff]
    %v4529 = vld [vmem:[%s6 + $0x1e8] sm:$0xff]
    %v4530 = vld [vmem:[%s6 + $0x1f0] sm:$0xff]
    %v4531 = vld [vmem:[%s6 + $0x1f8] sm:$0xff]
    %4532 = vmatprep.subr.mxu0 %v4529
    %4533 = vmatpush1.msra.mxu0 %v4528
    %4534 = vmatprep.subr.mxu0 %v4525
    %4535 = vmatpush1.msra.mxu0 %v4524
    %4536 = vmatprep.subr.mxu0 %v4521
    %4537 = vmatpush1.msra.mxu0 %v4520
    %4538 = vmatprep.subr.mxu0 %v4517
    %4539 = vmatpush1.msra.mxu0 %v4516
    %4540 = vmatprep.subr.mxu0 %v4513
    %4541 = vmatpush1.msra.mxu0 %v4512
    %4542 = vmatprep.subr.mxu0 %v4509
    %4543 = vmatpush1.msra.mxu0 %v4508
    %4544 = vmatprep.subr.mxu0 %v4505
    %4545 = vmatpush1.msra.mxu0 %v4504
    %4546 = vmatprep.subr.mxu0 %v4501
    %4547 = vmatpush1.msra.mxu0 %v4500
    %4548 = vmatprep.subr.mxu0 %v4497
    %4549 = vmatpush1.msra.mxu0 %v4496
    %4550 = vmatprep.subr.mxu0 %v4493
    %4551 = vmatpush1.msra.mxu0 %v4492
    %4552 = vmatprep.subr.mxu0 %v4489
    %4553 = vmatpush1.msra.mxu0 %v4488
    %4554 = vmatprep.subr.mxu0 %v4485
    %4555 = vmatpush1.msra.mxu0 %v4484
    %4556 = vmatprep.subr.mxu0 %v4481
    %4557 = vmatpush1.msra.mxu0 %v4480
    %4558 = vmatprep.subr.mxu0 %v4477
    %4559 = vmatpush1.msra.mxu0 %v4476
    %4560 = vmatprep.subr.mxu0 %v4473
    %4561 = vmatpush1.msra.mxu0 %v4472
    %4562 = vmatprep.subr.mxu0 %v4469
    %4563 = vmatpush1.msra.mxu0 %v4468
    %4564 = vmatprep.subr.mxu0 0.0
    %4565 = vmatpush2.msra.mxu0 0.0
    %4566 = vmatprep.subr.mxu0 0.0
    %4567 = vmatpush2.msra.mxu0 0.0
    %4568 = vmatprep.subr.mxu0 0.0
    %4569 = vmatpush2.msra.mxu0 0.0
    %4570 = vmatprep.subr.mxu0 0.0
    %4571 = vmatpush2.msra.mxu0 0.0
    %4572 = vmatprep.subr.mxu0 0.0
    %4573 = vmatpush2.msra.mxu0 0.0
    %4574 = vmatprep.subr.mxu0 0.0
    %4575 = vmatpush2.msra.mxu0 0.0
    %4576 = vmatprep.subr.mxu0 0.0
    %4577 = vmatpush2.msra.mxu0 0.0
    %4578 = vmatprep.subr.mxu0 0.0
    %4579 = vmatpush2.msra.mxu0 0.0
    %4580 = vmatprep.subr.mxu0 0.0
    %4581 = vmatpush2.msra.mxu0 0.0
    %4582 = vmatprep.subr.mxu0 0.0
    %4583 = vmatpush2.msra.mxu0 0.0
    %4584 = vmatprep.subr.mxu0 0.0
    %4585 = vmatpush2.msra.mxu0 0.0
    %4586 = vmatprep.subr.mxu0 0.0
    %4587 = vmatpush2.msra.mxu0 0.0
    %4588 = vmatprep.subr.mxu0 0.0
    %4589 = vmatpush2.msra.mxu0 0.0
    %4590 = vmatprep.subr.mxu0 0.0
    %4591 = vmatpush2.msra.mxu0 0.0
    %4592 = vmatprep.subr.mxu0 0.0
    %4593 = vmatpush2.msra.mxu0 0.0
    %4594 = vmatprep.subr.mxu0 0.0
    %4595 = vmatpush2.msra.mxu0 0.0
    %4596 = vmatprep.mubr.f32.mxu0 0.0
    %4597 = vmatmul.mubr.f32.gmra.mxu0 %v4367
    %v4598 = vpop.f32.mrf.mxu0
    %v4599 = vadd.f32 0.0, %v4598
    %v4600 = vpop.f32.mrf.mxu0
    %v4601 = vadd.f32 0.0, %v4600
    %4602 = vdwg.mxu0
    %4603 = vmatprep.subr.mxu0 %v4531
    %4604 = vmatpush1.msra.mxu0 %v4530
    %4605 = vmatprep.subr.mxu0 %v4527
    %4606 = vmatpush1.msra.mxu0 %v4526
    %4607 = vmatprep.subr.mxu0 %v4523
    %4608 = vmatpush1.msra.mxu0 %v4522
    %4609 = vmatprep.subr.mxu0 %v4519
    %4610 = vmatpush1.msra.mxu0 %v4518
    %4611 = vmatprep.subr.mxu0 %v4515
    %4612 = vmatpush1.msra.mxu0 %v4514
    %4613 = vmatprep.subr.mxu0 %v4511
    %4614 = vmatpush1.msra.mxu0 %v4510
    %4615 = vmatprep.subr.mxu0 %v4507
    %4616 = vmatpush1.msra.mxu0 %v4506
    %4617 = vmatprep.subr.mxu0 %v4503
    %4618 = vmatpush1.msra.mxu0 %v4502
    %4619 = vmatprep.subr.mxu0 %v4499
    %4620 = vmatpush1.msra.mxu0 %v4498
    %4621 = vmatprep.subr.mxu0 %v4495
    %4622 = vmatpush1.msra.mxu0 %v4494
    %4623 = vmatprep.subr.mxu0 %v4491
    %4624 = vmatpush1.msra.mxu0 %v4490
    %4625 = vmatprep.subr.mxu0 %v4487
    %4626 = vmatpush1.msra.mxu0 %v4486
    %4627 = vmatprep.subr.mxu0 %v4483
    %4628 = vmatpush1.msra.mxu0 %v4482
    %4629 = vmatprep.subr.mxu0 %v4479
    %4630 = vmatpush1.msra.mxu0 %v4478
    %4631 = vmatprep.subr.mxu0 %v4475
    %4632 = vmatpush1.msra.mxu0 %v4474
    %4633 = vmatprep.subr.mxu0 %v4471
    %4634 = vmatpush1.msra.mxu0 %v4470
    %4635 = vmatprep.subr.mxu0 0.0
    %4636 = vmatpush2.msra.mxu0 0.0
    %4637 = vmatprep.subr.mxu0 0.0
    %4638 = vmatpush2.msra.mxu0 0.0
    %4639 = vmatprep.subr.mxu0 0.0
    %4640 = vmatpush2.msra.mxu0 0.0
    %4641 = vmatprep.subr.mxu0 0.0
    %4642 = vmatpush2.msra.mxu0 0.0
    %4643 = vmatprep.subr.mxu0 0.0
    %4644 = vmatpush2.msra.mxu0 0.0
    %4645 = vmatprep.subr.mxu0 0.0
    %4646 = vmatpush2.msra.mxu0 0.0
    %4647 = vmatprep.subr.mxu0 0.0
    %4648 = vmatpush2.msra.mxu0 0.0
    %4649 = vmatprep.subr.mxu0 0.0
    %4650 = vmatpush2.msra.mxu0 0.0
    %4651 = vmatprep.subr.mxu0 0.0
    %4652 = vmatpush2.msra.mxu0 0.0
    %4653 = vmatprep.subr.mxu0 0.0
    %4654 = vmatpush2.msra.mxu0 0.0
    %4655 = vmatprep.subr.mxu0 0.0
    %4656 = vmatpush2.msra.mxu0 0.0
    %4657 = vmatprep.subr.mxu0 0.0
    %4658 = vmatpush2.msra.mxu0 0.0
    %4659 = vmatprep.subr.mxu0 0.0
    %4660 = vmatpush2.msra.mxu0 0.0
    %4661 = vmatprep.subr.mxu0 0.0
    %4662 = vmatpush2.msra.mxu0 0.0
    %4663 = vmatprep.subr.mxu0 0.0
    %4664 = vmatpush2.msra.mxu0 0.0
    %4665 = vmatprep.subr.mxu0 0.0
    %4666 = vmatpush2.msra.mxu0 0.0
    %4667 = vmatprep.mubr.f32.mxu0 0.0
    %4668 = vmatmul.mubr.f32.gmra.mxu0 %v4367
    %v4669 = vpop.f32.mrf.mxu0
    %v4670 = vadd.f32 0.0, %v4669
    %v4671 = vpop.f32.mrf.mxu0
    %v4672 = vadd.f32 0.0, %v4671
    %4673 = vdwg.mxu0
    %v4674 = vadd.f32 %v4601, %v200
    %v4675 = vadd.f32 %v4670, %v204
    %v4676 = vadd.f32 %v4672, %v208
    %v4678 = vcombine.high %v4599, %v4599
    %v4680 = vunpack.c.l.s4 1966171168
    %v4681 = vunpack.c.0.s8 %v4680
    %v4682 = vlaneseq
    %v4683 = vshrl.u32 %v4682, 7
    %v4684 = vsub.s32 %v4681, %v4683
    %v4685 = vrot.slane %v4599, %v4684
    %v4687 = vunpack.c.l.s4 1966171168
    %v4688 = vunpack.c.0.s8 %v4687
    %v4689 = vlaneseq
    %v4690 = vshrl.u32 %v4689, 7
    %v4691 = vsub.s32 %v4688, %v4690
    %v4692 = vrot.slane %v4678, %v4691
    %v4693 = vcombine.high %v4685, %v4685
    %v4694 = vcombine.high %v4692, %v4692
    %v4696 = vunpack.c.l.s4 1966171168
    %v4697 = vunpack.c.0.s8 %v4696
    %v4698 = vlaneseq
    %v4699 = vshrl.u32 %v4698, 7
    %v4700 = vsub.s32 %v4697, %v4699
    %v4701 = vrot.slane %v4685, %v4700
    %v4703 = vunpack.c.l.s4 1966171168
    %v4704 = vunpack.c.0.s8 %v4703
    %v4705 = vlaneseq
    %v4706 = vshrl.u32 %v4705, 7
    %v4707 = vsub.s32 %v4704, %v4706
    %v4708 = vrot.slane %v4692, %v4707
    %v4710 = vunpack.c.l.s4 1966171168
    %v4711 = vunpack.c.0.s8 %v4710
    %v4712 = vlaneseq
    %v4713 = vshrl.u32 %v4712, 7
    %v4714 = vsub.s32 %v4711, %v4713
    %v4715 = vrot.slane %v4693, %v4714
    %v4717 = vunpack.c.l.s4 1966171168
    %v4718 = vunpack.c.0.s8 %v4717
    %v4719 = vlaneseq
    %v4720 = vshrl.u32 %v4719, 7
    %v4721 = vsub.s32 %v4718, %v4720
    %v4722 = vrot.slane %v4694, %v4721
    %v4723 = vcombine.high %v4701, %v4701
    %v4724 = vcombine.high %v4708, %v4708
    %v4725 = vcombine.high %v4715, %v4715
    %v4726 = vcombine.high %v4722, %v4722
    %v4727 = vlaneseq
    %v4728 = vshrl.u32 %v4727, 7
    %v4729 = vsub.s32 0, %v4728
    %v4730 = vrot.slane %v4701, %v4729
    %v4731 = vlaneseq
    %v4732 = vshrl.u32 %v4731, 7
    %v4733 = vsub.s32 0, %v4732
    %v4734 = vrot.slane %v4715, %v4733
    %v4735 = vlaneseq
    %v4736 = vshrl.u32 %v4735, 7
    %v4737 = vsub.s32 0, %v4736
    %v4738 = vrot.slane %v4723, %v4737
    %v4739 = vlaneseq
    %v4740 = vshrl.u32 %v4739, 7
    %v4741 = vsub.s32 0, %v4740
    %v4742 = vrot.slane %v4725, %v4741
    %v4743 = vlaneseq
    %v4744 = vshrl.u32 %v4743, 7
    %v4745 = vsub.s32 0, %v4744
    %v4746 = vrot.slane %v4708, %v4745
    %v4747 = vlaneseq
    %v4748 = vshrl.u32 %v4747, 7
    %v4749 = vsub.s32 0, %v4748
    %v4750 = vrot.slane %v4722, %v4749
    %v4751 = vlaneseq
    %v4752 = vshrl.u32 %v4751, 7
    %v4753 = vsub.s32 0, %v4752
    %v4754 = vrot.slane %v4724, %v4753
    %v4755 = vlaneseq
    %v4756 = vshrl.u32 %v4755, 7
    %v4757 = vsub.s32 0, %v4756
    %v4758 = vrot.slane %v4726, %v4757
    %v4767 = vadd.f32 %v4730, %v139
    %v4768 = vadd.f32 %v4734, %v144
    %v4769 = vadd.f32 %v4738, %v149
    %v4770 = vadd.f32 %v4742, %v154
    %v4771 = vadd.f32 %v4746, %v159
    %v4772 = vadd.f32 %v4750, %v164
    %v4773 = vadd.f32 %v4754, %v169
    %v4774 = vadd.f32 %v4758, %v174
    %v4775 = vtanh.pop %v4767
    %v4776 = vtanh.pop %v4768
    %v4777 = vtanh.pop %v4769
    %v4778 = vtanh.pop %v4770
    %v4779 = vtanh.pop %v4771
    %v4780 = vtanh.pop %v4772
    %v4781 = vtanh.pop %v4773
    %v4782 = vtanh.pop %v4774
    %v4783 = vmul.f32 %v4775, %v539
    %v4784 = vmul.f32 %v4776, %v539
    %v4785 = vmul.f32 %v4777, %v539
    %v4786 = vmul.f32 %v4778, %v539
    %v4787 = vmul.f32 %v4779, %v539
    %v4788 = vmul.f32 %v4780, %v539
    %v4789 = vmul.f32 %v4781, %v539
    %v4790 = vmul.f32 %v4782, %v539
    %4791 = vadd.xlane.f32.xlu0 %v4783
    %v4792 = vpop.xlane.xlu0 %4791
    %4793 = vadd.xlane.f32.xlu0 %v4784
    %v4794 = vpop.xlane.xlu0 %4793
    %4795 = vadd.xlane.f32.xlu0 %v4785
    %v4796 = vpop.xlane.xlu0 %4795
    %4797 = vadd.xlane.f32.xlu0 %v4786
    %v4798 = vpop.xlane.xlu0 %4797
    %4799 = vadd.xlane.f32.xlu0 %v4787
    %v4800 = vpop.xlane.xlu0 %4799
    %4801 = vadd.xlane.f32.xlu0 %v4788
    %v4802 = vpop.xlane.xlu0 %4801
    %4803 = vadd.xlane.f32.xlu0 %v4789
    %v4804 = vpop.xlane.xlu0 %4803
    %4805 = vadd.xlane.f32.xlu0 %v4790
    %v4806 = vpop.xlane.xlu0 %4805
    %v4815 = vlaneseq
    %v4816 = vshrl.u32 %v4815, 7
    %v4817 = vsub.s32 %v574, %v4816
    %v4818 = vrot.slane %v4792, %v4817
    %v4819 = vlaneseq
    %v4820 = vshrl.u32 %v4819, 7
    %v4821 = vsub.s32 %v574, %v4820
    %v4822 = vrot.slane %v4794, %v4821
    %v4823 = vlaneseq
    %v4824 = vshrl.u32 %v4823, 7
    %v4825 = vsub.s32 %v574, %v4824
    %v4826 = vrot.slane %v4796, %v4825
    %v4827 = vlaneseq
    %v4828 = vshrl.u32 %v4827, 7
    %v4829 = vsub.s32 %v574, %v4828
    %v4830 = vrot.slane %v4798, %v4829
    %v4831 = vlaneseq
    %v4832 = vshrl.u32 %v4831, 7
    %v4833 = vsub.s32 %v574, %v4832
    %v4834 = vrot.slane %v4800, %v4833
    %v4835 = vlaneseq
    %v4836 = vshrl.u32 %v4835, 7
    %v4837 = vsub.s32 %v574, %v4836
    %v4838 = vrot.slane %v4802, %v4837
    %v4839 = vlaneseq
    %v4840 = vshrl.u32 %v4839, 7
    %v4841 = vsub.s32 %v574, %v4840
    %v4842 = vrot.slane %v4804, %v4841
    %v4843 = vlaneseq
    %v4844 = vshrl.u32 %v4843, 7
    %v4845 = vsub.s32 %v574, %v4844
    %v4846 = vrot.slane %v4806, %v4845
    %v4847 = vsel %vm607, %v4822, %v4818
    %v4848 = vsel %vm609, %v4826, %v4847
    %v4849 = vsel %vm611, %v4830, %v4848
    %v4850 = vsel %vm613, %v4834, %v4849
    %v4851 = vsel %vm615, %v4838, %v4850
    %v4852 = vsel %vm617, %v4842, %v4851
    %v4853 = vsel %vm619, %v4846, %v4852
    %v4855 = vsel %vm55, %v4853, -1e+09
    %v4856 = vsel %vm623, %v4855, -inf
    %4857 = vmax.xlane.f32.xlu0 %v4856
    %v4858 = vpop.xlane.xlu0 %4857
    %v4859 = vsub.f32 %v4855, %v4858
    %v4860 = vmul.f32 %v4859, 1.442695
    %v4861 = vpow.pop %v4860
    %v4862 = vsel %vm623, %v4861, 0.0
    %4863 = vadd.xlane.f32.xlu0 %v4862
    %v4864 = vpop.xlane.xlu0 %4863
    %v4865 = vrcp.pop %v4864
    %v4866 = vmul.f32 %v4861, %v4865
    %v4867 = vlaneseq
    %v4868 = vshrl.u32 %v4867, 7
    %v4869 = vsub.s32 0, %v4868
    %v4870 = vrot.slane %v4866, %v4869
    %4872 = vbcast.lane.b32.xlu0 %v4870, 256
    %v4873 = vpop.permute.xlu0 %4872
    %v4874 = vlaneseq
    %v4875 = vshrl.u32 %v4874, 7
    %v4876 = vsub.s32 1, %v4875
    %v4877 = vrot.slane %v4866, %v4876
    %4879 = vbcast.lane.b32.xlu0 %v4877, 256
    %v4880 = vpop.permute.xlu0 %4879
    %v4881 = vlaneseq
    %v4882 = vshrl.u32 %v4881, 7
    %v4883 = vsub.s32 2, %v4882
    %v4884 = vrot.slane %v4866, %v4883
    %4886 = vbcast.lane.b32.xlu0 %v4884, 256
    %v4887 = vpop.permute.xlu0 %4886
    %v4888 = vlaneseq
    %v4889 = vshrl.u32 %v4888, 7
    %v4890 = vsub.s32 3, %v4889
    %v4891 = vrot.slane %v4866, %v4890
    %4893 = vbcast.lane.b32.xlu0 %v4891, 256
    %v4894 = vpop.permute.xlu0 %4893
    %v4895 = vlaneseq
    %v4896 = vshrl.u32 %v4895, 7
    %v4897 = vsub.s32 4, %v4896
    %v4898 = vrot.slane %v4866, %v4897
    %4900 = vbcast.lane.b32.xlu0 %v4898, 256
    %v4901 = vpop.permute.xlu0 %4900
    %v4902 = vlaneseq
    %v4903 = vshrl.u32 %v4902, 7
    %v4904 = vsub.s32 5, %v4903
    %v4905 = vrot.slane %v4866, %v4904
    %4907 = vbcast.lane.b32.xlu0 %v4905, 256
    %v4908 = vpop.permute.xlu0 %4907
    %v4909 = vlaneseq
    %v4910 = vshrl.u32 %v4909, 7
    %v4911 = vsub.s32 6, %v4910
    %v4912 = vrot.slane %v4866, %v4911
    %4914 = vbcast.lane.b32.xlu0 %v4912, 256
    %v4915 = vpop.permute.xlu0 %4914
    %v4916 = vlaneseq
    %v4917 = vshrl.u32 %v4916, 7
    %v4918 = vsub.s32 7, %v4917
    %v4919 = vrot.slane %v4866, %v4918
    %4921 = vbcast.lane.b32.xlu0 %v4919, 256
    %v4922 = vpop.permute.xlu0 %4921
    %v4923 = vmul.f32 %v4873, %v46
    %v4924 = vmul.f32 %v4880, %v47
    %v4925 = vmul.f32 %v4887, %v48
    %v4926 = vmul.f32 %v4894, %v49
    %v4927 = vmul.f32 %v4901, %v50
    %v4928 = vmul.f32 %v4908, %v51
    %v4929 = vmul.f32 %v4915, %v52
    %v4930 = vmul.f32 %v4922, %v53
    %v4931 = vrot.slane %v4923, 4
    %v4932 = vadd.f32 %v4923, %v4931
    %v4933 = vrot.slane %v4932, 2
    %v4934 = vadd.f32 %v4932, %v4933
    %v4935 = vrot.slane %v4934, 1
    %v4936 = vadd.f32 %v4934, %v4935
    %v4937 = vrot.slane %v4924, 4
    %v4938 = vadd.f32 %v4924, %v4937
    %v4939 = vrot.slane %v4938, 2
    %v4940 = vadd.f32 %v4938, %v4939
    %v4941 = vrot.slane %v4940, 1
    %v4942 = vadd.f32 %v4940, %v4941
    %v4943 = vrot.slane %v4925, 4
    %v4944 = vadd.f32 %v4925, %v4943
    %v4945 = vrot.slane %v4944, 2
    %v4946 = vadd.f32 %v4944, %v4945
    %v4947 = vrot.slane %v4946, 1
    %v4948 = vadd.f32 %v4946, %v4947
    %v4949 = vrot.slane %v4926, 4
    %v4950 = vadd.f32 %v4926, %v4949
    %v4951 = vrot.slane %v4950, 2
    %v4952 = vadd.f32 %v4950, %v4951
    %v4953 = vrot.slane %v4952, 1
    %v4954 = vadd.f32 %v4952, %v4953
    %v4955 = vrot.slane %v4927, 4
    %v4956 = vadd.f32 %v4927, %v4955
    %v4957 = vrot.slane %v4956, 2
    %v4958 = vadd.f32 %v4956, %v4957
    %v4959 = vrot.slane %v4958, 1
    %v4960 = vadd.f32 %v4958, %v4959
    %v4961 = vrot.slane %v4928, 4
    %v4962 = vadd.f32 %v4928, %v4961
    %v4963 = vrot.slane %v4962, 2
    %v4964 = vadd.f32 %v4962, %v4963
    %v4965 = vrot.slane %v4964, 1
    %v4966 = vadd.f32 %v4964, %v4965
    %v4967 = vrot.slane %v4929, 4
    %v4968 = vadd.f32 %v4929, %v4967
    %v4969 = vrot.slane %v4968, 2
    %v4970 = vadd.f32 %v4968, %v4969
    %v4971 = vrot.slane %v4970, 1
    %v4972 = vadd.f32 %v4970, %v4971
    %v4973 = vrot.slane %v4930, 4
    %v4974 = vadd.f32 %v4930, %v4973
    %v4975 = vrot.slane %v4974, 2
    %v4976 = vadd.f32 %v4974, %v4975
    %v4977 = vrot.slane %v4976, 1
    %v4978 = vadd.f32 %v4976, %v4977
    %s4979 = scalar_lea.vmem %s0, 120
    %v4980 = vld [vmem:[%s4979] sm:$0xff]
    %v4981 = vld [vmem:[%s4979 + $0x8] sm:$0xff]
    %v4982 = vld [vmem:[%s4979 + $0x10] sm:$0xff]
    %v4983 = vld [vmem:[%s7] sm:$0xff]
    %v4984 = vld [vmem:[%s7 + $0x8] sm:$0xff]
    %v4985 = vld [vmem:[%s7 + $0x10] sm:$0xff]
    %v4986 = vld [vmem:[%s7 + $0x18] sm:$0xff]
    %v4987 = vld [vmem:[%s7 + $0x20] sm:$0xff]
    %v4988 = vld [vmem:[%s7 + $0x28] sm:$0xff]
    %v4989 = vld [vmem:[%s7 + $0x30] sm:$0xff]
    %v4990 = vld [vmem:[%s7 + $0x38] sm:$0xff]
    %v4991 = vld [vmem:[%s7 + $0x40] sm:$0xff]
    %v4992 = vld [vmem:[%s7 + $0x48] sm:$0xff]
    %v4993 = vld [vmem:[%s7 + $0x50] sm:$0xff]
    %v4994 = vld [vmem:[%s7 + $0x58] sm:$0xff]
    %v4995 = vld [vmem:[%s7 + $0x60] sm:$0xff]
    %v4996 = vld [vmem:[%s7 + $0x68] sm:$0xff]
    %v4997 = vld [vmem:[%s7 + $0x70] sm:$0xff]
    %v4998 = vld [vmem:[%s7 + $0x78] sm:$0xff]
    %v4999 = vld [vmem:[%s7 + $0x80] sm:$0xff]
    %v5000 = vld [vmem:[%s7 + $0x88] sm:$0xff]
    %v5001 = vld [vmem:[%s7 + $0x90] sm:$0xff]
    %v5002 = vld [vmem:[%s7 + $0x98] sm:$0xff]
    %v5003 = vld [vmem:[%s7 + $0xa0] sm:$0xff]
    %v5004 = vld [vmem:[%s7 + $0xa8] sm:$0xff]
    %v5005 = vld [vmem:[%s7 + $0xb0] sm:$0xff]
    %v5006 = vld [vmem:[%s7 + $0xb8] sm:$0xff]
    %v5007 = vld [vmem:[%s7 + $0xc0] sm:$0xff]
    %v5008 = vld [vmem:[%s7 + $0xc8] sm:$0xff]
    %v5009 = vld [vmem:[%s7 + $0xd0] sm:$0xff]
    %v5010 = vld [vmem:[%s7 + $0xd8] sm:$0xff]
    %v5011 = vld [vmem:[%s7 + $0xe0] sm:$0xff]
    %v5012 = vld [vmem:[%s7 + $0xe8] sm:$0xff]
    %v5013 = vld [vmem:[%s7 + $0xf0] sm:$0xff]
    %v5014 = vld [vmem:[%s7 + $0xf8] sm:$0xff]
    %v5015 = vld [vmem:[%s7 + $0x100] sm:$0xff]
    %v5016 = vld [vmem:[%s7 + $0x108] sm:$0xff]
    %v5017 = vld [vmem:[%s7 + $0x110] sm:$0xff]
    %v5018 = vld [vmem:[%s7 + $0x118] sm:$0xff]
    %v5019 = vld [vmem:[%s7 + $0x120] sm:$0xff]
    %v5020 = vld [vmem:[%s7 + $0x128] sm:$0xff]
    %v5021 = vld [vmem:[%s7 + $0x130] sm:$0xff]
    %v5022 = vld [vmem:[%s7 + $0x138] sm:$0xff]
    %v5023 = vld [vmem:[%s7 + $0x140] sm:$0xff]
    %v5024 = vld [vmem:[%s7 + $0x148] sm:$0xff]
    %v5025 = vld [vmem:[%s7 + $0x150] sm:$0xff]
    %v5026 = vld [vmem:[%s7 + $0x158] sm:$0xff]
    %v5027 = vld [vmem:[%s7 + $0x160] sm:$0xff]
    %v5028 = vld [vmem:[%s7 + $0x168] sm:$0xff]
    %v5029 = vld [vmem:[%s7 + $0x170] sm:$0xff]
    %v5030 = vld [vmem:[%s7 + $0x178] sm:$0xff]
    %v5039 = vsel %vm607, %v4942, %v4936
    %v5040 = vsel %vm609, %v4948, %v5039
    %v5041 = vsel %vm611, %v4954, %v5040
    %v5042 = vsel %vm613, %v4960, %v5041
    %v5043 = vsel %vm615, %v4966, %v5042
    %v5044 = vsel %vm617, %v4972, %v5043
    %v5045 = vsel %vm619, %v4978, %v5044
    %5047 = vmatprep.subr.mxu0 %v5029
    %5048 = vmatpush1.msra.mxu0 %v5028
    %5049 = vmatprep.subr.mxu0 %v5026
    %5050 = vmatpush1.msra.mxu0 %v5025
    %5051 = vmatprep.subr.mxu0 %v5023
    %5052 = vmatpush1.msra.mxu0 %v5022
    %5053 = vmatprep.subr.mxu0 %v5020
    %5054 = vmatpush1.msra.mxu0 %v5019
    %5055 = vmatprep.subr.mxu0 %v5017
    %5056 = vmatpush1.msra.mxu0 %v5016
    %5057 = vmatprep.subr.mxu0 %v5014
    %5058 = vmatpush1.msra.mxu0 %v5013
    %5059 = vmatprep.subr.mxu0 %v5011
    %5060 = vmatpush1.msra.mxu0 %v5010
    %5061 = vmatprep.subr.mxu0 %v5008
    %5062 = vmatpush1.msra.mxu0 %v5007
    %5063 = vmatprep.subr.mxu0 %v5005
    %5064 = vmatpush1.msra.mxu0 %v5004
    %5065 = vmatprep.subr.mxu0 %v5002
    %5066 = vmatpush1.msra.mxu0 %v5001
    %5067 = vmatprep.subr.mxu0 %v4999
    %5068 = vmatpush1.msra.mxu0 %v4998
    %5069 = vmatprep.subr.mxu0 %v4996
    %5070 = vmatpush1.msra.mxu0 %v4995
    %5071 = vmatprep.subr.mxu0 %v4993
    %5072 = vmatpush1.msra.mxu0 %v4992
    %5073 = vmatprep.subr.mxu0 %v4990
    %5074 = vmatpush1.msra.mxu0 %v4989
    %5075 = vmatprep.subr.mxu0 %v4987
    %5076 = vmatpush1.msra.mxu0 %v4986
    %5077 = vmatprep.subr.mxu0 %v4984
    %5078 = vmatpush1.msra.mxu0 %v4983
    %5079 = vmatprep.subr.mxu0 0.0
    %5080 = vmatpush2.msra.mxu0 0.0
    %5081 = vmatprep.subr.mxu0 0.0
    %5082 = vmatpush2.msra.mxu0 0.0
    %5083 = vmatprep.subr.mxu0 0.0
    %5084 = vmatpush2.msra.mxu0 0.0
    %5085 = vmatprep.subr.mxu0 0.0
    %5086 = vmatpush2.msra.mxu0 0.0
    %5087 = vmatprep.subr.mxu0 0.0
    %5088 = vmatpush2.msra.mxu0 0.0
    %5089 = vmatprep.subr.mxu0 0.0
    %5090 = vmatpush2.msra.mxu0 0.0
    %5091 = vmatprep.subr.mxu0 0.0
    %5092 = vmatpush2.msra.mxu0 0.0
    %5093 = vmatprep.subr.mxu0 0.0
    %5094 = vmatpush2.msra.mxu0 0.0
    %5095 = vmatprep.subr.mxu0 0.0
    %5096 = vmatpush2.msra.mxu0 0.0
    %5097 = vmatprep.subr.mxu0 0.0
    %5098 = vmatpush2.msra.mxu0 0.0
    %5099 = vmatprep.subr.mxu0 0.0
    %5100 = vmatpush2.msra.mxu0 0.0
    %5101 = vmatprep.subr.mxu0 0.0
    %5102 = vmatpush2.msra.mxu0 0.0
    %5103 = vmatprep.subr.mxu0 0.0
    %5104 = vmatpush2.msra.mxu0 0.0
    %5105 = vmatprep.subr.mxu0 0.0
    %5106 = vmatpush2.msra.mxu0 0.0
    %5107 = vmatprep.subr.mxu0 0.0
    %5108 = vmatpush2.msra.mxu0 0.0
    %5109 = vmatprep.subr.mxu0 0.0
    %5110 = vmatpush2.msra.mxu0 0.0
    %5111 = vmatprep.mubr.f32.mxu0 0.0
    %5112 = vmatmul.mubr.f32.gmra.mxu0 %v5045
    %v5113 = vpop.f32.mrf.mxu0
    %v5114 = vadd.f32 0.0, %v5113
    %v5115 = vpop.f32.mrf.mxu0
    %v5116 = vadd.f32 0.0, %v5115
    %5117 = vdwg.mxu0
    %5118 = vmatprep.subr.mxu0 0.0
    %5119 = vmatpush1.msra.mxu0 %v5030
    %5120 = vmatprep.subr.mxu0 0.0
    %5121 = vmatpush1.msra.mxu0 %v5027
    %5122 = vmatprep.subr.mxu0 0.0
    %5123 = vmatpush1.msra.mxu0 %v5024
    %5124 = vmatprep.subr.mxu0 0.0
    %5125 = vmatpush1.msra.mxu0 %v5021
    %5126 = vmatprep.subr.mxu0 0.0
    %5127 = vmatpush1.msra.mxu0 %v5018
    %5128 = vmatprep.subr.mxu0 0.0
    %5129 = vmatpush1.msra.mxu0 %v5015
    %5130 = vmatprep.subr.mxu0 0.0
    %5131 = vmatpush1.msra.mxu0 %v5012
    %5132 = vmatprep.subr.mxu0 0.0
    %5133 = vmatpush1.msra.mxu0 %v5009
    %5134 = vmatprep.subr.mxu0 0.0
    %5135 = vmatpush1.msra.mxu0 %v5006
    %5136 = vmatprep.subr.mxu0 0.0
    %5137 = vmatpush1.msra.mxu0 %v5003
    %5138 = vmatprep.subr.mxu0 0.0
    %5139 = vmatpush1.msra.mxu0 %v5000
    %5140 = vmatprep.subr.mxu0 0.0
    %5141 = vmatpush1.msra.mxu0 %v4997
    %5142 = vmatprep.subr.mxu0 0.0
    %5143 = vmatpush1.msra.mxu0 %v4994
    %5144 = vmatprep.subr.mxu0 0.0
    %5145 = vmatpush1.msra.mxu0 %v4991
    %5146 = vmatprep.subr.mxu0 0.0
    %5147 = vmatpush1.msra.mxu0 %v4988
    %5148 = vmatprep.subr.mxu0 0.0
    %5149 = vmatpush1.msra.mxu0 %v4985
    %5150 = vmatprep.subr.mxu0 0.0
    %5151 = vmatpush2.msra.mxu0 0.0
    %5152 = vmatprep.subr.mxu0 0.0
    %5153 = vmatpush2.msra.mxu0 0.0
    %5154 = vmatprep.subr.mxu0 0.0
    %5155 = vmatpush2.msra.mxu0 0.0
    %5156 = vmatprep.subr.mxu0 0.0
    %5157 = vmatpush2.msra.mxu0 0.0
    %5158 = vmatprep.subr.mxu0 0.0
    %5159 = vmatpush2.msra.mxu0 0.0
    %5160 = vmatprep.subr.mxu0 0.0
    %5161 = vmatpush2.msra.mxu0 0.0
    %5162 = vmatprep.subr.mxu0 0.0
    %5163 = vmatpush2.msra.mxu0 0.0
    %5164 = vmatprep.subr.mxu0 0.0
    %5165 = vmatpush2.msra.mxu0 0.0
    %5166 = vmatprep.subr.mxu0 0.0
    %5167 = vmatpush2.msra.mxu0 0.0
    %5168 = vmatprep.subr.mxu0 0.0
    %5169 = vmatpush2.msra.mxu0 0.0
    %5170 = vmatprep.subr.mxu0 0.0
    %5171 = vmatpush2.msra.mxu0 0.0
    %5172 = vmatprep.subr.mxu0 0.0
    %5173 = vmatpush2.msra.mxu0 0.0
    %5174 = vmatprep.subr.mxu0 0.0
    %5175 = vmatpush2.msra.mxu0 0.0
    %5176 = vmatprep.subr.mxu0 0.0
    %5177 = vmatpush2.msra.mxu0 0.0
    %5178 = vmatprep.subr.mxu0 0.0
    %5179 = vmatpush2.msra.mxu0 0.0
    %5180 = vmatprep.subr.mxu0 0.0
    %5181 = vmatpush2.msra.mxu0 0.0
    %5182 = vmatprep.mubr.f32.mxu0 0.0
    %5183 = vmatmul.mubr.f32.gmra.mxu0 %v5045
    %v5184 = vpop.f32.mrf.mxu0
    %v5185 = vadd.f32 0.0, %v5184
    %v5186 = vpop.f32.mrf.mxu0
    %5187 = vdwg.mxu0
    %v5188 = vadd.f32 %v4980, %v5114
    %v5189 = vadd.f32 %v4981, %v5116
    %v5190 = vadd.f32 %v4982, %v5185
    %v5191 = vadd.f32 %v5188, %v183
    %v5192 = vadd.f32 %v5189, %v187
    %v5193 = vadd.f32 %v5190, %v191
    %v5194 = vadd.f32 %v5191, %v4674
    %v5195 = vxor.u32 %v5194, 2147483648
    %v5196 = vmul.f32 %v5195, 1.442695
    %v5197 = vpow.pop %v5196
    %v5198 = vadd.f32 %v5197, 1.0
    %v5199 = vrcp.pop %v5198
    %v5200 = vmul.f32 1.0, %v5199
    %v5201 = vadd.f32 %v5192, %v4675
    %v5202 = vxor.u32 %v5201, 2147483648
    %v5203 = vmul.f32 %v5202, 1.442695
    %v5204 = vpow.pop %v5203
    %v5205 = vadd.f32 %v5204, 1.0
    %v5206 = vrcp.pop %v5205
    %v5207 = vmul.f32 1.0, %v5206
    %v5208 = vmul.f32 %v5200, %v4676
    %v5209 = vadd.f32 %v5193, %v5208
    %v5210 = vtanh.pop %v5209
    %v5211 = vsub.f32 1.0, %v5207
    %v5212 = vmul.f32 %v5211, %v5210
    %v5213 = vmul.f32 %v5207, %v4367
    %v5214 = vadd.f32 %v5212, %v5213
    %v5215 = vld [vmem:[%s10] sm:$0xff]
    %v5216 = vld [vmem:[%s10 + $0x8] sm:$0xff]
    %v5217 = vld [vmem:[%s10 + $0x10] sm:$0xff]
    %v5218 = vld [vmem:[%s10 + $0x18] sm:$0xff]
    %v5219 = vld [vmem:[%s10 + $0x20] sm:$0xff]
    %v5220 = vld [vmem:[%s10 + $0x28] sm:$0xff]
    %v5221 = vld [vmem:[%s10 + $0x30] sm:$0xff]
    %v5222 = vld [vmem:[%s10 + $0x38] sm:$0xff]
    %v5223 = vld [vmem:[%s10 + $0x40] sm:$0xff]
    %v5224 = vld [vmem:[%s10 + $0x48] sm:$0xff]
    %v5225 = vld [vmem:[%s10 + $0x50] sm:$0xff]
    %v5226 = vld [vmem:[%s10 + $0x58] sm:$0xff]
    %v5227 = vld [vmem:[%s10 + $0x60] sm:$0xff]
    %v5228 = vld [vmem:[%s10 + $0x68] sm:$0xff]
    %v5229 = vld [vmem:[%s10 + $0x70] sm:$0xff]
    %v5230 = vld [vmem:[%s10 + $0x78] sm:$0xff]
    %5231 = vmatprep.subr.mxu0 0.0
    %5232 = vmatpush1.msra.mxu0 %v5230
    %5233 = vmatprep.subr.mxu0 0.0
    %5234 = vmatpush1.msra.mxu0 %v5229
    %5235 = vmatprep.subr.mxu0 0.0
    %5236 = vmatpush1.msra.mxu0 %v5228
    %5237 = vmatprep.subr.mxu0 0.0
    %5238 = vmatpush1.msra.mxu0 %v5227
    %5239 = vmatprep.subr.mxu0 0.0
    %5240 = vmatpush1.msra.mxu0 %v5226
    %5241 = vmatprep.subr.mxu0 0.0
    %5242 = vmatpush1.msra.mxu0 %v5225
    %5243 = vmatprep.subr.mxu0 0.0
    %5244 = vmatpush1.msra.mxu0 %v5224
    %5245 = vmatprep.subr.mxu0 0.0
    %5246 = vmatpush1.msra.mxu0 %v5223
    %5247 = vmatprep.subr.mxu0 0.0
    %5248 = vmatpush1.msra.mxu0 %v5222
    %5249 = vmatprep.subr.mxu0 0.0
    %5250 = vmatpush1.msra.mxu0 %v5221
    %5251 = vmatprep.subr.mxu0 0.0
    %5252 = vmatpush1.msra.mxu0 %v5220
    %5253 = vmatprep.subr.mxu0 0.0
    %5254 = vmatpush1.msra.mxu0 %v5219
    %5255 = vmatprep.subr.mxu0 0.0
    %5256 = vmatpush1.msra.mxu0 %v5218
    %5257 = vmatprep.subr.mxu0 0.0
    %5258 = vmatpush1.msra.mxu0 %v5217
    %5259 = vmatprep.subr.mxu0 0.0
    %5260 = vmatpush1.msra.mxu0 %v5216
    %5261 = vmatprep.subr.mxu0 0.0
    %5262 = vmatpush1.msra.mxu0 %v5215
    %5263 = vmatprep.subr.mxu0 0.0
    %5264 = vmatpush2.msra.mxu0 0.0
    %5265 = vmatprep.subr.mxu0 0.0
    %5266 = vmatpush2.msra.mxu0 0.0
    %5267 = vmatprep.subr.mxu0 0.0
    %5268 = vmatpush2.msra.mxu0 0.0
    %5269 = vmatprep.subr.mxu0 0.0
    %5270 = vmatpush2.msra.mxu0 0.0
    %5271 = vmatprep.subr.mxu0 0.0
    %5272 = vmatpush2.msra.mxu0 0.0
    %5273 = vmatprep.subr.mxu0 0.0
    %5274 = vmatpush2.msra.mxu0 0.0
    %5275 = vmatprep.subr.mxu0 0.0
    %5276 = vmatpush2.msra.mxu0 0.0
    %5277 = vmatprep.subr.mxu0 0.0
    %5278 = vmatpush2.msra.mxu0 0.0
    %5279 = vmatprep.subr.mxu0 0.0
    %5280 = vmatpush2.msra.mxu0 0.0
    %5281 = vmatprep.subr.mxu0 0.0
    %5282 = vmatpush2.msra.mxu0 0.0
    %5283 = vmatprep.subr.mxu0 0.0
    %5284 = vmatpush2.msra.mxu0 0.0
    %5285 = vmatprep.subr.mxu0 0.0
    %5286 = vmatpush2.msra.mxu0 0.0
    %5287 = vmatprep.subr.mxu0 0.0
    %5288 = vmatpush2.msra.mxu0 0.0
    %5289 = vmatprep.subr.mxu0 0.0
    %5290 = vmatpush2.msra.mxu0 0.0
    %5291 = vmatprep.subr.mxu0 0.0
    %5292 = vmatpush2.msra.mxu0 0.0
    %5293 = vmatprep.subr.mxu0 0.0
    %5294 = vmatpush2.msra.mxu0 0.0
    %5295 = vmatprep.mubr.f32.mxu0 0.0
    %5296 = vmatmul.mubr.f32.gmra.mxu0 %v5214
    %v5297 = vpop.f32.mrf.mxu0
    %v5298 = vadd.f32 %v217, %v5297
    %v5299 = vpop.f32.mrf.mxu0
    %5300 = vdwg.mxu0
    %5301 = vmax.xlane.f32.xlu0 %v5298
    %v5302 = vpop.xlane.xlu0 %5301
    %v5303 = vsub.f32 %v5298, %v5302
    %v5304 = vmul.f32 %v5303, 1.442695
    %v5305 = vpow.pop %v5304
    %5306 = vadd.xlane.f32.xlu0 %v5305
    %v5307 = vpop.xlane.xlu0 %5306
    %v5308 = vlog2.pop %v5307
    %v5309 = vmul.f32 %v5308, 0.6931472
    %v5310 = vsub.f32 %v5303, %v5309
    %s5311 = scalar_lea.vmem [#allocation2], 40
    %5312 = vst [vmem:[%s5311] sm:$0xff] %v5310
    %s5313 = scalar_lea.vmem [#allocation4], 40
    %5314 = vst [vmem:[%s5313] sm:$0xff] %v5045
    %v5315 = vld [vmem:[%s6] sm:$0xff]
    %v5316 = vld [vmem:[%s6 + $0x8] sm:$0xff]
    %v5317 = vld [vmem:[%s6 + $0x10] sm:$0xff]
    %v5318 = vld [vmem:[%s6 + $0x18] sm:$0xff]
    %v5319 = vld [vmem:[%s6 + $0x20] sm:$0xff]
    %v5320 = vld [vmem:[%s6 + $0x28] sm:$0xff]
    %v5321 = vld [vmem:[%s6 + $0x30] sm:$0xff]
    %v5322 = vld [vmem:[%s6 + $0x38] sm:$0xff]
    %v5323 = vld [vmem:[%s6 + $0x40] sm:$0xff]
    %v5324 = vld [vmem:[%s6 + $0x48] sm:$0xff]
    %v5325 = vld [vmem:[%s6 + $0x50] sm:$0xff]
    %v5326 = vld [vmem:[%s6 + $0x58] sm:$0xff]
    %v5327 = vld [vmem:[%s6 + $0x60] sm:$0xff]
    %v5328 = vld [vmem:[%s6 + $0x68] sm:$0xff]
    %v5329 = vld [vmem:[%s6 + $0x70] sm:$0xff]
    %v5330 = vld [vmem:[%s6 + $0x78] sm:$0xff]
    %v5331 = vld [vmem:[%s6 + $0x80] sm:$0xff]
    %v5332 = vld [vmem:[%s6 + $0x88] sm:$0xff]
    %v5333 = vld [vmem:[%s6 + $0x90] sm:$0xff]
    %v5334 = vld [vmem:[%s6 + $0x98] sm:$0xff]
    %v5335 = vld [vmem:[%s6 + $0xa0] sm:$0xff]
    %v5336 = vld [vmem:[%s6 + $0xa8] sm:$0xff]
    %v5337 = vld [vmem:[%s6 + $0xb0] sm:$0xff]
    %v5338 = vld [vmem:[%s6 + $0xb8] sm:$0xff]
    %v5339 = vld [vmem:[%s6 + $0xc0] sm:$0xff]
    %v5340 = vld [vmem:[%s6 + $0xc8] sm:$0xff]
    %v5341 = vld [vmem:[%s6 + $0xd0] sm:$0xff]
    %v5342 = vld [vmem:[%s6 + $0xd8] sm:$0xff]
    %v5343 = vld [vmem:[%s6 + $0xe0] sm:$0xff]
    %v5344 = vld [vmem:[%s6 + $0xe8] sm:$0xff]
    %v5345 = vld [vmem:[%s6 + $0xf0] sm:$0xff]
    %v5346 = vld [vmem:[%s6 + $0xf8] sm:$0xff]
    %v5347 = vld [vmem:[%s6 + $0x100] sm:$0xff]
    %v5348 = vld [vmem:[%s6 + $0x108] sm:$0xff]
    %v5349 = vld [vmem:[%s6 + $0x110] sm:$0xff]
    %v5350 = vld [vmem:[%s6 + $0x118] sm:$0xff]
    %v5351 = vld [vmem:[%s6 + $0x120] sm:$0xff]
    %v5352 = vld [vmem:[%s6 + $0x128] sm:$0xff]
    %v5353 = vld [vmem:[%s6 + $0x130] sm:$0xff]
    %v5354 = vld [vmem:[%s6 + $0x138] sm:$0xff]
    %v5355 = vld [vmem:[%s6 + $0x140] sm:$0xff]
    %v5356 = vld [vmem:[%s6 + $0x148] sm:$0xff]
    %v5357 = vld [vmem:[%s6 + $0x150] sm:$0xff]
    %v5358 = vld [vmem:[%s6 + $0x158] sm:$0xff]
    %v5359 = vld [vmem:[%s6 + $0x160] sm:$0xff]
    %v5360 = vld [vmem:[%s6 + $0x168] sm:$0xff]
    %v5361 = vld [vmem:[%s6 + $0x170] sm:$0xff]
    %v5362 = vld [vmem:[%s6 + $0x178] sm:$0xff]
    %v5363 = vld [vmem:[%s6 + $0x180] sm:$0xff]
    %v5364 = vld [vmem:[%s6 + $0x188] sm:$0xff]
    %v5365 = vld [vmem:[%s6 + $0x190] sm:$0xff]
    %v5366 = vld [vmem:[%s6 + $0x198] sm:$0xff]
    %v5367 = vld [vmem:[%s6 + $0x1a0] sm:$0xff]
    %v5368 = vld [vmem:[%s6 + $0x1a8] sm:$0xff]
    %v5369 = vld [vmem:[%s6 + $0x1b0] sm:$0xff]
    %v5370 = vld [vmem:[%s6 + $0x1b8] sm:$0xff]
    %v5371 = vld [vmem:[%s6 + $0x1c0] sm:$0xff]
    %v5372 = vld [vmem:[%s6 + $0x1c8] sm:$0xff]
    %v5373 = vld [vmem:[%s6 + $0x1d0] sm:$0xff]
    %v5374 = vld [vmem:[%s6 + $0x1d8] sm:$0xff]
    %v5375 = vld [vmem:[%s6 + $0x1e0] sm:$0xff]
    %v5376 = vld [vmem:[%s6 + $0x1e8] sm:$0xff]
    %v5377 = vld [vmem:[%s6 + $0x1f0] sm:$0xff]
    %v5378 = vld [vmem:[%s6 + $0x1f8] sm:$0xff]
    %5379 = vmatprep.subr.mxu0 %v5376
    %5380 = vmatpush1.msra.mxu0 %v5375
    %5381 = vmatprep.subr.mxu0 %v5372
    %5382 = vmatpush1.msra.mxu0 %v5371
    %5383 = vmatprep.subr.mxu0 %v5368
    %5384 = vmatpush1.msra.mxu0 %v5367
    %5385 = vmatprep.subr.mxu0 %v5364
    %5386 = vmatpush1.msra.mxu0 %v5363
    %5387 = vmatprep.subr.mxu0 %v5360
    %5388 = vmatpush1.msra.mxu0 %v5359
    %5389 = vmatprep.subr.mxu0 %v5356
    %5390 = vmatpush1.msra.mxu0 %v5355
    %5391 = vmatprep.subr.mxu0 %v5352
    %5392 = vmatpush1.msra.mxu0 %v5351
    %5393 = vmatprep.subr.mxu0 %v5348
    %5394 = vmatpush1.msra.mxu0 %v5347
    %5395 = vmatprep.subr.mxu0 %v5344
    %5396 = vmatpush1.msra.mxu0 %v5343
    %5397 = vmatprep.subr.mxu0 %v5340
    %5398 = vmatpush1.msra.mxu0 %v5339
    %5399 = vmatprep.subr.mxu0 %v5336
    %5400 = vmatpush1.msra.mxu0 %v5335
    %5401 = vmatprep.subr.mxu0 %v5332
    %5402 = vmatpush1.msra.mxu0 %v5331
    %5403 = vmatprep.subr.mxu0 %v5328
    %5404 = vmatpush1.msra.mxu0 %v5327
    %5405 = vmatprep.subr.mxu0 %v5324
    %5406 = vmatpush1.msra.mxu0 %v5323
    %5407 = vmatprep.subr.mxu0 %v5320
    %5408 = vmatpush1.msra.mxu0 %v5319
    %5409 = vmatprep.subr.mxu0 %v5316
    %5410 = vmatpush1.msra.mxu0 %v5315
    %5411 = vmatprep.subr.mxu0 0.0
    %5412 = vmatpush2.msra.mxu0 0.0
    %5413 = vmatprep.subr.mxu0 0.0
    %5414 = vmatpush2.msra.mxu0 0.0
    %5415 = vmatprep.subr.mxu0 0.0
    %5416 = vmatpush2.msra.mxu0 0.0
    %5417 = vmatprep.subr.mxu0 0.0
    %5418 = vmatpush2.msra.mxu0 0.0
    %5419 = vmatprep.subr.mxu0 0.0
    %5420 = vmatpush2.msra.mxu0 0.0
    %5421 = vmatprep.subr.mxu0 0.0
    %5422 = vmatpush2.msra.mxu0 0.0
    %5423 = vmatprep.subr.mxu0 0.0
    %5424 = vmatpush2.msra.mxu0 0.0
    %5425 = vmatprep.subr.mxu0 0.0
    %5426 = vmatpush2.msra.mxu0 0.0
    %5427 = vmatprep.subr.mxu0 0.0
    %5428 = vmatpush2.msra.mxu0 0.0
    %5429 = vmatprep.subr.mxu0 0.0
    %5430 = vmatpush2.msra.mxu0 0.0
    %5431 = vmatprep.subr.mxu0 0.0
    %5432 = vmatpush2.msra.mxu0 0.0
    %5433 = vmatprep.subr.mxu0 0.0
    %5434 = vmatpush2.msra.mxu0 0.0
    %5435 = vmatprep.subr.mxu0 0.0
    %5436 = vmatpush2.msra.mxu0 0.0
    %5437 = vmatprep.subr.mxu0 0.0
    %5438 = vmatpush2.msra.mxu0 0.0
    %5439 = vmatprep.subr.mxu0 0.0
    %5440 = vmatpush2.msra.mxu0 0.0
    %5441 = vmatprep.subr.mxu0 0.0
    %5442 = vmatpush2.msra.mxu0 0.0
    %5443 = vmatprep.mubr.f32.mxu0 0.0
    %5444 = vmatmul.mubr.f32.gmra.mxu0 %v5214
    %v5445 = vpop.f32.mrf.mxu0
    %v5446 = vadd.f32 0.0, %v5445
    %v5447 = vpop.f32.mrf.mxu0
    %v5448 = vadd.f32 0.0, %v5447
    %5449 = vdwg.mxu0
    %5450 = vmatprep.subr.mxu0 %v5378
    %5451 = vmatpush1.msra.mxu0 %v5377
    %5452 = vmatprep.subr.mxu0 %v5374
    %5453 = vmatpush1.msra.mxu0 %v5373
    %5454 = vmatprep.subr.mxu0 %v5370
    %5455 = vmatpush1.msra.mxu0 %v5369
    %5456 = vmatprep.subr.mxu0 %v5366
    %5457 = vmatpush1.msra.mxu0 %v5365
    %5458 = vmatprep.subr.mxu0 %v5362
    %5459 = vmatpush1.msra.mxu0 %v5361
    %5460 = vmatprep.subr.mxu0 %v5358
    %5461 = vmatpush1.msra.mxu0 %v5357
    %5462 = vmatprep.subr.mxu0 %v5354
    %5463 = vmatpush1.msra.mxu0 %v5353
    %5464 = vmatprep.subr.mxu0 %v5350
    %5465 = vmatpush1.msra.mxu0 %v5349
    %5466 = vmatprep.subr.mxu0 %v5346
    %5467 = vmatpush1.msra.mxu0 %v5345
    %5468 = vmatprep.subr.mxu0 %v5342
    %5469 = vmatpush1.msra.mxu0 %v5341
    %5470 = vmatprep.subr.mxu0 %v5338
    %5471 = vmatpush1.msra.mxu0 %v5337
    %5472 = vmatprep.subr.mxu0 %v5334
    %5473 = vmatpush1.msra.mxu0 %v5333
    %5474 = vmatprep.subr.mxu0 %v5330
    %5475 = vmatpush1.msra.mxu0 %v5329
    %5476 = vmatprep.subr.mxu0 %v5326
    %5477 = vmatpush1.msra.mxu0 %v5325
    %5478 = vmatprep.subr.mxu0 %v5322
    %5479 = vmatpush1.msra.mxu0 %v5321
    %5480 = vmatprep.subr.mxu0 %v5318
    %5481 = vmatpush1.msra.mxu0 %v5317
    %5482 = vmatprep.subr.mxu0 0.0
    %5483 = vmatpush2.msra.mxu0 0.0
    %5484 = vmatprep.subr.mxu0 0.0
    %5485 = vmatpush2.msra.mxu0 0.0
    %5486 = vmatprep.subr.mxu0 0.0
    %5487 = vmatpush2.msra.mxu0 0.0
    %5488 = vmatprep.subr.mxu0 0.0
    %5489 = vmatpush2.msra.mxu0 0.0
    %5490 = vmatprep.subr.mxu0 0.0
    %5491 = vmatpush2.msra.mxu0 0.0
    %5492 = vmatprep.subr.mxu0 0.0
    %5493 = vmatpush2.msra.mxu0 0.0
    %5494 = vmatprep.subr.mxu0 0.0
    %5495 = vmatpush2.msra.mxu0 0.0
    %5496 = vmatprep.subr.mxu0 0.0
    %5497 = vmatpush2.msra.mxu0 0.0
    %5498 = vmatprep.subr.mxu0 0.0
    %5499 = vmatpush2.msra.mxu0 0.0
    %5500 = vmatprep.subr.mxu0 0.0
    %5501 = vmatpush2.msra.mxu0 0.0
    %5502 = vmatprep.subr.mxu0 0.0
    %5503 = vmatpush2.msra.mxu0 0.0
    %5504 = vmatprep.subr.mxu0 0.0
    %5505 = vmatpush2.msra.mxu0 0.0
    %5506 = vmatprep.subr.mxu0 0.0
    %5507 = vmatpush2.msra.mxu0 0.0
    %5508 = vmatprep.subr.mxu0 0.0
    %5509 = vmatpush2.msra.mxu0 0.0
    %5510 = vmatprep.subr.mxu0 0.0
    %5511 = vmatpush2.msra.mxu0 0.0
    %5512 = vmatprep.subr.mxu0 0.0
    %5513 = vmatpush2.msra.mxu0 0.0
    %5514 = vmatprep.mubr.f32.mxu0 0.0
    %5515 = vmatmul.mubr.f32.gmra.mxu0 %v5214
    %v5516 = vpop.f32.mrf.mxu0
    %v5517 = vadd.f32 0.0, %v5516
    %v5518 = vpop.f32.mrf.mxu0
    %v5519 = vadd.f32 0.0, %v5518
    %5520 = vdwg.mxu0
    %v5521 = vadd.f32 %v5448, %v200
    %v5522 = vadd.f32 %v5517, %v204
    %v5523 = vadd.f32 %v5519, %v208
    %v5525 = vcombine.high %v5446, %v5446
    %v5527 = vunpack.c.l.s4 1966171168
    %v5528 = vunpack.c.0.s8 %v5527
    %v5529 = vlaneseq
    %v5530 = vshrl.u32 %v5529, 7
    %v5531 = vsub.s32 %v5528, %v5530
    %v5532 = vrot.slane %v5446, %v5531
    %v5534 = vunpack.c.l.s4 1966171168
    %v5535 = vunpack.c.0.s8 %v5534
    %v5536 = vlaneseq
    %v5537 = vshrl.u32 %v5536, 7
    %v5538 = vsub.s32 %v5535, %v5537
    %v5539 = vrot.slane %v5525, %v5538
    %v5540 = vcombine.high %v5532, %v5532
    %v5541 = vcombine.high %v5539, %v5539
    %v5543 = vunpack.c.l.s4 1966171168
    %v5544 = vunpack.c.0.s8 %v5543
    %v5545 = vlaneseq
    %v5546 = vshrl.u32 %v5545, 7
    %v5547 = vsub.s32 %v5544, %v5546
    %v5548 = vrot.slane %v5532, %v5547
    %v5550 = vunpack.c.l.s4 1966171168
    %v5551 = vunpack.c.0.s8 %v5550
    %v5552 = vlaneseq
    %v5553 = vshrl.u32 %v5552, 7
    %v5554 = vsub.s32 %v5551, %v5553
    %v5555 = vrot.slane %v5539, %v5554
    %v5557 = vunpack.c.l.s4 1966171168
    %v5558 = vunpack.c.0.s8 %v5557
    %v5559 = vlaneseq
    %v5560 = vshrl.u32 %v5559, 7
    %v5561 = vsub.s32 %v5558, %v5560
    %v5562 = vrot.slane %v5540, %v5561
    %v5564 = vunpack.c.l.s4 1966171168
    %v5565 = vunpack.c.0.s8 %v5564
    %v5566 = vlaneseq
    %v5567 = vshrl.u32 %v5566, 7
    %v5568 = vsub.s32 %v5565, %v5567
    %v5569 = vrot.slane %v5541, %v5568
    %v5570 = vcombine.high %v5548, %v5548
    %v5571 = vcombine.high %v5555, %v5555
    %v5572 = vcombine.high %v5562, %v5562
    %v5573 = vcombine.high %v5569, %v5569
    %v5574 = vlaneseq
    %v5575 = vshrl.u32 %v5574, 7
    %v5576 = vsub.s32 0, %v5575
    %v5577 = vrot.slane %v5548, %v5576
    %v5578 = vlaneseq
    %v5579 = vshrl.u32 %v5578, 7
    %v5580 = vsub.s32 0, %v5579
    %v5581 = vrot.slane %v5562, %v5580
    %v5582 = vlaneseq
    %v5583 = vshrl.u32 %v5582, 7
    %v5584 = vsub.s32 0, %v5583
    %v5585 = vrot.slane %v5570, %v5584
    %v5586 = vlaneseq
    %v5587 = vshrl.u32 %v5586, 7
    %v5588 = vsub.s32 0, %v5587
    %v5589 = vrot.slane %v5572, %v5588
    %v5590 = vlaneseq
    %v5591 = vshrl.u32 %v5590, 7
    %v5592 = vsub.s32 0, %v5591
    %v5593 = vrot.slane %v5555, %v5592
    %v5594 = vlaneseq
    %v5595 = vshrl.u32 %v5594, 7
    %v5596 = vsub.s32 0, %v5595
    %v5597 = vrot.slane %v5569, %v5596
    %v5598 = vlaneseq
    %v5599 = vshrl.u32 %v5598, 7
    %v5600 = vsub.s32 0, %v5599
    %v5601 = vrot.slane %v5571, %v5600
    %v5602 = vlaneseq
    %v5603 = vshrl.u32 %v5602, 7
    %v5604 = vsub.s32 0, %v5603
    %v5605 = vrot.slane %v5573, %v5604
    %v5614 = vadd.f32 %v5577, %v139
    %v5615 = vadd.f32 %v5581, %v144
    %v5616 = vadd.f32 %v5585, %v149
    %v5617 = vadd.f32 %v5589, %v154
    %v5618 = vadd.f32 %v5593, %v159
    %v5619 = vadd.f32 %v5597, %v164
    %v5620 = vadd.f32 %v5601, %v169
    %v5621 = vadd.f32 %v5605, %v174
    %v5622 = vtanh.pop %v5614
    %v5623 = vtanh.pop %v5615
    %v5624 = vtanh.pop %v5616
    %v5625 = vtanh.pop %v5617
    %v5626 = vtanh.pop %v5618
    %v5627 = vtanh.pop %v5619
    %v5628 = vtanh.pop %v5620
    %v5629 = vtanh.pop %v5621
    %v5630 = vmul.f32 %v5622, %v539
    %v5631 = vmul.f32 %v5623, %v539
    %v5632 = vmul.f32 %v5624, %v539
    %v5633 = vmul.f32 %v5625, %v539
    %v5634 = vmul.f32 %v5626, %v539
    %v5635 = vmul.f32 %v5627, %v539
    %v5636 = vmul.f32 %v5628, %v539
    %v5637 = vmul.f32 %v5629, %v539
    %5638 = vadd.xlane.f32.xlu0 %v5630
    %v5639 = vpop.xlane.xlu0 %5638
    %5640 = vadd.xlane.f32.xlu0 %v5631
    %v5641 = vpop.xlane.xlu0 %5640
    %5642 = vadd.xlane.f32.xlu0 %v5632
    %v5643 = vpop.xlane.xlu0 %5642
    %5644 = vadd.xlane.f32.xlu0 %v5633
    %v5645 = vpop.xlane.xlu0 %5644
    %5646 = vadd.xlane.f32.xlu0 %v5634
    %v5647 = vpop.xlane.xlu0 %5646
    %5648 = vadd.xlane.f32.xlu0 %v5635
    %v5649 = vpop.xlane.xlu0 %5648
    %5650 = vadd.xlane.f32.xlu0 %v5636
    %v5651 = vpop.xlane.xlu0 %5650
    %5652 = vadd.xlane.f32.xlu0 %v5637
    %v5653 = vpop.xlane.xlu0 %5652
    %v5662 = vlaneseq
    %v5663 = vshrl.u32 %v5662, 7
    %v5664 = vsub.s32 %v574, %v5663
    %v5665 = vrot.slane %v5639, %v5664
    %v5666 = vlaneseq
    %v5667 = vshrl.u32 %v5666, 7
    %v5668 = vsub.s32 %v574, %v5667
    %v5669 = vrot.slane %v5641, %v5668
    %v5670 = vlaneseq
    %v5671 = vshrl.u32 %v5670, 7
    %v5672 = vsub.s32 %v574, %v5671
    %v5673 = vrot.slane %v5643, %v5672
    %v5674 = vlaneseq
    %v5675 = vshrl.u32 %v5674, 7
    %v5676 = vsub.s32 %v574, %v5675
    %v5677 = vrot.slane %v5645, %v5676
    %v5678 = vlaneseq
    %v5679 = vshrl.u32 %v5678, 7
    %v5680 = vsub.s32 %v574, %v5679
    %v5681 = vrot.slane %v5647, %v5680
    %v5682 = vlaneseq
    %v5683 = vshrl.u32 %v5682, 7
    %v5684 = vsub.s32 %v574, %v5683
    %v5685 = vrot.slane %v5649, %v5684
    %v5686 = vlaneseq
    %v5687 = vshrl.u32 %v5686, 7
    %v5688 = vsub.s32 %v574, %v5687
    %v5689 = vrot.slane %v5651, %v5688
    %v5690 = vlaneseq
    %v5691 = vshrl.u32 %v5690, 7
    %v5692 = vsub.s32 %v574, %v5691
    %v5693 = vrot.slane %v5653, %v5692
    %v5694 = vsel %vm607, %v5669, %v5665
    %v5695 = vsel %vm609, %v5673, %v5694
    %v5696 = vsel %vm611, %v5677, %v5695
    %v5697 = vsel %vm613, %v5681, %v5696
    %v5698 = vsel %vm615, %v5685, %v5697
    %v5699 = vsel %vm617, %v5689, %v5698
    %v5700 = vsel %vm619, %v5693, %v5699
    %v5702 = vsel %vm55, %v5700, -1e+09
    %v5703 = vsel %vm623, %v5702, -inf
    %5704 = vmax.xlane.f32.xlu0 %v5703
    %v5705 = vpop.xlane.xlu0 %5704
    %v5706 = vsub.f32 %v5702, %v5705
    %v5707 = vmul.f32 %v5706, 1.442695
    %v5708 = vpow.pop %v5707
    %v5709 = vsel %vm623, %v5708, 0.0
    %5710 = vadd.xlane.f32.xlu0 %v5709
    %v5711 = vpop.xlane.xlu0 %5710
    %v5712 = vrcp.pop %v5711
    %v5713 = vmul.f32 %v5708, %v5712
    %v5714 = vlaneseq
    %v5715 = vshrl.u32 %v5714, 7
    %v5716 = vsub.s32 0, %v5715
    %v5717 = vrot.slane %v5713, %v5716
    %5719 = vbcast.lane.b32.xlu0 %v5717, 256
    %v5720 = vpop.permute.xlu0 %5719
    %v5721 = vlaneseq
    %v5722 = vshrl.u32 %v5721, 7
    %v5723 = vsub.s32 1, %v5722
    %v5724 = vrot.slane %v5713, %v5723
    %5726 = vbcast.lane.b32.xlu0 %v5724, 256
    %v5727 = vpop.permute.xlu0 %5726
    %v5728 = vlaneseq
    %v5729 = vshrl.u32 %v5728, 7
    %v5730 = vsub.s32 2, %v5729
    %v5731 = vrot.slane %v5713, %v5730
    %5733 = vbcast.lane.b32.xlu0 %v5731, 256
    %v5734 = vpop.permute.xlu0 %5733
    %v5735 = vlaneseq
    %v5736 = vshrl.u32 %v5735, 7
    %v5737 = vsub.s32 3, %v5736
    %v5738 = vrot.slane %v5713, %v5737
    %5740 = vbcast.lane.b32.xlu0 %v5738, 256
    %v5741 = vpop.permute.xlu0 %5740
    %v5742 = vlaneseq
    %v5743 = vshrl.u32 %v5742, 7
    %v5744 = vsub.s32 4, %v5743
    %v5745 = vrot.slane %v5713, %v5744
    %5747 = vbcast.lane.b32.xlu0 %v5745, 256
    %v5748 = vpop.permute.xlu0 %5747
    %v5749 = vlaneseq
    %v5750 = vshrl.u32 %v5749, 7
    %v5751 = vsub.s32 5, %v5750
    %v5752 = vrot.slane %v5713, %v5751
    %5754 = vbcast.lane.b32.xlu0 %v5752, 256
    %v5755 = vpop.permute.xlu0 %5754
    %v5756 = vlaneseq
    %v5757 = vshrl.u32 %v5756, 7
    %v5758 = vsub.s32 6, %v5757
    %v5759 = vrot.slane %v5713, %v5758
    %5761 = vbcast.lane.b32.xlu0 %v5759, 256
    %v5762 = vpop.permute.xlu0 %5761
    %v5763 = vlaneseq
    %v5764 = vshrl.u32 %v5763, 7
    %v5765 = vsub.s32 7, %v5764
    %v5766 = vrot.slane %v5713, %v5765
    %5768 = vbcast.lane.b32.xlu0 %v5766, 256
    %v5769 = vpop.permute.xlu0 %5768
    %v5770 = vmul.f32 %v5720, %v46
    %v5771 = vmul.f32 %v5727, %v47
    %v5772 = vmul.f32 %v5734, %v48
    %v5773 = vmul.f32 %v5741, %v49
    %v5774 = vmul.f32 %v5748, %v50
    %v5775 = vmul.f32 %v5755, %v51
    %v5776 = vmul.f32 %v5762, %v52
    %v5777 = vmul.f32 %v5769, %v53
    %v5778 = vrot.slane %v5770, 4
    %v5779 = vadd.f32 %v5770, %v5778
    %v5780 = vrot.slane %v5779, 2
    %v5781 = vadd.f32 %v5779, %v5780
    %v5782 = vrot.slane %v5781, 1
    %v5783 = vadd.f32 %v5781, %v5782
    %v5784 = vrot.slane %v5771, 4
    %v5785 = vadd.f32 %v5771, %v5784
    %v5786 = vrot.slane %v5785, 2
    %v5787 = vadd.f32 %v5785, %v5786
    %v5788 = vrot.slane %v5787, 1
    %v5789 = vadd.f32 %v5787, %v5788
    %v5790 = vrot.slane %v5772, 4
    %v5791 = vadd.f32 %v5772, %v5790
    %v5792 = vrot.slane %v5791, 2
    %v5793 = vadd.f32 %v5791, %v5792
    %v5794 = vrot.slane %v5793, 1
    %v5795 = vadd.f32 %v5793, %v5794
    %v5796 = vrot.slane %v5773, 4
    %v5797 = vadd.f32 %v5773, %v5796
    %v5798 = vrot.slane %v5797, 2
    %v5799 = vadd.f32 %v5797, %v5798
    %v5800 = vrot.slane %v5799, 1
    %v5801 = vadd.f32 %v5799, %v5800
    %v5802 = vrot.slane %v5774, 4
    %v5803 = vadd.f32 %v5774, %v5802
    %v5804 = vrot.slane %v5803, 2
    %v5805 = vadd.f32 %v5803, %v5804
    %v5806 = vrot.slane %v5805, 1
    %v5807 = vadd.f32 %v5805, %v5806
    %v5808 = vrot.slane %v5775, 4
    %v5809 = vadd.f32 %v5775, %v5808
    %v5810 = vrot.slane %v5809, 2
    %v5811 = vadd.f32 %v5809, %v5810
    %v5812 = vrot.slane %v5811, 1
    %v5813 = vadd.f32 %v5811, %v5812
    %v5814 = vrot.slane %v5776, 4
    %v5815 = vadd.f32 %v5776, %v5814
    %v5816 = vrot.slane %v5815, 2
    %v5817 = vadd.f32 %v5815, %v5816
    %v5818 = vrot.slane %v5817, 1
    %v5819 = vadd.f32 %v5817, %v5818
    %v5820 = vrot.slane %v5777, 4
    %v5821 = vadd.f32 %v5777, %v5820
    %v5822 = vrot.slane %v5821, 2
    %v5823 = vadd.f32 %v5821, %v5822
    %v5824 = vrot.slane %v5823, 1
    %v5825 = vadd.f32 %v5823, %v5824
    %s5826 = scalar_lea.vmem %s0, 144
    %v5827 = vld [vmem:[%s5826] sm:$0xff]
    %v5828 = vld [vmem:[%s5826 + $0x8] sm:$0xff]
    %v5829 = vld [vmem:[%s5826 + $0x10] sm:$0xff]
    %v5830 = vld [vmem:[%s7] sm:$0xff]
    %v5831 = vld [vmem:[%s7 + $0x8] sm:$0xff]
    %v5832 = vld [vmem:[%s7 + $0x10] sm:$0xff]
    %v5833 = vld [vmem:[%s7 + $0x18] sm:$0xff]
    %v5834 = vld [vmem:[%s7 + $0x20] sm:$0xff]
    %v5835 = vld [vmem:[%s7 + $0x28] sm:$0xff]
    %v5836 = vld [vmem:[%s7 + $0x30] sm:$0xff]
    %v5837 = vld [vmem:[%s7 + $0x38] sm:$0xff]
    %v5838 = vld [vmem:[%s7 + $0x40] sm:$0xff]
    %v5839 = vld [vmem:[%s7 + $0x48] sm:$0xff]
    %v5840 = vld [vmem:[%s7 + $0x50] sm:$0xff]
    %v5841 = vld [vmem:[%s7 + $0x58] sm:$0xff]
    %v5842 = vld [vmem:[%s7 + $0x60] sm:$0xff]
    %v5843 = vld [vmem:[%s7 + $0x68] sm:$0xff]
    %v5844 = vld [vmem:[%s7 + $0x70] sm:$0xff]
    %v5845 = vld [vmem:[%s7 + $0x78] sm:$0xff]
    %v5846 = vld [vmem:[%s7 + $0x80] sm:$0xff]
    %v5847 = vld [vmem:[%s7 + $0x88] sm:$0xff]
    %v5848 = vld [vmem:[%s7 + $0x90] sm:$0xff]
    %v5849 = vld [vmem:[%s7 + $0x98] sm:$0xff]
    %v5850 = vld [vmem:[%s7 + $0xa0] sm:$0xff]
    %v5851 = vld [vmem:[%s7 + $0xa8] sm:$0xff]
    %v5852 = vld [vmem:[%s7 + $0xb0] sm:$0xff]
    %v5853 = vld [vmem:[%s7 + $0xb8] sm:$0xff]
    %v5854 = vld [vmem:[%s7 + $0xc0] sm:$0xff]
    %v5855 = vld [vmem:[%s7 + $0xc8] sm:$0xff]
    %v5856 = vld [vmem:[%s7 + $0xd0] sm:$0xff]
    %v5857 = vld [vmem:[%s7 + $0xd8] sm:$0xff]
    %v5858 = vld [vmem:[%s7 + $0xe0] sm:$0xff]
    %v5859 = vld [vmem:[%s7 + $0xe8] sm:$0xff]
    %v5860 = vld [vmem:[%s7 + $0xf0] sm:$0xff]
    %v5861 = vld [vmem:[%s7 + $0xf8] sm:$0xff]
    %v5862 = vld [vmem:[%s7 + $0x100] sm:$0xff]
    %v5863 = vld [vmem:[%s7 + $0x108] sm:$0xff]
    %v5864 = vld [vmem:[%s7 + $0x110] sm:$0xff]
    %v5865 = vld [vmem:[%s7 + $0x118] sm:$0xff]
    %v5866 = vld [vmem:[%s7 + $0x120] sm:$0xff]
    %v5867 = vld [vmem:[%s7 + $0x128] sm:$0xff]
    %v5868 = vld [vmem:[%s7 + $0x130] sm:$0xff]
    %v5869 = vld [vmem:[%s7 + $0x138] sm:$0xff]
    %v5870 = vld [vmem:[%s7 + $0x140] sm:$0xff]
    %v5871 = vld [vmem:[%s7 + $0x148] sm:$0xff]
    %v5872 = vld [vmem:[%s7 + $0x150] sm:$0xff]
    %v5873 = vld [vmem:[%s7 + $0x158] sm:$0xff]
    %v5874 = vld [vmem:[%s7 + $0x160] sm:$0xff]
    %v5875 = vld [vmem:[%s7 + $0x168] sm:$0xff]
    %v5876 = vld [vmem:[%s7 + $0x170] sm:$0xff]
    %v5877 = vld [vmem:[%s7 + $0x178] sm:$0xff]
    %v5886 = vsel %vm607, %v5789, %v5783
    %v5887 = vsel %vm609, %v5795, %v5886
    %v5888 = vsel %vm611, %v5801, %v5887
    %v5889 = vsel %vm613, %v5807, %v5888
    %v5890 = vsel %vm615, %v5813, %v5889
    %v5891 = vsel %vm617, %v5819, %v5890
    %v5892 = vsel %vm619, %v5825, %v5891
    %5894 = vmatprep.subr.mxu0 %v5876
    %5895 = vmatpush1.msra.mxu0 %v5875
    %5896 = vmatprep.subr.mxu0 %v5873
    %5897 = vmatpush1.msra.mxu0 %v5872
    %5898 = vmatprep.subr.mxu0 %v5870
    %5899 = vmatpush1.msra.mxu0 %v5869
    %5900 = vmatprep.subr.mxu0 %v5867
    %5901 = vmatpush1.msra.mxu0 %v5866
    %5902 = vmatprep.subr.mxu0 %v5864
    %5903 = vmatpush1.msra.mxu0 %v5863
    %5904 = vmatprep.subr.mxu0 %v5861
    %5905 = vmatpush1.msra.mxu0 %v5860
    %5906 = vmatprep.subr.mxu0 %v5858
    %5907 = vmatpush1.msra.mxu0 %v5857
    %5908 = vmatprep.subr.mxu0 %v5855
    %5909 = vmatpush1.msra.mxu0 %v5854
    %5910 = vmatprep.subr.mxu0 %v5852
    %5911 = vmatpush1.msra.mxu0 %v5851
    %5912 = vmatprep.subr.mxu0 %v5849
    %5913 = vmatpush1.msra.mxu0 %v5848
    %5914 = vmatprep.subr.mxu0 %v5846
    %5915 = vmatpush1.msra.mxu0 %v5845
    %5916 = vmatprep.subr.mxu0 %v5843
    %5917 = vmatpush1.msra.mxu0 %v5842
    %5918 = vmatprep.subr.mxu0 %v5840
    %5919 = vmatpush1.msra.mxu0 %v5839
    %5920 = vmatprep.subr.mxu0 %v5837
    %5921 = vmatpush1.msra.mxu0 %v5836
    %5922 = vmatprep.subr.mxu0 %v5834
    %5923 = vmatpush1.msra.mxu0 %v5833
    %5924 = vmatprep.subr.mxu0 %v5831
    %5925 = vmatpush1.msra.mxu0 %v5830
    %5926 = vmatprep.subr.mxu0 0.0
    %5927 = vmatpush2.msra.mxu0 0.0
    %5928 = vmatprep.subr.mxu0 0.0
    %5929 = vmatpush2.msra.mxu0 0.0
    %5930 = vmatprep.subr.mxu0 0.0
    %5931 = vmatpush2.msra.mxu0 0.0
    %5932 = vmatprep.subr.mxu0 0.0
    %5933 = vmatpush2.msra.mxu0 0.0
    %5934 = vmatprep.subr.mxu0 0.0
    %5935 = vmatpush2.msra.mxu0 0.0
    %5936 = vmatprep.subr.mxu0 0.0
    %5937 = vmatpush2.msra.mxu0 0.0
    %5938 = vmatprep.subr.mxu0 0.0
    %5939 = vmatpush2.msra.mxu0 0.0
    %5940 = vmatprep.subr.mxu0 0.0
    %5941 = vmatpush2.msra.mxu0 0.0
    %5942 = vmatprep.subr.mxu0 0.0
    %5943 = vmatpush2.msra.mxu0 0.0
    %5944 = vmatprep.subr.mxu0 0.0
    %5945 = vmatpush2.msra.mxu0 0.0
    %5946 = vmatprep.subr.mxu0 0.0
    %5947 = vmatpush2.msra.mxu0 0.0
    %5948 = vmatprep.subr.mxu0 0.0
    %5949 = vmatpush2.msra.mxu0 0.0
    %5950 = vmatprep.subr.mxu0 0.0
    %5951 = vmatpush2.msra.mxu0 0.0
    %5952 = vmatprep.subr.mxu0 0.0
    %5953 = vmatpush2.msra.mxu0 0.0
    %5954 = vmatprep.subr.mxu0 0.0
    %5955 = vmatpush2.msra.mxu0 0.0
    %5956 = vmatprep.subr.mxu0 0.0
    %5957 = vmatpush2.msra.mxu0 0.0
    %5958 = vmatprep.mubr.f32.mxu0 0.0
    %5959 = vmatmul.mubr.f32.gmra.mxu0 %v5892
    %v5960 = vpop.f32.mrf.mxu0
    %v5961 = vadd.f32 0.0, %v5960
    %v5962 = vpop.f32.mrf.mxu0
    %v5963 = vadd.f32 0.0, %v5962
    %5964 = vdwg.mxu0
    %5965 = vmatprep.subr.mxu0 0.0
    %5966 = vmatpush1.msra.mxu0 %v5877
    %5967 = vmatprep.subr.mxu0 0.0
    %5968 = vmatpush1.msra.mxu0 %v5874
    %5969 = vmatprep.subr.mxu0 0.0
    %5970 = vmatpush1.msra.mxu0 %v5871
    %5971 = vmatprep.subr.mxu0 0.0
    %5972 = vmatpush1.msra.mxu0 %v5868
    %5973 = vmatprep.subr.mxu0 0.0
    %5974 = vmatpush1.msra.mxu0 %v5865
    %5975 = vmatprep.subr.mxu0 0.0
    %5976 = vmatpush1.msra.mxu0 %v5862
    %5977 = vmatprep.subr.mxu0 0.0
    %5978 = vmatpush1.msra.mxu0 %v5859
    %5979 = vmatprep.subr.mxu0 0.0
    %5980 = vmatpush1.msra.mxu0 %v5856
    %5981 = vmatprep.subr.mxu0 0.0
    %5982 = vmatpush1.msra.mxu0 %v5853
    %5983 = vmatprep.subr.mxu0 0.0
    %5984 = vmatpush1.msra.mxu0 %v5850
    %5985 = vmatprep.subr.mxu0 0.0
    %5986 = vmatpush1.msra.mxu0 %v5847
    %5987 = vmatprep.subr.mxu0 0.0
    %5988 = vmatpush1.msra.mxu0 %v5844
    %5989 = vmatprep.subr.mxu0 0.0
    %5990 = vmatpush1.msra.mxu0 %v5841
    %5991 = vmatprep.subr.mxu0 0.0
    %5992 = vmatpush1.msra.mxu0 %v5838
    %5993 = vmatprep.subr.mxu0 0.0
    %5994 = vmatpush1.msra.mxu0 %v5835
    %5995 = vmatprep.subr.mxu0 0.0
    %5996 = vmatpush1.msra.mxu0 %v5832
    %5997 = vmatprep.subr.mxu0 0.0
    %5998 = vmatpush2.msra.mxu0 0.0
    %5999 = vmatprep.subr.mxu0 0.0
    %6000 = vmatpush2.msra.mxu0 0.0
    %6001 = vmatprep.subr.mxu0 0.0
    %6002 = vmatpush2.msra.mxu0 0.0
    %6003 = vmatprep.subr.mxu0 0.0
    %6004 = vmatpush2.msra.mxu0 0.0
    %6005 = vmatprep.subr.mxu0 0.0
    %6006 = vmatpush2.msra.mxu0 0.0
    %6007 = vmatprep.subr.mxu0 0.0
    %6008 = vmatpush2.msra.mxu0 0.0
    %6009 = vmatprep.subr.mxu0 0.0
    %6010 = vmatpush2.msra.mxu0 0.0
    %6011 = vmatprep.subr.mxu0 0.0
    %6012 = vmatpush2.msra.mxu0 0.0
    %6013 = vmatprep.subr.mxu0 0.0
    %6014 = vmatpush2.msra.mxu0 0.0
    %6015 = vmatprep.subr.mxu0 0.0
    %6016 = vmatpush2.msra.mxu0 0.0
    %6017 = vmatprep.subr.mxu0 0.0
    %6018 = vmatpush2.msra.mxu0 0.0
    %6019 = vmatprep.subr.mxu0 0.0
    %6020 = vmatpush2.msra.mxu0 0.0
    %6021 = vmatprep.subr.mxu0 0.0
    %6022 = vmatpush2.msra.mxu0 0.0
    %6023 = vmatprep.subr.mxu0 0.0
    %6024 = vmatpush2.msra.mxu0 0.0
    %6025 = vmatprep.subr.mxu0 0.0
    %6026 = vmatpush2.msra.mxu0 0.0
    %6027 = vmatprep.subr.mxu0 0.0
    %6028 = vmatpush2.msra.mxu0 0.0
    %6029 = vmatprep.mubr.f32.mxu0 0.0
    %6030 = vmatmul.mubr.f32.gmra.mxu0 %v5892
    %v6031 = vpop.f32.mrf.mxu0
    %v6032 = vadd.f32 0.0, %v6031
    %v6033 = vpop.f32.mrf.mxu0
    %6034 = vdwg.mxu0
    %v6035 = vadd.f32 %v5827, %v5961
    %v6036 = vadd.f32 %v5828, %v5963
    %v6037 = vadd.f32 %v5829, %v6032
    %v6038 = vadd.f32 %v6035, %v183
    %v6039 = vadd.f32 %v6036, %v187
    %v6040 = vadd.f32 %v6037, %v191
    %v6041 = vadd.f32 %v6038, %v5521
    %v6042 = vxor.u32 %v6041, 2147483648
    %v6043 = vmul.f32 %v6042, 1.442695
    %v6044 = vpow.pop %v6043
    %v6045 = vadd.f32 %v6044, 1.0
    %v6046 = vrcp.pop %v6045
    %v6047 = vmul.f32 1.0, %v6046
    %v6048 = vadd.f32 %v6039, %v5522
    %v6049 = vxor.u32 %v6048, 2147483648
    %v6050 = vmul.f32 %v6049, 1.442695
    %v6051 = vpow.pop %v6050
    %v6052 = vadd.f32 %v6051, 1.0
    %v6053 = vrcp.pop %v6052
    %v6054 = vmul.f32 1.0, %v6053
    %v6055 = vmul.f32 %v6047, %v5523
    %v6056 = vadd.f32 %v6040, %v6055
    %v6057 = vtanh.pop %v6056
    %v6058 = vsub.f32 1.0, %v6054
    %v6059 = vmul.f32 %v6058, %v6057
    %v6060 = vmul.f32 %v6054, %v5214
    %v6061 = vadd.f32 %v6059, %v6060
    %v6062 = vld [vmem:[%s10] sm:$0xff]
    %v6063 = vld [vmem:[%s10 + $0x8] sm:$0xff]
    %v6064 = vld [vmem:[%s10 + $0x10] sm:$0xff]
    %v6065 = vld [vmem:[%s10 + $0x18] sm:$0xff]
    %v6066 = vld [vmem:[%s10 + $0x20] sm:$0xff]
    %v6067 = vld [vmem:[%s10 + $0x28] sm:$0xff]
    %v6068 = vld [vmem:[%s10 + $0x30] sm:$0xff]
    %v6069 = vld [vmem:[%s10 + $0x38] sm:$0xff]
    %v6070 = vld [vmem:[%s10 + $0x40] sm:$0xff]
    %v6071 = vld [vmem:[%s10 + $0x48] sm:$0xff]
    %v6072 = vld [vmem:[%s10 + $0x50] sm:$0xff]
    %v6073 = vld [vmem:[%s10 + $0x58] sm:$0xff]
    %v6074 = vld [vmem:[%s10 + $0x60] sm:$0xff]
    %v6075 = vld [vmem:[%s10 + $0x68] sm:$0xff]
    %v6076 = vld [vmem:[%s10 + $0x70] sm:$0xff]
    %v6077 = vld [vmem:[%s10 + $0x78] sm:$0xff]
    %6078 = vmatprep.subr.mxu0 0.0
    %6079 = vmatpush1.msra.mxu0 %v6077
    %6080 = vmatprep.subr.mxu0 0.0
    %6081 = vmatpush1.msra.mxu0 %v6076
    %6082 = vmatprep.subr.mxu0 0.0
    %6083 = vmatpush1.msra.mxu0 %v6075
    %6084 = vmatprep.subr.mxu0 0.0
    %6085 = vmatpush1.msra.mxu0 %v6074
    %6086 = vmatprep.subr.mxu0 0.0
    %6087 = vmatpush1.msra.mxu0 %v6073
    %6088 = vmatprep.subr.mxu0 0.0
    %6089 = vmatpush1.msra.mxu0 %v6072
    %6090 = vmatprep.subr.mxu0 0.0
    %6091 = vmatpush1.msra.mxu0 %v6071
    %6092 = vmatprep.subr.mxu0 0.0
    %6093 = vmatpush1.msra.mxu0 %v6070
    %6094 = vmatprep.subr.mxu0 0.0
    %6095 = vmatpush1.msra.mxu0 %v6069
    %6096 = vmatprep.subr.mxu0 0.0
    %6097 = vmatpush1.msra.mxu0 %v6068
    %6098 = vmatprep.subr.mxu0 0.0
    %6099 = vmatpush1.msra.mxu0 %v6067
    %6100 = vmatprep.subr.mxu0 0.0
    %6101 = vmatpush1.msra.mxu0 %v6066
    %6102 = vmatprep.subr.mxu0 0.0
    %6103 = vmatpush1.msra.mxu0 %v6065
    %6104 = vmatprep.subr.mxu0 0.0
    %6105 = vmatpush1.msra.mxu0 %v6064
    %6106 = vmatprep.subr.mxu0 0.0
    %6107 = vmatpush1.msra.mxu0 %v6063
    %6108 = vmatprep.subr.mxu0 0.0
    %6109 = vmatpush1.msra.mxu0 %v6062
    %6110 = vmatprep.subr.mxu0 0.0
    %6111 = vmatpush2.msra.mxu0 0.0
    %6112 = vmatprep.subr.mxu0 0.0
    %6113 = vmatpush2.msra.mxu0 0.0
    %6114 = vmatprep.subr.mxu0 0.0
    %6115 = vmatpush2.msra.mxu0 0.0
    %6116 = vmatprep.subr.mxu0 0.0
    %6117 = vmatpush2.msra.mxu0 0.0
    %6118 = vmatprep.subr.mxu0 0.0
    %6119 = vmatpush2.msra.mxu0 0.0
    %6120 = vmatprep.subr.mxu0 0.0
    %6121 = vmatpush2.msra.mxu0 0.0
    %6122 = vmatprep.subr.mxu0 0.0
    %6123 = vmatpush2.msra.mxu0 0.0
    %6124 = vmatprep.subr.mxu0 0.0
    %6125 = vmatpush2.msra.mxu0 0.0
    %6126 = vmatprep.subr.mxu0 0.0
    %6127 = vmatpush2.msra.mxu0 0.0
    %6128 = vmatprep.subr.mxu0 0.0
    %6129 = vmatpush2.msra.mxu0 0.0
    %6130 = vmatprep.subr.mxu0 0.0
    %6131 = vmatpush2.msra.mxu0 0.0
    %6132 = vmatprep.subr.mxu0 0.0
    %6133 = vmatpush2.msra.mxu0 0.0
    %6134 = vmatprep.subr.mxu0 0.0
    %6135 = vmatpush2.msra.mxu0 0.0
    %6136 = vmatprep.subr.mxu0 0.0
    %6137 = vmatpush2.msra.mxu0 0.0
    %6138 = vmatprep.subr.mxu0 0.0
    %6139 = vmatpush2.msra.mxu0 0.0
    %6140 = vmatprep.subr.mxu0 0.0
    %6141 = vmatpush2.msra.mxu0 0.0
    %6142 = vmatprep.mubr.f32.mxu0 0.0
    %6143 = vmatmul.mubr.f32.gmra.mxu0 %v6061
    %v6144 = vpop.f32.mrf.mxu0
    %v6145 = vadd.f32 %v217, %v6144
    %v6146 = vpop.f32.mrf.mxu0
    %6147 = vdwg.mxu0
    %6148 = vmax.xlane.f32.xlu0 %v6145
    %v6149 = vpop.xlane.xlu0 %6148
    %v6150 = vsub.f32 %v6145, %v6149
    %v6151 = vmul.f32 %v6150, 1.442695
    %v6152 = vpow.pop %v6151
    %6153 = vadd.xlane.f32.xlu0 %v6152
    %v6154 = vpop.xlane.xlu0 %6153
    %v6155 = vlog2.pop %v6154
    %v6156 = vmul.f32 %v6155, 0.6931472
    %v6157 = vsub.f32 %v6150, %v6156
    %s6158 = scalar_lea.vmem [#allocation2], 48
    %6159 = vst [vmem:[%s6158] sm:$0xff] %v6157
    %s6160 = scalar_lea.vmem [#allocation4], 48
    %6161 = vst [vmem:[%s6160] sm:$0xff] %v5892
    %v6162 = vld [vmem:[%s6] sm:$0xff]
    %v6163 = vld [vmem:[%s6 + $0x8] sm:$0xff]
    %v6164 = vld [vmem:[%s6 + $0x10] sm:$0xff]
    %v6165 = vld [vmem:[%s6 + $0x18] sm:$0xff]
    %v6166 = vld [vmem:[%s6 + $0x20] sm:$0xff]
    %v6167 = vld [vmem:[%s6 + $0x28] sm:$0xff]
    %v6168 = vld [vmem:[%s6 + $0x30] sm:$0xff]
    %v6169 = vld [vmem:[%s6 + $0x38] sm:$0xff]
    %v6170 = vld [vmem:[%s6 + $0x40] sm:$0xff]
    %v6171 = vld [vmem:[%s6 + $0x48] sm:$0xff]
    %v6172 = vld [vmem:[%s6 + $0x50] sm:$0xff]
    %v6173 = vld [vmem:[%s6 + $0x58] sm:$0xff]
    %v6174 = vld [vmem:[%s6 + $0x60] sm:$0xff]
    %v6175 = vld [vmem:[%s6 + $0x68] sm:$0xff]
    %v6176 = vld [vmem:[%s6 + $0x70] sm:$0xff]
    %v6177 = vld [vmem:[%s6 + $0x78] sm:$0xff]
    %v6178 = vld [vmem:[%s6 + $0x80] sm:$0xff]
    %v6179 = vld [vmem:[%s6 + $0x88] sm:$0xff]
    %v6180 = vld [vmem:[%s6 + $0x90] sm:$0xff]
    %v6181 = vld [vmem:[%s6 + $0x98] sm:$0xff]
    %v6182 = vld [vmem:[%s6 + $0xa0] sm:$0xff]
    %v6183 = vld [vmem:[%s6 + $0xa8] sm:$0xff]
    %v6184 = vld [vmem:[%s6 + $0xb0] sm:$0xff]
    %v6185 = vld [vmem:[%s6 + $0xb8] sm:$0xff]
    %v6186 = vld [vmem:[%s6 + $0xc0] sm:$0xff]
    %v6187 = vld [vmem:[%s6 + $0xc8] sm:$0xff]
    %v6188 = vld [vmem:[%s6 + $0xd0] sm:$0xff]
    %v6189 = vld [vmem:[%s6 + $0xd8] sm:$0xff]
    %v6190 = vld [vmem:[%s6 + $0xe0] sm:$0xff]
    %v6191 = vld [vmem:[%s6 + $0xe8] sm:$0xff]
    %v6192 = vld [vmem:[%s6 + $0xf0] sm:$0xff]
    %v6193 = vld [vmem:[%s6 + $0xf8] sm:$0xff]
    %v6194 = vld [vmem:[%s6 + $0x100] sm:$0xff]
    %v6195 = vld [vmem:[%s6 + $0x108] sm:$0xff]
    %v6196 = vld [vmem:[%s6 + $0x110] sm:$0xff]
    %v6197 = vld [vmem:[%s6 + $0x118] sm:$0xff]
    %v6198 = vld [vmem:[%s6 + $0x120] sm:$0xff]
    %v6199 = vld [vmem:[%s6 + $0x128] sm:$0xff]
    %v6200 = vld [vmem:[%s6 + $0x130] sm:$0xff]
    %v6201 = vld [vmem:[%s6 + $0x138] sm:$0xff]
    %v6202 = vld [vmem:[%s6 + $0x140] sm:$0xff]
    %v6203 = vld [vmem:[%s6 + $0x148] sm:$0xff]
    %v6204 = vld [vmem:[%s6 + $0x150] sm:$0xff]
    %v6205 = vld [vmem:[%s6 + $0x158] sm:$0xff]
    %v6206 = vld [vmem:[%s6 + $0x160] sm:$0xff]
    %v6207 = vld [vmem:[%s6 + $0x168] sm:$0xff]
    %v6208 = vld [vmem:[%s6 + $0x170] sm:$0xff]
    %v6209 = vld [vmem:[%s6 + $0x178] sm:$0xff]
    %v6210 = vld [vmem:[%s6 + $0x180] sm:$0xff]
    %v6211 = vld [vmem:[%s6 + $0x188] sm:$0xff]
    %v6212 = vld [vmem:[%s6 + $0x190] sm:$0xff]
    %v6213 = vld [vmem:[%s6 + $0x198] sm:$0xff]
    %v6214 = vld [vmem:[%s6 + $0x1a0] sm:$0xff]
    %v6215 = vld [vmem:[%s6 + $0x1a8] sm:$0xff]
    %v6216 = vld [vmem:[%s6 + $0x1b0] sm:$0xff]
    %v6217 = vld [vmem:[%s6 + $0x1b8] sm:$0xff]
    %v6218 = vld [vmem:[%s6 + $0x1c0] sm:$0xff]
    %v6219 = vld [vmem:[%s6 + $0x1c8] sm:$0xff]
    %v6220 = vld [vmem:[%s6 + $0x1d0] sm:$0xff]
    %v6221 = vld [vmem:[%s6 + $0x1d8] sm:$0xff]
    %v6222 = vld [vmem:[%s6 + $0x1e0] sm:$0xff]
    %v6223 = vld [vmem:[%s6 + $0x1e8] sm:$0xff]
    %v6224 = vld [vmem:[%s6 + $0x1f0] sm:$0xff]
    %v6225 = vld [vmem:[%s6 + $0x1f8] sm:$0xff]
    %6226 = vmatprep.subr.mxu0 %v6223
    %6227 = vmatpush1.msra.mxu0 %v6222
    %6228 = vmatprep.subr.mxu0 %v6219
    %6229 = vmatpush1.msra.mxu0 %v6218
    %6230 = vmatprep.subr.mxu0 %v6215
    %6231 = vmatpush1.msra.mxu0 %v6214
    %6232 = vmatprep.subr.mxu0 %v6211
    %6233 = vmatpush1.msra.mxu0 %v6210
    %6234 = vmatprep.subr.mxu0 %v6207
    %6235 = vmatpush1.msra.mxu0 %v6206
    %6236 = vmatprep.subr.mxu0 %v6203
    %6237 = vmatpush1.msra.mxu0 %v6202
    %6238 = vmatprep.subr.mxu0 %v6199
    %6239 = vmatpush1.msra.mxu0 %v6198
    %6240 = vmatprep.subr.mxu0 %v6195
    %6241 = vmatpush1.msra.mxu0 %v6194
    %6242 = vmatprep.subr.mxu0 %v6191
    %6243 = vmatpush1.msra.mxu0 %v6190
    %6244 = vmatprep.subr.mxu0 %v6187
    %6245 = vmatpush1.msra.mxu0 %v6186
    %6246 = vmatprep.subr.mxu0 %v6183
    %6247 = vmatpush1.msra.mxu0 %v6182
    %6248 = vmatprep.subr.mxu0 %v6179
    %6249 = vmatpush1.msra.mxu0 %v6178
    %6250 = vmatprep.subr.mxu0 %v6175
    %6251 = vmatpush1.msra.mxu0 %v6174
    %6252 = vmatprep.subr.mxu0 %v6171
    %6253 = vmatpush1.msra.mxu0 %v6170
    %6254 = vmatprep.subr.mxu0 %v6167
    %6255 = vmatpush1.msra.mxu0 %v6166
    %6256 = vmatprep.subr.mxu0 %v6163
    %6257 = vmatpush1.msra.mxu0 %v6162
    %6258 = vmatprep.subr.mxu0 0.0
    %6259 = vmatpush2.msra.mxu0 0.0
    %6260 = vmatprep.subr.mxu0 0.0
    %6261 = vmatpush2.msra.mxu0 0.0
    %6262 = vmatprep.subr.mxu0 0.0
    %6263 = vmatpush2.msra.mxu0 0.0
    %6264 = vmatprep.subr.mxu0 0.0
    %6265 = vmatpush2.msra.mxu0 0.0
    %6266 = vmatprep.subr.mxu0 0.0
    %6267 = vmatpush2.msra.mxu0 0.0
    %6268 = vmatprep.subr.mxu0 0.0
    %6269 = vmatpush2.msra.mxu0 0.0
    %6270 = vmatprep.subr.mxu0 0.0
    %6271 = vmatpush2.msra.mxu0 0.0
    %6272 = vmatprep.subr.mxu0 0.0
    %6273 = vmatpush2.msra.mxu0 0.0
    %6274 = vmatprep.subr.mxu0 0.0
    %6275 = vmatpush2.msra.mxu0 0.0
    %6276 = vmatprep.subr.mxu0 0.0
    %6277 = vmatpush2.msra.mxu0 0.0
    %6278 = vmatprep.subr.mxu0 0.0
    %6279 = vmatpush2.msra.mxu0 0.0
    %6280 = vmatprep.subr.mxu0 0.0
    %6281 = vmatpush2.msra.mxu0 0.0
    %6282 = vmatprep.subr.mxu0 0.0
    %6283 = vmatpush2.msra.mxu0 0.0
    %6284 = vmatprep.subr.mxu0 0.0
    %6285 = vmatpush2.msra.mxu0 0.0
    %6286 = vmatprep.subr.mxu0 0.0
    %6287 = vmatpush2.msra.mxu0 0.0
    %6288 = vmatprep.subr.mxu0 0.0
    %6289 = vmatpush2.msra.mxu0 0.0
    %6290 = vmatprep.mubr.f32.mxu0 0.0
    %6291 = vmatmul.mubr.f32.gmra.mxu0 %v6061
    %v6292 = vpop.f32.mrf.mxu0
    %v6293 = vadd.f32 0.0, %v6292
    %v6294 = vpop.f32.mrf.mxu0
    %v6295 = vadd.f32 0.0, %v6294
    %6296 = vdwg.mxu0
    %6297 = vmatprep.subr.mxu0 %v6225
    %6298 = vmatpush1.msra.mxu0 %v6224
    %6299 = vmatprep.subr.mxu0 %v6221
    %6300 = vmatpush1.msra.mxu0 %v6220
    %6301 = vmatprep.subr.mxu0 %v6217
    %6302 = vmatpush1.msra.mxu0 %v6216
    %6303 = vmatprep.subr.mxu0 %v6213
    %6304 = vmatpush1.msra.mxu0 %v6212
    %6305 = vmatprep.subr.mxu0 %v6209
    %6306 = vmatpush1.msra.mxu0 %v6208
    %6307 = vmatprep.subr.mxu0 %v6205
    %6308 = vmatpush1.msra.mxu0 %v6204
    %6309 = vmatprep.subr.mxu0 %v6201
    %6310 = vmatpush1.msra.mxu0 %v6200
    %6311 = vmatprep.subr.mxu0 %v6197
    %6312 = vmatpush1.msra.mxu0 %v6196
    %6313 = vmatprep.subr.mxu0 %v6193
    %6314 = vmatpush1.msra.mxu0 %v6192
    %6315 = vmatprep.subr.mxu0 %v6189
    %6316 = vmatpush1.msra.mxu0 %v6188
    %6317 = vmatprep.subr.mxu0 %v6185
    %6318 = vmatpush1.msra.mxu0 %v6184
    %6319 = vmatprep.subr.mxu0 %v6181
    %6320 = vmatpush1.msra.mxu0 %v6180
    %6321 = vmatprep.subr.mxu0 %v6177
    %6322 = vmatpush1.msra.mxu0 %v6176
    %6323 = vmatprep.subr.mxu0 %v6173
    %6324 = vmatpush1.msra.mxu0 %v6172
    %6325 = vmatprep.subr.mxu0 %v6169
    %6326 = vmatpush1.msra.mxu0 %v6168
    %6327 = vmatprep.subr.mxu0 %v6165
    %6328 = vmatpush1.msra.mxu0 %v6164
    %6329 = vmatprep.subr.mxu0 0.0
    %6330 = vmatpush2.msra.mxu0 0.0
    %6331 = vmatprep.subr.mxu0 0.0
    %6332 = vmatpush2.msra.mxu0 0.0
    %6333 = vmatprep.subr.mxu0 0.0
    %6334 = vmatpush2.msra.mxu0 0.0
    %6335 = vmatprep.subr.mxu0 0.0
    %6336 = vmatpush2.msra.mxu0 0.0
    %6337 = vmatprep.subr.mxu0 0.0
    %6338 = vmatpush2.msra.mxu0 0.0
    %6339 = vmatprep.subr.mxu0 0.0
    %6340 = vmatpush2.msra.mxu0 0.0
    %6341 = vmatprep.subr.mxu0 0.0
    %6342 = vmatpush2.msra.mxu0 0.0
    %6343 = vmatprep.subr.mxu0 0.0
    %6344 = vmatpush2.msra.mxu0 0.0
    %6345 = vmatprep.subr.mxu0 0.0
    %6346 = vmatpush2.msra.mxu0 0.0
    %6347 = vmatprep.subr.mxu0 0.0
    %6348 = vmatpush2.msra.mxu0 0.0
    %6349 = vmatprep.subr.mxu0 0.0
    %6350 = vmatpush2.msra.mxu0 0.0
    %6351 = vmatprep.subr.mxu0 0.0
    %6352 = vmatpush2.msra.mxu0 0.0
    %6353 = vmatprep.subr.mxu0 0.0
    %6354 = vmatpush2.msra.mxu0 0.0
    %6355 = vmatprep.subr.mxu0 0.0
    %6356 = vmatpush2.msra.mxu0 0.0
    %6357 = vmatprep.subr.mxu0 0.0
    %6358 = vmatpush2.msra.mxu0 0.0
    %6359 = vmatprep.subr.mxu0 0.0
    %6360 = vmatpush2.msra.mxu0 0.0
    %6361 = vmatprep.mubr.f32.mxu0 0.0
    %6362 = vmatmul.mubr.f32.gmra.mxu0 %v6061
    %v6363 = vpop.f32.mrf.mxu0
    %v6364 = vadd.f32 0.0, %v6363
    %v6365 = vpop.f32.mrf.mxu0
    %v6366 = vadd.f32 0.0, %v6365
    %6367 = vdwg.mxu0
    %v6368 = vadd.f32 %v6295, %v200
    %v6369 = vadd.f32 %v6364, %v204
    %v6370 = vadd.f32 %v6366, %v208
    %v6372 = vcombine.high %v6293, %v6293
    %v6374 = vunpack.c.l.s4 1966171168
    %v6375 = vunpack.c.0.s8 %v6374
    %v6376 = vlaneseq
    %v6377 = vshrl.u32 %v6376, 7
    %v6378 = vsub.s32 %v6375, %v6377
    %v6379 = vrot.slane %v6293, %v6378
    %v6381 = vunpack.c.l.s4 1966171168
    %v6382 = vunpack.c.0.s8 %v6381
    %v6383 = vlaneseq
    %v6384 = vshrl.u32 %v6383, 7
    %v6385 = vsub.s32 %v6382, %v6384
    %v6386 = vrot.slane %v6372, %v6385
    %v6387 = vcombine.high %v6379, %v6379
    %v6388 = vcombine.high %v6386, %v6386
    %v6390 = vunpack.c.l.s4 1966171168
    %v6391 = vunpack.c.0.s8 %v6390
    %v6392 = vlaneseq
    %v6393 = vshrl.u32 %v6392, 7
    %v6394 = vsub.s32 %v6391, %v6393
    %v6395 = vrot.slane %v6379, %v6394
    %v6397 = vunpack.c.l.s4 1966171168
    %v6398 = vunpack.c.0.s8 %v6397
    %v6399 = vlaneseq
    %v6400 = vshrl.u32 %v6399, 7
    %v6401 = vsub.s32 %v6398, %v6400
    %v6402 = vrot.slane %v6386, %v6401
    %v6404 = vunpack.c.l.s4 1966171168
    %v6405 = vunpack.c.0.s8 %v6404
    %v6406 = vlaneseq
    %v6407 = vshrl.u32 %v6406, 7
    %v6408 = vsub.s32 %v6405, %v6407
    %v6409 = vrot.slane %v6387, %v6408
    %v6411 = vunpack.c.l.s4 1966171168
    %v6412 = vunpack.c.0.s8 %v6411
    %v6413 = vlaneseq
    %v6414 = vshrl.u32 %v6413, 7
    %v6415 = vsub.s32 %v6412, %v6414
    %v6416 = vrot.slane %v6388, %v6415
    %v6417 = vcombine.high %v6395, %v6395
    %v6418 = vcombine.high %v6402, %v6402
    %v6419 = vcombine.high %v6409, %v6409
    %v6420 = vcombine.high %v6416, %v6416
    %v6421 = vlaneseq
    %v6422 = vshrl.u32 %v6421, 7
    %v6423 = vsub.s32 0, %v6422
    %v6424 = vrot.slane %v6395, %v6423
    %v6425 = vlaneseq
    %v6426 = vshrl.u32 %v6425, 7
    %v6427 = vsub.s32 0, %v6426
    %v6428 = vrot.slane %v6409, %v6427
    %v6429 = vlaneseq
    %v6430 = vshrl.u32 %v6429, 7
    %v6431 = vsub.s32 0, %v6430
    %v6432 = vrot.slane %v6417, %v6431
    %v6433 = vlaneseq
    %v6434 = vshrl.u32 %v6433, 7
    %v6435 = vsub.s32 0, %v6434
    %v6436 = vrot.slane %v6419, %v6435
    %v6437 = vlaneseq
    %v6438 = vshrl.u32 %v6437, 7
    %v6439 = vsub.s32 0, %v6438
    %v6440 = vrot.slane %v6402, %v6439
    %v6441 = vlaneseq
    %v6442 = vshrl.u32 %v6441, 7
    %v6443 = vsub.s32 0, %v6442
    %v6444 = vrot.slane %v6416, %v6443
    %v6445 = vlaneseq
    %v6446 = vshrl.u32 %v6445, 7
    %v6447 = vsub.s32 0, %v6446
    %v6448 = vrot.slane %v6418, %v6447
    %v6449 = vlaneseq
    %v6450 = vshrl.u32 %v6449, 7
    %v6451 = vsub.s32 0, %v6450
    %v6452 = vrot.slane %v6420, %v6451
    %v6461 = vadd.f32 %v6424, %v139
    %v6462 = vadd.f32 %v6428, %v144
    %v6463 = vadd.f32 %v6432, %v149
    %v6464 = vadd.f32 %v6436, %v154
    %v6465 = vadd.f32 %v6440, %v159
    %v6466 = vadd.f32 %v6444, %v164
    %v6467 = vadd.f32 %v6448, %v169
    %v6468 = vadd.f32 %v6452, %v174
    %v6469 = vtanh.pop %v6461
    %v6470 = vtanh.pop %v6462
    %v6471 = vtanh.pop %v6463
    %v6472 = vtanh.pop %v6464
    %v6473 = vtanh.pop %v6465
    %v6474 = vtanh.pop %v6466
    %v6475 = vtanh.pop %v6467
    %v6476 = vtanh.pop %v6468
    %v6477 = vmul.f32 %v6469, %v539
    %v6478 = vmul.f32 %v6470, %v539
    %v6479 = vmul.f32 %v6471, %v539
    %v6480 = vmul.f32 %v6472, %v539
    %v6481 = vmul.f32 %v6473, %v539
    %v6482 = vmul.f32 %v6474, %v539
    %v6483 = vmul.f32 %v6475, %v539
    %v6484 = vmul.f32 %v6476, %v539
    %6485 = vadd.xlane.f32.xlu0 %v6477
    %v6486 = vpop.xlane.xlu0 %6485
    %6487 = vadd.xlane.f32.xlu0 %v6478
    %v6488 = vpop.xlane.xlu0 %6487
    %6489 = vadd.xlane.f32.xlu0 %v6479
    %v6490 = vpop.xlane.xlu0 %6489
    %6491 = vadd.xlane.f32.xlu0 %v6480
    %v6492 = vpop.xlane.xlu0 %6491
    %6493 = vadd.xlane.f32.xlu0 %v6481
    %v6494 = vpop.xlane.xlu0 %6493
    %6495 = vadd.xlane.f32.xlu0 %v6482
    %v6496 = vpop.xlane.xlu0 %6495
    %6497 = vadd.xlane.f32.xlu0 %v6483
    %v6498 = vpop.xlane.xlu0 %6497
    %6499 = vadd.xlane.f32.xlu0 %v6484
    %v6500 = vpop.xlane.xlu0 %6499
    %v6509 = vlaneseq
    %v6510 = vshrl.u32 %v6509, 7
    %v6511 = vsub.s32 %v574, %v6510
    %v6512 = vrot.slane %v6486, %v6511
    %v6513 = vlaneseq
    %v6514 = vshrl.u32 %v6513, 7
    %v6515 = vsub.s32 %v574, %v6514
    %v6516 = vrot.slane %v6488, %v6515
    %v6517 = vlaneseq
    %v6518 = vshrl.u32 %v6517, 7
    %v6519 = vsub.s32 %v574, %v6518
    %v6520 = vrot.slane %v6490, %v6519
    %v6521 = vlaneseq
    %v6522 = vshrl.u32 %v6521, 7
    %v6523 = vsub.s32 %v574, %v6522
    %v6524 = vrot.slane %v6492, %v6523
    %v6525 = vlaneseq
    %v6526 = vshrl.u32 %v6525, 7
    %v6527 = vsub.s32 %v574, %v6526
    %v6528 = vrot.slane %v6494, %v6527
    %v6529 = vlaneseq
    %v6530 = vshrl.u32 %v6529, 7
    %v6531 = vsub.s32 %v574, %v6530
    %v6532 = vrot.slane %v6496, %v6531
    %v6533 = vlaneseq
    %v6534 = vshrl.u32 %v6533, 7
    %v6535 = vsub.s32 %v574, %v6534
    %v6536 = vrot.slane %v6498, %v6535
    %v6537 = vlaneseq
    %v6538 = vshrl.u32 %v6537, 7
    %v6539 = vsub.s32 %v574, %v6538
    %v6540 = vrot.slane %v6500, %v6539
    %v6541 = vsel %vm607, %v6516, %v6512
    %v6542 = vsel %vm609, %v6520, %v6541
    %v6543 = vsel %vm611, %v6524, %v6542
    %v6544 = vsel %vm613, %v6528, %v6543
    %v6545 = vsel %vm615, %v6532, %v6544
    %v6546 = vsel %vm617, %v6536, %v6545
    %v6547 = vsel %vm619, %v6540, %v6546
    %v6549 = vsel %vm55, %v6547, -1e+09
    %v6550 = vsel %vm623, %v6549, -inf
    %6551 = vmax.xlane.f32.xlu0 %v6550
    %v6552 = vpop.xlane.xlu0 %6551
    %v6553 = vsub.f32 %v6549, %v6552
    %v6554 = vmul.f32 %v6553, 1.442695
    %v6555 = vpow.pop %v6554
    %v6556 = vsel %vm623, %v6555, 0.0
    %6557 = vadd.xlane.f32.xlu0 %v6556
    %v6558 = vpop.xlane.xlu0 %6557
    %v6559 = vrcp.pop %v6558
    %v6560 = vmul.f32 %v6555, %v6559
    %v6561 = vlaneseq
    %v6562 = vshrl.u32 %v6561, 7
    %v6563 = vsub.s32 0, %v6562
    %v6564 = vrot.slane %v6560, %v6563
    %6566 = vbcast.lane.b32.xlu0 %v6564, 256
    %v6567 = vpop.permute.xlu0 %6566
    %v6568 = vlaneseq
    %v6569 = vshrl.u32 %v6568, 7
    %v6570 = vsub.s32 1, %v6569
    %v6571 = vrot.slane %v6560, %v6570
    %6573 = vbcast.lane.b32.xlu0 %v6571, 256
    %v6574 = vpop.permute.xlu0 %6573
    %v6575 = vlaneseq
    %v6576 = vshrl.u32 %v6575, 7
    %v6577 = vsub.s32 2, %v6576
    %v6578 = vrot.slane %v6560, %v6577
    %6580 = vbcast.lane.b32.xlu0 %v6578, 256
    %v6581 = vpop.permute.xlu0 %6580
    %v6582 = vlaneseq
    %v6583 = vshrl.u32 %v6582, 7
    %v6584 = vsub.s32 3, %v6583
    %v6585 = vrot.slane %v6560, %v6584
    %6587 = vbcast.lane.b32.xlu0 %v6585, 256
    %v6588 = vpop.permute.xlu0 %6587
    %v6589 = vlaneseq
    %v6590 = vshrl.u32 %v6589, 7
    %v6591 = vsub.s32 4, %v6590
    %v6592 = vrot.slane %v6560, %v6591
    %6594 = vbcast.lane.b32.xlu0 %v6592, 256
    %v6595 = vpop.permute.xlu0 %6594
    %v6596 = vlaneseq
    %v6597 = vshrl.u32 %v6596, 7
    %v6598 = vsub.s32 5, %v6597
    %v6599 = vrot.slane %v6560, %v6598
    %6601 = vbcast.lane.b32.xlu0 %v6599, 256
    %v6602 = vpop.permute.xlu0 %6601
    %v6603 = vlaneseq
    %v6604 = vshrl.u32 %v6603, 7
    %v6605 = vsub.s32 6, %v6604
    %v6606 = vrot.slane %v6560, %v6605
    %6608 = vbcast.lane.b32.xlu0 %v6606, 256
    %v6609 = vpop.permute.xlu0 %6608
    %v6610 = vlaneseq
    %v6611 = vshrl.u32 %v6610, 7
    %v6612 = vsub.s32 7, %v6611
    %v6613 = vrot.slane %v6560, %v6612
    %6615 = vbcast.lane.b32.xlu0 %v6613, 256
    %v6616 = vpop.permute.xlu0 %6615
    %v6617 = vmul.f32 %v6567, %v46
    %v6618 = vmul.f32 %v6574, %v47
    %v6619 = vmul.f32 %v6581, %v48
    %v6620 = vmul.f32 %v6588, %v49
    %v6621 = vmul.f32 %v6595, %v50
    %v6622 = vmul.f32 %v6602, %v51
    %v6623 = vmul.f32 %v6609, %v52
    %v6624 = vmul.f32 %v6616, %v53
    %v6625 = vrot.slane %v6617, 4
    %v6626 = vadd.f32 %v6617, %v6625
    %v6627 = vrot.slane %v6626, 2
    %v6628 = vadd.f32 %v6626, %v6627
    %v6629 = vrot.slane %v6628, 1
    %v6630 = vadd.f32 %v6628, %v6629
    %v6631 = vrot.slane %v6618, 4
    %v6632 = vadd.f32 %v6618, %v6631
    %v6633 = vrot.slane %v6632, 2
    %v6634 = vadd.f32 %v6632, %v6633
    %v6635 = vrot.slane %v6634, 1
    %v6636 = vadd.f32 %v6634, %v6635
    %v6637 = vrot.slane %v6619, 4
    %v6638 = vadd.f32 %v6619, %v6637
    %v6639 = vrot.slane %v6638, 2
    %v6640 = vadd.f32 %v6638, %v6639
    %v6641 = vrot.slane %v6640, 1
    %v6642 = vadd.f32 %v6640, %v6641
    %v6643 = vrot.slane %v6620, 4
    %v6644 = vadd.f32 %v6620, %v6643
    %v6645 = vrot.slane %v6644, 2
    %v6646 = vadd.f32 %v6644, %v6645
    %v6647 = vrot.slane %v6646, 1
    %v6648 = vadd.f32 %v6646, %v6647
    %v6649 = vrot.slane %v6621, 4
    %v6650 = vadd.f32 %v6621, %v6649
    %v6651 = vrot.slane %v6650, 2
    %v6652 = vadd.f32 %v6650, %v6651
    %v6653 = vrot.slane %v6652, 1
    %v6654 = vadd.f32 %v6652, %v6653
    %v6655 = vrot.slane %v6622, 4
    %v6656 = vadd.f32 %v6622, %v6655
    %v6657 = vrot.slane %v6656, 2
    %v6658 = vadd.f32 %v6656, %v6657
    %v6659 = vrot.slane %v6658, 1
    %v6660 = vadd.f32 %v6658, %v6659
    %v6661 = vrot.slane %v6623, 4
    %v6662 = vadd.f32 %v6623, %v6661
    %v6663 = vrot.slane %v6662, 2
    %v6664 = vadd.f32 %v6662, %v6663
    %v6665 = vrot.slane %v6664, 1
    %v6666 = vadd.f32 %v6664, %v6665
    %v6667 = vrot.slane %v6624, 4
    %v6668 = vadd.f32 %v6624, %v6667
    %v6669 = vrot.slane %v6668, 2
    %v6670 = vadd.f32 %v6668, %v6669
    %v6671 = vrot.slane %v6670, 1
    %v6672 = vadd.f32 %v6670, %v6671
    %s6673 = scalar_lea.vmem %s0, 168
    %v6674 = vld [vmem:[%s6673] sm:$0xff]
    %v6675 = vld [vmem:[%s6673 + $0x8] sm:$0xff]
    %v6676 = vld [vmem:[%s6673 + $0x10] sm:$0xff]
    %v6677 = vld [vmem:[%s7] sm:$0xff]
    %v6678 = vld [vmem:[%s7 + $0x8] sm:$0xff]
    %v6679 = vld [vmem:[%s7 + $0x10] sm:$0xff]
    %v6680 = vld [vmem:[%s7 + $0x18] sm:$0xff]
    %v6681 = vld [vmem:[%s7 + $0x20] sm:$0xff]
    %v6682 = vld [vmem:[%s7 + $0x28] sm:$0xff]
    %v6683 = vld [vmem:[%s7 + $0x30] sm:$0xff]
    %v6684 = vld [vmem:[%s7 + $0x38] sm:$0xff]
    %v6685 = vld [vmem:[%s7 + $0x40] sm:$0xff]
    %v6686 = vld [vmem:[%s7 + $0x48] sm:$0xff]
    %v6687 = vld [vmem:[%s7 + $0x50] sm:$0xff]
    %v6688 = vld [vmem:[%s7 + $0x58] sm:$0xff]
    %v6689 = vld [vmem:[%s7 + $0x60] sm:$0xff]
    %v6690 = vld [vmem:[%s7 + $0x68] sm:$0xff]
    %v6691 = vld [vmem:[%s7 + $0x70] sm:$0xff]
    %v6692 = vld [vmem:[%s7 + $0x78] sm:$0xff]
    %v6693 = vld [vmem:[%s7 + $0x80] sm:$0xff]
    %v6694 = vld [vmem:[%s7 + $0x88] sm:$0xff]
    %v6695 = vld [vmem:[%s7 + $0x90] sm:$0xff]
    %v6696 = vld [vmem:[%s7 + $0x98] sm:$0xff]
    %v6697 = vld [vmem:[%s7 + $0xa0] sm:$0xff]
    %v6698 = vld [vmem:[%s7 + $0xa8] sm:$0xff]
    %v6699 = vld [vmem:[%s7 + $0xb0] sm:$0xff]
    %v6700 = vld [vmem:[%s7 + $0xb8] sm:$0xff]
    %v6701 = vld [vmem:[%s7 + $0xc0] sm:$0xff]
    %v6702 = vld [vmem:[%s7 + $0xc8] sm:$0xff]
    %v6703 = vld [vmem:[%s7 + $0xd0] sm:$0xff]
    %v6704 = vld [vmem:[%s7 + $0xd8] sm:$0xff]
    %v6705 = vld [vmem:[%s7 + $0xe0] sm:$0xff]
    %v6706 = vld [vmem:[%s7 + $0xe8] sm:$0xff]
    %v6707 = vld [vmem:[%s7 + $0xf0] sm:$0xff]
    %v6708 = vld [vmem:[%s7 + $0xf8] sm:$0xff]
    %v6709 = vld [vmem:[%s7 + $0x100] sm:$0xff]
    %v6710 = vld [vmem:[%s7 + $0x108] sm:$0xff]
    %v6711 = vld [vmem:[%s7 + $0x110] sm:$0xff]
    %v6712 = vld [vmem:[%s7 + $0x118] sm:$0xff]
    %v6713 = vld [vmem:[%s7 + $0x120] sm:$0xff]
    %v6714 = vld [vmem:[%s7 + $0x128] sm:$0xff]
    %v6715 = vld [vmem:[%s7 + $0x130] sm:$0xff]
    %v6716 = vld [vmem:[%s7 + $0x138] sm:$0xff]
    %v6717 = vld [vmem:[%s7 + $0x140] sm:$0xff]
    %v6718 = vld [vmem:[%s7 + $0x148] sm:$0xff]
    %v6719 = vld [vmem:[%s7 + $0x150] sm:$0xff]
    %v6720 = vld [vmem:[%s7 + $0x158] sm:$0xff]
    %v6721 = vld [vmem:[%s7 + $0x160] sm:$0xff]
    %v6722 = vld [vmem:[%s7 + $0x168] sm:$0xff]
    %v6723 = vld [vmem:[%s7 + $0x170] sm:$0xff]
    %v6724 = vld [vmem:[%s7 + $0x178] sm:$0xff]
    %v6733 = vsel %vm607, %v6636, %v6630
    %v6734 = vsel %vm609, %v6642, %v6733
    %v6735 = vsel %vm611, %v6648, %v6734
    %v6736 = vsel %vm613, %v6654, %v6735
    %v6737 = vsel %vm615, %v6660, %v6736
    %v6738 = vsel %vm617, %v6666, %v6737
    %v6739 = vsel %vm619, %v6672, %v6738
    %6741 = vmatprep.subr.mxu0 %v6723
    %6742 = vmatpush1.msra.mxu0 %v6722
    %6743 = vmatprep.subr.mxu0 %v6720
    %6744 = vmatpush1.msra.mxu0 %v6719
    %6745 = vmatprep.subr.mxu0 %v6717
    %6746 = vmatpush1.msra.mxu0 %v6716
    %6747 = vmatprep.subr.mxu0 %v6714
    %6748 = vmatpush1.msra.mxu0 %v6713
    %6749 = vmatprep.subr.mxu0 %v6711
    %6750 = vmatpush1.msra.mxu0 %v6710
    %6751 = vmatprep.subr.mxu0 %v6708
    %6752 = vmatpush1.msra.mxu0 %v6707
    %6753 = vmatprep.subr.mxu0 %v6705
    %6754 = vmatpush1.msra.mxu0 %v6704
    %6755 = vmatprep.subr.mxu0 %v6702
    %6756 = vmatpush1.msra.mxu0 %v6701
    %6757 = vmatprep.subr.mxu0 %v6699
    %6758 = vmatpush1.msra.mxu0 %v6698
    %6759 = vmatprep.subr.mxu0 %v6696
    %6760 = vmatpush1.msra.mxu0 %v6695
    %6761 = vmatprep.subr.mxu0 %v6693
    %6762 = vmatpush1.msra.mxu0 %v6692
    %6763 = vmatprep.subr.mxu0 %v6690
    %6764 = vmatpush1.msra.mxu0 %v6689
    %6765 = vmatprep.subr.mxu0 %v6687
    %6766 = vmatpush1.msra.mxu0 %v6686
    %6767 = vmatprep.subr.mxu0 %v6684
    %6768 = vmatpush1.msra.mxu0 %v6683
    %6769 = vmatprep.subr.mxu0 %v6681
    %6770 = vmatpush1.msra.mxu0 %v6680
    %6771 = vmatprep.subr.mxu0 %v6678
    %6772 = vmatpush1.msra.mxu0 %v6677
    %6773 = vmatprep.subr.mxu0 0.0
    %6774 = vmatpush2.msra.mxu0 0.0
    %6775 = vmatprep.subr.mxu0 0.0
    %6776 = vmatpush2.msra.mxu0 0.0
    %6777 = vmatprep.subr.mxu0 0.0
    %6778 = vmatpush2.msra.mxu0 0.0
    %6779 = vmatprep.subr.mxu0 0.0
    %6780 = vmatpush2.msra.mxu0 0.0
    %6781 = vmatprep.subr.mxu0 0.0
    %6782 = vmatpush2.msra.mxu0 0.0
    %6783 = vmatprep.subr.mxu0 0.0
    %6784 = vmatpush2.msra.mxu0 0.0
    %6785 = vmatprep.subr.mxu0 0.0
    %6786 = vmatpush2.msra.mxu0 0.0
    %6787 = vmatprep.subr.mxu0 0.0
    %6788 = vmatpush2.msra.mxu0 0.0
    %6789 = vmatprep.subr.mxu0 0.0
    %6790 = vmatpush2.msra.mxu0 0.0
    %6791 = vmatprep.subr.mxu0 0.0
    %6792 = vmatpush2.msra.mxu0 0.0
    %6793 = vmatprep.subr.mxu0 0.0
    %6794 = vmatpush2.msra.mxu0 0.0
    %6795 = vmatprep.subr.mxu0 0.0
    %6796 = vmatpush2.msra.mxu0 0.0
    %6797 = vmatprep.subr.mxu0 0.0
    %6798 = vmatpush2.msra.mxu0 0.0
    %6799 = vmatprep.subr.mxu0 0.0
    %6800 = vmatpush2.msra.mxu0 0.0
    %6801 = vmatprep.subr.mxu0 0.0
    %6802 = vmatpush2.msra.mxu0 0.0
    %6803 = vmatprep.subr.mxu0 0.0
    %6804 = vmatpush2.msra.mxu0 0.0
    %6805 = vmatprep.mubr.f32.mxu0 0.0
    %6806 = vmatmul.mubr.f32.gmra.mxu0 %v6739
    %v6807 = vpop.f32.mrf.mxu0
    %v6808 = vadd.f32 0.0, %v6807
    %v6809 = vpop.f32.mrf.mxu0
    %v6810 = vadd.f32 0.0, %v6809
    %6811 = vdwg.mxu0
    %6812 = vmatprep.subr.mxu0 0.0
    %6813 = vmatpush1.msra.mxu0 %v6724
    %6814 = vmatprep.subr.mxu0 0.0
    %6815 = vmatpush1.msra.mxu0 %v6721
    %6816 = vmatprep.subr.mxu0 0.0
    %6817 = vmatpush1.msra.mxu0 %v6718
    %6818 = vmatprep.subr.mxu0 0.0
    %6819 = vmatpush1.msra.mxu0 %v6715
    %6820 = vmatprep.subr.mxu0 0.0
    %6821 = vmatpush1.msra.mxu0 %v6712
    %6822 = vmatprep.subr.mxu0 0.0
    %6823 = vmatpush1.msra.mxu0 %v6709
    %6824 = vmatprep.subr.mxu0 0.0
    %6825 = vmatpush1.msra.mxu0 %v6706
    %6826 = vmatprep.subr.mxu0 0.0
    %6827 = vmatpush1.msra.mxu0 %v6703
    %6828 = vmatprep.subr.mxu0 0.0
    %6829 = vmatpush1.msra.mxu0 %v6700
    %6830 = vmatprep.subr.mxu0 0.0
    %6831 = vmatpush1.msra.mxu0 %v6697
    %6832 = vmatprep.subr.mxu0 0.0
    %6833 = vmatpush1.msra.mxu0 %v6694
    %6834 = vmatprep.subr.mxu0 0.0
    %6835 = vmatpush1.msra.mxu0 %v6691
    %6836 = vmatprep.subr.mxu0 0.0
    %6837 = vmatpush1.msra.mxu0 %v6688
    %6838 = vmatprep.subr.mxu0 0.0
    %6839 = vmatpush1.msra.mxu0 %v6685
    %6840 = vmatprep.subr.mxu0 0.0
    %6841 = vmatpush1.msra.mxu0 %v6682
    %6842 = vmatprep.subr.mxu0 0.0
    %6843 = vmatpush1.msra.mxu0 %v6679
    %6844 = vmatprep.subr.mxu0 0.0
    %6845 = vmatpush2.msra.mxu0 0.0
    %6846 = vmatprep.subr.mxu0 0.0
    %6847 = vmatpush2.msra.mxu0 0.0
    %6848 = vmatprep.subr.mxu0 0.0
    %6849 = vmatpush2.msra.mxu0 0.0
    %6850 = vmatprep.subr.mxu0 0.0
    %6851 = vmatpush2.msra.mxu0 0.0
    %6852 = vmatprep.subr.mxu0 0.0
    %6853 = vmatpush2.msra.mxu0 0.0
    %6854 = vmatprep.subr.mxu0 0.0
    %6855 = vmatpush2.msra.mxu0 0.0
    %6856 = vmatprep.subr.mxu0 0.0
    %6857 = vmatpush2.msra.mxu0 0.0
    %6858 = vmatprep.subr.mxu0 0.0
    %6859 = vmatpush2.msra.mxu0 0.0
    %6860 = vmatprep.subr.mxu0 0.0
    %6861 = vmatpush2.msra.mxu0 0.0
    %6862 = vmatprep.subr.mxu0 0.0
    %6863 = vmatpush2.msra.mxu0 0.0
    %6864 = vmatprep.subr.mxu0 0.0
    %6865 = vmatpush2.msra.mxu0 0.0
    %6866 = vmatprep.subr.mxu0 0.0
    %6867 = vmatpush2.msra.mxu0 0.0
    %6868 = vmatprep.subr.mxu0 0.0
    %6869 = vmatpush2.msra.mxu0 0.0
    %6870 = vmatprep.subr.mxu0 0.0
    %6871 = vmatpush2.msra.mxu0 0.0
    %6872 = vmatprep.subr.mxu0 0.0
    %6873 = vmatpush2.msra.mxu0 0.0
    %6874 = vmatprep.subr.mxu0 0.0
    %6875 = vmatpush2.msra.mxu0 0.0
    %6876 = vmatprep.mubr.f32.mxu0 0.0
    %6877 = vmatmul.mubr.f32.gmra.mxu0 %v6739
    %v6878 = vpop.f32.mrf.mxu0
    %v6879 = vadd.f32 0.0, %v6878
    %v6880 = vpop.f32.mrf.mxu0
    %6881 = vdwg.mxu0
    %v6882 = vadd.f32 %v6674, %v6808
    %v6883 = vadd.f32 %v6675, %v6810
    %v6884 = vadd.f32 %v6676, %v6879
    %v6885 = vadd.f32 %v6882, %v183
    %v6886 = vadd.f32 %v6883, %v187
    %v6887 = vadd.f32 %v6884, %v191
    %v6888 = vadd.f32 %v6885, %v6368
    %v6889 = vxor.u32 %v6888, 2147483648
    %v6890 = vmul.f32 %v6889, 1.442695
    %v6891 = vpow.pop %v6890
    %v6892 = vadd.f32 %v6891, 1.0
    %v6893 = vrcp.pop %v6892
    %v6894 = vmul.f32 1.0, %v6893
    %v6895 = vadd.f32 %v6886, %v6369
    %v6896 = vxor.u32 %v6895, 2147483648
    %v6897 = vmul.f32 %v6896, 1.442695
    %v6898 = vpow.pop %v6897
    %v6899 = vadd.f32 %v6898, 1.0
    %v6900 = vrcp.pop %v6899
    %v6901 = vmul.f32 1.0, %v6900
    %v6902 = vmul.f32 %v6894, %v6370
    %v6903 = vadd.f32 %v6887, %v6902
    %v6904 = vtanh.pop %v6903
    %v6905 = vsub.f32 1.0, %v6901
    %v6906 = vmul.f32 %v6905, %v6904
    %v6907 = vmul.f32 %v6901, %v6061
    %v6908 = vadd.f32 %v6906, %v6907
    %v6909 = vld [vmem:[%s10] sm:$0xff]
    %v6910 = vld [vmem:[%s10 + $0x8] sm:$0xff]
    %v6911 = vld [vmem:[%s10 + $0x10] sm:$0xff]
    %v6912 = vld [vmem:[%s10 + $0x18] sm:$0xff]
    %v6913 = vld [vmem:[%s10 + $0x20] sm:$0xff]
    %v6914 = vld [vmem:[%s10 + $0x28] sm:$0xff]
    %v6915 = vld [vmem:[%s10 + $0x30] sm:$0xff]
    %v6916 = vld [vmem:[%s10 + $0x38] sm:$0xff]
    %v6917 = vld [vmem:[%s10 + $0x40] sm:$0xff]
    %v6918 = vld [vmem:[%s10 + $0x48] sm:$0xff]
    %v6919 = vld [vmem:[%s10 + $0x50] sm:$0xff]
    %v6920 = vld [vmem:[%s10 + $0x58] sm:$0xff]
    %v6921 = vld [vmem:[%s10 + $0x60] sm:$0xff]
    %v6922 = vld [vmem:[%s10 + $0x68] sm:$0xff]
    %v6923 = vld [vmem:[%s10 + $0x70] sm:$0xff]
    %v6924 = vld [vmem:[%s10 + $0x78] sm:$0xff]
    %6925 = vmatprep.subr.mxu0 0.0
    %6926 = vmatpush1.msra.mxu0 %v6924
    %6927 = vmatprep.subr.mxu0 0.0
    %6928 = vmatpush1.msra.mxu0 %v6923
    %6929 = vmatprep.subr.mxu0 0.0
    %6930 = vmatpush1.msra.mxu0 %v6922
    %6931 = vmatprep.subr.mxu0 0.0
    %6932 = vmatpush1.msra.mxu0 %v6921
    %6933 = vmatprep.subr.mxu0 0.0
    %6934 = vmatpush1.msra.mxu0 %v6920
    %6935 = vmatprep.subr.mxu0 0.0
    %6936 = vmatpush1.msra.mxu0 %v6919
    %6937 = vmatprep.subr.mxu0 0.0
    %6938 = vmatpush1.msra.mxu0 %v6918
    %6939 = vmatprep.subr.mxu0 0.0
    %6940 = vmatpush1.msra.mxu0 %v6917
    %6941 = vmatprep.subr.mxu0 0.0
    %6942 = vmatpush1.msra.mxu0 %v6916
    %6943 = vmatprep.subr.mxu0 0.0
    %6944 = vmatpush1.msra.mxu0 %v6915
    %6945 = vmatprep.subr.mxu0 0.0
    %6946 = vmatpush1.msra.mxu0 %v6914
    %6947 = vmatprep.subr.mxu0 0.0
    %6948 = vmatpush1.msra.mxu0 %v6913
    %6949 = vmatprep.subr.mxu0 0.0
    %6950 = vmatpush1.msra.mxu0 %v6912
    %6951 = vmatprep.subr.mxu0 0.0
    %6952 = vmatpush1.msra.mxu0 %v6911
    %6953 = vmatprep.subr.mxu0 0.0
    %6954 = vmatpush1.msra.mxu0 %v6910
    %6955 = vmatprep.subr.mxu0 0.0
    %6956 = vmatpush1.msra.mxu0 %v6909
    %6957 = vmatprep.subr.mxu0 0.0
    %6958 = vmatpush2.msra.mxu0 0.0
    %6959 = vmatprep.subr.mxu0 0.0
    %6960 = vmatpush2.msra.mxu0 0.0
    %6961 = vmatprep.subr.mxu0 0.0
    %6962 = vmatpush2.msra.mxu0 0.0
    %6963 = vmatprep.subr.mxu0 0.0
    %6964 = vmatpush2.msra.mxu0 0.0
    %6965 = vmatprep.subr.mxu0 0.0
    %6966 = vmatpush2.msra.mxu0 0.0
    %6967 = vmatprep.subr.mxu0 0.0
    %6968 = vmatpush2.msra.mxu0 0.0
    %6969 = vmatprep.subr.mxu0 0.0
    %6970 = vmatpush2.msra.mxu0 0.0
    %6971 = vmatprep.subr.mxu0 0.0
    %6972 = vmatpush2.msra.mxu0 0.0
    %6973 = vmatprep.subr.mxu0 0.0
    %6974 = vmatpush2.msra.mxu0 0.0
    %6975 = vmatprep.subr.mxu0 0.0
    %6976 = vmatpush2.msra.mxu0 0.0
    %6977 = vmatprep.subr.mxu0 0.0
    %6978 = vmatpush2.msra.mxu0 0.0
    %6979 = vmatprep.subr.mxu0 0.0
    %6980 = vmatpush2.msra.mxu0 0.0
    %6981 = vmatprep.subr.mxu0 0.0
    %6982 = vmatpush2.msra.mxu0 0.0
    %6983 = vmatprep.subr.mxu0 0.0
    %6984 = vmatpush2.msra.mxu0 0.0
    %6985 = vmatprep.subr.mxu0 0.0
    %6986 = vmatpush2.msra.mxu0 0.0
    %6987 = vmatprep.subr.mxu0 0.0
    %6988 = vmatpush2.msra.mxu0 0.0
    %6989 = vmatprep.mubr.f32.mxu0 0.0
    %6990 = vmatmul.mubr.f32.gmra.mxu0 %v6908
    %v6991 = vpop.f32.mrf.mxu0
    %v6992 = vadd.f32 %v217, %v6991
    %v6993 = vpop.f32.mrf.mxu0
    %6994 = vdwg.mxu0
    %6995 = vmax.xlane.f32.xlu0 %v6992
    %v6996 = vpop.xlane.xlu0 %6995
    %v6997 = vsub.f32 %v6992, %v6996
    %v6998 = vmul.f32 %v6997, 1.442695
    %v6999 = vpow.pop %v6998
    %7000 = vadd.xlane.f32.xlu0 %v6999
    %v7001 = vpop.xlane.xlu0 %7000
    %v7002 = vlog2.pop %v7001
    %v7003 = vmul.f32 %v7002, 0.6931472
    %v7004 = vsub.f32 %v6997, %v7003
    %s7005 = scalar_lea.vmem [#allocation2], 56
    %7006 = vst [vmem:[%s7005] sm:$0xff] %v7004
    %s7007 = scalar_lea.vmem [#allocation4], 56
    %7008 = vst [vmem:[%s7007] sm:$0xff] %v6739
    %7009 = vst [vmem:[%s14] sm:$0xff] %v6908
    // Predicated region
    $region50: #{decoder_forward.1} parent=1 // pred_check
      _
    $region51: #{decoder_forward.1} parent=1 // pred_check_branch
      %7011 = sbr.rel (0) target = $region53
    $region52: #{decoder_forward.1} parent=1 // pred_region
      %s7013 = ssub.s32 1024, 1024
      %7014 = vsyncadd [#allocation3], %s7013
      %s7015 = sshll.u32 [#allocation2], 4
      %s7016 = int_to_ptr.vmem [resolvable:$true] %s7015
      %7021 = dma.vmem_to_hbm [thread:$0]  %s7016, 1024, %s12, [#allocation3], 128, 128, 8
    $region53: #{decoder_forward.1} parent=1 // pred_fallthru
      _
    // Predicated region
    $region54: #{decoder_forward.1} parent=1 // pred_check
      _
    $region55: #{decoder_forward.1} parent=1 // pred_check_branch
      %7023 = sbr.rel (0) target = $region57
    $region56: #{decoder_forward.1} parent=1 // pred_region
      %s7025 = ssub.s32 1024, 1024
      %7026 = vsyncadd [#allocation5], %s7025
      %s7027 = sshll.u32 [#allocation4], 4
      %s7028 = int_to_ptr.vmem [resolvable:$true] %s7027
      %7033 = dma.vmem_to_hbm [thread:$0]  %s7028, 1024, %s13, [#allocation5], 128, 128, 8
    $region57: #{decoder_forward.1} parent=1 // pred_fallthru
      _
    // Predicated region
    $region58: #{decoder_forward.1} parent=1 // pred_check
      _
    $region59: #{decoder_forward.1} parent=1 // pred_check_branch
      %7035 = sbr.rel (0) target = $region61
    $region60: #{decoder_forward.1} parent=1 // pred_region
      _
    $region61: #{decoder_forward.1} parent=1 // pred_fallthru
      _
    // Predicated region
    $region62: #{decoder_forward.1} parent=1 // pred_check
      _
    $region63: #{decoder_forward.1} parent=1 // pred_check_branch
      %7037 = sbr.rel (0) target = $region65
    $region64: #{decoder_forward.1} parent=1 // pred_region
      %7038 = dma.done [#allocation3], 1024
    $region65: #{decoder_forward.1} parent=1 // pred_fallthru
      _
    // Predicated region
    $region66: #{decoder_forward.1} parent=1 // pred_check
      _
    $region67: #{decoder_forward.1} parent=1 // pred_check_branch
      %7040 = sbr.rel (0) target = $region69
    $region68: #{decoder_forward.1} parent=1 // pred_region
      %7041 = dma.done [#allocation5], 1024
    $region69: #{decoder_forward.1} parent=1 // pred_fallthru
      _
    // Predicated region
    $region70: #{decoder_forward.1} parent=1 // pred_check
      _
    $region71: #{decoder_forward.1} parent=1 // pred_check_branch
      %7043 = sbr.rel (0) target = $region73
    $region72: #{decoder_forward.1} parent=1 // pred_region
      _
    $region73: #{decoder_forward.1} parent=1 // pred_fallthru
      _
    %7044 = vsyncpa [#allocation3], 1
    %7045 = vsyncpa [#allocation5], 1

</llo_original>
